<compile_context>
chip_gen: v6e
topology: v6e:2x2x1
jax: 0.10.0
libtpu: 0.0.40
codegen_flags: <defaults>
</compile_context>

<pallas_src>
import jax
import jax.numpy as jnp
import numpy as np
from jax.experimental import pallas as pl
from jax.experimental.pallas import tpu as pltpu


# ---------------------------------------------------------------------------
# host-side helpers (precomputed constant matrices)
# ---------------------------------------------------------------------------
def _const_index_map(ndim):
    return lambda b: (0,) * ndim


def _make_pool_matrix(H, W, OH=2, OW=4):
    """(OH*OW, H*W) matrix implementing AdaptiveAvgPool2d((OH, OW)) on the
    row-major flattened spatial dims (exact PyTorch bin boundaries)."""
    P = np.zeros((OH * OW, H * W), np.float32)
    for oh in range(OH):
        h0 = (oh * H) // OH
        h1 = ((oh + 1) * H + OH - 1) // OH
        for ow in range(OW):
            w0 = (ow * W) // OW
            w1 = ((ow + 1) * W + OW - 1) // OW
            inv = 1.0 / ((h1 - h0) * (w1 - w0))
            for hh in range(h0, h1):
                for ww in range(w0, w1):
                    P[oh * OW + ow, hh * W + ww] = inv
    return jnp.asarray(P)


def _make_shift_matrices(H, W):
    """(9, HW, HW) selection matrices: S[t] @ x  ==  x spatially shifted by the
    t-th 3x3 tap offset with zero padding at the image border."""
    HW = H * W
    S = np.zeros((9, HW, HW), np.float32)
    for t in range(9):
        dy, dx = t // 3 - 1, t % 3 - 1
        for r in range(H):
            for c in range(W):
                rr, cc = r + dy, c + dx
                if 0 <= rr < H and 0 <= cc < W:
                    S[t, r * W + c, rr * W + cc] = 1.0
    return jnp.asarray(S)


# ---------------------------------------------------------------------------
# fused DenseBlock kernel
# ---------------------------------------------------------------------------
_PER_LAYER = 6  # w1_folded, shift1, shift_sel, w2_folded(9 taps), shift2, pool


def _make_dense_block_kernel(n_layers):
    def kernel(*args):
        x_ref = args[0]
        o_ref = args[1 + _PER_LAYER * n_layers]

        a = x_ref[...]                                   # (HW_in, Cin)
        for li in range(n_layers):
            (w1_ref, sh1_ref, sel_ref, w2_ref, sh2_ref, pool_ref) = \
                args[1 + _PER_LAYER * li: 1 + _PER_LAYER * (li + 1)]

            # ---- conv1 (1x1) + folded BN1 + ReLU: ONE matmul over all pixels
            h1 = jnp.maximum(
                jnp.dot(a, w1_ref[...], preferred_element_type=jnp.float32)
                + sh1_ref[...], 0.0)                     # (HW, C)

            # ---- conv2 (3x3, stride 1, pad 1) + folded BN2 + ReLU ----
            # 9 taps; each tap is (shift-select @ h1) @ W_t  -> pure MXU work.
            acc = None
            for t in range(9):
                shifted = jnp.dot(sel_ref[t], h1,
                                  preferred_element_type=jnp.float32)
                term = jnp.dot(shifted, w2_ref[t],
                               preferred_element_type=jnp.float32)
                acc = term if acc is None else acc + term
            h2 = jnp.maximum(acc + sh2_ref[...], 0.0)    # (HW, C)

            # Dropout: identity in eval mode.
            # TODO(synk): train-mode dropout / batch-stat BN would need RNG &
            # batch statistics; inference-mode semantics are implemented.

            # ---- AdaptiveAvgPool2d((2,4)) as ONE matmul ----
            a = jnp.dot(pool_ref[...], h2,
                        preferred_element_type=jnp.float32)   # (8, C)

        o_ref[...] = a                                   # single dense store
    return kernel


def dense_block_forward(x_nchw, layer_params):
    """x_nchw: (B, Cin, H, W) -> (B, Cout, 2, 4), matching DenseBlock.forward."""
    B, Cin0, H0, W0 = x_nchw.shape
    # NCHW -> NHWC -> flattened (B, H*W, C): conv1 becomes a plain matmul.
    x2d = jnp.transpose(x_nchw, (0, 2, 3, 1)).reshape(B, H0 * W0, Cin0)

    inputs = [x2d]
    in_specs = [pl.BlockSpec((None, H0 * W0, Cin0), lambda b: (b, 0, 0))]

    n_layers = len(layer_params)
    H, W = H0, W0
    c_out = None
    for p in layer_params:
        _, c = p["w1"].shape
        # Fold inference BatchNorm into the conv weights / a single shift.
        w1f = p["w1"] * p["s1"]                              # (Cin, C)
        sh1 = p["b1"] * p["s1"] + p["t1"]                    # (1, C)
        w2f = p["w2"].reshape(9, c, c) * p["s2"].reshape(1, 1, c)   # (9, C, C)
        sh2 = p["b2"] * p["s2"] + p["t2"]                    # (1, C)
        sel = _make_shift_matrices(H, W)                     # (9, HW, HW)
        pool = _make_pool_matrix(H, W)                       # (8, HW)

        arrs = [w1f, sh1, sel, w2f, sh2, pool]
        inputs.extend(arrs)
        in_specs.extend(pl.BlockSpec(a.shape, _const_index_map(a.ndim))
                        for a in arrs)
        H, W = 2, 4                       # every DenseLayer pools to (2, 4)
        c_out = c

    out = pl.pallas_call(
        _make_dense_block_kernel(n_layers),
        out_shape=jax.ShapeDtypeStruct((B, 8, c_out), jnp.float32),
        grid=(B,),
        in_specs=in_specs,
        out_specs=pl.BlockSpec((None, 8, c_out), lambda b: (b, 0, 0)),
        compiler_params=pltpu.CompilerParams(
            dimension_semantics=("parallel",)),   # shard batch across TCs
    )(*inputs)

    # (B, OH*OW, C) -> (B, C, 2, 4)
    return jnp.transpose(out.reshape(B, 2, 4, c_out), (0, 3, 1, 2))


# ---------------- deterministic parameter construction ----------------
def _make_bn(key, c):
    k1, k2, k3, k4 = jax.random.split(key, 4)
    gamma = 1.0 + 0.1 * jax.random.normal(k1, (1, c), jnp.float32)
    beta = 0.1 * jax.random.normal(k2, (1, c), jnp.float32)
    mean = 0.1 * jax.random.normal(k3, (1, c), jnp.float32)
    var = jnp.abs(jax.random.normal(k4, (1, c), jnp.float32)) + 0.5
    s = gamma / jnp.sqrt(var + 1e-5)
    t = beta - mean * s
    return s, t


def init_dense_layer(key, cin, chid):
    ks = jax.random.split(key, 6)
    w1 = jax.random.normal(ks[0], (cin, chid), jnp.float32) / np.sqrt(cin)
    b1 = 0.1 * jax.random.normal(ks[1], (1, chid), jnp.float32)
    w2 = jax.random.normal(ks[2], (3, 3, chid, chid), jnp.float32) / np.sqrt(9 * chid)
    b2 = 0.1 * jax.random.normal(ks[3], (1, chid), jnp.float32)
    s1, t1 = _make_bn(ks[4], chid)
    s2, t2 = _make_bn(ks[5], chid)
    return dict(w1=w1, b1=b1, s1=s1, t1=t1, w2=w2, b2=b2, s2=s2, t2=t2)


def init_dense_block(key, layer_num, in_dim, hid_dim, out_dim):
    # Mirrors DenseBlock.__init__ layer structure (downsample conv is unused
    # in forward() and therefore omitted).
    dims = [(in_dim, hid_dim)]
    for _ in range(layer_num - 2):
        dims.append((hid_dim, hid_dim))
    if layer_num > 1:
        dims.append((hid_dim, out_dim))
    keys = jax.random.split(key, len(dims))
    return [init_dense_layer(k, ci, co) for k, (ci, co) in zip(keys, dims)]


# ---------------- plain-JAX reference for verification ----------------
def ref_dense_layer(x, p):
    h1 = jnp.einsum("bhwc,cd->bhwd", x, p["w1"]) + p["b1"][0]
    h1 = jnp.maximum(h1 * p["s1"][0] + p["t1"][0], 0.0)
    B, H, W, C = h1.shape
    xp = jnp.pad(h1, ((0, 0), (1, 1), (1, 1), (0, 0)))
    h2 = jnp.zeros((B, H, W, C), jnp.float32)
    for dy in range(3):
        for dx in range(3):
            h2 = h2 + jnp.einsum("bhwc,cd->bhwd",
                                 xp[:, dy:dy + H, dx:dx + W, :],
                                 p["w2"][dy, dx])
    h2 = jnp.maximum((h2 + p["b2"][0]) * p["s2"][0] + p["t2"][0], 0.0)
    OH, OW = 2, 4
    return h2.reshape(B, OH, H // OH, OW, W // OW, C).mean(axis=(2, 4))


if __name__ == "__main__":
    key = jax.random.PRNGKey(0)
    kx, kp = jax.random.split(key)

    B, in_dim, H, W = 2, 4, 8, 8
    hid_dim, out_dim, layer_num = 32, 64, 3

    x_nchw = jax.random.normal(kx, (B, in_dim, H, W), jnp.float32)
    params = init_dense_block(kp, layer_num, in_dim, hid_dim, out_dim)

    fwd = jax.jit(dense_block_forward)
    out = jax.block_until_ready(fwd(x_nchw, params))
    assert out.shape == (B, out_dim, 2, 4), out.shape

    # cross-check against a plain-JAX reference (same default MXU precision)
    xr = jnp.transpose(x_nchw, (0, 2, 3, 1))
    for p in params:
        xr = ref_dense_layer(xr, p)
    ref = jnp.transpose(xr, (0, 3, 1, 2))
    np.testing.assert_allclose(np.asarray(out), np.asarray(ref),
                               rtol=3e-2, atol=3e-2)

    print("KERNEL_OK")
</pallas_src>

<mosaic_0001>
module attributes {stable_mosaic.version = 11 : i64} {
  func.func @kernel(%arg0: i32, %arg1: memref<1x64x4xf32, #tpu.memory_space<vmem>>, %arg2: memref<4x32xf32, #tpu.memory_space<vmem>>, %arg3: memref<1x32xf32, #tpu.memory_space<vmem>>, %arg4: memref<9x64x64xf32, #tpu.memory_space<vmem>>, %arg5: memref<9x32x32xf32, #tpu.memory_space<vmem>>, %arg6: memref<1x32xf32, #tpu.memory_space<vmem>>, %arg7: memref<8x64xf32, #tpu.memory_space<vmem>>, %arg8: memref<32x32xf32, #tpu.memory_space<vmem>>, %arg9: memref<1x32xf32, #tpu.memory_space<vmem>>, %arg10: memref<9x8x8xf32, #tpu.memory_space<vmem>>, %arg11: memref<9x32x32xf32, #tpu.memory_space<vmem>>, %arg12: memref<1x32xf32, #tpu.memory_space<vmem>>, %arg13: memref<8x8xf32, #tpu.memory_space<vmem>>, %arg14: memref<32x64xf32, #tpu.memory_space<vmem>>, %arg15: memref<1x64xf32, #tpu.memory_space<vmem>>, %arg16: memref<9x8x8xf32, #tpu.memory_space<vmem>>, %arg17: memref<9x64x64xf32, #tpu.memory_space<vmem>>, %arg18: memref<1x64xf32, #tpu.memory_space<vmem>>, %arg19: memref<8x8xf32, #tpu.memory_space<vmem>>, %arg20: memref<1x8x64xf32, #tpu.memory_space<vmem>>) attributes {dimension_semantics = [#tpu.dimension_semantics<parallel>], iteration_bounds = array<i64: 2>, scalar_prefetch = 0 : i64, scratch_operands = 0 : i64, tpu.core_type = #tpu.core_type<tc>, window_params = [{transform_indices = @transform_0, window_bounds = array<i64: 1, 64, 4>}, {pipeline_mode = #tpu.pipeline_mode<synchronous>, transform_indices = @transform_1, window_bounds = array<i64: 4, 32>}, {pipeline_mode = #tpu.pipeline_mode<synchronous>, transform_indices = @transform_2, window_bounds = array<i64: 1, 32>}, {pipeline_mode = #tpu.pipeline_mode<synchronous>, transform_indices = @transform_3, window_bounds = array<i64: 9, 64, 64>}, {pipeline_mode = #tpu.pipeline_mode<synchronous>, transform_indices = @transform_4, window_bounds = array<i64: 9, 32, 32>}, {pipeline_mode = #tpu.pipeline_mode<synchronous>, transform_indices = @transform_5, window_bounds = array<i64: 1, 32>}, {pipeline_mode = #tpu.pipeline_mode<synchronous>, transform_indices = @transform_6, window_bounds = array<i64: 8, 64>}, {pipeline_mode = #tpu.pipeline_mode<synchronous>, transform_indices = @transform_7, window_bounds = array<i64: 32, 32>}, {pipeline_mode = #tpu.pipeline_mode<synchronous>, transform_indices = @transform_8, window_bounds = array<i64: 1, 32>}, {pipeline_mode = #tpu.pipeline_mode<synchronous>, transform_indices = @transform_9, window_bounds = array<i64: 9, 8, 8>}, {pipeline_mode = #tpu.pipeline_mode<synchronous>, transform_indices = @transform_10, window_bounds = array<i64: 9, 32, 32>}, {pipeline_mode = #tpu.pipeline_mode<synchronous>, transform_indices = @transform_11, window_bounds = array<i64: 1, 32>}, {pipeline_mode = #tpu.pipeline_mode<synchronous>, transform_indices = @transform_12, window_bounds = array<i64: 8, 8>}, {pipeline_mode = #tpu.pipeline_mode<synchronous>, transform_indices = @transform_13, window_bounds = array<i64: 32, 64>}, {pipeline_mode = #tpu.pipeline_mode<synchronous>, transform_indices = @transform_14, window_bounds = array<i64: 1, 64>}, {pipeline_mode = #tpu.pipeline_mode<synchronous>, transform_indices = @transform_15, window_bounds = array<i64: 9, 8, 8>}, {pipeline_mode = #tpu.pipeline_mode<synchronous>, transform_indices = @transform_16, window_bounds = array<i64: 9, 64, 64>}, {pipeline_mode = #tpu.pipeline_mode<synchronous>, transform_indices = @transform_17, window_bounds = array<i64: 1, 64>}, {pipeline_mode = #tpu.pipeline_mode<synchronous>, transform_indices = @transform_18, window_bounds = array<i64: 8, 8>}, {transform_indices = @transform_19, window_bounds = array<i64: 1, 8, 64>}]} {
    %c0 = arith.constant 0 : index
    %c0_0 = arith.constant 0 : index
    %c0_1 = arith.constant 0 : index
    %0 = vector.load %arg1[%c0, %c0_0, %c0_1] : memref<1x64x4xf32, #tpu.memory_space<vmem>>, vector<1x64x4xf32>
    %1 = vector.shape_cast %0 : vector<1x64x4xf32> to vector<64x4xf32>
    %c0_2 = arith.constant 0 : index
    %c0_3 = arith.constant 0 : index
    %2 = vector.load %arg2[%c0_2, %c0_3] : memref<4x32xf32, #tpu.memory_space<vmem>>, vector<4x32xf32>
    %cst = arith.constant dense<0.000000e+00> : vector<64x32xf32>
    %3 = tpu.matmul %1, %2, %cst {dimension_numbers = #tpu.dot_dimension_numbers<[1], [0], [0], [1], [0, 0, 1, 1], [], []>} : vector<64x4xf32>, vector<4x32xf32>, vector<64x32xf32> -> vector<64x32xf32>
    %c0_4 = arith.constant 0 : index
    %c0_5 = arith.constant 0 : index
    %4 = vector.load %arg3[%c0_4, %c0_5] : memref<1x32xf32, #tpu.memory_space<vmem>>, vector<1x32xf32>
    %5 = vector.broadcast %4 : vector<1x32xf32> to vector<64x32xf32>
    %6 = arith.addf %3, %5 : vector<64x32xf32>
    %cst_6 = arith.constant 0.000000e+00 : f32
    %7 = vector.broadcast %cst_6 : f32 to vector<64x32xf32>
    %8 = arith.maximumf %6, %7 : vector<64x32xf32>
    %c0_7 = arith.constant 0 : index
    %c0_8 = arith.constant 0 : index
    %c0_9 = arith.constant 0 : index
    %9 = vector.load %arg4[%c0_7, %c0_8, %c0_9] : memref<9x64x64xf32, #tpu.memory_space<vmem>>, vector<1x64x64xf32>
    %10 = vector.shape_cast %9 : vector<1x64x64xf32> to vector<64x64xf32>
    %cst_10 = arith.constant dense<0.000000e+00> : vector<64x32xf32>
    %11 = tpu.matmul %10, %8, %cst_10 {dimension_numbers = #tpu.dot_dimension_numbers<[1], [0], [0], [1], [0, 0, 1, 1], [], []>} : vector<64x64xf32>, vector<64x32xf32>, vector<64x32xf32> -> vector<64x32xf32>
    %c0_11 = arith.constant 0 : index
    %c0_12 = arith.constant 0 : index
    %c0_13 = arith.constant 0 : index
    %12 = vector.load %arg5[%c0_11, %c0_12, %c0_13] : memref<9x32x32xf32, #tpu.memory_space<vmem>>, vector<1x32x32xf32>
    %13 = vector.shape_cast %12 : vector<1x32x32xf32> to vector<32x32xf32>
    %cst_14 = arith.constant dense<0.000000e+00> : vector<64x32xf32>
    %14 = tpu.matmul %11, %13, %cst_14 {dimension_numbers = #tpu.dot_dimension_numbers<[1], [0], [0], [1], [0, 0, 1, 1], [], []>} : vector<64x32xf32>, vector<32x32xf32>, vector<64x32xf32> -> vector<64x32xf32>
    %c1 = arith.constant 1 : index
    %c0_15 = arith.constant 0 : index
    %c0_16 = arith.constant 0 : index
    %15 = vector.load %arg4[%c1, %c0_15, %c0_16] : memref<9x64x64xf32, #tpu.memory_space<vmem>>, vector<1x64x64xf32>
    %16 = vector.shape_cast %15 : vector<1x64x64xf32> to vector<64x64xf32>
    %cst_17 = arith.constant dense<0.000000e+00> : vector<64x32xf32>
    %17 = tpu.matmul %16, %8, %cst_17 {dimension_numbers = #tpu.dot_dimension_numbers<[1], [0], [0], [1], [0, 0, 1, 1], [], []>} : vector<64x64xf32>, vector<64x32xf32>, vector<64x32xf32> -> vector<64x32xf32>
    %c1_18 = arith.constant 1 : index
    %c0_19 = arith.constant 0 : index
    %c0_20 = arith.constant 0 : index
    %18 = vector.load %arg5[%c1_18, %c0_19, %c0_20] : memref<9x32x32xf32, #tpu.memory_space<vmem>>, vector<1x32x32xf32>
    %19 = vector.shape_cast %18 : vector<1x32x32xf32> to vector<32x32xf32>
    %cst_21 = arith.constant dense<0.000000e+00> : vector<64x32xf32>
    %20 = tpu.matmul %17, %19, %cst_21 {dimension_numbers = #tpu.dot_dimension_numbers<[1], [0], [0], [1], [0, 0, 1, 1], [], []>} : vector<64x32xf32>, vector<32x32xf32>, vector<64x32xf32> -> vector<64x32xf32>
    %21 = arith.addf %14, %20 : vector<64x32xf32>
    %c2 = arith.constant 2 : index
    %c0_22 = arith.constant 0 : index
    %c0_23 = arith.constant 0 : index
    %22 = vector.load %arg4[%c2, %c0_22, %c0_23] : memref<9x64x64xf32, #tpu.memory_space<vmem>>, vector<1x64x64xf32>
    %23 = vector.shape_cast %22 : vector<1x64x64xf32> to vector<64x64xf32>
    %cst_24 = arith.constant dense<0.000000e+00> : vector<64x32xf32>
    %24 = tpu.matmul %23, %8, %cst_24 {dimension_numbers = #tpu.dot_dimension_numbers<[1], [0], [0], [1], [0, 0, 1, 1], [], []>} : vector<64x64xf32>, vector<64x32xf32>, vector<64x32xf32> -> vector<64x32xf32>
    %c2_25 = arith.constant 2 : index
    %c0_26 = arith.constant 0 : index
    %c0_27 = arith.constant 0 : index
    %25 = vector.load %arg5[%c2_25, %c0_26, %c0_27] : memref<9x32x32xf32, #tpu.memory_space<vmem>>, vector<1x32x32xf32>
    %26 = vector.shape_cast %25 : vector<1x32x32xf32> to vector<32x32xf32>
    %cst_28 = arith.constant dense<0.000000e+00> : vector<64x32xf32>
    %27 = tpu.matmul %24, %26, %cst_28 {dimension_numbers = #tpu.dot_dimension_numbers<[1], [0], [0], [1], [0, 0, 1, 1], [], []>} : vector<64x32xf32>, vector<32x32xf32>, vector<64x32xf32> -> vector<64x32xf32>
    %28 = arith.addf %21, %27 : vector<64x32xf32>
    %c3 = arith.constant 3 : index
    %c0_29 = arith.constant 0 : index
    %c0_30 = arith.constant 0 : index
    %29 = vector.load %arg4[%c3, %c0_29, %c0_30] : memref<9x64x64xf32, #tpu.memory_space<vmem>>, vector<1x64x64xf32>
    %30 = vector.shape_cast %29 : vector<1x64x64xf32> to vector<64x64xf32>
    %cst_31 = arith.constant dense<0.000000e+00> : vector<64x32xf32>
    %31 = tpu.matmul %30, %8, %cst_31 {dimension_numbers = #tpu.dot_dimension_numbers<[1], [0], [0], [1], [0, 0, 1, 1], [], []>} : vector<64x64xf32>, vector<64x32xf32>, vector<64x32xf32> -> vector<64x32xf32>
    %c3_32 = arith.constant 3 : index
    %c0_33 = arith.constant 0 : index
    %c0_34 = arith.constant 0 : index
    %32 = vector.load %arg5[%c3_32, %c0_33, %c0_34] : memref<9x32x32xf32, #tpu.memory_space<vmem>>, vector<1x32x32xf32>
    %33 = vector.shape_cast %32 : vector<1x32x32xf32> to vector<32x32xf32>
    %cst_35 = arith.constant dense<0.000000e+00> : vector<64x32xf32>
    %34 = tpu.matmul %31, %33, %cst_35 {dimension_numbers = #tpu.dot_dimension_numbers<[1], [0], [0], [1], [0, 0, 1, 1], [], []>} : vector<64x32xf32>, vector<32x32xf32>, vector<64x32xf32> -> vector<64x32xf32>
    %35 = arith.addf %28, %34 : vector<64x32xf32>
    %c4 = arith.constant 4 : index
    %c0_36 = arith.constant 0 : index
    %c0_37 = arith.constant 0 : index
    %36 = vector.load %arg4[%c4, %c0_36, %c0_37] : memref<9x64x64xf32, #tpu.memory_space<vmem>>, vector<1x64x64xf32>
    %37 = vector.shape_cast %36 : vector<1x64x64xf32> to vector<64x64xf32>
    %cst_38 = arith.constant dense<0.000000e+00> : vector<64x32xf32>
    %38 = tpu.matmul %37, %8, %cst_38 {dimension_numbers = #tpu.dot_dimension_numbers<[1], [0], [0], [1], [0, 0, 1, 1], [], []>} : vector<64x64xf32>, vector<64x32xf32>, vector<64x32xf32> -> vector<64x32xf32>
    %c4_39 = arith.constant 4 : index
    %c0_40 = arith.constant 0 : index
    %c0_41 = arith.constant 0 : index
    %39 = vector.load %arg5[%c4_39, %c0_40, %c0_41] : memref<9x32x32xf32, #tpu.memory_space<vmem>>, vector<1x32x32xf32>
    %40 = vector.shape_cast %39 : vector<1x32x32xf32> to vector<32x32xf32>
    %cst_42 = arith.constant dense<0.000000e+00> : vector<64x32xf32>
    %41 = tpu.matmul %38, %40, %cst_42 {dimension_numbers = #tpu.dot_dimension_numbers<[1], [0], [0], [1], [0, 0, 1, 1], [], []>} : vector<64x32xf32>, vector<32x32xf32>, vector<64x32xf32> -> vector<64x32xf32>
    %42 = arith.addf %35, %41 : vector<64x32xf32>
    %c5 = arith.constant 5 : index
    %c0_43 = arith.constant 0 : index
    %c0_44 = arith.constant 0 : index
    %43 = vector.load %arg4[%c5, %c0_43, %c0_44] : memref<9x64x64xf32, #tpu.memory_space<vmem>>, vector<1x64x64xf32>
    %44 = vector.shape_cast %43 : vector<1x64x64xf32> to vector<64x64xf32>
    %cst_45 = arith.constant dense<0.000000e+00> : vector<64x32xf32>
    %45 = tpu.matmul %44, %8, %cst_45 {dimension_numbers = #tpu.dot_dimension_numbers<[1], [0], [0], [1], [0, 0, 1, 1], [], []>} : vector<64x64xf32>, vector<64x32xf32>, vector<64x32xf32> -> vector<64x32xf32>
    %c5_46 = arith.constant 5 : index
    %c0_47 = arith.constant 0 : index
    %c0_48 = arith.constant 0 : index
    %46 = vector.load %arg5[%c5_46, %c0_47, %c0_48] : memref<9x32x32xf32, #tpu.memory_space<vmem>>, vector<1x32x32xf32>
    %47 = vector.shape_cast %46 : vector<1x32x32xf32> to vector<32x32xf32>
    %cst_49 = arith.constant dense<0.000000e+00> : vector<64x32xf32>
    %48 = tpu.matmul %45, %47, %cst_49 {dimension_numbers = #tpu.dot_dimension_numbers<[1], [0], [0], [1], [0, 0, 1, 1], [], []>} : vector<64x32xf32>, vector<32x32xf32>, vector<64x32xf32> -> vector<64x32xf32>
    %49 = arith.addf %42, %48 : vector<64x32xf32>
    %c6 = arith.constant 6 : index
    %c0_50 = arith.constant 0 : index
    %c0_51 = arith.constant 0 : index
    %50 = vector.load %arg4[%c6, %c0_50, %c0_51] : memref<9x64x64xf32, #tpu.memory_space<vmem>>, vector<1x64x64xf32>
    %51 = vector.shape_cast %50 : vector<1x64x64xf32> to vector<64x64xf32>
    %cst_52 = arith.constant dense<0.000000e+00> : vector<64x32xf32>
    %52 = tpu.matmul %51, %8, %cst_52 {dimension_numbers = #tpu.dot_dimension_numbers<[1], [0], [0], [1], [0, 0, 1, 1], [], []>} : vector<64x64xf32>, vector<64x32xf32>, vector<64x32xf32> -> vector<64x32xf32>
    %c6_53 = arith.constant 6 : index
    %c0_54 = arith.constant 0 : index
    %c0_55 = arith.constant 0 : index
    %53 = vector.load %arg5[%c6_53, %c0_54, %c0_55] : memref<9x32x32xf32, #tpu.memory_space<vmem>>, vector<1x32x32xf32>
    %54 = vector.shape_cast %53 : vector<1x32x32xf32> to vector<32x32xf32>
    %cst_56 = arith.constant dense<0.000000e+00> : vector<64x32xf32>
    %55 = tpu.matmul %52, %54, %cst_56 {dimension_numbers = #tpu.dot_dimension_numbers<[1], [0], [0], [1], [0, 0, 1, 1], [], []>} : vector<64x32xf32>, vector<32x32xf32>, vector<64x32xf32> -> vector<64x32xf32>
    %56 = arith.addf %49, %55 : vector<64x32xf32>
    %c7 = arith.constant 7 : index
    %c0_57 = arith.constant 0 : index
    %c0_58 = arith.constant 0 : index
    %57 = vector.load %arg4[%c7, %c0_57, %c0_58] : memref<9x64x64xf32, #tpu.memory_space<vmem>>, vector<1x64x64xf32>
    %58 = vector.shape_cast %57 : vector<1x64x64xf32> to vector<64x64xf32>
    %cst_59 = arith.constant dense<0.000000e+00> : vector<64x32xf32>
    %59 = tpu.matmul %58, %8, %cst_59 {dimension_numbers = #tpu.dot_dimension_numbers<[1], [0], [0], [1], [0, 0, 1, 1], [], []>} : vector<64x64xf32>, vector<64x32xf32>, vector<64x32xf32> -> vector<64x32xf32>
    %c7_60 = arith.constant 7 : index
    %c0_61 = arith.constant 0 : index
    %c0_62 = arith.constant 0 : index
    %60 = vector.load %arg5[%c7_60, %c0_61, %c0_62] : memref<9x32x32xf32, #tpu.memory_space<vmem>>, vector<1x32x32xf32>
    %61 = vector.shape_cast %60 : vector<1x32x32xf32> to vector<32x32xf32>
    %cst_63 = arith.constant dense<0.000000e+00> : vector<64x32xf32>
    %62 = tpu.matmul %59, %61, %cst_63 {dimension_numbers = #tpu.dot_dimension_numbers<[1], [0], [0], [1], [0, 0, 1, 1], [], []>} : vector<64x32xf32>, vector<32x32xf32>, vector<64x32xf32> -> vector<64x32xf32>
    %63 = arith.addf %56, %62 : vector<64x32xf32>
    %c8 = arith.constant 8 : index
    %c0_64 = arith.constant 0 : index
    %c0_65 = arith.constant 0 : index
    %64 = vector.load %arg4[%c8, %c0_64, %c0_65] : memref<9x64x64xf32, #tpu.memory_space<vmem>>, vector<1x64x64xf32>
    %65 = vector.shape_cast %64 : vector<1x64x64xf32> to vector<64x64xf32>
    %cst_66 = arith.constant dense<0.000000e+00> : vector<64x32xf32>
    %66 = tpu.matmul %65, %8, %cst_66 {dimension_numbers = #tpu.dot_dimension_numbers<[1], [0], [0], [1], [0, 0, 1, 1], [], []>} : vector<64x64xf32>, vector<64x32xf32>, vector<64x32xf32> -> vector<64x32xf32>
    %c8_67 = arith.constant 8 : index
    %c0_68 = arith.constant 0 : index
    %c0_69 = arith.constant 0 : index
    %67 = vector.load %arg5[%c8_67, %c0_68, %c0_69] : memref<9x32x32xf32, #tpu.memory_space<vmem>>, vector<1x32x32xf32>
    %68 = vector.shape_cast %67 : vector<1x32x32xf32> to vector<32x32xf32>
    %cst_70 = arith.constant dense<0.000000e+00> : vector<64x32xf32>
    %69 = tpu.matmul %66, %68, %cst_70 {dimension_numbers = #tpu.dot_dimension_numbers<[1], [0], [0], [1], [0, 0, 1, 1], [], []>} : vector<64x32xf32>, vector<32x32xf32>, vector<64x32xf32> -> vector<64x32xf32>
    %70 = arith.addf %63, %69 : vector<64x32xf32>
    %c0_71 = arith.constant 0 : index
    %c0_72 = arith.constant 0 : index
    %71 = vector.load %arg6[%c0_71, %c0_72] : memref<1x32xf32, #tpu.memory_space<vmem>>, vector<1x32xf32>
    %72 = vector.broadcast %71 : vector<1x32xf32> to vector<64x32xf32>
    %73 = arith.addf %70, %72 : vector<64x32xf32>
    %cst_73 = arith.constant 0.000000e+00 : f32
    %74 = vector.broadcast %cst_73 : f32 to vector<64x32xf32>
    %75 = arith.maximumf %73, %74 : vector<64x32xf32>
    %c0_74 = arith.constant 0 : index
    %c0_75 = arith.constant 0 : index
    %76 = vector.load %arg7[%c0_74, %c0_75] : memref<8x64xf32, #tpu.memory_space<vmem>>, vector<8x64xf32>
    %cst_76 = arith.constant dense<0.000000e+00> : vector<8x32xf32>
    %77 = tpu.matmul %76, %75, %cst_76 {dimension_numbers = #tpu.dot_dimension_numbers<[1], [0], [0], [1], [0, 0, 1, 1], [], []>} : vector<8x64xf32>, vector<64x32xf32>, vector<8x32xf32> -> vector<8x32xf32>
    %c0_77 = arith.constant 0 : index
    %c0_78 = arith.constant 0 : index
    %78 = vector.load %arg8[%c0_77, %c0_78] : memref<32x32xf32, #tpu.memory_space<vmem>>, vector<32x32xf32>
    %cst_79 = arith.constant dense<0.000000e+00> : vector<8x32xf32>
    %79 = tpu.matmul %77, %78, %cst_79 {dimension_numbers = #tpu.dot_dimension_numbers<[1], [0], [0], [1], [0, 0, 1, 1], [], []>} : vector<8x32xf32>, vector<32x32xf32>, vector<8x32xf32> -> vector<8x32xf32>
    %c0_80 = arith.constant 0 : index
    %c0_81 = arith.constant 0 : index
    %80 = vector.load %arg9[%c0_80, %c0_81] : memref<1x32xf32, #tpu.memory_space<vmem>>, vector<1x32xf32>
    %81 = vector.broadcast %80 : vector<1x32xf32> to vector<8x32xf32>
    %82 = arith.addf %79, %81 : vector<8x32xf32>
    %cst_82 = arith.constant 0.000000e+00 : f32
    %83 = vector.broadcast %cst_82 : f32 to vector<8x32xf32>
    %84 = arith.maximumf %82, %83 : vector<8x32xf32>
    %c0_83 = arith.constant 0 : index
    %c0_84 = arith.constant 0 : index
    %c0_85 = arith.constant 0 : index
    %85 = vector.load %arg10[%c0_83, %c0_84, %c0_85] : memref<9x8x8xf32, #tpu.memory_space<vmem>>, vector<1x8x8xf32>
    %86 = vector.shape_cast %85 : vector<1x8x8xf32> to vector<8x8xf32>
    %cst_86 = arith.constant dense<0.000000e+00> : vector<8x32xf32>
    %87 = tpu.matmul %86, %84, %cst_86 {dimension_numbers = #tpu.dot_dimension_numbers<[1], [0], [0], [1], [0, 0, 1, 1], [], []>} : vector<8x8xf32>, vector<8x32xf32>, vector<8x32xf32> -> vector<8x32xf32>
    %c0_87 = arith.constant 0 : index
    %c0_88 = arith.constant 0 : index
    %c0_89 = arith.constant 0 : index
    %88 = vector.load %arg11[%c0_87, %c0_88, %c0_89] : memref<9x32x32xf32, #tpu.memory_space<vmem>>, vector<1x32x32xf32>
    %89 = vector.shape_cast %88 : vector<1x32x32xf32> to vector<32x32xf32>
    %cst_90 = arith.constant dense<0.000000e+00> : vector<8x32xf32>
    %90 = tpu.matmul %87, %89, %cst_90 {dimension_numbers = #tpu.dot_dimension_numbers<[1], [0], [0], [1], [0, 0, 1, 1], [], []>} : vector<8x32xf32>, vector<32x32xf32>, vector<8x32xf32> -> vector<8x32xf32>
    %c1_91 = arith.constant 1 : index
    %c0_92 = arith.constant 0 : index
    %c0_93 = arith.constant 0 : index
    %91 = vector.load %arg10[%c1_91, %c0_92, %c0_93] : memref<9x8x8xf32, #tpu.memory_space<vmem>>, vector<1x8x8xf32>
    %92 = vector.shape_cast %91 : vector<1x8x8xf32> to vector<8x8xf32>
    %cst_94 = arith.constant dense<0.000000e+00> : vector<8x32xf32>
    %93 = tpu.matmul %92, %84, %cst_94 {dimension_numbers = #tpu.dot_dimension_numbers<[1], [0], [0], [1], [0, 0, 1, 1], [], []>} : vector<8x8xf32>, vector<8x32xf32>, vector<8x32xf32> -> vector<8x32xf32>
    %c1_95 = arith.constant 1 : index
    %c0_96 = arith.constant 0 : index
    %c0_97 = arith.constant 0 : index
    %94 = vector.load %arg11[%c1_95, %c0_96, %c0_97] : memref<9x32x32xf32, #tpu.memory_space<vmem>>, vector<1x32x32xf32>
    %95 = vector.shape_cast %94 : vector<1x32x32xf32> to vector<32x32xf32>
    %cst_98 = arith.constant dense<0.000000e+00> : vector<8x32xf32>
    %96 = tpu.matmul %93, %95, %cst_98 {dimension_numbers = #tpu.dot_dimension_numbers<[1], [0], [0], [1], [0, 0, 1, 1], [], []>} : vector<8x32xf32>, vector<32x32xf32>, vector<8x32xf32> -> vector<8x32xf32>
    %97 = arith.addf %90, %96 : vector<8x32xf32>
    %c2_99 = arith.constant 2 : index
    %c0_100 = arith.constant 0 : index
    %c0_101 = arith.constant 0 : index
    %98 = vector.load %arg10[%c2_99, %c0_100, %c0_101] : memref<9x8x8xf32, #tpu.memory_space<vmem>>, vector<1x8x8xf32>
    %99 = vector.shape_cast %98 : vector<1x8x8xf32> to vector<8x8xf32>
    %cst_102 = arith.constant dense<0.000000e+00> : vector<8x32xf32>
    %100 = tpu.matmul %99, %84, %cst_102 {dimension_numbers = #tpu.dot_dimension_numbers<[1], [0], [0], [1], [0, 0, 1, 1], [], []>} : vector<8x8xf32>, vector<8x32xf32>, vector<8x32xf32> -> vector<8x32xf32>
    %c2_103 = arith.constant 2 : index
    %c0_104 = arith.constant 0 : index
    %c0_105 = arith.constant 0 : index
    %101 = vector.load %arg11[%c2_103, %c0_104, %c0_105] : memref<9x32x32xf32, #tpu.memory_space<vmem>>, vector<1x32x32xf32>
    %102 = vector.shape_cast %101 : vector<1x32x32xf32> to vector<32x32xf32>
    %cst_106 = arith.constant dense<0.000000e+00> : vector<8x32xf32>
    %103 = tpu.matmul %100, %102, %cst_106 {dimension_numbers = #tpu.dot_dimension_numbers<[1], [0], [0], [1], [0, 0, 1, 1], [], []>} : vector<8x32xf32>, vector<32x32xf32>, vector<8x32xf32> -> vector<8x32xf32>
    %104 = arith.addf %97, %103 : vector<8x32xf32>
    %c3_107 = arith.constant 3 : index
    %c0_108 = arith.constant 0 : index
    %c0_109 = arith.constant 0 : index
    %105 = vector.load %arg10[%c3_107, %c0_108, %c0_109] : memref<9x8x8xf32, #tpu.memory_space<vmem>>, vector<1x8x8xf32>
    %106 = vector.shape_cast %105 : vector<1x8x8xf32> to vector<8x8xf32>
    %cst_110 = arith.constant dense<0.000000e+00> : vector<8x32xf32>
    %107 = tpu.matmul %106, %84, %cst_110 {dimension_numbers = #tpu.dot_dimension_numbers<[1], [0], [0], [1], [0, 0, 1, 1], [], []>} : vector<8x8xf32>, vector<8x32xf32>, vector<8x32xf32> -> vector<8x32xf32>
    %c3_111 = arith.constant 3 : index
    %c0_112 = arith.constant 0 : index
    %c0_113 = arith.constant 0 : index
    %108 = vector.load %arg11[%c3_111, %c0_112, %c0_113] : memref<9x32x32xf32, #tpu.memory_space<vmem>>, vector<1x32x32xf32>
    %109 = vector.shape_cast %108 : vector<1x32x32xf32> to vector<32x32xf32>
    %cst_114 = arith.constant dense<0.000000e+00> : vector<8x32xf32>
    %110 = tpu.matmul %107, %109, %cst_114 {dimension_numbers = #tpu.dot_dimension_numbers<[1], [0], [0], [1], [0, 0, 1, 1], [], []>} : vector<8x32xf32>, vector<32x32xf32>, vector<8x32xf32> -> vector<8x32xf32>
    %111 = arith.addf %104, %110 : vector<8x32xf32>
    %c4_115 = arith.constant 4 : index
    %c0_116 = arith.constant 0 : index
    %c0_117 = arith.constant 0 : index
    %112 = vector.load %arg10[%c4_115, %c0_116, %c0_117] : memref<9x8x8xf32, #tpu.memory_space<vmem>>, vector<1x8x8xf32>
    %113 = vector.shape_cast %112 : vector<1x8x8xf32> to vector<8x8xf32>
    %cst_118 = arith.constant dense<0.000000e+00> : vector<8x32xf32>
    %114 = tpu.matmul %113, %84, %cst_118 {dimension_numbers = #tpu.dot_dimension_numbers<[1], [0], [0], [1], [0, 0, 1, 1], [], []>} : vector<8x8xf32>, vector<8x32xf32>, vector<8x32xf32> -> vector<8x32xf32>
    %c4_119 = arith.constant 4 : index
    %c0_120 = arith.constant 0 : index
    %c0_121 = arith.constant 0 : index
    %115 = vector.load %arg11[%c4_119, %c0_120, %c0_121] : memref<9x32x32xf32, #tpu.memory_space<vmem>>, vector<1x32x32xf32>
    %116 = vector.shape_cast %115 : vector<1x32x32xf32> to vector<32x32xf32>
    %cst_122 = arith.constant dense<0.000000e+00> : vector<8x32xf32>
    %117 = tpu.matmul %114, %116, %cst_122 {dimension_numbers = #tpu.dot_dimension_numbers<[1], [0], [0], [1], [0, 0, 1, 1], [], []>} : vector<8x32xf32>, vector<32x32xf32>, vector<8x32xf32> -> vector<8x32xf32>
    %118 = arith.addf %111, %117 : vector<8x32xf32>
    %c5_123 = arith.constant 5 : index
    %c0_124 = arith.constant 0 : index
    %c0_125 = arith.constant 0 : index
    %119 = vector.load %arg10[%c5_123, %c0_124, %c0_125] : memref<9x8x8xf32, #tpu.memory_space<vmem>>, vector<1x8x8xf32>
    %120 = vector.shape_cast %119 : vector<1x8x8xf32> to vector<8x8xf32>
    %cst_126 = arith.constant dense<0.000000e+00> : vector<8x32xf32>
    %121 = tpu.matmul %120, %84, %cst_126 {dimension_numbers = #tpu.dot_dimension_numbers<[1], [0], [0], [1], [0, 0, 1, 1], [], []>} : vector<8x8xf32>, vector<8x32xf32>, vector<8x32xf32> -> vector<8x32xf32>
    %c5_127 = arith.constant 5 : index
    %c0_128 = arith.constant 0 : index
    %c0_129 = arith.constant 0 : index
    %122 = vector.load %arg11[%c5_127, %c0_128, %c0_129] : memref<9x32x32xf32, #tpu.memory_space<vmem>>, vector<1x32x32xf32>
    %123 = vector.shape_cast %122 : vector<1x32x32xf32> to vector<32x32xf32>
    %cst_130 = arith.constant dense<0.000000e+00> : vector<8x32xf32>
    %124 = tpu.matmul %121, %123, %cst_130 {dimension_numbers = #tpu.dot_dimension_numbers<[1], [0], [0], [1], [0, 0, 1, 1], [], []>} : vector<8x32xf32>, vector<32x32xf32>, vector<8x32xf32> -> vector<8x32xf32>
    %125 = arith.addf %118, %124 : vector<8x32xf32>
    %c6_131 = arith.constant 6 : index
    %c0_132 = arith.constant 0 : index
    %c0_133 = arith.constant 0 : index
    %126 = vector.load %arg10[%c6_131, %c0_132, %c0_133] : memref<9x8x8xf32, #tpu.memory_space<vmem>>, vector<1x8x8xf32>
    %127 = vector.shape_cast %126 : vector<1x8x8xf32> to vector<8x8xf32>
    %cst_134 = arith.constant dense<0.000000e+00> : vector<8x32xf32>
    %128 = tpu.matmul %127, %84, %cst_134 {dimension_numbers = #tpu.dot_dimension_numbers<[1], [0], [0], [1], [0, 0, 1, 1], [], []>} : vector<8x8xf32>, vector<8x32xf32>, vector<8x32xf32> -> vector<8x32xf32>
    %c6_135 = arith.constant 6 : index
    %c0_136 = arith.constant 0 : index
    %c0_137 = arith.constant 0 : index
    %129 = vector.load %arg11[%c6_135, %c0_136, %c0_137] : memref<9x32x32xf32, #tpu.memory_space<vmem>>, vector<1x32x32xf32>
    %130 = vector.shape_cast %129 : vector<1x32x32xf32> to vector<32x32xf32>
    %cst_138 = arith.constant dense<0.000000e+00> : vector<8x32xf32>
    %131 = tpu.matmul %128, %130, %cst_138 {dimension_numbers = #tpu.dot_dimension_numbers<[1], [0], [0], [1], [0, 0, 1, 1], [], []>} : vector<8x32xf32>, vector<32x32xf32>, vector<8x32xf32> -> vector<8x32xf32>
    %132 = arith.addf %125, %131 : vector<8x32xf32>
    %c7_139 = arith.constant 7 : index
    %c0_140 = arith.constant 0 : index
    %c0_141 = arith.constant 0 : index
    %133 = vector.load %arg10[%c7_139, %c0_140, %c0_141] : memref<9x8x8xf32, #tpu.memory_space<vmem>>, vector<1x8x8xf32>
    %134 = vector.shape_cast %133 : vector<1x8x8xf32> to vector<8x8xf32>
    %cst_142 = arith.constant dense<0.000000e+00> : vector<8x32xf32>
    %135 = tpu.matmul %134, %84, %cst_142 {dimension_numbers = #tpu.dot_dimension_numbers<[1], [0], [0], [1], [0, 0, 1, 1], [], []>} : vector<8x8xf32>, vector<8x32xf32>, vector<8x32xf32> -> vector<8x32xf32>
    %c7_143 = arith.constant 7 : index
    %c0_144 = arith.constant 0 : index
    %c0_145 = arith.constant 0 : index
    %136 = vector.load %arg11[%c7_143, %c0_144, %c0_145] : memref<9x32x32xf32, #tpu.memory_space<vmem>>, vector<1x32x32xf32>
    %137 = vector.shape_cast %136 : vector<1x32x32xf32> to vector<32x32xf32>
    %cst_146 = arith.constant dense<0.000000e+00> : vector<8x32xf32>
    %138 = tpu.matmul %135, %137, %cst_146 {dimension_numbers = #tpu.dot_dimension_numbers<[1], [0], [0], [1], [0, 0, 1, 1], [], []>} : vector<8x32xf32>, vector<32x32xf32>, vector<8x32xf32> -> vector<8x32xf32>
    %139 = arith.addf %132, %138 : vector<8x32xf32>
    %c8_147 = arith.constant 8 : index
    %c0_148 = arith.constant 0 : index
    %c0_149 = arith.constant 0 : index
    %140 = vector.load %arg10[%c8_147, %c0_148, %c0_149] : memref<9x8x8xf32, #tpu.memory_space<vmem>>, vector<1x8x8xf32>
    %141 = vector.shape_cast %140 : vector<1x8x8xf32> to vector<8x8xf32>
    %cst_150 = arith.constant dense<0.000000e+00> : vector<8x32xf32>
    %142 = tpu.matmul %141, %84, %cst_150 {dimension_numbers = #tpu.dot_dimension_numbers<[1], [0], [0], [1], [0, 0, 1, 1], [], []>} : vector<8x8xf32>, vector<8x32xf32>, vector<8x32xf32> -> vector<8x32xf32>
    %c8_151 = arith.constant 8 : index
    %c0_152 = arith.constant 0 : index
    %c0_153 = arith.constant 0 : index
    %143 = vector.load %arg11[%c8_151, %c0_152, %c0_153] : memref<9x32x32xf32, #tpu.memory_space<vmem>>, vector<1x32x32xf32>
    %144 = vector.shape_cast %143 : vector<1x32x32xf32> to vector<32x32xf32>
    %cst_154 = arith.constant dense<0.000000e+00> : vector<8x32xf32>
    %145 = tpu.matmul %142, %144, %cst_154 {dimension_numbers = #tpu.dot_dimension_numbers<[1], [0], [0], [1], [0, 0, 1, 1], [], []>} : vector<8x32xf32>, vector<32x32xf32>, vector<8x32xf32> -> vector<8x32xf32>
    %146 = arith.addf %139, %145 : vector<8x32xf32>
    %c0_155 = arith.constant 0 : index
    %c0_156 = arith.constant 0 : index
    %147 = vector.load %arg12[%c0_155, %c0_156] : memref<1x32xf32, #tpu.memory_space<vmem>>, vector<1x32xf32>
    %148 = vector.broadcast %147 : vector<1x32xf32> to vector<8x32xf32>
    %149 = arith.addf %146, %148 : vector<8x32xf32>
    %cst_157 = arith.constant 0.000000e+00 : f32
    %150 = vector.broadcast %cst_157 : f32 to vector<8x32xf32>
    %151 = arith.maximumf %149, %150 : vector<8x32xf32>
    %c0_158 = arith.constant 0 : index
    %c0_159 = arith.constant 0 : index
    %152 = vector.load %arg13[%c0_158, %c0_159] : memref<8x8xf32, #tpu.memory_space<vmem>>, vector<8x8xf32>
    %cst_160 = arith.constant dense<0.000000e+00> : vector<8x32xf32>
    %153 = tpu.matmul %152, %151, %cst_160 {dimension_numbers = #tpu.dot_dimension_numbers<[1], [0], [0], [1], [0, 0, 1, 1], [], []>} : vector<8x8xf32>, vector<8x32xf32>, vector<8x32xf32> -> vector<8x32xf32>
    %c0_161 = arith.constant 0 : index
    %c0_162 = arith.constant 0 : index
    %154 = vector.load %arg14[%c0_161, %c0_162] : memref<32x64xf32, #tpu.memory_space<vmem>>, vector<32x64xf32>
    %cst_163 = arith.constant dense<0.000000e+00> : vector<8x64xf32>
    %155 = tpu.matmul %153, %154, %cst_163 {dimension_numbers = #tpu.dot_dimension_numbers<[1], [0], [0], [1], [0, 0, 1, 1], [], []>} : vector<8x32xf32>, vector<32x64xf32>, vector<8x64xf32> -> vector<8x64xf32>
    %c0_164 = arith.constant 0 : index
    %c0_165 = arith.constant 0 : index
    %156 = vector.load %arg15[%c0_164, %c0_165] : memref<1x64xf32, #tpu.memory_space<vmem>>, vector<1x64xf32>
    %157 = vector.broadcast %156 : vector<1x64xf32> to vector<8x64xf32>
    %158 = arith.addf %155, %157 : vector<8x64xf32>
    %cst_166 = arith.constant 0.000000e+00 : f32
    %159 = vector.broadcast %cst_166 : f32 to vector<8x64xf32>
    %160 = arith.maximumf %158, %159 : vector<8x64xf32>
    %c0_167 = arith.constant 0 : index
    %c0_168 = arith.constant 0 : index
    %c0_169 = arith.constant 0 : index
    %161 = vector.load %arg16[%c0_167, %c0_168, %c0_169] : memref<9x8x8xf32, #tpu.memory_space<vmem>>, vector<1x8x8xf32>
    %162 = vector.shape_cast %161 : vector<1x8x8xf32> to vector<8x8xf32>
    %cst_170 = arith.constant dense<0.000000e+00> : vector<8x64xf32>
    %163 = tpu.matmul %162, %160, %cst_170 {dimension_numbers = #tpu.dot_dimension_numbers<[1], [0], [0], [1], [0, 0, 1, 1], [], []>} : vector<8x8xf32>, vector<8x64xf32>, vector<8x64xf32> -> vector<8x64xf32>
    %c0_171 = arith.constant 0 : index
    %c0_172 = arith.constant 0 : index
    %c0_173 = arith.constant 0 : index
    %164 = vector.load %arg17[%c0_171, %c0_172, %c0_173] : memref<9x64x64xf32, #tpu.memory_space<vmem>>, vector<1x64x64xf32>
    %165 = vector.shape_cast %164 : vector<1x64x64xf32> to vector<64x64xf32>
    %cst_174 = arith.constant dense<0.000000e+00> : vector<8x64xf32>
    %166 = tpu.matmul %163, %165, %cst_174 {dimension_numbers = #tpu.dot_dimension_numbers<[1], [0], [0], [1], [0, 0, 1, 1], [], []>} : vector<8x64xf32>, vector<64x64xf32>, vector<8x64xf32> -> vector<8x64xf32>
    %c1_175 = arith.constant 1 : index
    %c0_176 = arith.constant 0 : index
    %c0_177 = arith.constant 0 : index
    %167 = vector.load %arg16[%c1_175, %c0_176, %c0_177] : memref<9x8x8xf32, #tpu.memory_space<vmem>>, vector<1x8x8xf32>
    %168 = vector.shape_cast %167 : vector<1x8x8xf32> to vector<8x8xf32>
    %cst_178 = arith.constant dense<0.000000e+00> : vector<8x64xf32>
    %169 = tpu.matmul %168, %160, %cst_178 {dimension_numbers = #tpu.dot_dimension_numbers<[1], [0], [0], [1], [0, 0, 1, 1], [], []>} : vector<8x8xf32>, vector<8x64xf32>, vector<8x64xf32> -> vector<8x64xf32>
    %c1_179 = arith.constant 1 : index
    %c0_180 = arith.constant 0 : index
    %c0_181 = arith.constant 0 : index
    %170 = vector.load %arg17[%c1_179, %c0_180, %c0_181] : memref<9x64x64xf32, #tpu.memory_space<vmem>>, vector<1x64x64xf32>
    %171 = vector.shape_cast %170 : vector<1x64x64xf32> to vector<64x64xf32>
    %cst_182 = arith.constant dense<0.000000e+00> : vector<8x64xf32>
    %172 = tpu.matmul %169, %171, %cst_182 {dimension_numbers = #tpu.dot_dimension_numbers<[1], [0], [0], [1], [0, 0, 1, 1], [], []>} : vector<8x64xf32>, vector<64x64xf32>, vector<8x64xf32> -> vector<8x64xf32>
    %173 = arith.addf %166, %172 : vector<8x64xf32>
    %c2_183 = arith.constant 2 : index
    %c0_184 = arith.constant 0 : index
    %c0_185 = arith.constant 0 : index
    %174 = vector.load %arg16[%c2_183, %c0_184, %c0_185] : memref<9x8x8xf32, #tpu.memory_space<vmem>>, vector<1x8x8xf32>
    %175 = vector.shape_cast %174 : vector<1x8x8xf32> to vector<8x8xf32>
    %cst_186 = arith.constant dense<0.000000e+00> : vector<8x64xf32>
    %176 = tpu.matmul %175, %160, %cst_186 {dimension_numbers = #tpu.dot_dimension_numbers<[1], [0], [0], [1], [0, 0, 1, 1], [], []>} : vector<8x8xf32>, vector<8x64xf32>, vector<8x64xf32> -> vector<8x64xf32>
    %c2_187 = arith.constant 2 : index
    %c0_188 = arith.constant 0 : index
    %c0_189 = arith.constant 0 : index
    %177 = vector.load %arg17[%c2_187, %c0_188, %c0_189] : memref<9x64x64xf32, #tpu.memory_space<vmem>>, vector<1x64x64xf32>
    %178 = vector.shape_cast %177 : vector<1x64x64xf32> to vector<64x64xf32>
    %cst_190 = arith.constant dense<0.000000e+00> : vector<8x64xf32>
    %179 = tpu.matmul %176, %178, %cst_190 {dimension_numbers = #tpu.dot_dimension_numbers<[1], [0], [0], [1], [0, 0, 1, 1], [], []>} : vector<8x64xf32>, vector<64x64xf32>, vector<8x64xf32> -> vector<8x64xf32>
    %180 = arith.addf %173, %179 : vector<8x64xf32>
    %c3_191 = arith.constant 3 : index
    %c0_192 = arith.constant 0 : index
    %c0_193 = arith.constant 0 : index
    %181 = vector.load %arg16[%c3_191, %c0_192, %c0_193] : memref<9x8x8xf32, #tpu.memory_space<vmem>>, vector<1x8x8xf32>
    %182 = vector.shape_cast %181 : vector<1x8x8xf32> to vector<8x8xf32>
    %cst_194 = arith.constant dense<0.000000e+00> : vector<8x64xf32>
    %183 = tpu.matmul %182, %160, %cst_194 {dimension_numbers = #tpu.dot_dimension_numbers<[1], [0], [0], [1], [0, 0, 1, 1], [], []>} : vector<8x8xf32>, vector<8x64xf32>, vector<8x64xf32> -> vector<8x64xf32>
    %c3_195 = arith.constant 3 : index
    %c0_196 = arith.constant 0 : index
    %c0_197 = arith.constant 0 : index
    %184 = vector.load %arg17[%c3_195, %c0_196, %c0_197] : memref<9x64x64xf32, #tpu.memory_space<vmem>>, vector<1x64x64xf32>
    %185 = vector.shape_cast %184 : vector<1x64x64xf32> to vector<64x64xf32>
    %cst_198 = arith.constant dense<0.000000e+00> : vector<8x64xf32>
    %186 = tpu.matmul %183, %185, %cst_198 {dimension_numbers = #tpu.dot_dimension_numbers<[1], [0], [0], [1], [0, 0, 1, 1], [], []>} : vector<8x64xf32>, vector<64x64xf32>, vector<8x64xf32> -> vector<8x64xf32>
    %187 = arith.addf %180, %186 : vector<8x64xf32>
    %c4_199 = arith.constant 4 : index
    %c0_200 = arith.constant 0 : index
    %c0_201 = arith.constant 0 : index
    %188 = vector.load %arg16[%c4_199, %c0_200, %c0_201] : memref<9x8x8xf32, #tpu.memory_space<vmem>>, vector<1x8x8xf32>
    %189 = vector.shape_cast %188 : vector<1x8x8xf32> to vector<8x8xf32>
    %cst_202 = arith.constant dense<0.000000e+00> : vector<8x64xf32>
    %190 = tpu.matmul %189, %160, %cst_202 {dimension_numbers = #tpu.dot_dimension_numbers<[1], [0], [0], [1], [0, 0, 1, 1], [], []>} : vector<8x8xf32>, vector<8x64xf32>, vector<8x64xf32> -> vector<8x64xf32>
    %c4_203 = arith.constant 4 : index
    %c0_204 = arith.constant 0 : index
    %c0_205 = arith.constant 0 : index
    %191 = vector.load %arg17[%c4_203, %c0_204, %c0_205] : memref<9x64x64xf32, #tpu.memory_space<vmem>>, vector<1x64x64xf32>
    %192 = vector.shape_cast %191 : vector<1x64x64xf32> to vector<64x64xf32>
    %cst_206 = arith.constant dense<0.000000e+00> : vector<8x64xf32>
    %193 = tpu.matmul %190, %192, %cst_206 {dimension_numbers = #tpu.dot_dimension_numbers<[1], [0], [0], [1], [0, 0, 1, 1], [], []>} : vector<8x64xf32>, vector<64x64xf32>, vector<8x64xf32> -> vector<8x64xf32>
    %194 = arith.addf %187, %193 : vector<8x64xf32>
    %c5_207 = arith.constant 5 : index
    %c0_208 = arith.constant 0 : index
    %c0_209 = arith.constant 0 : index
    %195 = vector.load %arg16[%c5_207, %c0_208, %c0_209] : memref<9x8x8xf32, #tpu.memory_space<vmem>>, vector<1x8x8xf32>
    %196 = vector.shape_cast %195 : vector<1x8x8xf32> to vector<8x8xf32>
    %cst_210 = arith.constant dense<0.000000e+00> : vector<8x64xf32>
    %197 = tpu.matmul %196, %160, %cst_210 {dimension_numbers = #tpu.dot_dimension_numbers<[1], [0], [0], [1], [0, 0, 1, 1], [], []>} : vector<8x8xf32>, vector<8x64xf32>, vector<8x64xf32> -> vector<8x64xf32>
    %c5_211 = arith.constant 5 : index
    %c0_212 = arith.constant 0 : index
    %c0_213 = arith.constant 0 : index
    %198 = vector.load %arg17[%c5_211, %c0_212, %c0_213] : memref<9x64x64xf32, #tpu.memory_space<vmem>>, vector<1x64x64xf32>
    %199 = vector.shape_cast %198 : vector<1x64x64xf32> to vector<64x64xf32>
    %cst_214 = arith.constant dense<0.000000e+00> : vector<8x64xf32>
    %200 = tpu.matmul %197, %199, %cst_214 {dimension_numbers = #tpu.dot_dimension_numbers<[1], [0], [0], [1], [0, 0, 1, 1], [], []>} : vector<8x64xf32>, vector<64x64xf32>, vector<8x64xf32> -> vector<8x64xf32>
    %201 = arith.addf %194, %200 : vector<8x64xf32>
    %c6_215 = arith.constant 6 : index
    %c0_216 = arith.constant 0 : index
    %c0_217 = arith.constant 0 : index
    %202 = vector.load %arg16[%c6_215, %c0_216, %c0_217] : memref<9x8x8xf32, #tpu.memory_space<vmem>>, vector<1x8x8xf32>
    %203 = vector.shape_cast %202 : vector<1x8x8xf32> to vector<8x8xf32>
    %cst_218 = arith.constant dense<0.000000e+00> : vector<8x64xf32>
    %204 = tpu.matmul %203, %160, %cst_218 {dimension_numbers = #tpu.dot_dimension_numbers<[1], [0], [0], [1], [0, 0, 1, 1], [], []>} : vector<8x8xf32>, vector<8x64xf32>, vector<8x64xf32> -> vector<8x64xf32>
    %c6_219 = arith.constant 6 : index
    %c0_220 = arith.constant 0 : index
    %c0_221 = arith.constant 0 : index
    %205 = vector.load %arg17[%c6_219, %c0_220, %c0_221] : memref<9x64x64xf32, #tpu.memory_space<vmem>>, vector<1x64x64xf32>
    %206 = vector.shape_cast %205 : vector<1x64x64xf32> to vector<64x64xf32>
    %cst_222 = arith.constant dense<0.000000e+00> : vector<8x64xf32>
    %207 = tpu.matmul %204, %206, %cst_222 {dimension_numbers = #tpu.dot_dimension_numbers<[1], [0], [0], [1], [0, 0, 1, 1], [], []>} : vector<8x64xf32>, vector<64x64xf32>, vector<8x64xf32> -> vector<8x64xf32>
    %208 = arith.addf %201, %207 : vector<8x64xf32>
    %c7_223 = arith.constant 7 : index
    %c0_224 = arith.constant 0 : index
    %c0_225 = arith.constant 0 : index
    %209 = vector.load %arg16[%c7_223, %c0_224, %c0_225] : memref<9x8x8xf32, #tpu.memory_space<vmem>>, vector<1x8x8xf32>
    %210 = vector.shape_cast %209 : vector<1x8x8xf32> to vector<8x8xf32>
    %cst_226 = arith.constant dense<0.000000e+00> : vector<8x64xf32>
    %211 = tpu.matmul %210, %160, %cst_226 {dimension_numbers = #tpu.dot_dimension_numbers<[1], [0], [0], [1], [0, 0, 1, 1], [], []>} : vector<8x8xf32>, vector<8x64xf32>, vector<8x64xf32> -> vector<8x64xf32>
    %c7_227 = arith.constant 7 : index
    %c0_228 = arith.constant 0 : index
    %c0_229 = arith.constant 0 : index
    %212 = vector.load %arg17[%c7_227, %c0_228, %c0_229] : memref<9x64x64xf32, #tpu.memory_space<vmem>>, vector<1x64x64xf32>
    %213 = vector.shape_cast %212 : vector<1x64x64xf32> to vector<64x64xf32>
    %cst_230 = arith.constant dense<0.000000e+00> : vector<8x64xf32>
    %214 = tpu.matmul %211, %213, %cst_230 {dimension_numbers = #tpu.dot_dimension_numbers<[1], [0], [0], [1], [0, 0, 1, 1], [], []>} : vector<8x64xf32>, vector<64x64xf32>, vector<8x64xf32> -> vector<8x64xf32>
    %215 = arith.addf %208, %214 : vector<8x64xf32>
    %c8_231 = arith.constant 8 : index
    %c0_232 = arith.constant 0 : index
    %c0_233 = arith.constant 0 : index
    %216 = vector.load %arg16[%c8_231, %c0_232, %c0_233] : memref<9x8x8xf32, #tpu.memory_space<vmem>>, vector<1x8x8xf32>
    %217 = vector.shape_cast %216 : vector<1x8x8xf32> to vector<8x8xf32>
    %cst_234 = arith.constant dense<0.000000e+00> : vector<8x64xf32>
    %218 = tpu.matmul %217, %160, %cst_234 {dimension_numbers = #tpu.dot_dimension_numbers<[1], [0], [0], [1], [0, 0, 1, 1], [], []>} : vector<8x8xf32>, vector<8x64xf32>, vector<8x64xf32> -> vector<8x64xf32>
    %c8_235 = arith.constant 8 : index
    %c0_236 = arith.constant 0 : index
    %c0_237 = arith.constant 0 : index
    %219 = vector.load %arg17[%c8_235, %c0_236, %c0_237] : memref<9x64x64xf32, #tpu.memory_space<vmem>>, vector<1x64x64xf32>
    %220 = vector.shape_cast %219 : vector<1x64x64xf32> to vector<64x64xf32>
    %cst_238 = arith.constant dense<0.000000e+00> : vector<8x64xf32>
    %221 = tpu.matmul %218, %220, %cst_238 {dimension_numbers = #tpu.dot_dimension_numbers<[1], [0], [0], [1], [0, 0, 1, 1], [], []>} : vector<8x64xf32>, vector<64x64xf32>, vector<8x64xf32> -> vector<8x64xf32>
    %222 = arith.addf %215, %221 : vector<8x64xf32>
    %c0_239 = arith.constant 0 : index
    %c0_240 = arith.constant 0 : index
    %223 = vector.load %arg18[%c0_239, %c0_240] : memref<1x64xf32, #tpu.memory_space<vmem>>, vector<1x64xf32>
    %224 = vector.broadcast %223 : vector<1x64xf32> to vector<8x64xf32>
    %225 = arith.addf %222, %224 : vector<8x64xf32>
    %cst_241 = arith.constant 0.000000e+00 : f32
    %226 = vector.broadcast %cst_241 : f32 to vector<8x64xf32>
    %227 = arith.maximumf %225, %226 : vector<8x64xf32>
    %c0_242 = arith.constant 0 : index
    %c0_243 = arith.constant 0 : index
    %228 = vector.load %arg19[%c0_242, %c0_243] : memref<8x8xf32, #tpu.memory_space<vmem>>, vector<8x8xf32>
    %cst_244 = arith.constant dense<0.000000e+00> : vector<8x64xf32>
    %229 = tpu.matmul %228, %227, %cst_244 {dimension_numbers = #tpu.dot_dimension_numbers<[1], [0], [0], [1], [0, 0, 1, 1], [], []>} : vector<8x8xf32>, vector<8x64xf32>, vector<8x64xf32> -> vector<8x64xf32>
    %c0_245 = arith.constant 0 : index
    %c0_246 = arith.constant 0 : index
    %c0_247 = arith.constant 0 : index
    %230 = vector.load %arg20[%c0_245, %c0_246, %c0_247] : memref<1x8x64xf32, #tpu.memory_space<vmem>>, vector<1x8x64xf32>
    %231 = vector.shape_cast %230 : vector<1x8x64xf32> to vector<8x64xf32>
    %232 = vector.shape_cast %229 : vector<8x64xf32> to vector<1x8x64xf32>
    tpu.vector_store %arg20[%c0_245, %c0_246, %c0_247], %232 {strides = array<i32>} : memref<1x8x64xf32, #tpu.memory_space<vmem>>, vector<1x8x64xf32>,
    return
  }
  func.func @transform_0(%arg0: i32) -> (i32, i32, i32) {
    %c0_i32 = arith.constant 0 : i32
    %c0_i32_0 = arith.constant 0 : i32
    %c0_i32_1 = arith.constant 0 : i32
    return %arg0, %c0_i32, %c0_i32_0 : i32, i32, i32
  }
  func.func @transform_1(%arg0: i32) -> (i32, i32) {
    %c0_i32 = arith.constant 0 : i32
    %c0_i32_0 = arith.constant 0 : i32
    %c0_i32_1 = arith.constant 0 : i32
    return %c0_i32, %c0_i32_0 : i32, i32
  }
  func.func @transform_2(%arg0: i32) -> (i32, i32) {
    %c0_i32 = arith.constant 0 : i32
    %c0_i32_0 = arith.constant 0 : i32
    %c0_i32_1 = arith.constant 0 : i32
    return %c0_i32, %c0_i32_0 : i32, i32
  }
  func.func @transform_3(%arg0: i32) -> (i32, i32, i32) {
    %c0_i32 = arith.constant 0 : i32
    %c0_i32_0 = arith.constant 0 : i32
    %c0_i32_1 = arith.constant 0 : i32
    %c0_i32_2 = arith.constant 0 : i32
    return %c0_i32, %c0_i32_0, %c0_i32_1 : i32, i32, i32
  }
  func.func @transform_4(%arg0: i32) -> (i32, i32, i32) {
    %c0_i32 = arith.constant 0 : i32
    %c0_i32_0 = arith.constant 0 : i32
    %c0_i32_1 = arith.constant 0 : i32
    %c0_i32_2 = arith.constant 0 : i32
    return %c0_i32, %c0_i32_0, %c0_i32_1 : i32, i32, i32
  }
  func.func @transform_5(%arg0: i32) -> (i32, i32) {
    %c0_i32 = arith.constant 0 : i32
    %c0_i32_0 = arith.constant 0 : i32
    %c0_i32_1 = arith.constant 0 : i32
    return %c0_i32, %c0_i32_0 : i32, i32
  }
  func.func @transform_6(%arg0: i32) -> (i32, i32) {
    %c0_i32 = arith.constant 0 : i32
    %c0_i32_0 = arith.constant 0 : i32
    %c0_i32_1 = arith.constant 0 : i32
    return %c0_i32, %c0_i32_0 : i32, i32
  }
  func.func @transform_7(%arg0: i32) -> (i32, i32) {
    %c0_i32 = arith.constant 0 : i32
    %c0_i32_0 = arith.constant 0 : i32
    %c0_i32_1 = arith.constant 0 : i32
    return %c0_i32, %c0_i32_0 : i32, i32
  }
  func.func @transform_8(%arg0: i32) -> (i32, i32) {
    %c0_i32 = arith.constant 0 : i32
    %c0_i32_0 = arith.constant 0 : i32
    %c0_i32_1 = arith.constant 0 : i32
    return %c0_i32, %c0_i32_0 : i32, i32
  }
  func.func @transform_9(%arg0: i32) -> (i32, i32, i32) {
    %c0_i32 = arith.constant 0 : i32
    %c0_i32_0 = arith.constant 0 : i32
    %c0_i32_1 = arith.constant 0 : i32
    %c0_i32_2 = arith.constant 0 : i32
    return %c0_i32, %c0_i32_0, %c0_i32_1 : i32, i32, i32
  }
  func.func @transform_10(%arg0: i32) -> (i32, i32, i32) {
    %c0_i32 = arith.constant 0 : i32
    %c0_i32_0 = arith.constant 0 : i32
    %c0_i32_1 = arith.constant 0 : i32
    %c0_i32_2 = arith.constant 0 : i32
    return %c0_i32, %c0_i32_0, %c0_i32_1 : i32, i32, i32
  }
  func.func @transform_11(%arg0: i32) -> (i32, i32) {
    %c0_i32 = arith.constant 0 : i32
    %c0_i32_0 = arith.constant 0 : i32
    %c0_i32_1 = arith.constant 0 : i32
    return %c0_i32, %c0_i32_0 : i32, i32
  }
  func.func @transform_12(%arg0: i32) -> (i32, i32) {
    %c0_i32 = arith.constant 0 : i32
    %c0_i32_0 = arith.constant 0 : i32
    %c0_i32_1 = arith.constant 0 : i32
    return %c0_i32, %c0_i32_0 : i32, i32
  }
  func.func @transform_13(%arg0: i32) -> (i32, i32) {
    %c0_i32 = arith.constant 0 : i32
    %c0_i32_0 = arith.constant 0 : i32
    %c0_i32_1 = arith.constant 0 : i32
    return %c0_i32, %c0_i32_0 : i32, i32
  }
  func.func @transform_14(%arg0: i32) -> (i32, i32) {
    %c0_i32 = arith.constant 0 : i32
    %c0_i32_0 = arith.constant 0 : i32
    %c0_i32_1 = arith.constant 0 : i32
    return %c0_i32, %c0_i32_0 : i32, i32
  }
  func.func @transform_15(%arg0: i32) -> (i32, i32, i32) {
    %c0_i32 = arith.constant 0 : i32
    %c0_i32_0 = arith.constant 0 : i32
    %c0_i32_1 = arith.constant 0 : i32
    %c0_i32_2 = arith.constant 0 : i32
    return %c0_i32, %c0_i32_0, %c0_i32_1 : i32, i32, i32
  }
  func.func @transform_16(%arg0: i32) -> (i32, i32, i32) {
    %c0_i32 = arith.constant 0 : i32
    %c0_i32_0 = arith.constant 0 : i32
    %c0_i32_1 = arith.constant 0 : i32
    %c0_i32_2 = arith.constant 0 : i32
    return %c0_i32, %c0_i32_0, %c0_i32_1 : i32, i32, i32
  }
  func.func @transform_17(%arg0: i32) -> (i32, i32) {
    %c0_i32 = arith.constant 0 : i32
    %c0_i32_0 = arith.constant 0 : i32
    %c0_i32_1 = arith.constant 0 : i32
    return %c0_i32, %c0_i32_0 : i32, i32
  }
  func.func @transform_18(%arg0: i32) -> (i32, i32) {
    %c0_i32 = arith.constant 0 : i32
    %c0_i32_0 = arith.constant 0 : i32
    %c0_i32_1 = arith.constant 0 : i32
    return %c0_i32, %c0_i32_0 : i32, i32
  }
  func.func @transform_19(%arg0: i32) -> (i32, i32, i32) {
    %c0_i32 = arith.constant 0 : i32
    %c0_i32_0 = arith.constant 0 : i32
    %c0_i32_1 = arith.constant 0 : i32
    return %arg0, %c0_i32, %c0_i32_0 : i32, i32, i32
  }
}

</mosaic_0001>

<llo_original>
// kernel: dense_block_forward.1
$region0: #{dense_block_forward.1}
  #allocation0 [shape = 'u32[]', space=smem, size = 0x4, offset = 0x4, fixed_abs, tag = 'smem constant byte address 0x4 - core index']
  #allocation1 [shape = 'u32[144,128]{1,0:T(1,128)}', space=vmem, size = 0x12000, scoped, tag = 'internal scratch']
  %s0 = inlined_call_operand.vmem [shape: f32[2,64,4], index: 0, kind: input, shape index: {}]
  %s1 = inlined_call_operand.vmem [shape: f32[4,32], index: 1, kind: input, shape index: {}]
  %s2 = inlined_call_operand.vmem [shape: f32[1,32], index: 2, kind: input, shape index: {}]
  %s3 = inlined_call_operand.vmem [shape: f32[9,64,64], index: 3, kind: input, shape index: {}]
  %s4 = inlined_call_operand.vmem [shape: f32[9,32,32], index: 4, kind: input, shape index: {}]
  %s5 = inlined_call_operand.vmem [shape: f32[1,32], index: 5, kind: input, shape index: {}]
  %s6 = inlined_call_operand.vmem [shape: f32[8,64], index: 6, kind: input, shape index: {}]
  %s7 = inlined_call_operand.vmem [shape: f32[32,32], index: 7, kind: input, shape index: {}]
  %s8 = inlined_call_operand.vmem [shape: f32[1,32], index: 8, kind: input, shape index: {}]
  %s9 = inlined_call_operand.vmem [shape: f32[9,8,8], index: 9, kind: input, shape index: {}, may-alias: {9,15}]
  %s10 = inlined_call_operand.vmem [shape: f32[9,32,32], index: 10, kind: input, shape index: {}]
  %s11 = inlined_call_operand.vmem [shape: f32[1,32], index: 11, kind: input, shape index: {}]
  %s12 = inlined_call_operand.vmem [shape: f32[8,8], index: 12, kind: input, shape index: {}, may-alias: {12,18}]
  %s13 = inlined_call_operand.vmem [shape: f32[32,64], index: 13, kind: input, shape index: {}]
  %s14 = inlined_call_operand.vmem [shape: f32[1,64], index: 14, kind: input, shape index: {}]
  %s15 = inlined_call_operand.vmem [shape: f32[9,8,8], index: 15, kind: input, shape index: {}, may-alias: {9,15}]
  %s16 = inlined_call_operand.vmem [shape: f32[9,64,64], index: 16, kind: input, shape index: {}]
  %s17 = inlined_call_operand.vmem [shape: f32[1,64], index: 17, kind: input, shape index: {}]
  %s18 = inlined_call_operand.vmem [shape: f32[8,8], index: 18, kind: input, shape index: {}, may-alias: {12,18}]
  %s19 = inlined_call_operand.hbm [shape: f32[2,8,64], index: 19, kind: output, shape index: {}]
  %s20 = sld [smem:[#allocation0]]
  $region109: #{dense_block_forward.1} parent=0
    _
  %s22 = ssub.s32 1, %s20
  %s23 = scalar_select 0, %s22, %s20
  $region1: #{dense_block_forward.1} parent=0
    #allocation2 [shape = 'u8[8192]{0}', space=vmem, size = 0x2000, scoped, tag = 'output window, operand 0']
    #allocation3 [shape = 's32[2]{0}', space=sflag, size = 0x8, scoped, tag = 'scoped memory for dense_block_forward.1']
    %24 = vsyncpa [#allocation3], 0
    %s25 = scalar_lea.sflag [#allocation3], 1
    %26 = vsyncpa %s25, 0
    loop: start=0, step=1, limit=4
    $region2: #{dense_block_forward.1} parent=1 // loop_pre_header
      _
    $region3: #{dense_block_forward.1} parent=1 // loop_header
      %s28 = sphi 0, %s32
      %p29 = scmp.ge.s32.totalorder %s28, 4
      %s38 = sphi 0, %s40
      %s41 = sphi 0, %s38
      %s42 = sphi 0, %s41
      %s58 = sphi 0, %s42
      %s62 = sphi 0, %s62
      %s64 = sphi 0, %s62
      %s65 = sphi 0, %s64
      %s79 = sphi 0, %s65
      %s83 = sphi 0, %s83
      %s85 = sphi 0, %s83
      %s86 = sphi 0, %s85
      %s100 = sphi 0, %s86
      %s104 = sphi 0, %s104
      %s106 = sphi 0, %s104
      %s107 = sphi 0, %s106
      %s121 = sphi 0, %s107
      %s125 = sphi 0, %s125
      %s127 = sphi 0, %s125
      %s128 = sphi 0, %s127
      %s142 = sphi 0, %s128
      %s146 = sphi 0, %s146
      %s148 = sphi 0, %s146
      %s149 = sphi 0, %s148
      %s163 = sphi 0, %s149
      %s167 = sphi 0, %s167
      %s169 = sphi 0, %s167
      %s170 = sphi 0, %s169
      %s184 = sphi 0, %s170
      %s188 = sphi 0, %s188
      %s190 = sphi 0, %s188
      %s191 = sphi 0, %s190
      %s205 = sphi 0, %s191
      %s209 = sphi 0, %s209
      %s211 = sphi 0, %s209
      %s212 = sphi 0, %s211
      %s226 = sphi 0, %s212
      %s230 = sphi 0, %s230
      %s232 = sphi 0, %s230
      %s233 = sphi 0, %s232
      %s247 = sphi 0, %s233
      %s251 = sphi 0, %s251
      %s253 = sphi 0, %s251
      %s254 = sphi 0, %s253
      %s268 = sphi 0, %s254
      %s272 = sphi 0, %s272
      %s274 = sphi 0, %s272
      %s275 = sphi 0, %s274
      %s289 = sphi 0, %s275
      %s293 = sphi 0, %s293
      %s295 = sphi 0, %s293
      %s296 = sphi 0, %s295
      %s310 = sphi 0, %s296
      %s314 = sphi 0, %s314
      %s316 = sphi 0, %s314
      %s317 = sphi 0, %s316
      %s331 = sphi 0, %s317
      %s335 = sphi 0, %s335
      %s337 = sphi 0, %s335
      %s338 = sphi 0, %s337
      %s352 = sphi 0, %s338
      %s356 = sphi 0, %s356
      %s358 = sphi 0, %s356
      %s359 = sphi 0, %s358
      %s373 = sphi 0, %s359
      %s377 = sphi 0, %s377
      %s379 = sphi 0, %s377
      %s380 = sphi 0, %s379
      %s394 = sphi 0, %s380
      %s398 = sphi 0, %s398
      %s400 = sphi 0, %s398
      %s401 = sphi 0, %s400
      %s415 = sphi 0, %s401
      %s419 = sphi 0, %s419
      %s421 = sphi 0, %s419
      %s422 = sphi 0, %s421
      %s436 = sphi 0, %s422
      %s442 = sphi 0, %s444
      %s445 = sphi 0, %s442
      %s446 = sphi 0, %s445
      %s462 = sphi 0, %s446
    $region4: #{dense_block_forward.1} parent=1 // loop_header_branch
      %31 = sbr.rel (%p29) target = $region8
    $region5: #{dense_block_forward.1} parent=1 // loop_body
      %s33 = ssub.s32 %s28, 1
      %s34 = ssub.s32 %s28, 2
      %s35 = sadd.s32 %s28, 1
      %s36 = ssub.s32 %s28, %s35
      %p37 = scmp.eq.s32.totalorder %s36, 0
      %s39 = sadd.s32 %s38, 1
      %s40 = scalar_select %p37, %s38, %s39
      %p43 = pneg %p37
      %p44 = scmp.eq.s32.totalorder %s28, 1
      %p45 = por %p43, %p44
      %p46 = scmp.ne.s32.totalorder %s38, %s41
      %p47 = scmp.eq.s32.totalorder %s28, 0
      %p48 = por %p46, %p47
      %p49 = scmp.ne.s32.totalorder %s38, %s41
      %p50 = scmp.eq.s32.totalorder %s33, 1
      %p51 = por %p49, %p50
      %p52 = scmp.ne.s32.totalorder %s41, %s42
      %p53 = scmp.eq.s32.totalorder %s33, 0
      %p54 = por %p52, %p53
      %p55 = scmp.ne.s32.totalorder %s41, %s42
      %p56 = scmp.eq.s32.totalorder %s34, 1
      %p57 = por %p55, %p56
      %p59 = scmp.ne.s32.totalorder %s42, %s58
      %p60 = scmp.eq.s32.totalorder %s34, 0
      %p61 = por %p59, %p60
      %s63 = sadd.s32 %s62, 1
      %p66 = scmp.eq.s32.totalorder %s28, 1
      %p67 = scmp.ne.s32.totalorder %s62, %s64
      %p68 = scmp.eq.s32.totalorder %s28, 0
      %p69 = por %p67, %p68
      %p70 = scmp.ne.s32.totalorder %s62, %s64
      %p71 = scmp.eq.s32.totalorder %s33, 1
      %p72 = por %p70, %p71
      %p73 = scmp.ne.s32.totalorder %s64, %s65
      %p74 = scmp.eq.s32.totalorder %s33, 0
      %p75 = por %p73, %p74
      %p76 = scmp.ne.s32.totalorder %s64, %s65
      %p77 = scmp.eq.s32.totalorder %s34, 1
      %p78 = por %p76, %p77
      %p80 = scmp.ne.s32.totalorder %s65, %s79
      %p81 = scmp.eq.s32.totalorder %s34, 0
      %p82 = por %p80, %p81
      %s84 = sadd.s32 %s83, 1
      %p87 = scmp.eq.s32.totalorder %s28, 1
      %p88 = scmp.ne.s32.totalorder %s83, %s85
      %p89 = scmp.eq.s32.totalorder %s28, 0
      %p90 = por %p88, %p89
      %p91 = scmp.ne.s32.totalorder %s83, %s85
      %p92 = scmp.eq.s32.totalorder %s33, 1
      %p93 = por %p91, %p92
      %p94 = scmp.ne.s32.totalorder %s85, %s86
      %p95 = scmp.eq.s32.totalorder %s33, 0
      %p96 = por %p94, %p95
      %p97 = scmp.ne.s32.totalorder %s85, %s86
      %p98 = scmp.eq.s32.totalorder %s34, 1
      %p99 = por %p97, %p98
      %p101 = scmp.ne.s32.totalorder %s86, %s100
      %p102 = scmp.eq.s32.totalorder %s34, 0
      %p103 = por %p101, %p102
      %s105 = sadd.s32 %s104, 1
      %p108 = scmp.eq.s32.totalorder %s28, 1
      %p109 = scmp.ne.s32.totalorder %s104, %s106
      %p110 = scmp.eq.s32.totalorder %s28, 0
      %p111 = por %p109, %p110
      %p112 = scmp.ne.s32.totalorder %s104, %s106
      %p113 = scmp.eq.s32.totalorder %s33, 1
      %p114 = por %p112, %p113
      %p115 = scmp.ne.s32.totalorder %s106, %s107
      %p116 = scmp.eq.s32.totalorder %s33, 0
      %p117 = por %p115, %p116
      %p118 = scmp.ne.s32.totalorder %s106, %s107
      %p119 = scmp.eq.s32.totalorder %s34, 1
      %p120 = por %p118, %p119
      %p122 = scmp.ne.s32.totalorder %s107, %s121
      %p123 = scmp.eq.s32.totalorder %s34, 0
      %p124 = por %p122, %p123
      %s126 = sadd.s32 %s125, 1
      %p129 = scmp.eq.s32.totalorder %s28, 1
      %p130 = scmp.ne.s32.totalorder %s125, %s127
      %p131 = scmp.eq.s32.totalorder %s28, 0
      %p132 = por %p130, %p131
      %p133 = scmp.ne.s32.totalorder %s125, %s127
      %p134 = scmp.eq.s32.totalorder %s33, 1
      %p135 = por %p133, %p134
      %p136 = scmp.ne.s32.totalorder %s127, %s128
      %p137 = scmp.eq.s32.totalorder %s33, 0
      %p138 = por %p136, %p137
      %p139 = scmp.ne.s32.totalorder %s127, %s128
      %p140 = scmp.eq.s32.totalorder %s34, 1
      %p141 = por %p139, %p140
      %p143 = scmp.ne.s32.totalorder %s128, %s142
      %p144 = scmp.eq.s32.totalorder %s34, 0
      %p145 = por %p143, %p144
      %s147 = sadd.s32 %s146, 1
      %p150 = scmp.eq.s32.totalorder %s28, 1
      %p151 = scmp.ne.s32.totalorder %s146, %s148
      %p152 = scmp.eq.s32.totalorder %s28, 0
      %p153 = por %p151, %p152
      %p154 = scmp.ne.s32.totalorder %s146, %s148
      %p155 = scmp.eq.s32.totalorder %s33, 1
      %p156 = por %p154, %p155
      %p157 = scmp.ne.s32.totalorder %s148, %s149
      %p158 = scmp.eq.s32.totalorder %s33, 0
      %p159 = por %p157, %p158
      %p160 = scmp.ne.s32.totalorder %s148, %s149
      %p161 = scmp.eq.s32.totalorder %s34, 1
      %p162 = por %p160, %p161
      %p164 = scmp.ne.s32.totalorder %s149, %s163
      %p165 = scmp.eq.s32.totalorder %s34, 0
      %p166 = por %p164, %p165
      %s168 = sadd.s32 %s167, 1
      %p171 = scmp.eq.s32.totalorder %s28, 1
      %p172 = scmp.ne.s32.totalorder %s167, %s169
      %p173 = scmp.eq.s32.totalorder %s28, 0
      %p174 = por %p172, %p173
      %p175 = scmp.ne.s32.totalorder %s167, %s169
      %p176 = scmp.eq.s32.totalorder %s33, 1
      %p177 = por %p175, %p176
      %p178 = scmp.ne.s32.totalorder %s169, %s170
      %p179 = scmp.eq.s32.totalorder %s33, 0
      %p180 = por %p178, %p179
      %p181 = scmp.ne.s32.totalorder %s169, %s170
      %p182 = scmp.eq.s32.totalorder %s34, 1
      %p183 = por %p181, %p182
      %p185 = scmp.ne.s32.totalorder %s170, %s184
      %p186 = scmp.eq.s32.totalorder %s34, 0
      %p187 = por %p185, %p186
      %s189 = sadd.s32 %s188, 1
      %p192 = scmp.eq.s32.totalorder %s28, 1
      %p193 = scmp.ne.s32.totalorder %s188, %s190
      %p194 = scmp.eq.s32.totalorder %s28, 0
      %p195 = por %p193, %p194
      %p196 = scmp.ne.s32.totalorder %s188, %s190
      %p197 = scmp.eq.s32.totalorder %s33, 1
      %p198 = por %p196, %p197
      %p199 = scmp.ne.s32.totalorder %s190, %s191
      %p200 = scmp.eq.s32.totalorder %s33, 0
      %p201 = por %p199, %p200
      %p202 = scmp.ne.s32.totalorder %s190, %s191
      %p203 = scmp.eq.s32.totalorder %s34, 1
      %p204 = por %p202, %p203
      %p206 = scmp.ne.s32.totalorder %s191, %s205
      %p207 = scmp.eq.s32.totalorder %s34, 0
      %p208 = por %p206, %p207
      %s210 = sadd.s32 %s209, 1
      %p213 = scmp.eq.s32.totalorder %s28, 1
      %p214 = scmp.ne.s32.totalorder %s209, %s211
      %p215 = scmp.eq.s32.totalorder %s28, 0
      %p216 = por %p214, %p215
      %p217 = scmp.ne.s32.totalorder %s209, %s211
      %p218 = scmp.eq.s32.totalorder %s33, 1
      %p219 = por %p217, %p218
      %p220 = scmp.ne.s32.totalorder %s211, %s212
      %p221 = scmp.eq.s32.totalorder %s33, 0
      %p222 = por %p220, %p221
      %p223 = scmp.ne.s32.totalorder %s211, %s212
      %p224 = scmp.eq.s32.totalorder %s34, 1
      %p225 = por %p223, %p224
      %p227 = scmp.ne.s32.totalorder %s212, %s226
      %p228 = scmp.eq.s32.totalorder %s34, 0
      %p229 = por %p227, %p228
      %s231 = sadd.s32 %s230, 1
      %p234 = scmp.eq.s32.totalorder %s28, 1
      %p235 = scmp.ne.s32.totalorder %s230, %s232
      %p236 = scmp.eq.s32.totalorder %s28, 0
      %p237 = por %p235, %p236
      %p238 = scmp.ne.s32.totalorder %s230, %s232
      %p239 = scmp.eq.s32.totalorder %s33, 1
      %p240 = por %p238, %p239
      %p241 = scmp.ne.s32.totalorder %s232, %s233
      %p242 = scmp.eq.s32.totalorder %s33, 0
      %p243 = por %p241, %p242
      %p244 = scmp.ne.s32.totalorder %s232, %s233
      %p245 = scmp.eq.s32.totalorder %s34, 1
      %p246 = por %p244, %p245
      %p248 = scmp.ne.s32.totalorder %s233, %s247
      %p249 = scmp.eq.s32.totalorder %s34, 0
      %p250 = por %p248, %p249
      %s252 = sadd.s32 %s251, 1
      %p255 = scmp.eq.s32.totalorder %s28, 1
      %p256 = scmp.ne.s32.totalorder %s251, %s253
      %p257 = scmp.eq.s32.totalorder %s28, 0
      %p258 = por %p256, %p257
      %p259 = scmp.ne.s32.totalorder %s251, %s253
      %p260 = scmp.eq.s32.totalorder %s33, 1
      %p261 = por %p259, %p260
      %p262 = scmp.ne.s32.totalorder %s253, %s254
      %p263 = scmp.eq.s32.totalorder %s33, 0
      %p264 = por %p262, %p263
      %p265 = scmp.ne.s32.totalorder %s253, %s254
      %p266 = scmp.eq.s32.totalorder %s34, 1
      %p267 = por %p265, %p266
      %p269 = scmp.ne.s32.totalorder %s254, %s268
      %p270 = scmp.eq.s32.totalorder %s34, 0
      %p271 = por %p269, %p270
      %s273 = sadd.s32 %s272, 1
      %p276 = scmp.eq.s32.totalorder %s28, 1
      %p277 = scmp.ne.s32.totalorder %s272, %s274
      %p278 = scmp.eq.s32.totalorder %s28, 0
      %p279 = por %p277, %p278
      %p280 = scmp.ne.s32.totalorder %s272, %s274
      %p281 = scmp.eq.s32.totalorder %s33, 1
      %p282 = por %p280, %p281
      %p283 = scmp.ne.s32.totalorder %s274, %s275
      %p284 = scmp.eq.s32.totalorder %s33, 0
      %p285 = por %p283, %p284
      %p286 = scmp.ne.s32.totalorder %s274, %s275
      %p287 = scmp.eq.s32.totalorder %s34, 1
      %p288 = por %p286, %p287
      %p290 = scmp.ne.s32.totalorder %s275, %s289
      %p291 = scmp.eq.s32.totalorder %s34, 0
      %p292 = por %p290, %p291
      %s294 = sadd.s32 %s293, 1
      %p297 = scmp.eq.s32.totalorder %s28, 1
      %p298 = scmp.ne.s32.totalorder %s293, %s295
      %p299 = scmp.eq.s32.totalorder %s28, 0
      %p300 = por %p298, %p299
      %p301 = scmp.ne.s32.totalorder %s293, %s295
      %p302 = scmp.eq.s32.totalorder %s33, 1
      %p303 = por %p301, %p302
      %p304 = scmp.ne.s32.totalorder %s295, %s296
      %p305 = scmp.eq.s32.totalorder %s33, 0
      %p306 = por %p304, %p305
      %p307 = scmp.ne.s32.totalorder %s295, %s296
      %p308 = scmp.eq.s32.totalorder %s34, 1
      %p309 = por %p307, %p308
      %p311 = scmp.ne.s32.totalorder %s296, %s310
      %p312 = scmp.eq.s32.totalorder %s34, 0
      %p313 = por %p311, %p312
      %s315 = sadd.s32 %s314, 1
      %p318 = scmp.eq.s32.totalorder %s28, 1
      %p319 = scmp.ne.s32.totalorder %s314, %s316
      %p320 = scmp.eq.s32.totalorder %s28, 0
      %p321 = por %p319, %p320
      %p322 = scmp.ne.s32.totalorder %s314, %s316
      %p323 = scmp.eq.s32.totalorder %s33, 1
      %p324 = por %p322, %p323
      %p325 = scmp.ne.s32.totalorder %s316, %s317
      %p326 = scmp.eq.s32.totalorder %s33, 0
      %p327 = por %p325, %p326
      %p328 = scmp.ne.s32.totalorder %s316, %s317
      %p329 = scmp.eq.s32.totalorder %s34, 1
      %p330 = por %p328, %p329
      %p332 = scmp.ne.s32.totalorder %s317, %s331
      %p333 = scmp.eq.s32.totalorder %s34, 0
      %p334 = por %p332, %p333
      %s336 = sadd.s32 %s335, 1
      %p339 = scmp.eq.s32.totalorder %s28, 1
      %p340 = scmp.ne.s32.totalorder %s335, %s337
      %p341 = scmp.eq.s32.totalorder %s28, 0
      %p342 = por %p340, %p341
      %p343 = scmp.ne.s32.totalorder %s335, %s337
      %p344 = scmp.eq.s32.totalorder %s33, 1
      %p345 = por %p343, %p344
      %p346 = scmp.ne.s32.totalorder %s337, %s338
      %p347 = scmp.eq.s32.totalorder %s33, 0
      %p348 = por %p346, %p347
      %p349 = scmp.ne.s32.totalorder %s337, %s338
      %p350 = scmp.eq.s32.totalorder %s34, 1
      %p351 = por %p349, %p350
      %p353 = scmp.ne.s32.totalorder %s338, %s352
      %p354 = scmp.eq.s32.totalorder %s34, 0
      %p355 = por %p353, %p354
      %s357 = sadd.s32 %s356, 1
      %p360 = scmp.eq.s32.totalorder %s28, 1
      %p361 = scmp.ne.s32.totalorder %s356, %s358
      %p362 = scmp.eq.s32.totalorder %s28, 0
      %p363 = por %p361, %p362
      %p364 = scmp.ne.s32.totalorder %s356, %s358
      %p365 = scmp.eq.s32.totalorder %s33, 1
      %p366 = por %p364, %p365
      %p367 = scmp.ne.s32.totalorder %s358, %s359
      %p368 = scmp.eq.s32.totalorder %s33, 0
      %p369 = por %p367, %p368
      %p370 = scmp.ne.s32.totalorder %s358, %s359
      %p371 = scmp.eq.s32.totalorder %s34, 1
      %p372 = por %p370, %p371
      %p374 = scmp.ne.s32.totalorder %s359, %s373
      %p375 = scmp.eq.s32.totalorder %s34, 0
      %p376 = por %p374, %p375
      %s378 = sadd.s32 %s377, 1
      %p381 = scmp.eq.s32.totalorder %s28, 1
      %p382 = scmp.ne.s32.totalorder %s377, %s379
      %p383 = scmp.eq.s32.totalorder %s28, 0
      %p384 = por %p382, %p383
      %p385 = scmp.ne.s32.totalorder %s377, %s379
      %p386 = scmp.eq.s32.totalorder %s33, 1
      %p387 = por %p385, %p386
      %p388 = scmp.ne.s32.totalorder %s379, %s380
      %p389 = scmp.eq.s32.totalorder %s33, 0
      %p390 = por %p388, %p389
      %p391 = scmp.ne.s32.totalorder %s379, %s380
      %p392 = scmp.eq.s32.totalorder %s34, 1
      %p393 = por %p391, %p392
      %p395 = scmp.ne.s32.totalorder %s380, %s394
      %p396 = scmp.eq.s32.totalorder %s34, 0
      %p397 = por %p395, %p396
      %s399 = sadd.s32 %s398, 1
      %p402 = scmp.eq.s32.totalorder %s28, 1
      %p403 = scmp.ne.s32.totalorder %s398, %s400
      %p404 = scmp.eq.s32.totalorder %s28, 0
      %p405 = por %p403, %p404
      %p406 = scmp.ne.s32.totalorder %s398, %s400
      %p407 = scmp.eq.s32.totalorder %s33, 1
      %p408 = por %p406, %p407
      %p409 = scmp.ne.s32.totalorder %s400, %s401
      %p410 = scmp.eq.s32.totalorder %s33, 0
      %p411 = por %p409, %p410
      %p412 = scmp.ne.s32.totalorder %s400, %s401
      %p413 = scmp.eq.s32.totalorder %s34, 1
      %p414 = por %p412, %p413
      %p416 = scmp.ne.s32.totalorder %s401, %s415
      %p417 = scmp.eq.s32.totalorder %s34, 0
      %p418 = por %p416, %p417
      %s420 = sadd.s32 %s419, 1
      %p423 = scmp.eq.s32.totalorder %s28, 1
      %p424 = scmp.ne.s32.totalorder %s419, %s421
      %p425 = scmp.eq.s32.totalorder %s28, 0
      %p426 = por %p424, %p425
      %p427 = scmp.ne.s32.totalorder %s419, %s421
      %p428 = scmp.eq.s32.totalorder %s33, 1
      %p429 = por %p427, %p428
      %p430 = scmp.ne.s32.totalorder %s421, %s422
      %p431 = scmp.eq.s32.totalorder %s33, 0
      %p432 = por %p430, %p431
      %p433 = scmp.ne.s32.totalorder %s421, %s422
      %p434 = scmp.eq.s32.totalorder %s34, 1
      %p435 = por %p433, %p434
      %p437 = scmp.ne.s32.totalorder %s422, %s436
      %p438 = scmp.eq.s32.totalorder %s34, 0
      %p439 = por %p437, %p438
      %s440 = ssub.s32 %s28, %s35
      %p441 = scmp.eq.s32.totalorder %s440, 0
      %s443 = sadd.s32 %s442, 1
      %s444 = scalar_select %p441, %s442, %s443
      %p447 = pneg %p441
      %p448 = scmp.eq.s32.totalorder %s28, 1
      %p449 = por %p447, %p448
      %p450 = scmp.ne.s32.totalorder %s442, %s445
      %p451 = scmp.eq.s32.totalorder %s28, 0
      %p452 = por %p450, %p451
      %p453 = scmp.ne.s32.totalorder %s442, %s445
      %p454 = scmp.eq.s32.totalorder %s33, 1
      %p455 = por %p453, %p454
      %p456 = scmp.ne.s32.totalorder %s445, %s446
      %p457 = scmp.eq.s32.totalorder %s33, 0
      %p458 = por %p456, %p457
      %p459 = scmp.ne.s32.totalorder %s445, %s446
      %p460 = scmp.eq.s32.totalorder %s34, 1
      %p461 = por %p459, %p460
      %p463 = scmp.ne.s32.totalorder %s446, %s462
      %p464 = scmp.eq.s32.totalorder %s34, 0
      %p465 = por %p463, %p464
      %p466 = scmp.le.s32.totalorder 1, %s28
      %p467 = scmp.lt.s32.totalorder %s28, 3
      %p468 = pnand %p466, %p467
      %p469 = pneg %p468
      // Predicated region
      $region9: #{dense_block_forward.1} parent=5 // pred_check
        _
      $region10: #{dense_block_forward.1} parent=5 // pred_check_branch
        %471 = sbr.rel (%p468) target = $region12
      $region11: #{dense_block_forward.1} parent=5 // pred_region
        %s472 = ssub.s32 %s28, 1
        // Predicated region
        $region13: #{dense_block_forward.1} parent=11 // pred_check
          %p473 = pneg %p75
        $region14: #{dense_block_forward.1} parent=11 // pred_check_branch
          %475 = sbr.rel (%p473) target = $region16
        $region15: #{dense_block_forward.1} parent=11 // pred_region
          _
        $region16: #{dense_block_forward.1} parent=11 // pred_fallthru
          _
        // Predicated region
        $region17: #{dense_block_forward.1} parent=11 // pred_check
          %p476 = pneg %p96
        $region18: #{dense_block_forward.1} parent=11 // pred_check_branch
          %478 = sbr.rel (%p476) target = $region20
        $region19: #{dense_block_forward.1} parent=11 // pred_region
          _
        $region20: #{dense_block_forward.1} parent=11 // pred_fallthru
          _
        // Predicated region
        $region21: #{dense_block_forward.1} parent=11 // pred_check
          %p479 = pneg %p117
        $region22: #{dense_block_forward.1} parent=11 // pred_check_branch
          %481 = sbr.rel (%p479) target = $region24
        $region23: #{dense_block_forward.1} parent=11 // pred_region
          _
        $region24: #{dense_block_forward.1} parent=11 // pred_fallthru
          _
        // Predicated region
        $region25: #{dense_block_forward.1} parent=11 // pred_check
          %p482 = pneg %p138
        $region26: #{dense_block_forward.1} parent=11 // pred_check_branch
          %484 = sbr.rel (%p482) target = $region28
        $region27: #{dense_block_forward.1} parent=11 // pred_region
          _
        $region28: #{dense_block_forward.1} parent=11 // pred_fallthru
          _
        // Predicated region
        $region29: #{dense_block_forward.1} parent=11 // pred_check
          %p485 = pneg %p159
        $region30: #{dense_block_forward.1} parent=11 // pred_check_branch
          %487 = sbr.rel (%p485) target = $region32
        $region31: #{dense_block_forward.1} parent=11 // pred_region
          _
        $region32: #{dense_block_forward.1} parent=11 // pred_fallthru
          _
        // Predicated region
        $region33: #{dense_block_forward.1} parent=11 // pred_check
          %p488 = pneg %p180
        $region34: #{dense_block_forward.1} parent=11 // pred_check_branch
          %490 = sbr.rel (%p488) target = $region36
        $region35: #{dense_block_forward.1} parent=11 // pred_region
          _
        $region36: #{dense_block_forward.1} parent=11 // pred_fallthru
          _
        // Predicated region
        $region37: #{dense_block_forward.1} parent=11 // pred_check
          %p491 = pneg %p201
        $region38: #{dense_block_forward.1} parent=11 // pred_check_branch
          %493 = sbr.rel (%p491) target = $region40
        $region39: #{dense_block_forward.1} parent=11 // pred_region
          _
        $region40: #{dense_block_forward.1} parent=11 // pred_fallthru
          _
        // Predicated region
        $region41: #{dense_block_forward.1} parent=11 // pred_check
          %p494 = pneg %p222
        $region42: #{dense_block_forward.1} parent=11 // pred_check_branch
          %496 = sbr.rel (%p494) target = $region44
        $region43: #{dense_block_forward.1} parent=11 // pred_region
          _
        $region44: #{dense_block_forward.1} parent=11 // pred_fallthru
          _
        // Predicated region
        $region45: #{dense_block_forward.1} parent=11 // pred_check
          %p497 = pneg %p243
        $region46: #{dense_block_forward.1} parent=11 // pred_check_branch
          %499 = sbr.rel (%p497) target = $region48
        $region47: #{dense_block_forward.1} parent=11 // pred_region
          _
        $region48: #{dense_block_forward.1} parent=11 // pred_fallthru
          _
        // Predicated region
        $region49: #{dense_block_forward.1} parent=11 // pred_check
          %p500 = pneg %p264
        $region50: #{dense_block_forward.1} parent=11 // pred_check_branch
          %502 = sbr.rel (%p500) target = $region52
        $region51: #{dense_block_forward.1} parent=11 // pred_region
          _
        $region52: #{dense_block_forward.1} parent=11 // pred_fallthru
          _
        // Predicated region
        $region53: #{dense_block_forward.1} parent=11 // pred_check
          %p503 = pneg %p285
        $region54: #{dense_block_forward.1} parent=11 // pred_check_branch
          %505 = sbr.rel (%p503) target = $region56
        $region55: #{dense_block_forward.1} parent=11 // pred_region
          _
        $region56: #{dense_block_forward.1} parent=11 // pred_fallthru
          _
        // Predicated region
        $region57: #{dense_block_forward.1} parent=11 // pred_check
          %p506 = pneg %p306
        $region58: #{dense_block_forward.1} parent=11 // pred_check_branch
          %508 = sbr.rel (%p506) target = $region60
        $region59: #{dense_block_forward.1} parent=11 // pred_region
          _
        $region60: #{dense_block_forward.1} parent=11 // pred_fallthru
          _
        // Predicated region
        $region61: #{dense_block_forward.1} parent=11 // pred_check
          %p509 = pneg %p327
        $region62: #{dense_block_forward.1} parent=11 // pred_check_branch
          %511 = sbr.rel (%p509) target = $region64
        $region63: #{dense_block_forward.1} parent=11 // pred_region
          _
        $region64: #{dense_block_forward.1} parent=11 // pred_fallthru
          _
        // Predicated region
        $region65: #{dense_block_forward.1} parent=11 // pred_check
          %p512 = pneg %p348
        $region66: #{dense_block_forward.1} parent=11 // pred_check_branch
          %514 = sbr.rel (%p512) target = $region68
        $region67: #{dense_block_forward.1} parent=11 // pred_region
          _
        $region68: #{dense_block_forward.1} parent=11 // pred_fallthru
          _
        // Predicated region
        $region69: #{dense_block_forward.1} parent=11 // pred_check
          %p515 = pneg %p369
        $region70: #{dense_block_forward.1} parent=11 // pred_check_branch
          %517 = sbr.rel (%p515) target = $region72
        $region71: #{dense_block_forward.1} parent=11 // pred_region
          _
        $region72: #{dense_block_forward.1} parent=11 // pred_fallthru
          _
        // Predicated region
        $region73: #{dense_block_forward.1} parent=11 // pred_check
          %p518 = pneg %p390
        $region74: #{dense_block_forward.1} parent=11 // pred_check_branch
          %520 = sbr.rel (%p518) target = $region76
        $region75: #{dense_block_forward.1} parent=11 // pred_region
          _
        $region76: #{dense_block_forward.1} parent=11 // pred_fallthru
          _
        // Predicated region
        $region77: #{dense_block_forward.1} parent=11 // pred_check
          %p521 = pneg %p411
        $region78: #{dense_block_forward.1} parent=11 // pred_check_branch
          %523 = sbr.rel (%p521) target = $region80
        $region79: #{dense_block_forward.1} parent=11 // pred_region
          _
        $region80: #{dense_block_forward.1} parent=11 // pred_fallthru
          _
        // Predicated region
        $region81: #{dense_block_forward.1} parent=11 // pred_check
          %p524 = pneg %p432
        $region82: #{dense_block_forward.1} parent=11 // pred_check_branch
          %526 = sbr.rel (%p524) target = $region84
        $region83: #{dense_block_forward.1} parent=11 // pred_region
          _
        $region84: #{dense_block_forward.1} parent=11 // pred_fallthru
          _
      $region12: #{dense_block_forward.1} parent=5 // pred_fallthru
        _
      %p527 = scmp.lt.s32.totalorder %s28, 2
      // Predicated region
      $region85: #{dense_block_forward.1} parent=5 // pred_check
        %p528 = pneg %p527
      $region86: #{dense_block_forward.1} parent=5 // pred_check_branch
        %530 = sbr.rel (%p528) target = $region88
      $region87: #{dense_block_forward.1} parent=5 // pred_region
        // Predicated region
        $region89: #{dense_block_forward.1} parent=87 // pred_check
          %p531 = pneg %p48
        $region90: #{dense_block_forward.1} parent=87 // pred_check_branch
          %533 = sbr.rel (%p531) target = $region92
        $region91: #{dense_block_forward.1} parent=87 // pred_region
          %p534 = scmp.lt.s32.totalorder %s28, 1
          %s535 = scalar_select %p534, %s28, 1
          %s536 = smul.addr %s535, 8
          %s537 = smul.addr %s536, 8
          %s538 = scalar_lea.vmem %s0, %s537
        $region92: #{dense_block_forward.1} parent=87 // pred_fallthru
          _
      $region88: #{dense_block_forward.1} parent=5 // pred_fallthru
        _
      %p539 = scmp.le.s32.totalorder 1, %s28
      %p540 = scmp.lt.s32.totalorder %s28, 3
      %p541 = pnand %p539, %p540
      %p542 = pneg %p541
      // Predicated region
      $region93: #{dense_block_forward.1} parent=5 // pred_check
        _
      $region94: #{dense_block_forward.1} parent=5 // pred_check_branch
        %544 = sbr.rel (%p541) target = $region96
      $region95: #{dense_block_forward.1} parent=5 // pred_region
        %s545 = ssub.s32 %s28, 1
        %p546 = scmp.lt.s32.totalorder %s33, 1
        %s547 = scalar_select %p546, %s33, 1
        %s548 = smul.addr %s547, 8
        %s549 = smul.addr %s548, 8
        %s550 = scalar_lea.vmem %s0, %s549
        %p551 = pneg %p54
        %p552 = pneg %p51
        %p553 = pneg %p75
        %p554 = pneg %p72
        %p555 = pneg %p96
        %p556 = pneg %p93
        %p557 = pneg %p117
        %p558 = pneg %p114
        %p559 = pneg %p138
        %p560 = pneg %p135
        %p561 = pneg %p159
        %p562 = pneg %p156
        %p563 = pneg %p180
        %p564 = pneg %p177
        %p565 = pneg %p201
        %p566 = pneg %p198
        %p567 = pneg %p222
        %p568 = pneg %p219
        %p569 = pneg %p243
        %p570 = pneg %p240
        %p571 = pneg %p264
        %p572 = pneg %p261
        %p573 = pneg %p285
        %p574 = pneg %p282
        %p575 = pneg %p306
        %p576 = pneg %p303
        %p577 = pneg %p327
        %p578 = pneg %p324
        %p579 = pneg %p348
        %p580 = pneg %p345
        %p581 = pneg %p369
        %p582 = pneg %p366
        %p583 = pneg %p390
        %p584 = pneg %p387
        %p585 = pneg %p411
        %p586 = pneg %p408
        %p587 = pneg %p432
        %p588 = pneg %p429
        %p589 = pneg %p458
        %p590 = pneg %p455
        %s591 = sand.u32 %s445, 1
        %s592 = scalar_lea.sflag [#allocation3], %s591
        %s593 = sand.u32 %s445, 1
        %s594 = smul.addr %s593, 8
        %s595 = scalar_lea.vmem [#allocation2], %s594
        %p596 = scmp.lt.s32.totalorder %s33, 1
        %s597 = scalar_select %p596, %s33, 1
        %s598 = smul.addr %s597, 8
        %s599 = smul.addr %s598, 8
        %s600 = scalar_lea.vmem %s0, %s599
        %v601 = vld [vmem:[%s600] sm:$0xff]
        %v602 = vld [vmem:[%s600 + $0x8] sm:$0xff]
        %v603 = vld [vmem:[%s600 + $0x10] sm:$0xff]
        %v604 = vld [vmem:[%s600 + $0x18] sm:$0xff]
        %v605 = vld [vmem:[%s600 + $0x20] sm:$0xff]
        %v606 = vld [vmem:[%s600 + $0x28] sm:$0xff]
        %v607 = vld [vmem:[%s600 + $0x30] sm:$0xff]
        %v608 = vld [vmem:[%s600 + $0x38] sm:$0xff]
        %v609 = vld [vmem:[%s1] sm:$0xf]
        %v610 = vld [vmem:[%s2] sm:$0x1]
        %v612 = vlaneseq
        %v613 = vshrl.u32 %v612, 7
        %v614 = vsub.s32 0, %v613
        %v615 = vrot.slane %v610, %v614
        %vm617 = vcmask 31744
        %v619 = vsel %vm617, %v601, 0
        %v622 = vsel %vm617, %v602, 0
        %v625 = vsel %vm617, %v603, 0
        %v628 = vsel %vm617, %v604, 0
        %v631 = vsel %vm617, %v605, 0
        %v634 = vsel %vm617, %v606, 0
        %v637 = vsel %vm617, %v607, 0
        %v640 = vsel %vm617, %v608, 0
        %vm642 = vcmask 1043456
        %v644 = vsel %vm642, %v609, 0
        %646 = vmatprep.subr.mxu0 0.0
        %647 = vmatpush1.msra.mxu0 0.0
        %648 = vmatprep.subr.mxu0 0.0
        %649 = vmatpush1.msra.mxu0 0.0
        %650 = vmatprep.subr.mxu0 0.0
        %651 = vmatpush1.msra.mxu0 0.0
        %652 = vmatprep.subr.mxu0 0.0
        %653 = vmatpush1.msra.mxu0 0.0
        %654 = vmatprep.subr.mxu0 0.0
        %655 = vmatpush1.msra.mxu0 0.0
        %656 = vmatprep.subr.mxu0 0.0
        %657 = vmatpush1.msra.mxu0 0.0
        %658 = vmatprep.subr.mxu0 0.0
        %659 = vmatpush1.msra.mxu0 0.0
        %660 = vmatprep.subr.mxu0 0.0
        %661 = vmatpush1.msra.mxu0 0.0
        %662 = vmatprep.subr.mxu0 0.0
        %663 = vmatpush1.msra.mxu0 0.0
        %664 = vmatprep.subr.mxu0 0.0
        %665 = vmatpush1.msra.mxu0 0.0
        %666 = vmatprep.subr.mxu0 0.0
        %667 = vmatpush1.msra.mxu0 0.0
        %668 = vmatprep.subr.mxu0 0.0
        %669 = vmatpush1.msra.mxu0 0.0
        %670 = vmatprep.subr.mxu0 0.0
        %671 = vmatpush1.msra.mxu0 0.0
        %672 = vmatprep.subr.mxu0 0.0
        %673 = vmatpush1.msra.mxu0 0.0
        %674 = vmatprep.subr.mxu0 0.0
        %675 = vmatpush1.msra.mxu0 0.0
        %676 = vmatprep.subr.mxu0 0.0
        %677 = vmatpush1.msra.mxu0 %v644
        %678 = vmatprep.subr.mxu0 0.0
        %679 = vmatpush2.msra.mxu0 0.0
        %680 = vmatprep.subr.mxu0 0.0
        %681 = vmatpush2.msra.mxu0 0.0
        %682 = vmatprep.subr.mxu0 0.0
        %683 = vmatpush2.msra.mxu0 0.0
        %684 = vmatprep.subr.mxu0 0.0
        %685 = vmatpush2.msra.mxu0 0.0
        %686 = vmatprep.subr.mxu0 0.0
        %687 = vmatpush2.msra.mxu0 0.0
        %688 = vmatprep.subr.mxu0 0.0
        %689 = vmatpush2.msra.mxu0 0.0
        %690 = vmatprep.subr.mxu0 0.0
        %691 = vmatpush2.msra.mxu0 0.0
        %692 = vmatprep.subr.mxu0 0.0
        %693 = vmatpush2.msra.mxu0 0.0
        %694 = vmatprep.subr.mxu0 0.0
        %695 = vmatpush2.msra.mxu0 0.0
        %696 = vmatprep.subr.mxu0 0.0
        %697 = vmatpush2.msra.mxu0 0.0
        %698 = vmatprep.subr.mxu0 0.0
        %699 = vmatpush2.msra.mxu0 0.0
        %700 = vmatprep.subr.mxu0 0.0
        %701 = vmatpush2.msra.mxu0 0.0
        %702 = vmatprep.subr.mxu0 0.0
        %703 = vmatpush2.msra.mxu0 0.0
        %704 = vmatprep.subr.mxu0 0.0
        %705 = vmatpush2.msra.mxu0 0.0
        %706 = vmatprep.subr.mxu0 0.0
        %707 = vmatpush2.msra.mxu0 0.0
        %708 = vmatprep.subr.mxu0 0.0
        %709 = vmatpush2.msra.mxu0 0.0
        %710 = vmatprep.mubr.f32.mxu0 0.0
        %711 = vmatmul.mubr.f32.gmra.mxu0 %v619
        %v712 = vpop.f32.mrf.mxu0
        %v713 = vadd.f32 %v615, %v712
        %v714 = vpop.f32.mrf.mxu0
        %715 = vmatprep.mubr.f32.mxu0 0.0
        %716 = vmatmul.mubr.f32.gmra.mxu0 %v622
        %v717 = vpop.f32.mrf.mxu0
        %v718 = vadd.f32 %v615, %v717
        %v719 = vpop.f32.mrf.mxu0
        %720 = vmatprep.mubr.f32.mxu0 0.0
        %721 = vmatmul.mubr.f32.gmra.mxu0 %v625
        %v722 = vpop.f32.mrf.mxu0
        %v723 = vadd.f32 %v615, %v722
        %v724 = vpop.f32.mrf.mxu0
        %725 = vmatprep.mubr.f32.mxu0 0.0
        %726 = vmatmul.mubr.f32.gmra.mxu0 %v628
        %v727 = vpop.f32.mrf.mxu0
        %v728 = vadd.f32 %v615, %v727
        %v729 = vpop.f32.mrf.mxu0
        %730 = vmatprep.mubr.f32.mxu0 0.0
        %731 = vmatmul.mubr.f32.gmra.mxu0 %v631
        %v732 = vpop.f32.mrf.mxu0
        %v733 = vadd.f32 %v615, %v732
        %v734 = vpop.f32.mrf.mxu0
        %735 = vmatprep.mubr.f32.mxu0 0.0
        %736 = vmatmul.mubr.f32.gmra.mxu0 %v634
        %v737 = vpop.f32.mrf.mxu0
        %v738 = vadd.f32 %v615, %v737
        %v739 = vpop.f32.mrf.mxu0
        %740 = vmatprep.mubr.f32.mxu0 0.0
        %741 = vmatmul.mubr.f32.gmra.mxu0 %v637
        %v742 = vpop.f32.mrf.mxu0
        %v743 = vadd.f32 %v615, %v742
        %v744 = vpop.f32.mrf.mxu0
        %745 = vmatprep.mubr.f32.mxu0 0.0
        %746 = vmatmul.mubr.f32.gmra.mxu0 %v640
        %v747 = vpop.f32.mrf.mxu0
        %v748 = vadd.f32 %v615, %v747
        %v749 = vpop.f32.mrf.mxu0
        %750 = vdwg.mxu0
        %v751 = vmax.f32 %v713, 0.0
        %v752 = vmax.f32 %v718, 0.0
        %v753 = vmax.f32 %v723, 0.0
        %v754 = vmax.f32 %v728, 0.0
        %v755 = vmax.f32 %v733, 0.0
        %v756 = vmax.f32 %v738, 0.0
        %v757 = vmax.f32 %v743, 0.0
        %v758 = vmax.f32 %v748, 0.0
        %v759 = vld [vmem:[%s3] sm:$0xff]
        %v760 = vld [vmem:[%s3 + $0x8] sm:$0xff]
        %v761 = vld [vmem:[%s3 + $0x10] sm:$0xff]
        %v762 = vld [vmem:[%s3 + $0x18] sm:$0xff]
        %v763 = vld [vmem:[%s3 + $0x20] sm:$0xff]
        %v764 = vld [vmem:[%s3 + $0x28] sm:$0xff]
        %v765 = vld [vmem:[%s3 + $0x30] sm:$0xff]
        %v766 = vld [vmem:[%s3 + $0x38] sm:$0xff]
        %vm767 = vcmask 523264
        %v769 = vsel %vm767, %v759, 0
        %v772 = vsel %vm767, %v760, 0
        %v775 = vsel %vm767, %v761, 0
        %v778 = vsel %vm767, %v762, 0
        %v781 = vsel %vm767, %v763, 0
        %v784 = vsel %vm767, %v764, 0
        %v787 = vsel %vm767, %v765, 0
        %v790 = vsel %vm767, %v766, 0
        %792 = vmatprep.subr.mxu0 0.0
        %793 = vmatpush1.msra.mxu0 0.0
        %794 = vmatprep.subr.mxu0 0.0
        %795 = vmatpush1.msra.mxu0 0.0
        %796 = vmatprep.subr.mxu0 0.0
        %797 = vmatpush1.msra.mxu0 0.0
        %798 = vmatprep.subr.mxu0 0.0
        %799 = vmatpush1.msra.mxu0 0.0
        %800 = vmatprep.subr.mxu0 0.0
        %801 = vmatpush1.msra.mxu0 0.0
        %802 = vmatprep.subr.mxu0 0.0
        %803 = vmatpush1.msra.mxu0 0.0
        %804 = vmatprep.subr.mxu0 0.0
        %805 = vmatpush1.msra.mxu0 0.0
        %806 = vmatprep.subr.mxu0 0.0
        %807 = vmatpush1.msra.mxu0 0.0
        %808 = vmatprep.subr.mxu0 0.0
        %809 = vmatpush1.msra.mxu0 %v758
        %810 = vmatprep.subr.mxu0 0.0
        %811 = vmatpush1.msra.mxu0 %v757
        %812 = vmatprep.subr.mxu0 0.0
        %813 = vmatpush1.msra.mxu0 %v756
        %814 = vmatprep.subr.mxu0 0.0
        %815 = vmatpush1.msra.mxu0 %v755
        %816 = vmatprep.subr.mxu0 0.0
        %817 = vmatpush1.msra.mxu0 %v754
        %818 = vmatprep.subr.mxu0 0.0
        %819 = vmatpush1.msra.mxu0 %v753
        %820 = vmatprep.subr.mxu0 0.0
        %821 = vmatpush1.msra.mxu0 %v752
        %822 = vmatprep.subr.mxu0 0.0
        %823 = vmatpush1.msra.mxu0 %v751
        %824 = vmatprep.subr.mxu0 0.0
        %825 = vmatpush2.msra.mxu0 0.0
        %826 = vmatprep.subr.mxu0 0.0
        %827 = vmatpush2.msra.mxu0 0.0
        %828 = vmatprep.subr.mxu0 0.0
        %829 = vmatpush2.msra.mxu0 0.0
        %830 = vmatprep.subr.mxu0 0.0
        %831 = vmatpush2.msra.mxu0 0.0
        %832 = vmatprep.subr.mxu0 0.0
        %833 = vmatpush2.msra.mxu0 0.0
        %834 = vmatprep.subr.mxu0 0.0
        %835 = vmatpush2.msra.mxu0 0.0
        %836 = vmatprep.subr.mxu0 0.0
        %837 = vmatpush2.msra.mxu0 0.0
        %838 = vmatprep.subr.mxu0 0.0
        %839 = vmatpush2.msra.mxu0 0.0
        %840 = vmatprep.subr.mxu0 0.0
        %841 = vmatpush2.msra.mxu0 0.0
        %842 = vmatprep.subr.mxu0 0.0
        %843 = vmatpush2.msra.mxu0 0.0
        %844 = vmatprep.subr.mxu0 0.0
        %845 = vmatpush2.msra.mxu0 0.0
        %846 = vmatprep.subr.mxu0 0.0
        %847 = vmatpush2.msra.mxu0 0.0
        %848 = vmatprep.subr.mxu0 0.0
        %849 = vmatpush2.msra.mxu0 0.0
        %850 = vmatprep.subr.mxu0 0.0
        %851 = vmatpush2.msra.mxu0 0.0
        %852 = vmatprep.subr.mxu0 0.0
        %853 = vmatpush2.msra.mxu0 0.0
        %854 = vmatprep.subr.mxu0 0.0
        %855 = vmatpush2.msra.mxu0 0.0
        %856 = vmatprep.mubr.f32.mxu0 0.0
        %857 = vmatmul.mubr.f32.gmra.mxu0 %v769
        %v858 = vpop.f32.mrf.mxu0
        %v859 = vadd.f32 0.0, %v858
        %v860 = vpop.f32.mrf.mxu0
        %861 = vmatprep.mubr.f32.mxu0 0.0
        %862 = vmatmul.mubr.f32.gmra.mxu0 %v772
        %v863 = vpop.f32.mrf.mxu0
        %v864 = vadd.f32 0.0, %v863
        %v865 = vpop.f32.mrf.mxu0
        %866 = vmatprep.mubr.f32.mxu0 0.0
        %867 = vmatmul.mubr.f32.gmra.mxu0 %v775
        %v868 = vpop.f32.mrf.mxu0
        %v869 = vadd.f32 0.0, %v868
        %v870 = vpop.f32.mrf.mxu0
        %871 = vmatprep.mubr.f32.mxu0 0.0
        %872 = vmatmul.mubr.f32.gmra.mxu0 %v778
        %v873 = vpop.f32.mrf.mxu0
        %v874 = vadd.f32 0.0, %v873
        %v875 = vpop.f32.mrf.mxu0
        %876 = vmatprep.mubr.f32.mxu0 0.0
        %877 = vmatmul.mubr.f32.gmra.mxu0 %v781
        %v878 = vpop.f32.mrf.mxu0
        %v879 = vadd.f32 0.0, %v878
        %v880 = vpop.f32.mrf.mxu0
        %881 = vmatprep.mubr.f32.mxu0 0.0
        %882 = vmatmul.mubr.f32.gmra.mxu0 %v784
        %v883 = vpop.f32.mrf.mxu0
        %v884 = vadd.f32 0.0, %v883
        %v885 = vpop.f32.mrf.mxu0
        %886 = vmatprep.mubr.f32.mxu0 0.0
        %887 = vmatmul.mubr.f32.gmra.mxu0 %v787
        %v888 = vpop.f32.mrf.mxu0
        %v889 = vadd.f32 0.0, %v888
        %v890 = vpop.f32.mrf.mxu0
        %891 = vmatprep.mubr.f32.mxu0 0.0
        %892 = vmatmul.mubr.f32.gmra.mxu0 %v790
        %v893 = vpop.f32.mrf.mxu0
        %v894 = vadd.f32 0.0, %v893
        %v895 = vpop.f32.mrf.mxu0
        %896 = vdwg.mxu0
        %v897 = vld [vmem:[%s4] sm:$0xff]
        %v898 = vld [vmem:[%s4 + $0x8] sm:$0xff]
        %v899 = vld [vmem:[%s4 + $0x10] sm:$0xff]
        %v900 = vld [vmem:[%s4 + $0x18] sm:$0xff]
        %s901 = scalar_lea.vmem %s3, 64
        %v902 = vld [vmem:[%s901] sm:$0xff]
        %v903 = vld [vmem:[%s901 + $0x8] sm:$0xff]
        %v904 = vld [vmem:[%s901 + $0x10] sm:$0xff]
        %v905 = vld [vmem:[%s901 + $0x18] sm:$0xff]
        %v906 = vld [vmem:[%s901 + $0x20] sm:$0xff]
        %v907 = vld [vmem:[%s901 + $0x28] sm:$0xff]
        %v908 = vld [vmem:[%s901 + $0x30] sm:$0xff]
        %v909 = vld [vmem:[%s901 + $0x38] sm:$0xff]
        %v911 = vsel %vm767, %v902, 0
        %v914 = vsel %vm767, %v903, 0
        %v917 = vsel %vm767, %v904, 0
        %v920 = vsel %vm767, %v905, 0
        %v923 = vsel %vm767, %v906, 0
        %v926 = vsel %vm767, %v907, 0
        %v929 = vsel %vm767, %v908, 0
        %v932 = vsel %vm767, %v909, 0
        %934 = vmatprep.subr.mxu0 0.0
        %935 = vmatpush1.msra.mxu0 0.0
        %936 = vmatprep.subr.mxu0 0.0
        %937 = vmatpush1.msra.mxu0 0.0
        %938 = vmatprep.subr.mxu0 0.0
        %939 = vmatpush1.msra.mxu0 0.0
        %940 = vmatprep.subr.mxu0 0.0
        %941 = vmatpush1.msra.mxu0 0.0
        %942 = vmatprep.subr.mxu0 0.0
        %943 = vmatpush1.msra.mxu0 0.0
        %944 = vmatprep.subr.mxu0 0.0
        %945 = vmatpush1.msra.mxu0 0.0
        %946 = vmatprep.subr.mxu0 0.0
        %947 = vmatpush1.msra.mxu0 0.0
        %948 = vmatprep.subr.mxu0 0.0
        %949 = vmatpush1.msra.mxu0 0.0
        %950 = vmatprep.subr.mxu0 0.0
        %951 = vmatpush1.msra.mxu0 %v758
        %952 = vmatprep.subr.mxu0 0.0
        %953 = vmatpush1.msra.mxu0 %v757
        %954 = vmatprep.subr.mxu0 0.0
        %955 = vmatpush1.msra.mxu0 %v756
        %956 = vmatprep.subr.mxu0 0.0
        %957 = vmatpush1.msra.mxu0 %v755
        %958 = vmatprep.subr.mxu0 0.0
        %959 = vmatpush1.msra.mxu0 %v754
        %960 = vmatprep.subr.mxu0 0.0
        %961 = vmatpush1.msra.mxu0 %v753
        %962 = vmatprep.subr.mxu0 0.0
        %963 = vmatpush1.msra.mxu0 %v752
        %964 = vmatprep.subr.mxu0 0.0
        %965 = vmatpush1.msra.mxu0 %v751
        %966 = vmatprep.subr.mxu0 0.0
        %967 = vmatpush2.msra.mxu0 0.0
        %968 = vmatprep.subr.mxu0 0.0
        %969 = vmatpush2.msra.mxu0 0.0
        %970 = vmatprep.subr.mxu0 0.0
        %971 = vmatpush2.msra.mxu0 0.0
        %972 = vmatprep.subr.mxu0 0.0
        %973 = vmatpush2.msra.mxu0 0.0
        %974 = vmatprep.subr.mxu0 0.0
        %975 = vmatpush2.msra.mxu0 0.0
        %976 = vmatprep.subr.mxu0 0.0
        %977 = vmatpush2.msra.mxu0 0.0
        %978 = vmatprep.subr.mxu0 0.0
        %979 = vmatpush2.msra.mxu0 0.0
        %980 = vmatprep.subr.mxu0 0.0
        %981 = vmatpush2.msra.mxu0 0.0
        %982 = vmatprep.subr.mxu0 0.0
        %983 = vmatpush2.msra.mxu0 0.0
        %984 = vmatprep.subr.mxu0 0.0
        %985 = vmatpush2.msra.mxu0 0.0
        %986 = vmatprep.subr.mxu0 0.0
        %987 = vmatpush2.msra.mxu0 0.0
        %988 = vmatprep.subr.mxu0 0.0
        %989 = vmatpush2.msra.mxu0 0.0
        %990 = vmatprep.subr.mxu0 0.0
        %991 = vmatpush2.msra.mxu0 0.0
        %992 = vmatprep.subr.mxu0 0.0
        %993 = vmatpush2.msra.mxu0 0.0
        %994 = vmatprep.subr.mxu0 0.0
        %995 = vmatpush2.msra.mxu0 0.0
        %996 = vmatprep.subr.mxu0 0.0
        %997 = vmatpush2.msra.mxu0 0.0
        %998 = vmatprep.mubr.f32.mxu0 0.0
        %999 = vmatmul.mubr.f32.gmra.mxu0 %v911
        %v1000 = vpop.f32.mrf.mxu0
        %v1001 = vadd.f32 0.0, %v1000
        %v1002 = vpop.f32.mrf.mxu0
        %1003 = vmatprep.mubr.f32.mxu0 0.0
        %1004 = vmatmul.mubr.f32.gmra.mxu0 %v914
        %v1005 = vpop.f32.mrf.mxu0
        %v1006 = vadd.f32 0.0, %v1005
        %v1007 = vpop.f32.mrf.mxu0
        %1008 = vmatprep.mubr.f32.mxu0 0.0
        %1009 = vmatmul.mubr.f32.gmra.mxu0 %v917
        %v1010 = vpop.f32.mrf.mxu0
        %v1011 = vadd.f32 0.0, %v1010
        %v1012 = vpop.f32.mrf.mxu0
        %1013 = vmatprep.mubr.f32.mxu0 0.0
        %1014 = vmatmul.mubr.f32.gmra.mxu0 %v920
        %v1015 = vpop.f32.mrf.mxu0
        %v1016 = vadd.f32 0.0, %v1015
        %v1017 = vpop.f32.mrf.mxu0
        %1018 = vmatprep.mubr.f32.mxu0 0.0
        %1019 = vmatmul.mubr.f32.gmra.mxu0 %v923
        %v1020 = vpop.f32.mrf.mxu0
        %v1021 = vadd.f32 0.0, %v1020
        %v1022 = vpop.f32.mrf.mxu0
        %1023 = vmatprep.mubr.f32.mxu0 0.0
        %1024 = vmatmul.mubr.f32.gmra.mxu0 %v926
        %v1025 = vpop.f32.mrf.mxu0
        %v1026 = vadd.f32 0.0, %v1025
        %v1027 = vpop.f32.mrf.mxu0
        %1028 = vmatprep.mubr.f32.mxu0 0.0
        %1029 = vmatmul.mubr.f32.gmra.mxu0 %v929
        %v1030 = vpop.f32.mrf.mxu0
        %v1031 = vadd.f32 0.0, %v1030
        %v1032 = vpop.f32.mrf.mxu0
        %1033 = vmatprep.mubr.f32.mxu0 0.0
        %1034 = vmatmul.mubr.f32.gmra.mxu0 %v932
        %v1035 = vpop.f32.mrf.mxu0
        %v1036 = vadd.f32 0.0, %v1035
        %v1037 = vpop.f32.mrf.mxu0
        %1038 = vdwg.mxu0
        %s1039 = scalar_lea.vmem %s4, 32
        %v1040 = vld [vmem:[%s1039] sm:$0xff]
        %v1041 = vld [vmem:[%s1039 + $0x8] sm:$0xff]
        %v1042 = vld [vmem:[%s1039 + $0x10] sm:$0xff]
        %v1043 = vld [vmem:[%s1039 + $0x18] sm:$0xff]
        %vm1044 = vcmask 261120
        %v1046 = vsel %vm1044, %v1001, 0
        %v1049 = vsel %vm1044, %v1006, 0
        %v1052 = vsel %vm1044, %v1011, 0
        %v1055 = vsel %vm1044, %v1016, 0
        %v1058 = vsel %vm1044, %v1021, 0
        %v1061 = vsel %vm1044, %v1026, 0
        %v1064 = vsel %vm1044, %v1031, 0
        %v1067 = vsel %vm1044, %v1036, 0
        %1069 = vmatprep.subr.mxu0 0.0
        %1070 = vmatpush1.msra.mxu0 0.0
        %1071 = vmatprep.subr.mxu0 0.0
        %1072 = vmatpush1.msra.mxu0 0.0
        %1073 = vmatprep.subr.mxu0 0.0
        %1074 = vmatpush1.msra.mxu0 0.0
        %1075 = vmatprep.subr.mxu0 0.0
        %1076 = vmatpush1.msra.mxu0 0.0
        %1077 = vmatprep.subr.mxu0 0.0
        %1078 = vmatpush1.msra.mxu0 0.0
        %1079 = vmatprep.subr.mxu0 0.0
        %1080 = vmatpush1.msra.mxu0 0.0
        %1081 = vmatprep.subr.mxu0 0.0
        %1082 = vmatpush1.msra.mxu0 0.0
        %1083 = vmatprep.subr.mxu0 0.0
        %1084 = vmatpush1.msra.mxu0 0.0
        %1085 = vmatprep.subr.mxu0 0.0
        %1086 = vmatpush1.msra.mxu0 0.0
        %1087 = vmatprep.subr.mxu0 0.0
        %1088 = vmatpush1.msra.mxu0 0.0
        %1089 = vmatprep.subr.mxu0 0.0
        %1090 = vmatpush1.msra.mxu0 0.0
        %1091 = vmatprep.subr.mxu0 0.0
        %1092 = vmatpush1.msra.mxu0 0.0
        %1093 = vmatprep.subr.mxu0 0.0
        %1094 = vmatpush1.msra.mxu0 %v1043
        %1095 = vmatprep.subr.mxu0 0.0
        %1096 = vmatpush1.msra.mxu0 %v1042
        %1097 = vmatprep.subr.mxu0 0.0
        %1098 = vmatpush1.msra.mxu0 %v1041
        %1099 = vmatprep.subr.mxu0 0.0
        %1100 = vmatpush1.msra.mxu0 %v1040
        %1101 = vmatprep.subr.mxu0 0.0
        %1102 = vmatpush2.msra.mxu0 0.0
        %1103 = vmatprep.subr.mxu0 0.0
        %1104 = vmatpush2.msra.mxu0 0.0
        %1105 = vmatprep.subr.mxu0 0.0
        %1106 = vmatpush2.msra.mxu0 0.0
        %1107 = vmatprep.subr.mxu0 0.0
        %1108 = vmatpush2.msra.mxu0 0.0
        %1109 = vmatprep.subr.mxu0 0.0
        %1110 = vmatpush2.msra.mxu0 0.0
        %1111 = vmatprep.subr.mxu0 0.0
        %1112 = vmatpush2.msra.mxu0 0.0
        %1113 = vmatprep.subr.mxu0 0.0
        %1114 = vmatpush2.msra.mxu0 0.0
        %1115 = vmatprep.subr.mxu0 0.0
        %1116 = vmatpush2.msra.mxu0 0.0
        %1117 = vmatprep.subr.mxu0 0.0
        %1118 = vmatpush2.msra.mxu0 0.0
        %1119 = vmatprep.subr.mxu0 0.0
        %1120 = vmatpush2.msra.mxu0 0.0
        %1121 = vmatprep.subr.mxu0 0.0
        %1122 = vmatpush2.msra.mxu0 0.0
        %1123 = vmatprep.subr.mxu0 0.0
        %1124 = vmatpush2.msra.mxu0 0.0
        %1125 = vmatprep.subr.mxu0 0.0
        %1126 = vmatpush2.msra.mxu0 0.0
        %1127 = vmatprep.subr.mxu0 0.0
        %1128 = vmatpush2.msra.mxu0 0.0
        %1129 = vmatprep.subr.mxu0 0.0
        %1130 = vmatpush2.msra.mxu0 0.0
        %1131 = vmatprep.subr.mxu0 0.0
        %1132 = vmatpush2.msra.mxu0 0.0
        %1133 = vmatprep.mubr.f32.mxu0 0.0
        %1134 = vmatmul.mubr.f32.gmra.mxu0 %v1046
        %v1135 = vpop.f32.mrf.mxu0
        %v1136 = vadd.f32 0.0, %v1135
        %v1137 = vpop.f32.mrf.mxu0
        %1138 = vmatprep.mubr.f32.mxu0 0.0
        %1139 = vmatmul.mubr.f32.gmra.mxu0 %v1049
        %v1140 = vpop.f32.mrf.mxu0
        %v1141 = vadd.f32 0.0, %v1140
        %v1142 = vpop.f32.mrf.mxu0
        %1143 = vmatprep.mubr.f32.mxu0 0.0
        %1144 = vmatmul.mubr.f32.gmra.mxu0 %v1052
        %v1145 = vpop.f32.mrf.mxu0
        %v1146 = vadd.f32 0.0, %v1145
        %v1147 = vpop.f32.mrf.mxu0
        %1148 = vmatprep.mubr.f32.mxu0 0.0
        %1149 = vmatmul.mubr.f32.gmra.mxu0 %v1055
        %v1150 = vpop.f32.mrf.mxu0
        %v1151 = vadd.f32 0.0, %v1150
        %v1152 = vpop.f32.mrf.mxu0
        %1153 = vmatprep.mubr.f32.mxu0 0.0
        %1154 = vmatmul.mubr.f32.gmra.mxu0 %v1058
        %v1155 = vpop.f32.mrf.mxu0
        %v1156 = vadd.f32 0.0, %v1155
        %v1157 = vpop.f32.mrf.mxu0
        %1158 = vmatprep.mubr.f32.mxu0 0.0
        %1159 = vmatmul.mubr.f32.gmra.mxu0 %v1061
        %v1160 = vpop.f32.mrf.mxu0
        %v1161 = vadd.f32 0.0, %v1160
        %v1162 = vpop.f32.mrf.mxu0
        %1163 = vmatprep.mubr.f32.mxu0 0.0
        %1164 = vmatmul.mubr.f32.gmra.mxu0 %v1064
        %v1165 = vpop.f32.mrf.mxu0
        %v1166 = vadd.f32 0.0, %v1165
        %v1167 = vpop.f32.mrf.mxu0
        %1168 = vmatprep.mubr.f32.mxu0 0.0
        %1169 = vmatmul.mubr.f32.gmra.mxu0 %v1067
        %v1170 = vpop.f32.mrf.mxu0
        %v1171 = vadd.f32 0.0, %v1170
        %v1172 = vpop.f32.mrf.mxu0
        %1173 = vdwg.mxu0
        %v1175 = vsel %vm1044, %v859, 0
        %v1178 = vsel %vm1044, %v864, 0
        %v1181 = vsel %vm1044, %v869, 0
        %v1184 = vsel %vm1044, %v874, 0
        %v1187 = vsel %vm1044, %v879, 0
        %v1190 = vsel %vm1044, %v884, 0
        %v1193 = vsel %vm1044, %v889, 0
        %v1196 = vsel %vm1044, %v894, 0
        %1198 = vmatprep.subr.mxu0 0.0
        %1199 = vmatpush1.msra.mxu0 0.0
        %1200 = vmatprep.subr.mxu0 0.0
        %1201 = vmatpush1.msra.mxu0 0.0
        %1202 = vmatprep.subr.mxu0 0.0
        %1203 = vmatpush1.msra.mxu0 0.0
        %1204 = vmatprep.subr.mxu0 0.0
        %1205 = vmatpush1.msra.mxu0 0.0
        %1206 = vmatprep.subr.mxu0 0.0
        %1207 = vmatpush1.msra.mxu0 0.0
        %1208 = vmatprep.subr.mxu0 0.0
        %1209 = vmatpush1.msra.mxu0 0.0
        %1210 = vmatprep.subr.mxu0 0.0
        %1211 = vmatpush1.msra.mxu0 0.0
        %1212 = vmatprep.subr.mxu0 0.0
        %1213 = vmatpush1.msra.mxu0 0.0
        %1214 = vmatprep.subr.mxu0 0.0
        %1215 = vmatpush1.msra.mxu0 0.0
        %1216 = vmatprep.subr.mxu0 0.0
        %1217 = vmatpush1.msra.mxu0 0.0
        %1218 = vmatprep.subr.mxu0 0.0
        %1219 = vmatpush1.msra.mxu0 0.0
        %1220 = vmatprep.subr.mxu0 0.0
        %1221 = vmatpush1.msra.mxu0 0.0
        %1222 = vmatprep.subr.mxu0 0.0
        %1223 = vmatpush1.msra.mxu0 %v900
        %1224 = vmatprep.subr.mxu0 0.0
        %1225 = vmatpush1.msra.mxu0 %v899
        %1226 = vmatprep.subr.mxu0 0.0
        %1227 = vmatpush1.msra.mxu0 %v898
        %1228 = vmatprep.subr.mxu0 0.0
        %1229 = vmatpush1.msra.mxu0 %v897
        %1230 = vmatprep.subr.mxu0 0.0
        %1231 = vmatpush2.msra.mxu0 0.0
        %1232 = vmatprep.subr.mxu0 0.0
        %1233 = vmatpush2.msra.mxu0 0.0
        %1234 = vmatprep.subr.mxu0 0.0
        %1235 = vmatpush2.msra.mxu0 0.0
        %1236 = vmatprep.subr.mxu0 0.0
        %1237 = vmatpush2.msra.mxu0 0.0
        %1238 = vmatprep.subr.mxu0 0.0
        %1239 = vmatpush2.msra.mxu0 0.0
        %1240 = vmatprep.subr.mxu0 0.0
        %1241 = vmatpush2.msra.mxu0 0.0
        %1242 = vmatprep.subr.mxu0 0.0
        %1243 = vmatpush2.msra.mxu0 0.0
        %1244 = vmatprep.subr.mxu0 0.0
        %1245 = vmatpush2.msra.mxu0 0.0
        %1246 = vmatprep.subr.mxu0 0.0
        %1247 = vmatpush2.msra.mxu0 0.0
        %1248 = vmatprep.subr.mxu0 0.0
        %1249 = vmatpush2.msra.mxu0 0.0
        %1250 = vmatprep.subr.mxu0 0.0
        %1251 = vmatpush2.msra.mxu0 0.0
        %1252 = vmatprep.subr.mxu0 0.0
        %1253 = vmatpush2.msra.mxu0 0.0
        %1254 = vmatprep.subr.mxu0 0.0
        %1255 = vmatpush2.msra.mxu0 0.0
        %1256 = vmatprep.subr.mxu0 0.0
        %1257 = vmatpush2.msra.mxu0 0.0
        %1258 = vmatprep.subr.mxu0 0.0
        %1259 = vmatpush2.msra.mxu0 0.0
        %1260 = vmatprep.subr.mxu0 0.0
        %1261 = vmatpush2.msra.mxu0 0.0
        %1262 = vmatprep.mubr.f32.mxu0 0.0
        %1263 = vmatmul.mubr.f32.gmra.mxu0 %v1175
        %v1264 = vpop.f32.mrf.mxu0
        %v1265 = vadd.f32 %v1136, %v1264
        %v1266 = vpop.f32.mrf.mxu0
        %1267 = vmatprep.mubr.f32.mxu0 0.0
        %1268 = vmatmul.mubr.f32.gmra.mxu0 %v1178
        %v1269 = vpop.f32.mrf.mxu0
        %v1270 = vadd.f32 %v1141, %v1269
        %v1271 = vpop.f32.mrf.mxu0
        %1272 = vmatprep.mubr.f32.mxu0 0.0
        %1273 = vmatmul.mubr.f32.gmra.mxu0 %v1181
        %v1274 = vpop.f32.mrf.mxu0
        %v1275 = vadd.f32 %v1146, %v1274
        %v1276 = vpop.f32.mrf.mxu0
        %1277 = vmatprep.mubr.f32.mxu0 0.0
        %1278 = vmatmul.mubr.f32.gmra.mxu0 %v1184
        %v1279 = vpop.f32.mrf.mxu0
        %v1280 = vadd.f32 %v1151, %v1279
        %v1281 = vpop.f32.mrf.mxu0
        %1282 = vmatprep.mubr.f32.mxu0 0.0
        %1283 = vmatmul.mubr.f32.gmra.mxu0 %v1187
        %v1284 = vpop.f32.mrf.mxu0
        %v1285 = vadd.f32 %v1156, %v1284
        %v1286 = vpop.f32.mrf.mxu0
        %1287 = vmatprep.mubr.f32.mxu0 0.0
        %1288 = vmatmul.mubr.f32.gmra.mxu0 %v1190
        %v1289 = vpop.f32.mrf.mxu0
        %v1290 = vadd.f32 %v1161, %v1289
        %v1291 = vpop.f32.mrf.mxu0
        %1292 = vmatprep.mubr.f32.mxu0 0.0
        %1293 = vmatmul.mubr.f32.gmra.mxu0 %v1193
        %v1294 = vpop.f32.mrf.mxu0
        %v1295 = vadd.f32 %v1166, %v1294
        %v1296 = vpop.f32.mrf.mxu0
        %1297 = vmatprep.mubr.f32.mxu0 0.0
        %1298 = vmatmul.mubr.f32.gmra.mxu0 %v1196
        %v1299 = vpop.f32.mrf.mxu0
        %v1300 = vadd.f32 %v1171, %v1299
        %v1301 = vpop.f32.mrf.mxu0
        %1302 = vdwg.mxu0
        %s1303 = scalar_lea.vmem %s3, 128
        %v1304 = vld [vmem:[%s1303] sm:$0xff]
        %v1305 = vld [vmem:[%s1303 + $0x8] sm:$0xff]
        %v1306 = vld [vmem:[%s1303 + $0x10] sm:$0xff]
        %v1307 = vld [vmem:[%s1303 + $0x18] sm:$0xff]
        %v1308 = vld [vmem:[%s1303 + $0x20] sm:$0xff]
        %v1309 = vld [vmem:[%s1303 + $0x28] sm:$0xff]
        %v1310 = vld [vmem:[%s1303 + $0x30] sm:$0xff]
        %v1311 = vld [vmem:[%s1303 + $0x38] sm:$0xff]
        %v1313 = vsel %vm767, %v1304, 0
        %v1316 = vsel %vm767, %v1305, 0
        %v1319 = vsel %vm767, %v1306, 0
        %v1322 = vsel %vm767, %v1307, 0
        %v1325 = vsel %vm767, %v1308, 0
        %v1328 = vsel %vm767, %v1309, 0
        %v1331 = vsel %vm767, %v1310, 0
        %v1334 = vsel %vm767, %v1311, 0
        %1336 = vmatprep.subr.mxu0 0.0
        %1337 = vmatpush1.msra.mxu0 0.0
        %1338 = vmatprep.subr.mxu0 0.0
        %1339 = vmatpush1.msra.mxu0 0.0
        %1340 = vmatprep.subr.mxu0 0.0
        %1341 = vmatpush1.msra.mxu0 0.0
        %1342 = vmatprep.subr.mxu0 0.0
        %1343 = vmatpush1.msra.mxu0 0.0
        %1344 = vmatprep.subr.mxu0 0.0
        %1345 = vmatpush1.msra.mxu0 0.0
        %1346 = vmatprep.subr.mxu0 0.0
        %1347 = vmatpush1.msra.mxu0 0.0
        %1348 = vmatprep.subr.mxu0 0.0
        %1349 = vmatpush1.msra.mxu0 0.0
        %1350 = vmatprep.subr.mxu0 0.0
        %1351 = vmatpush1.msra.mxu0 0.0
        %1352 = vmatprep.subr.mxu0 0.0
        %1353 = vmatpush1.msra.mxu0 %v758
        %1354 = vmatprep.subr.mxu0 0.0
        %1355 = vmatpush1.msra.mxu0 %v757
        %1356 = vmatprep.subr.mxu0 0.0
        %1357 = vmatpush1.msra.mxu0 %v756
        %1358 = vmatprep.subr.mxu0 0.0
        %1359 = vmatpush1.msra.mxu0 %v755
        %1360 = vmatprep.subr.mxu0 0.0
        %1361 = vmatpush1.msra.mxu0 %v754
        %1362 = vmatprep.subr.mxu0 0.0
        %1363 = vmatpush1.msra.mxu0 %v753
        %1364 = vmatprep.subr.mxu0 0.0
        %1365 = vmatpush1.msra.mxu0 %v752
        %1366 = vmatprep.subr.mxu0 0.0
        %1367 = vmatpush1.msra.mxu0 %v751
        %1368 = vmatprep.subr.mxu0 0.0
        %1369 = vmatpush2.msra.mxu0 0.0
        %1370 = vmatprep.subr.mxu0 0.0
        %1371 = vmatpush2.msra.mxu0 0.0
        %1372 = vmatprep.subr.mxu0 0.0
        %1373 = vmatpush2.msra.mxu0 0.0
        %1374 = vmatprep.subr.mxu0 0.0
        %1375 = vmatpush2.msra.mxu0 0.0
        %1376 = vmatprep.subr.mxu0 0.0
        %1377 = vmatpush2.msra.mxu0 0.0
        %1378 = vmatprep.subr.mxu0 0.0
        %1379 = vmatpush2.msra.mxu0 0.0
        %1380 = vmatprep.subr.mxu0 0.0
        %1381 = vmatpush2.msra.mxu0 0.0
        %1382 = vmatprep.subr.mxu0 0.0
        %1383 = vmatpush2.msra.mxu0 0.0
        %1384 = vmatprep.subr.mxu0 0.0
        %1385 = vmatpush2.msra.mxu0 0.0
        %1386 = vmatprep.subr.mxu0 0.0
        %1387 = vmatpush2.msra.mxu0 0.0
        %1388 = vmatprep.subr.mxu0 0.0
        %1389 = vmatpush2.msra.mxu0 0.0
        %1390 = vmatprep.subr.mxu0 0.0
        %1391 = vmatpush2.msra.mxu0 0.0
        %1392 = vmatprep.subr.mxu0 0.0
        %1393 = vmatpush2.msra.mxu0 0.0
        %1394 = vmatprep.subr.mxu0 0.0
        %1395 = vmatpush2.msra.mxu0 0.0
        %1396 = vmatprep.subr.mxu0 0.0
        %1397 = vmatpush2.msra.mxu0 0.0
        %1398 = vmatprep.subr.mxu0 0.0
        %1399 = vmatpush2.msra.mxu0 0.0
        %1400 = vmatprep.mubr.f32.mxu0 0.0
        %1401 = vmatmul.mubr.f32.gmra.mxu0 %v1313
        %v1402 = vpop.f32.mrf.mxu0
        %v1403 = vadd.f32 0.0, %v1402
        %v1404 = vpop.f32.mrf.mxu0
        %1405 = vmatprep.mubr.f32.mxu0 0.0
        %1406 = vmatmul.mubr.f32.gmra.mxu0 %v1316
        %v1407 = vpop.f32.mrf.mxu0
        %v1408 = vadd.f32 0.0, %v1407
        %v1409 = vpop.f32.mrf.mxu0
        %1410 = vmatprep.mubr.f32.mxu0 0.0
        %1411 = vmatmul.mubr.f32.gmra.mxu0 %v1319
        %v1412 = vpop.f32.mrf.mxu0
        %v1413 = vadd.f32 0.0, %v1412
        %v1414 = vpop.f32.mrf.mxu0
        %1415 = vmatprep.mubr.f32.mxu0 0.0
        %1416 = vmatmul.mubr.f32.gmra.mxu0 %v1322
        %v1417 = vpop.f32.mrf.mxu0
        %v1418 = vadd.f32 0.0, %v1417
        %v1419 = vpop.f32.mrf.mxu0
        %1420 = vmatprep.mubr.f32.mxu0 0.0
        %1421 = vmatmul.mubr.f32.gmra.mxu0 %v1325
        %v1422 = vpop.f32.mrf.mxu0
        %v1423 = vadd.f32 0.0, %v1422
        %v1424 = vpop.f32.mrf.mxu0
        %1425 = vmatprep.mubr.f32.mxu0 0.0
        %1426 = vmatmul.mubr.f32.gmra.mxu0 %v1328
        %v1427 = vpop.f32.mrf.mxu0
        %v1428 = vadd.f32 0.0, %v1427
        %v1429 = vpop.f32.mrf.mxu0
        %1430 = vmatprep.mubr.f32.mxu0 0.0
        %1431 = vmatmul.mubr.f32.gmra.mxu0 %v1331
        %v1432 = vpop.f32.mrf.mxu0
        %v1433 = vadd.f32 0.0, %v1432
        %v1434 = vpop.f32.mrf.mxu0
        %1435 = vmatprep.mubr.f32.mxu0 0.0
        %1436 = vmatmul.mubr.f32.gmra.mxu0 %v1334
        %v1437 = vpop.f32.mrf.mxu0
        %v1438 = vadd.f32 0.0, %v1437
        %v1439 = vpop.f32.mrf.mxu0
        %1440 = vdwg.mxu0
        %s1441 = scalar_lea.vmem %s4, 64
        %v1442 = vld [vmem:[%s1441] sm:$0xff]
        %v1443 = vld [vmem:[%s1441 + $0x8] sm:$0xff]
        %v1444 = vld [vmem:[%s1441 + $0x10] sm:$0xff]
        %v1445 = vld [vmem:[%s1441 + $0x18] sm:$0xff]
        %v1447 = vsel %vm1044, %v1403, 0
        %v1450 = vsel %vm1044, %v1408, 0
        %v1453 = vsel %vm1044, %v1413, 0
        %v1456 = vsel %vm1044, %v1418, 0
        %v1459 = vsel %vm1044, %v1423, 0
        %v1462 = vsel %vm1044, %v1428, 0
        %v1465 = vsel %vm1044, %v1433, 0
        %v1468 = vsel %vm1044, %v1438, 0
        %1470 = vmatprep.subr.mxu0 0.0
        %1471 = vmatpush1.msra.mxu0 0.0
        %1472 = vmatprep.subr.mxu0 0.0
        %1473 = vmatpush1.msra.mxu0 0.0
        %1474 = vmatprep.subr.mxu0 0.0
        %1475 = vmatpush1.msra.mxu0 0.0
        %1476 = vmatprep.subr.mxu0 0.0
        %1477 = vmatpush1.msra.mxu0 0.0
        %1478 = vmatprep.subr.mxu0 0.0
        %1479 = vmatpush1.msra.mxu0 0.0
        %1480 = vmatprep.subr.mxu0 0.0
        %1481 = vmatpush1.msra.mxu0 0.0
        %1482 = vmatprep.subr.mxu0 0.0
        %1483 = vmatpush1.msra.mxu0 0.0
        %1484 = vmatprep.subr.mxu0 0.0
        %1485 = vmatpush1.msra.mxu0 0.0
        %1486 = vmatprep.subr.mxu0 0.0
        %1487 = vmatpush1.msra.mxu0 0.0
        %1488 = vmatprep.subr.mxu0 0.0
        %1489 = vmatpush1.msra.mxu0 0.0
        %1490 = vmatprep.subr.mxu0 0.0
        %1491 = vmatpush1.msra.mxu0 0.0
        %1492 = vmatprep.subr.mxu0 0.0
        %1493 = vmatpush1.msra.mxu0 0.0
        %1494 = vmatprep.subr.mxu0 0.0
        %1495 = vmatpush1.msra.mxu0 %v1445
        %1496 = vmatprep.subr.mxu0 0.0
        %1497 = vmatpush1.msra.mxu0 %v1444
        %1498 = vmatprep.subr.mxu0 0.0
        %1499 = vmatpush1.msra.mxu0 %v1443
        %1500 = vmatprep.subr.mxu0 0.0
        %1501 = vmatpush1.msra.mxu0 %v1442
        %1502 = vmatprep.subr.mxu0 0.0
        %1503 = vmatpush2.msra.mxu0 0.0
        %1504 = vmatprep.subr.mxu0 0.0
        %1505 = vmatpush2.msra.mxu0 0.0
        %1506 = vmatprep.subr.mxu0 0.0
        %1507 = vmatpush2.msra.mxu0 0.0
        %1508 = vmatprep.subr.mxu0 0.0
        %1509 = vmatpush2.msra.mxu0 0.0
        %1510 = vmatprep.subr.mxu0 0.0
        %1511 = vmatpush2.msra.mxu0 0.0
        %1512 = vmatprep.subr.mxu0 0.0
        %1513 = vmatpush2.msra.mxu0 0.0
        %1514 = vmatprep.subr.mxu0 0.0
        %1515 = vmatpush2.msra.mxu0 0.0
        %1516 = vmatprep.subr.mxu0 0.0
        %1517 = vmatpush2.msra.mxu0 0.0
        %1518 = vmatprep.subr.mxu0 0.0
        %1519 = vmatpush2.msra.mxu0 0.0
        %1520 = vmatprep.subr.mxu0 0.0
        %1521 = vmatpush2.msra.mxu0 0.0
        %1522 = vmatprep.subr.mxu0 0.0
        %1523 = vmatpush2.msra.mxu0 0.0
        %1524 = vmatprep.subr.mxu0 0.0
        %1525 = vmatpush2.msra.mxu0 0.0
        %1526 = vmatprep.subr.mxu0 0.0
        %1527 = vmatpush2.msra.mxu0 0.0
        %1528 = vmatprep.subr.mxu0 0.0
        %1529 = vmatpush2.msra.mxu0 0.0
        %1530 = vmatprep.subr.mxu0 0.0
        %1531 = vmatpush2.msra.mxu0 0.0
        %1532 = vmatprep.subr.mxu0 0.0
        %1533 = vmatpush2.msra.mxu0 0.0
        %1534 = vmatprep.mubr.f32.mxu0 0.0
        %1535 = vmatmul.mubr.f32.gmra.mxu0 %v1447
        %v1536 = vpop.f32.mrf.mxu0
        %v1537 = vadd.f32 0.0, %v1536
        %v1538 = vpop.f32.mrf.mxu0
        %1539 = vmatprep.mubr.f32.mxu0 0.0
        %1540 = vmatmul.mubr.f32.gmra.mxu0 %v1450
        %v1541 = vpop.f32.mrf.mxu0
        %v1542 = vadd.f32 0.0, %v1541
        %v1543 = vpop.f32.mrf.mxu0
        %1544 = vmatprep.mubr.f32.mxu0 0.0
        %1545 = vmatmul.mubr.f32.gmra.mxu0 %v1453
        %v1546 = vpop.f32.mrf.mxu0
        %v1547 = vadd.f32 0.0, %v1546
        %v1548 = vpop.f32.mrf.mxu0
        %1549 = vmatprep.mubr.f32.mxu0 0.0
        %1550 = vmatmul.mubr.f32.gmra.mxu0 %v1456
        %v1551 = vpop.f32.mrf.mxu0
        %v1552 = vadd.f32 0.0, %v1551
        %v1553 = vpop.f32.mrf.mxu0
        %1554 = vmatprep.mubr.f32.mxu0 0.0
        %1555 = vmatmul.mubr.f32.gmra.mxu0 %v1459
        %v1556 = vpop.f32.mrf.mxu0
        %v1557 = vadd.f32 0.0, %v1556
        %v1558 = vpop.f32.mrf.mxu0
        %1559 = vmatprep.mubr.f32.mxu0 0.0
        %1560 = vmatmul.mubr.f32.gmra.mxu0 %v1462
        %v1561 = vpop.f32.mrf.mxu0
        %v1562 = vadd.f32 0.0, %v1561
        %v1563 = vpop.f32.mrf.mxu0
        %1564 = vmatprep.mubr.f32.mxu0 0.0
        %1565 = vmatmul.mubr.f32.gmra.mxu0 %v1465
        %v1566 = vpop.f32.mrf.mxu0
        %v1567 = vadd.f32 0.0, %v1566
        %v1568 = vpop.f32.mrf.mxu0
        %1569 = vmatprep.mubr.f32.mxu0 0.0
        %1570 = vmatmul.mubr.f32.gmra.mxu0 %v1468
        %v1571 = vpop.f32.mrf.mxu0
        %v1572 = vadd.f32 0.0, %v1571
        %v1573 = vpop.f32.mrf.mxu0
        %1574 = vdwg.mxu0
        %v1575 = vadd.f32 %v1265, %v1537
        %v1576 = vadd.f32 %v1270, %v1542
        %v1577 = vadd.f32 %v1275, %v1547
        %v1578 = vadd.f32 %v1280, %v1552
        %v1579 = vadd.f32 %v1285, %v1557
        %v1580 = vadd.f32 %v1290, %v1562
        %v1581 = vadd.f32 %v1295, %v1567
        %v1582 = vadd.f32 %v1300, %v1572
        %s1583 = scalar_lea.vmem %s3, 192
        %v1584 = vld [vmem:[%s1583] sm:$0xff]
        %v1585 = vld [vmem:[%s1583 + $0x8] sm:$0xff]
        %v1586 = vld [vmem:[%s1583 + $0x10] sm:$0xff]
        %v1587 = vld [vmem:[%s1583 + $0x18] sm:$0xff]
        %v1588 = vld [vmem:[%s1583 + $0x20] sm:$0xff]
        %v1589 = vld [vmem:[%s1583 + $0x28] sm:$0xff]
        %v1590 = vld [vmem:[%s1583 + $0x30] sm:$0xff]
        %v1591 = vld [vmem:[%s1583 + $0x38] sm:$0xff]
        %v1593 = vsel %vm767, %v1584, 0
        %v1596 = vsel %vm767, %v1585, 0
        %v1599 = vsel %vm767, %v1586, 0
        %v1602 = vsel %vm767, %v1587, 0
        %v1605 = vsel %vm767, %v1588, 0
        %v1608 = vsel %vm767, %v1589, 0
        %v1611 = vsel %vm767, %v1590, 0
        %v1614 = vsel %vm767, %v1591, 0
        %1616 = vmatprep.subr.mxu0 0.0
        %1617 = vmatpush1.msra.mxu0 0.0
        %1618 = vmatprep.subr.mxu0 0.0
        %1619 = vmatpush1.msra.mxu0 0.0
        %1620 = vmatprep.subr.mxu0 0.0
        %1621 = vmatpush1.msra.mxu0 0.0
        %1622 = vmatprep.subr.mxu0 0.0
        %1623 = vmatpush1.msra.mxu0 0.0
        %1624 = vmatprep.subr.mxu0 0.0
        %1625 = vmatpush1.msra.mxu0 0.0
        %1626 = vmatprep.subr.mxu0 0.0
        %1627 = vmatpush1.msra.mxu0 0.0
        %1628 = vmatprep.subr.mxu0 0.0
        %1629 = vmatpush1.msra.mxu0 0.0
        %1630 = vmatprep.subr.mxu0 0.0
        %1631 = vmatpush1.msra.mxu0 0.0
        %1632 = vmatprep.subr.mxu0 0.0
        %1633 = vmatpush1.msra.mxu0 %v758
        %1634 = vmatprep.subr.mxu0 0.0
        %1635 = vmatpush1.msra.mxu0 %v757
        %1636 = vmatprep.subr.mxu0 0.0
        %1637 = vmatpush1.msra.mxu0 %v756
        %1638 = vmatprep.subr.mxu0 0.0
        %1639 = vmatpush1.msra.mxu0 %v755
        %1640 = vmatprep.subr.mxu0 0.0
        %1641 = vmatpush1.msra.mxu0 %v754
        %1642 = vmatprep.subr.mxu0 0.0
        %1643 = vmatpush1.msra.mxu0 %v753
        %1644 = vmatprep.subr.mxu0 0.0
        %1645 = vmatpush1.msra.mxu0 %v752
        %1646 = vmatprep.subr.mxu0 0.0
        %1647 = vmatpush1.msra.mxu0 %v751
        %1648 = vmatprep.subr.mxu0 0.0
        %1649 = vmatpush2.msra.mxu0 0.0
        %1650 = vmatprep.subr.mxu0 0.0
        %1651 = vmatpush2.msra.mxu0 0.0
        %1652 = vmatprep.subr.mxu0 0.0
        %1653 = vmatpush2.msra.mxu0 0.0
        %1654 = vmatprep.subr.mxu0 0.0
        %1655 = vmatpush2.msra.mxu0 0.0
        %1656 = vmatprep.subr.mxu0 0.0
        %1657 = vmatpush2.msra.mxu0 0.0
        %1658 = vmatprep.subr.mxu0 0.0
        %1659 = vmatpush2.msra.mxu0 0.0
        %1660 = vmatprep.subr.mxu0 0.0
        %1661 = vmatpush2.msra.mxu0 0.0
        %1662 = vmatprep.subr.mxu0 0.0
        %1663 = vmatpush2.msra.mxu0 0.0
        %1664 = vmatprep.subr.mxu0 0.0
        %1665 = vmatpush2.msra.mxu0 0.0
        %1666 = vmatprep.subr.mxu0 0.0
        %1667 = vmatpush2.msra.mxu0 0.0
        %1668 = vmatprep.subr.mxu0 0.0
        %1669 = vmatpush2.msra.mxu0 0.0
        %1670 = vmatprep.subr.mxu0 0.0
        %1671 = vmatpush2.msra.mxu0 0.0
        %1672 = vmatprep.subr.mxu0 0.0
        %1673 = vmatpush2.msra.mxu0 0.0
        %1674 = vmatprep.subr.mxu0 0.0
        %1675 = vmatpush2.msra.mxu0 0.0
        %1676 = vmatprep.subr.mxu0 0.0
        %1677 = vmatpush2.msra.mxu0 0.0
        %1678 = vmatprep.subr.mxu0 0.0
        %1679 = vmatpush2.msra.mxu0 0.0
        %1680 = vmatprep.mubr.f32.mxu0 0.0
        %1681 = vmatmul.mubr.f32.gmra.mxu0 %v1593
        %v1682 = vpop.f32.mrf.mxu0
        %v1683 = vadd.f32 0.0, %v1682
        %v1684 = vpop.f32.mrf.mxu0
        %1685 = vmatprep.mubr.f32.mxu0 0.0
        %1686 = vmatmul.mubr.f32.gmra.mxu0 %v1596
        %v1687 = vpop.f32.mrf.mxu0
        %v1688 = vadd.f32 0.0, %v1687
        %v1689 = vpop.f32.mrf.mxu0
        %1690 = vmatprep.mubr.f32.mxu0 0.0
        %1691 = vmatmul.mubr.f32.gmra.mxu0 %v1599
        %v1692 = vpop.f32.mrf.mxu0
        %v1693 = vadd.f32 0.0, %v1692
        %v1694 = vpop.f32.mrf.mxu0
        %1695 = vmatprep.mubr.f32.mxu0 0.0
        %1696 = vmatmul.mubr.f32.gmra.mxu0 %v1602
        %v1697 = vpop.f32.mrf.mxu0
        %v1698 = vadd.f32 0.0, %v1697
        %v1699 = vpop.f32.mrf.mxu0
        %1700 = vmatprep.mubr.f32.mxu0 0.0
        %1701 = vmatmul.mubr.f32.gmra.mxu0 %v1605
        %v1702 = vpop.f32.mrf.mxu0
        %v1703 = vadd.f32 0.0, %v1702
        %v1704 = vpop.f32.mrf.mxu0
        %1705 = vmatprep.mubr.f32.mxu0 0.0
        %1706 = vmatmul.mubr.f32.gmra.mxu0 %v1608
        %v1707 = vpop.f32.mrf.mxu0
        %v1708 = vadd.f32 0.0, %v1707
        %v1709 = vpop.f32.mrf.mxu0
        %1710 = vmatprep.mubr.f32.mxu0 0.0
        %1711 = vmatmul.mubr.f32.gmra.mxu0 %v1611
        %v1712 = vpop.f32.mrf.mxu0
        %v1713 = vadd.f32 0.0, %v1712
        %v1714 = vpop.f32.mrf.mxu0
        %1715 = vmatprep.mubr.f32.mxu0 0.0
        %1716 = vmatmul.mubr.f32.gmra.mxu0 %v1614
        %v1717 = vpop.f32.mrf.mxu0
        %v1718 = vadd.f32 0.0, %v1717
        %v1719 = vpop.f32.mrf.mxu0
        %1720 = vdwg.mxu0
        %s1721 = scalar_lea.vmem %s4, 96
        %v1722 = vld [vmem:[%s1721] sm:$0xff]
        %v1723 = vld [vmem:[%s1721 + $0x8] sm:$0xff]
        %v1724 = vld [vmem:[%s1721 + $0x10] sm:$0xff]
        %v1725 = vld [vmem:[%s1721 + $0x18] sm:$0xff]
        %v1727 = vsel %vm1044, %v1683, 0
        %v1730 = vsel %vm1044, %v1688, 0
        %v1733 = vsel %vm1044, %v1693, 0
        %v1736 = vsel %vm1044, %v1698, 0
        %v1739 = vsel %vm1044, %v1703, 0
        %v1742 = vsel %vm1044, %v1708, 0
        %v1745 = vsel %vm1044, %v1713, 0
        %v1748 = vsel %vm1044, %v1718, 0
        %1750 = vmatprep.subr.mxu0 0.0
        %1751 = vmatpush1.msra.mxu0 0.0
        %1752 = vmatprep.subr.mxu0 0.0
        %1753 = vmatpush1.msra.mxu0 0.0
        %1754 = vmatprep.subr.mxu0 0.0
        %1755 = vmatpush1.msra.mxu0 0.0
        %1756 = vmatprep.subr.mxu0 0.0
        %1757 = vmatpush1.msra.mxu0 0.0
        %1758 = vmatprep.subr.mxu0 0.0
        %1759 = vmatpush1.msra.mxu0 0.0
        %1760 = vmatprep.subr.mxu0 0.0
        %1761 = vmatpush1.msra.mxu0 0.0
        %1762 = vmatprep.subr.mxu0 0.0
        %1763 = vmatpush1.msra.mxu0 0.0
        %1764 = vmatprep.subr.mxu0 0.0
        %1765 = vmatpush1.msra.mxu0 0.0
        %1766 = vmatprep.subr.mxu0 0.0
        %1767 = vmatpush1.msra.mxu0 0.0
        %1768 = vmatprep.subr.mxu0 0.0
        %1769 = vmatpush1.msra.mxu0 0.0
        %1770 = vmatprep.subr.mxu0 0.0
        %1771 = vmatpush1.msra.mxu0 0.0
        %1772 = vmatprep.subr.mxu0 0.0
        %1773 = vmatpush1.msra.mxu0 0.0
        %1774 = vmatprep.subr.mxu0 0.0
        %1775 = vmatpush1.msra.mxu0 %v1725
        %1776 = vmatprep.subr.mxu0 0.0
        %1777 = vmatpush1.msra.mxu0 %v1724
        %1778 = vmatprep.subr.mxu0 0.0
        %1779 = vmatpush1.msra.mxu0 %v1723
        %1780 = vmatprep.subr.mxu0 0.0
        %1781 = vmatpush1.msra.mxu0 %v1722
        %1782 = vmatprep.subr.mxu0 0.0
        %1783 = vmatpush2.msra.mxu0 0.0
        %1784 = vmatprep.subr.mxu0 0.0
        %1785 = vmatpush2.msra.mxu0 0.0
        %1786 = vmatprep.subr.mxu0 0.0
        %1787 = vmatpush2.msra.mxu0 0.0
        %1788 = vmatprep.subr.mxu0 0.0
        %1789 = vmatpush2.msra.mxu0 0.0
        %1790 = vmatprep.subr.mxu0 0.0
        %1791 = vmatpush2.msra.mxu0 0.0
        %1792 = vmatprep.subr.mxu0 0.0
        %1793 = vmatpush2.msra.mxu0 0.0
        %1794 = vmatprep.subr.mxu0 0.0
        %1795 = vmatpush2.msra.mxu0 0.0
        %1796 = vmatprep.subr.mxu0 0.0
        %1797 = vmatpush2.msra.mxu0 0.0
        %1798 = vmatprep.subr.mxu0 0.0
        %1799 = vmatpush2.msra.mxu0 0.0
        %1800 = vmatprep.subr.mxu0 0.0
        %1801 = vmatpush2.msra.mxu0 0.0
        %1802 = vmatprep.subr.mxu0 0.0
        %1803 = vmatpush2.msra.mxu0 0.0
        %1804 = vmatprep.subr.mxu0 0.0
        %1805 = vmatpush2.msra.mxu0 0.0
        %1806 = vmatprep.subr.mxu0 0.0
        %1807 = vmatpush2.msra.mxu0 0.0
        %1808 = vmatprep.subr.mxu0 0.0
        %1809 = vmatpush2.msra.mxu0 0.0
        %1810 = vmatprep.subr.mxu0 0.0
        %1811 = vmatpush2.msra.mxu0 0.0
        %1812 = vmatprep.subr.mxu0 0.0
        %1813 = vmatpush2.msra.mxu0 0.0
        %1814 = vmatprep.mubr.f32.mxu0 0.0
        %1815 = vmatmul.mubr.f32.gmra.mxu0 %v1727
        %v1816 = vpop.f32.mrf.mxu0
        %v1817 = vadd.f32 0.0, %v1816
        %v1818 = vpop.f32.mrf.mxu0
        %1819 = vmatprep.mubr.f32.mxu0 0.0
        %1820 = vmatmul.mubr.f32.gmra.mxu0 %v1730
        %v1821 = vpop.f32.mrf.mxu0
        %v1822 = vadd.f32 0.0, %v1821
        %v1823 = vpop.f32.mrf.mxu0
        %1824 = vmatprep.mubr.f32.mxu0 0.0
        %1825 = vmatmul.mubr.f32.gmra.mxu0 %v1733
        %v1826 = vpop.f32.mrf.mxu0
        %v1827 = vadd.f32 0.0, %v1826
        %v1828 = vpop.f32.mrf.mxu0
        %1829 = vmatprep.mubr.f32.mxu0 0.0
        %1830 = vmatmul.mubr.f32.gmra.mxu0 %v1736
        %v1831 = vpop.f32.mrf.mxu0
        %v1832 = vadd.f32 0.0, %v1831
        %v1833 = vpop.f32.mrf.mxu0
        %1834 = vmatprep.mubr.f32.mxu0 0.0
        %1835 = vmatmul.mubr.f32.gmra.mxu0 %v1739
        %v1836 = vpop.f32.mrf.mxu0
        %v1837 = vadd.f32 0.0, %v1836
        %v1838 = vpop.f32.mrf.mxu0
        %1839 = vmatprep.mubr.f32.mxu0 0.0
        %1840 = vmatmul.mubr.f32.gmra.mxu0 %v1742
        %v1841 = vpop.f32.mrf.mxu0
        %v1842 = vadd.f32 0.0, %v1841
        %v1843 = vpop.f32.mrf.mxu0
        %1844 = vmatprep.mubr.f32.mxu0 0.0
        %1845 = vmatmul.mubr.f32.gmra.mxu0 %v1745
        %v1846 = vpop.f32.mrf.mxu0
        %v1847 = vadd.f32 0.0, %v1846
        %v1848 = vpop.f32.mrf.mxu0
        %1849 = vmatprep.mubr.f32.mxu0 0.0
        %1850 = vmatmul.mubr.f32.gmra.mxu0 %v1748
        %v1851 = vpop.f32.mrf.mxu0
        %v1852 = vadd.f32 0.0, %v1851
        %v1853 = vpop.f32.mrf.mxu0
        %1854 = vdwg.mxu0
        %v1855 = vadd.f32 %v1575, %v1817
        %v1856 = vadd.f32 %v1576, %v1822
        %v1857 = vadd.f32 %v1577, %v1827
        %v1858 = vadd.f32 %v1578, %v1832
        %v1859 = vadd.f32 %v1579, %v1837
        %v1860 = vadd.f32 %v1580, %v1842
        %v1861 = vadd.f32 %v1581, %v1847
        %v1862 = vadd.f32 %v1582, %v1852
        %s1863 = scalar_lea.vmem %s3, 256
        %v1864 = vld [vmem:[%s1863] sm:$0xff]
        %v1865 = vld [vmem:[%s1863 + $0x8] sm:$0xff]
        %v1866 = vld [vmem:[%s1863 + $0x10] sm:$0xff]
        %v1867 = vld [vmem:[%s1863 + $0x18] sm:$0xff]
        %v1868 = vld [vmem:[%s1863 + $0x20] sm:$0xff]
        %v1869 = vld [vmem:[%s1863 + $0x28] sm:$0xff]
        %v1870 = vld [vmem:[%s1863 + $0x30] sm:$0xff]
        %v1871 = vld [vmem:[%s1863 + $0x38] sm:$0xff]
        %v1873 = vsel %vm767, %v1864, 0
        %v1876 = vsel %vm767, %v1865, 0
        %v1879 = vsel %vm767, %v1866, 0
        %v1882 = vsel %vm767, %v1867, 0
        %v1885 = vsel %vm767, %v1868, 0
        %v1888 = vsel %vm767, %v1869, 0
        %v1891 = vsel %vm767, %v1870, 0
        %v1894 = vsel %vm767, %v1871, 0
        %1896 = vmatprep.subr.mxu0 0.0
        %1897 = vmatpush1.msra.mxu0 0.0
        %1898 = vmatprep.subr.mxu0 0.0
        %1899 = vmatpush1.msra.mxu0 0.0
        %1900 = vmatprep.subr.mxu0 0.0
        %1901 = vmatpush1.msra.mxu0 0.0
        %1902 = vmatprep.subr.mxu0 0.0
        %1903 = vmatpush1.msra.mxu0 0.0
        %1904 = vmatprep.subr.mxu0 0.0
        %1905 = vmatpush1.msra.mxu0 0.0
        %1906 = vmatprep.subr.mxu0 0.0
        %1907 = vmatpush1.msra.mxu0 0.0
        %1908 = vmatprep.subr.mxu0 0.0
        %1909 = vmatpush1.msra.mxu0 0.0
        %1910 = vmatprep.subr.mxu0 0.0
        %1911 = vmatpush1.msra.mxu0 0.0
        %1912 = vmatprep.subr.mxu0 0.0
        %1913 = vmatpush1.msra.mxu0 %v758
        %1914 = vmatprep.subr.mxu0 0.0
        %1915 = vmatpush1.msra.mxu0 %v757
        %1916 = vmatprep.subr.mxu0 0.0
        %1917 = vmatpush1.msra.mxu0 %v756
        %1918 = vmatprep.subr.mxu0 0.0
        %1919 = vmatpush1.msra.mxu0 %v755
        %1920 = vmatprep.subr.mxu0 0.0
        %1921 = vmatpush1.msra.mxu0 %v754
        %1922 = vmatprep.subr.mxu0 0.0
        %1923 = vmatpush1.msra.mxu0 %v753
        %1924 = vmatprep.subr.mxu0 0.0
        %1925 = vmatpush1.msra.mxu0 %v752
        %1926 = vmatprep.subr.mxu0 0.0
        %1927 = vmatpush1.msra.mxu0 %v751
        %1928 = vmatprep.subr.mxu0 0.0
        %1929 = vmatpush2.msra.mxu0 0.0
        %1930 = vmatprep.subr.mxu0 0.0
        %1931 = vmatpush2.msra.mxu0 0.0
        %1932 = vmatprep.subr.mxu0 0.0
        %1933 = vmatpush2.msra.mxu0 0.0
        %1934 = vmatprep.subr.mxu0 0.0
        %1935 = vmatpush2.msra.mxu0 0.0
        %1936 = vmatprep.subr.mxu0 0.0
        %1937 = vmatpush2.msra.mxu0 0.0
        %1938 = vmatprep.subr.mxu0 0.0
        %1939 = vmatpush2.msra.mxu0 0.0
        %1940 = vmatprep.subr.mxu0 0.0
        %1941 = vmatpush2.msra.mxu0 0.0
        %1942 = vmatprep.subr.mxu0 0.0
        %1943 = vmatpush2.msra.mxu0 0.0
        %1944 = vmatprep.subr.mxu0 0.0
        %1945 = vmatpush2.msra.mxu0 0.0
        %1946 = vmatprep.subr.mxu0 0.0
        %1947 = vmatpush2.msra.mxu0 0.0
        %1948 = vmatprep.subr.mxu0 0.0
        %1949 = vmatpush2.msra.mxu0 0.0
        %1950 = vmatprep.subr.mxu0 0.0
        %1951 = vmatpush2.msra.mxu0 0.0
        %1952 = vmatprep.subr.mxu0 0.0
        %1953 = vmatpush2.msra.mxu0 0.0
        %1954 = vmatprep.subr.mxu0 0.0
        %1955 = vmatpush2.msra.mxu0 0.0
        %1956 = vmatprep.subr.mxu0 0.0
        %1957 = vmatpush2.msra.mxu0 0.0
        %1958 = vmatprep.subr.mxu0 0.0
        %1959 = vmatpush2.msra.mxu0 0.0
        %1960 = vmatprep.mubr.f32.mxu0 0.0
        %1961 = vmatmul.mubr.f32.gmra.mxu0 %v1873
        %v1962 = vpop.f32.mrf.mxu0
        %v1963 = vadd.f32 0.0, %v1962
        %v1964 = vpop.f32.mrf.mxu0
        %1965 = vmatprep.mubr.f32.mxu0 0.0
        %1966 = vmatmul.mubr.f32.gmra.mxu0 %v1876
        %v1967 = vpop.f32.mrf.mxu0
        %v1968 = vadd.f32 0.0, %v1967
        %v1969 = vpop.f32.mrf.mxu0
        %1970 = vmatprep.mubr.f32.mxu0 0.0
        %1971 = vmatmul.mubr.f32.gmra.mxu0 %v1879
        %v1972 = vpop.f32.mrf.mxu0
        %v1973 = vadd.f32 0.0, %v1972
        %v1974 = vpop.f32.mrf.mxu0
        %1975 = vmatprep.mubr.f32.mxu0 0.0
        %1976 = vmatmul.mubr.f32.gmra.mxu0 %v1882
        %v1977 = vpop.f32.mrf.mxu0
        %v1978 = vadd.f32 0.0, %v1977
        %v1979 = vpop.f32.mrf.mxu0
        %1980 = vmatprep.mubr.f32.mxu0 0.0
        %1981 = vmatmul.mubr.f32.gmra.mxu0 %v1885
        %v1982 = vpop.f32.mrf.mxu0
        %v1983 = vadd.f32 0.0, %v1982
        %v1984 = vpop.f32.mrf.mxu0
        %1985 = vmatprep.mubr.f32.mxu0 0.0
        %1986 = vmatmul.mubr.f32.gmra.mxu0 %v1888
        %v1987 = vpop.f32.mrf.mxu0
        %v1988 = vadd.f32 0.0, %v1987
        %v1989 = vpop.f32.mrf.mxu0
        %1990 = vmatprep.mubr.f32.mxu0 0.0
        %1991 = vmatmul.mubr.f32.gmra.mxu0 %v1891
        %v1992 = vpop.f32.mrf.mxu0
        %v1993 = vadd.f32 0.0, %v1992
        %v1994 = vpop.f32.mrf.mxu0
        %1995 = vmatprep.mubr.f32.mxu0 0.0
        %1996 = vmatmul.mubr.f32.gmra.mxu0 %v1894
        %v1997 = vpop.f32.mrf.mxu0
        %v1998 = vadd.f32 0.0, %v1997
        %v1999 = vpop.f32.mrf.mxu0
        %2000 = vdwg.mxu0
        %s2001 = scalar_lea.vmem %s4, 128
        %v2002 = vld [vmem:[%s2001] sm:$0xff]
        %v2003 = vld [vmem:[%s2001 + $0x8] sm:$0xff]
        %v2004 = vld [vmem:[%s2001 + $0x10] sm:$0xff]
        %v2005 = vld [vmem:[%s2001 + $0x18] sm:$0xff]
        %v2007 = vsel %vm1044, %v1963, 0
        %v2010 = vsel %vm1044, %v1968, 0
        %v2013 = vsel %vm1044, %v1973, 0
        %v2016 = vsel %vm1044, %v1978, 0
        %v2019 = vsel %vm1044, %v1983, 0
        %v2022 = vsel %vm1044, %v1988, 0
        %v2025 = vsel %vm1044, %v1993, 0
        %v2028 = vsel %vm1044, %v1998, 0
        %2030 = vmatprep.subr.mxu0 0.0
        %2031 = vmatpush1.msra.mxu0 0.0
        %2032 = vmatprep.subr.mxu0 0.0
        %2033 = vmatpush1.msra.mxu0 0.0
        %2034 = vmatprep.subr.mxu0 0.0
        %2035 = vmatpush1.msra.mxu0 0.0
        %2036 = vmatprep.subr.mxu0 0.0
        %2037 = vmatpush1.msra.mxu0 0.0
        %2038 = vmatprep.subr.mxu0 0.0
        %2039 = vmatpush1.msra.mxu0 0.0
        %2040 = vmatprep.subr.mxu0 0.0
        %2041 = vmatpush1.msra.mxu0 0.0
        %2042 = vmatprep.subr.mxu0 0.0
        %2043 = vmatpush1.msra.mxu0 0.0
        %2044 = vmatprep.subr.mxu0 0.0
        %2045 = vmatpush1.msra.mxu0 0.0
        %2046 = vmatprep.subr.mxu0 0.0
        %2047 = vmatpush1.msra.mxu0 0.0
        %2048 = vmatprep.subr.mxu0 0.0
        %2049 = vmatpush1.msra.mxu0 0.0
        %2050 = vmatprep.subr.mxu0 0.0
        %2051 = vmatpush1.msra.mxu0 0.0
        %2052 = vmatprep.subr.mxu0 0.0
        %2053 = vmatpush1.msra.mxu0 0.0
        %2054 = vmatprep.subr.mxu0 0.0
        %2055 = vmatpush1.msra.mxu0 %v2005
        %2056 = vmatprep.subr.mxu0 0.0
        %2057 = vmatpush1.msra.mxu0 %v2004
        %2058 = vmatprep.subr.mxu0 0.0
        %2059 = vmatpush1.msra.mxu0 %v2003
        %2060 = vmatprep.subr.mxu0 0.0
        %2061 = vmatpush1.msra.mxu0 %v2002
        %2062 = vmatprep.subr.mxu0 0.0
        %2063 = vmatpush2.msra.mxu0 0.0
        %2064 = vmatprep.subr.mxu0 0.0
        %2065 = vmatpush2.msra.mxu0 0.0
        %2066 = vmatprep.subr.mxu0 0.0
        %2067 = vmatpush2.msra.mxu0 0.0
        %2068 = vmatprep.subr.mxu0 0.0
        %2069 = vmatpush2.msra.mxu0 0.0
        %2070 = vmatprep.subr.mxu0 0.0
        %2071 = vmatpush2.msra.mxu0 0.0
        %2072 = vmatprep.subr.mxu0 0.0
        %2073 = vmatpush2.msra.mxu0 0.0
        %2074 = vmatprep.subr.mxu0 0.0
        %2075 = vmatpush2.msra.mxu0 0.0
        %2076 = vmatprep.subr.mxu0 0.0
        %2077 = vmatpush2.msra.mxu0 0.0
        %2078 = vmatprep.subr.mxu0 0.0
        %2079 = vmatpush2.msra.mxu0 0.0
        %2080 = vmatprep.subr.mxu0 0.0
        %2081 = vmatpush2.msra.mxu0 0.0
        %2082 = vmatprep.subr.mxu0 0.0
        %2083 = vmatpush2.msra.mxu0 0.0
        %2084 = vmatprep.subr.mxu0 0.0
        %2085 = vmatpush2.msra.mxu0 0.0
        %2086 = vmatprep.subr.mxu0 0.0
        %2087 = vmatpush2.msra.mxu0 0.0
        %2088 = vmatprep.subr.mxu0 0.0
        %2089 = vmatpush2.msra.mxu0 0.0
        %2090 = vmatprep.subr.mxu0 0.0
        %2091 = vmatpush2.msra.mxu0 0.0
        %2092 = vmatprep.subr.mxu0 0.0
        %2093 = vmatpush2.msra.mxu0 0.0
        %2094 = vmatprep.mubr.f32.mxu0 0.0
        %2095 = vmatmul.mubr.f32.gmra.mxu0 %v2007
        %v2096 = vpop.f32.mrf.mxu0
        %v2097 = vadd.f32 0.0, %v2096
        %v2098 = vpop.f32.mrf.mxu0
        %2099 = vmatprep.mubr.f32.mxu0 0.0
        %2100 = vmatmul.mubr.f32.gmra.mxu0 %v2010
        %v2101 = vpop.f32.mrf.mxu0
        %v2102 = vadd.f32 0.0, %v2101
        %v2103 = vpop.f32.mrf.mxu0
        %2104 = vmatprep.mubr.f32.mxu0 0.0
        %2105 = vmatmul.mubr.f32.gmra.mxu0 %v2013
        %v2106 = vpop.f32.mrf.mxu0
        %v2107 = vadd.f32 0.0, %v2106
        %v2108 = vpop.f32.mrf.mxu0
        %2109 = vmatprep.mubr.f32.mxu0 0.0
        %2110 = vmatmul.mubr.f32.gmra.mxu0 %v2016
        %v2111 = vpop.f32.mrf.mxu0
        %v2112 = vadd.f32 0.0, %v2111
        %v2113 = vpop.f32.mrf.mxu0
        %2114 = vmatprep.mubr.f32.mxu0 0.0
        %2115 = vmatmul.mubr.f32.gmra.mxu0 %v2019
        %v2116 = vpop.f32.mrf.mxu0
        %v2117 = vadd.f32 0.0, %v2116
        %v2118 = vpop.f32.mrf.mxu0
        %2119 = vmatprep.mubr.f32.mxu0 0.0
        %2120 = vmatmul.mubr.f32.gmra.mxu0 %v2022
        %v2121 = vpop.f32.mrf.mxu0
        %v2122 = vadd.f32 0.0, %v2121
        %v2123 = vpop.f32.mrf.mxu0
        %2124 = vmatprep.mubr.f32.mxu0 0.0
        %2125 = vmatmul.mubr.f32.gmra.mxu0 %v2025
        %v2126 = vpop.f32.mrf.mxu0
        %v2127 = vadd.f32 0.0, %v2126
        %v2128 = vpop.f32.mrf.mxu0
        %2129 = vmatprep.mubr.f32.mxu0 0.0
        %2130 = vmatmul.mubr.f32.gmra.mxu0 %v2028
        %v2131 = vpop.f32.mrf.mxu0
        %v2132 = vadd.f32 0.0, %v2131
        %v2133 = vpop.f32.mrf.mxu0
        %2134 = vdwg.mxu0
        %v2135 = vadd.f32 %v1855, %v2097
        %v2136 = vadd.f32 %v1856, %v2102
        %v2137 = vadd.f32 %v1857, %v2107
        %v2138 = vadd.f32 %v1858, %v2112
        %v2139 = vadd.f32 %v1859, %v2117
        %v2140 = vadd.f32 %v1860, %v2122
        %v2141 = vadd.f32 %v1861, %v2127
        %v2142 = vadd.f32 %v1862, %v2132
        %s2143 = scalar_lea.vmem %s3, 320
        %v2144 = vld [vmem:[%s2143] sm:$0xff]
        %v2145 = vld [vmem:[%s2143 + $0x8] sm:$0xff]
        %v2146 = vld [vmem:[%s2143 + $0x10] sm:$0xff]
        %v2147 = vld [vmem:[%s2143 + $0x18] sm:$0xff]
        %v2148 = vld [vmem:[%s2143 + $0x20] sm:$0xff]
        %v2149 = vld [vmem:[%s2143 + $0x28] sm:$0xff]
        %v2150 = vld [vmem:[%s2143 + $0x30] sm:$0xff]
        %v2151 = vld [vmem:[%s2143 + $0x38] sm:$0xff]
        %v2153 = vsel %vm767, %v2144, 0
        %v2156 = vsel %vm767, %v2145, 0
        %v2159 = vsel %vm767, %v2146, 0
        %v2162 = vsel %vm767, %v2147, 0
        %v2165 = vsel %vm767, %v2148, 0
        %v2168 = vsel %vm767, %v2149, 0
        %v2171 = vsel %vm767, %v2150, 0
        %v2174 = vsel %vm767, %v2151, 0
        %2176 = vmatprep.subr.mxu0 0.0
        %2177 = vmatpush1.msra.mxu0 0.0
        %2178 = vmatprep.subr.mxu0 0.0
        %2179 = vmatpush1.msra.mxu0 0.0
        %2180 = vmatprep.subr.mxu0 0.0
        %2181 = vmatpush1.msra.mxu0 0.0
        %2182 = vmatprep.subr.mxu0 0.0
        %2183 = vmatpush1.msra.mxu0 0.0
        %2184 = vmatprep.subr.mxu0 0.0
        %2185 = vmatpush1.msra.mxu0 0.0
        %2186 = vmatprep.subr.mxu0 0.0
        %2187 = vmatpush1.msra.mxu0 0.0
        %2188 = vmatprep.subr.mxu0 0.0
        %2189 = vmatpush1.msra.mxu0 0.0
        %2190 = vmatprep.subr.mxu0 0.0
        %2191 = vmatpush1.msra.mxu0 0.0
        %2192 = vmatprep.subr.mxu0 0.0
        %2193 = vmatpush1.msra.mxu0 %v758
        %2194 = vmatprep.subr.mxu0 0.0
        %2195 = vmatpush1.msra.mxu0 %v757
        %2196 = vmatprep.subr.mxu0 0.0
        %2197 = vmatpush1.msra.mxu0 %v756
        %2198 = vmatprep.subr.mxu0 0.0
        %2199 = vmatpush1.msra.mxu0 %v755
        %2200 = vmatprep.subr.mxu0 0.0
        %2201 = vmatpush1.msra.mxu0 %v754
        %2202 = vmatprep.subr.mxu0 0.0
        %2203 = vmatpush1.msra.mxu0 %v753
        %2204 = vmatprep.subr.mxu0 0.0
        %2205 = vmatpush1.msra.mxu0 %v752
        %2206 = vmatprep.subr.mxu0 0.0
        %2207 = vmatpush1.msra.mxu0 %v751
        %2208 = vmatprep.subr.mxu0 0.0
        %2209 = vmatpush2.msra.mxu0 0.0
        %2210 = vmatprep.subr.mxu0 0.0
        %2211 = vmatpush2.msra.mxu0 0.0
        %2212 = vmatprep.subr.mxu0 0.0
        %2213 = vmatpush2.msra.mxu0 0.0
        %2214 = vmatprep.subr.mxu0 0.0
        %2215 = vmatpush2.msra.mxu0 0.0
        %2216 = vmatprep.subr.mxu0 0.0
        %2217 = vmatpush2.msra.mxu0 0.0
        %2218 = vmatprep.subr.mxu0 0.0
        %2219 = vmatpush2.msra.mxu0 0.0
        %2220 = vmatprep.subr.mxu0 0.0
        %2221 = vmatpush2.msra.mxu0 0.0
        %2222 = vmatprep.subr.mxu0 0.0
        %2223 = vmatpush2.msra.mxu0 0.0
        %2224 = vmatprep.subr.mxu0 0.0
        %2225 = vmatpush2.msra.mxu0 0.0
        %2226 = vmatprep.subr.mxu0 0.0
        %2227 = vmatpush2.msra.mxu0 0.0
        %2228 = vmatprep.subr.mxu0 0.0
        %2229 = vmatpush2.msra.mxu0 0.0
        %2230 = vmatprep.subr.mxu0 0.0
        %2231 = vmatpush2.msra.mxu0 0.0
        %2232 = vmatprep.subr.mxu0 0.0
        %2233 = vmatpush2.msra.mxu0 0.0
        %2234 = vmatprep.subr.mxu0 0.0
        %2235 = vmatpush2.msra.mxu0 0.0
        %2236 = vmatprep.subr.mxu0 0.0
        %2237 = vmatpush2.msra.mxu0 0.0
        %2238 = vmatprep.subr.mxu0 0.0
        %2239 = vmatpush2.msra.mxu0 0.0
        %2240 = vmatprep.mubr.f32.mxu0 0.0
        %2241 = vmatmul.mubr.f32.gmra.mxu0 %v2153
        %v2242 = vpop.f32.mrf.mxu0
        %v2243 = vadd.f32 0.0, %v2242
        %v2244 = vpop.f32.mrf.mxu0
        %2245 = vmatprep.mubr.f32.mxu0 0.0
        %2246 = vmatmul.mubr.f32.gmra.mxu0 %v2156
        %v2247 = vpop.f32.mrf.mxu0
        %v2248 = vadd.f32 0.0, %v2247
        %v2249 = vpop.f32.mrf.mxu0
        %2250 = vmatprep.mubr.f32.mxu0 0.0
        %2251 = vmatmul.mubr.f32.gmra.mxu0 %v2159
        %v2252 = vpop.f32.mrf.mxu0
        %v2253 = vadd.f32 0.0, %v2252
        %v2254 = vpop.f32.mrf.mxu0
        %2255 = vmatprep.mubr.f32.mxu0 0.0
        %2256 = vmatmul.mubr.f32.gmra.mxu0 %v2162
        %v2257 = vpop.f32.mrf.mxu0
        %v2258 = vadd.f32 0.0, %v2257
        %v2259 = vpop.f32.mrf.mxu0
        %2260 = vmatprep.mubr.f32.mxu0 0.0
        %2261 = vmatmul.mubr.f32.gmra.mxu0 %v2165
        %v2262 = vpop.f32.mrf.mxu0
        %v2263 = vadd.f32 0.0, %v2262
        %v2264 = vpop.f32.mrf.mxu0
        %2265 = vmatprep.mubr.f32.mxu0 0.0
        %2266 = vmatmul.mubr.f32.gmra.mxu0 %v2168
        %v2267 = vpop.f32.mrf.mxu0
        %v2268 = vadd.f32 0.0, %v2267
        %v2269 = vpop.f32.mrf.mxu0
        %2270 = vmatprep.mubr.f32.mxu0 0.0
        %2271 = vmatmul.mubr.f32.gmra.mxu0 %v2171
        %v2272 = vpop.f32.mrf.mxu0
        %v2273 = vadd.f32 0.0, %v2272
        %v2274 = vpop.f32.mrf.mxu0
        %2275 = vmatprep.mubr.f32.mxu0 0.0
        %2276 = vmatmul.mubr.f32.gmra.mxu0 %v2174
        %v2277 = vpop.f32.mrf.mxu0
        %v2278 = vadd.f32 0.0, %v2277
        %v2279 = vpop.f32.mrf.mxu0
        %2280 = vdwg.mxu0
        %s2281 = scalar_lea.vmem %s4, 160
        %v2282 = vld [vmem:[%s2281] sm:$0xff]
        %v2283 = vld [vmem:[%s2281 + $0x8] sm:$0xff]
        %v2284 = vld [vmem:[%s2281 + $0x10] sm:$0xff]
        %v2285 = vld [vmem:[%s2281 + $0x18] sm:$0xff]
        %v2287 = vsel %vm1044, %v2243, 0
        %v2290 = vsel %vm1044, %v2248, 0
        %v2293 = vsel %vm1044, %v2253, 0
        %v2296 = vsel %vm1044, %v2258, 0
        %v2299 = vsel %vm1044, %v2263, 0
        %v2302 = vsel %vm1044, %v2268, 0
        %v2305 = vsel %vm1044, %v2273, 0
        %v2308 = vsel %vm1044, %v2278, 0
        %2310 = vmatprep.subr.mxu0 0.0
        %2311 = vmatpush1.msra.mxu0 0.0
        %2312 = vmatprep.subr.mxu0 0.0
        %2313 = vmatpush1.msra.mxu0 0.0
        %2314 = vmatprep.subr.mxu0 0.0
        %2315 = vmatpush1.msra.mxu0 0.0
        %2316 = vmatprep.subr.mxu0 0.0
        %2317 = vmatpush1.msra.mxu0 0.0
        %2318 = vmatprep.subr.mxu0 0.0
        %2319 = vmatpush1.msra.mxu0 0.0
        %2320 = vmatprep.subr.mxu0 0.0
        %2321 = vmatpush1.msra.mxu0 0.0
        %2322 = vmatprep.subr.mxu0 0.0
        %2323 = vmatpush1.msra.mxu0 0.0
        %2324 = vmatprep.subr.mxu0 0.0
        %2325 = vmatpush1.msra.mxu0 0.0
        %2326 = vmatprep.subr.mxu0 0.0
        %2327 = vmatpush1.msra.mxu0 0.0
        %2328 = vmatprep.subr.mxu0 0.0
        %2329 = vmatpush1.msra.mxu0 0.0
        %2330 = vmatprep.subr.mxu0 0.0
        %2331 = vmatpush1.msra.mxu0 0.0
        %2332 = vmatprep.subr.mxu0 0.0
        %2333 = vmatpush1.msra.mxu0 0.0
        %2334 = vmatprep.subr.mxu0 0.0
        %2335 = vmatpush1.msra.mxu0 %v2285
        %2336 = vmatprep.subr.mxu0 0.0
        %2337 = vmatpush1.msra.mxu0 %v2284
        %2338 = vmatprep.subr.mxu0 0.0
        %2339 = vmatpush1.msra.mxu0 %v2283
        %2340 = vmatprep.subr.mxu0 0.0
        %2341 = vmatpush1.msra.mxu0 %v2282
        %2342 = vmatprep.subr.mxu0 0.0
        %2343 = vmatpush2.msra.mxu0 0.0
        %2344 = vmatprep.subr.mxu0 0.0
        %2345 = vmatpush2.msra.mxu0 0.0
        %2346 = vmatprep.subr.mxu0 0.0
        %2347 = vmatpush2.msra.mxu0 0.0
        %2348 = vmatprep.subr.mxu0 0.0
        %2349 = vmatpush2.msra.mxu0 0.0
        %2350 = vmatprep.subr.mxu0 0.0
        %2351 = vmatpush2.msra.mxu0 0.0
        %2352 = vmatprep.subr.mxu0 0.0
        %2353 = vmatpush2.msra.mxu0 0.0
        %2354 = vmatprep.subr.mxu0 0.0
        %2355 = vmatpush2.msra.mxu0 0.0
        %2356 = vmatprep.subr.mxu0 0.0
        %2357 = vmatpush2.msra.mxu0 0.0
        %2358 = vmatprep.subr.mxu0 0.0
        %2359 = vmatpush2.msra.mxu0 0.0
        %2360 = vmatprep.subr.mxu0 0.0
        %2361 = vmatpush2.msra.mxu0 0.0
        %2362 = vmatprep.subr.mxu0 0.0
        %2363 = vmatpush2.msra.mxu0 0.0
        %2364 = vmatprep.subr.mxu0 0.0
        %2365 = vmatpush2.msra.mxu0 0.0
        %2366 = vmatprep.subr.mxu0 0.0
        %2367 = vmatpush2.msra.mxu0 0.0
        %2368 = vmatprep.subr.mxu0 0.0
        %2369 = vmatpush2.msra.mxu0 0.0
        %2370 = vmatprep.subr.mxu0 0.0
        %2371 = vmatpush2.msra.mxu0 0.0
        %2372 = vmatprep.subr.mxu0 0.0
        %2373 = vmatpush2.msra.mxu0 0.0
        %2374 = vmatprep.mubr.f32.mxu0 0.0
        %2375 = vmatmul.mubr.f32.gmra.mxu0 %v2287
        %v2376 = vpop.f32.mrf.mxu0
        %v2377 = vadd.f32 0.0, %v2376
        %v2378 = vpop.f32.mrf.mxu0
        %2379 = vmatprep.mubr.f32.mxu0 0.0
        %2380 = vmatmul.mubr.f32.gmra.mxu0 %v2290
        %v2381 = vpop.f32.mrf.mxu0
        %v2382 = vadd.f32 0.0, %v2381
        %v2383 = vpop.f32.mrf.mxu0
        %2384 = vmatprep.mubr.f32.mxu0 0.0
        %2385 = vmatmul.mubr.f32.gmra.mxu0 %v2293
        %v2386 = vpop.f32.mrf.mxu0
        %v2387 = vadd.f32 0.0, %v2386
        %v2388 = vpop.f32.mrf.mxu0
        %2389 = vmatprep.mubr.f32.mxu0 0.0
        %2390 = vmatmul.mubr.f32.gmra.mxu0 %v2296
        %v2391 = vpop.f32.mrf.mxu0
        %v2392 = vadd.f32 0.0, %v2391
        %v2393 = vpop.f32.mrf.mxu0
        %2394 = vmatprep.mubr.f32.mxu0 0.0
        %2395 = vmatmul.mubr.f32.gmra.mxu0 %v2299
        %v2396 = vpop.f32.mrf.mxu0
        %v2397 = vadd.f32 0.0, %v2396
        %v2398 = vpop.f32.mrf.mxu0
        %2399 = vmatprep.mubr.f32.mxu0 0.0
        %2400 = vmatmul.mubr.f32.gmra.mxu0 %v2302
        %v2401 = vpop.f32.mrf.mxu0
        %v2402 = vadd.f32 0.0, %v2401
        %v2403 = vpop.f32.mrf.mxu0
        %2404 = vmatprep.mubr.f32.mxu0 0.0
        %2405 = vmatmul.mubr.f32.gmra.mxu0 %v2305
        %v2406 = vpop.f32.mrf.mxu0
        %v2407 = vadd.f32 0.0, %v2406
        %v2408 = vpop.f32.mrf.mxu0
        %2409 = vmatprep.mubr.f32.mxu0 0.0
        %2410 = vmatmul.mubr.f32.gmra.mxu0 %v2308
        %v2411 = vpop.f32.mrf.mxu0
        %v2412 = vadd.f32 0.0, %v2411
        %v2413 = vpop.f32.mrf.mxu0
        %2414 = vdwg.mxu0
        %v2415 = vadd.f32 %v2135, %v2377
        %v2416 = vadd.f32 %v2136, %v2382
        %v2417 = vadd.f32 %v2137, %v2387
        %v2418 = vadd.f32 %v2138, %v2392
        %v2419 = vadd.f32 %v2139, %v2397
        %v2420 = vadd.f32 %v2140, %v2402
        %v2421 = vadd.f32 %v2141, %v2407
        %v2422 = vadd.f32 %v2142, %v2412
        %s2423 = scalar_lea.vmem %s3, 384
        %v2424 = vld [vmem:[%s2423] sm:$0xff]
        %v2425 = vld [vmem:[%s2423 + $0x8] sm:$0xff]
        %v2426 = vld [vmem:[%s2423 + $0x10] sm:$0xff]
        %v2427 = vld [vmem:[%s2423 + $0x18] sm:$0xff]
        %v2428 = vld [vmem:[%s2423 + $0x20] sm:$0xff]
        %v2429 = vld [vmem:[%s2423 + $0x28] sm:$0xff]
        %v2430 = vld [vmem:[%s2423 + $0x30] sm:$0xff]
        %v2431 = vld [vmem:[%s2423 + $0x38] sm:$0xff]
        %v2433 = vsel %vm767, %v2424, 0
        %v2436 = vsel %vm767, %v2425, 0
        %v2439 = vsel %vm767, %v2426, 0
        %v2442 = vsel %vm767, %v2427, 0
        %v2445 = vsel %vm767, %v2428, 0
        %v2448 = vsel %vm767, %v2429, 0
        %v2451 = vsel %vm767, %v2430, 0
        %v2454 = vsel %vm767, %v2431, 0
        %2456 = vmatprep.subr.mxu0 0.0
        %2457 = vmatpush1.msra.mxu0 0.0
        %2458 = vmatprep.subr.mxu0 0.0
        %2459 = vmatpush1.msra.mxu0 0.0
        %2460 = vmatprep.subr.mxu0 0.0
        %2461 = vmatpush1.msra.mxu0 0.0
        %2462 = vmatprep.subr.mxu0 0.0
        %2463 = vmatpush1.msra.mxu0 0.0
        %2464 = vmatprep.subr.mxu0 0.0
        %2465 = vmatpush1.msra.mxu0 0.0
        %2466 = vmatprep.subr.mxu0 0.0
        %2467 = vmatpush1.msra.mxu0 0.0
        %2468 = vmatprep.subr.mxu0 0.0
        %2469 = vmatpush1.msra.mxu0 0.0
        %2470 = vmatprep.subr.mxu0 0.0
        %2471 = vmatpush1.msra.mxu0 0.0
        %2472 = vmatprep.subr.mxu0 0.0
        %2473 = vmatpush1.msra.mxu0 %v758
        %2474 = vmatprep.subr.mxu0 0.0
        %2475 = vmatpush1.msra.mxu0 %v757
        %2476 = vmatprep.subr.mxu0 0.0
        %2477 = vmatpush1.msra.mxu0 %v756
        %2478 = vmatprep.subr.mxu0 0.0
        %2479 = vmatpush1.msra.mxu0 %v755
        %2480 = vmatprep.subr.mxu0 0.0
        %2481 = vmatpush1.msra.mxu0 %v754
        %2482 = vmatprep.subr.mxu0 0.0
        %2483 = vmatpush1.msra.mxu0 %v753
        %2484 = vmatprep.subr.mxu0 0.0
        %2485 = vmatpush1.msra.mxu0 %v752
        %2486 = vmatprep.subr.mxu0 0.0
        %2487 = vmatpush1.msra.mxu0 %v751
        %2488 = vmatprep.subr.mxu0 0.0
        %2489 = vmatpush2.msra.mxu0 0.0
        %2490 = vmatprep.subr.mxu0 0.0
        %2491 = vmatpush2.msra.mxu0 0.0
        %2492 = vmatprep.subr.mxu0 0.0
        %2493 = vmatpush2.msra.mxu0 0.0
        %2494 = vmatprep.subr.mxu0 0.0
        %2495 = vmatpush2.msra.mxu0 0.0
        %2496 = vmatprep.subr.mxu0 0.0
        %2497 = vmatpush2.msra.mxu0 0.0
        %2498 = vmatprep.subr.mxu0 0.0
        %2499 = vmatpush2.msra.mxu0 0.0
        %2500 = vmatprep.subr.mxu0 0.0
        %2501 = vmatpush2.msra.mxu0 0.0
        %2502 = vmatprep.subr.mxu0 0.0
        %2503 = vmatpush2.msra.mxu0 0.0
        %2504 = vmatprep.subr.mxu0 0.0
        %2505 = vmatpush2.msra.mxu0 0.0
        %2506 = vmatprep.subr.mxu0 0.0
        %2507 = vmatpush2.msra.mxu0 0.0
        %2508 = vmatprep.subr.mxu0 0.0
        %2509 = vmatpush2.msra.mxu0 0.0
        %2510 = vmatprep.subr.mxu0 0.0
        %2511 = vmatpush2.msra.mxu0 0.0
        %2512 = vmatprep.subr.mxu0 0.0
        %2513 = vmatpush2.msra.mxu0 0.0
        %2514 = vmatprep.subr.mxu0 0.0
        %2515 = vmatpush2.msra.mxu0 0.0
        %2516 = vmatprep.subr.mxu0 0.0
        %2517 = vmatpush2.msra.mxu0 0.0
        %2518 = vmatprep.subr.mxu0 0.0
        %2519 = vmatpush2.msra.mxu0 0.0
        %2520 = vmatprep.mubr.f32.mxu0 0.0
        %2521 = vmatmul.mubr.f32.gmra.mxu0 %v2433
        %v2522 = vpop.f32.mrf.mxu0
        %v2523 = vadd.f32 0.0, %v2522
        %v2524 = vpop.f32.mrf.mxu0
        %2525 = vmatprep.mubr.f32.mxu0 0.0
        %2526 = vmatmul.mubr.f32.gmra.mxu0 %v2436
        %v2527 = vpop.f32.mrf.mxu0
        %v2528 = vadd.f32 0.0, %v2527
        %v2529 = vpop.f32.mrf.mxu0
        %2530 = vmatprep.mubr.f32.mxu0 0.0
        %2531 = vmatmul.mubr.f32.gmra.mxu0 %v2439
        %v2532 = vpop.f32.mrf.mxu0
        %v2533 = vadd.f32 0.0, %v2532
        %v2534 = vpop.f32.mrf.mxu0
        %2535 = vmatprep.mubr.f32.mxu0 0.0
        %2536 = vmatmul.mubr.f32.gmra.mxu0 %v2442
        %v2537 = vpop.f32.mrf.mxu0
        %v2538 = vadd.f32 0.0, %v2537
        %v2539 = vpop.f32.mrf.mxu0
        %2540 = vmatprep.mubr.f32.mxu0 0.0
        %2541 = vmatmul.mubr.f32.gmra.mxu0 %v2445
        %v2542 = vpop.f32.mrf.mxu0
        %v2543 = vadd.f32 0.0, %v2542
        %v2544 = vpop.f32.mrf.mxu0
        %2545 = vmatprep.mubr.f32.mxu0 0.0
        %2546 = vmatmul.mubr.f32.gmra.mxu0 %v2448
        %v2547 = vpop.f32.mrf.mxu0
        %v2548 = vadd.f32 0.0, %v2547
        %v2549 = vpop.f32.mrf.mxu0
        %2550 = vmatprep.mubr.f32.mxu0 0.0
        %2551 = vmatmul.mubr.f32.gmra.mxu0 %v2451
        %v2552 = vpop.f32.mrf.mxu0
        %v2553 = vadd.f32 0.0, %v2552
        %v2554 = vpop.f32.mrf.mxu0
        %2555 = vmatprep.mubr.f32.mxu0 0.0
        %2556 = vmatmul.mubr.f32.gmra.mxu0 %v2454
        %v2557 = vpop.f32.mrf.mxu0
        %v2558 = vadd.f32 0.0, %v2557
        %v2559 = vpop.f32.mrf.mxu0
        %2560 = vdwg.mxu0
        %s2561 = scalar_lea.vmem %s4, 192
        %v2562 = vld [vmem:[%s2561] sm:$0xff]
        %v2563 = vld [vmem:[%s2561 + $0x8] sm:$0xff]
        %v2564 = vld [vmem:[%s2561 + $0x10] sm:$0xff]
        %v2565 = vld [vmem:[%s2561 + $0x18] sm:$0xff]
        %v2567 = vsel %vm1044, %v2523, 0
        %v2570 = vsel %vm1044, %v2528, 0
        %v2573 = vsel %vm1044, %v2533, 0
        %v2576 = vsel %vm1044, %v2538, 0
        %v2579 = vsel %vm1044, %v2543, 0
        %v2582 = vsel %vm1044, %v2548, 0
        %v2585 = vsel %vm1044, %v2553, 0
        %v2588 = vsel %vm1044, %v2558, 0
        %2590 = vmatprep.subr.mxu0 0.0
        %2591 = vmatpush1.msra.mxu0 0.0
        %2592 = vmatprep.subr.mxu0 0.0
        %2593 = vmatpush1.msra.mxu0 0.0
        %2594 = vmatprep.subr.mxu0 0.0
        %2595 = vmatpush1.msra.mxu0 0.0
        %2596 = vmatprep.subr.mxu0 0.0
        %2597 = vmatpush1.msra.mxu0 0.0
        %2598 = vmatprep.subr.mxu0 0.0
        %2599 = vmatpush1.msra.mxu0 0.0
        %2600 = vmatprep.subr.mxu0 0.0
        %2601 = vmatpush1.msra.mxu0 0.0
        %2602 = vmatprep.subr.mxu0 0.0
        %2603 = vmatpush1.msra.mxu0 0.0
        %2604 = vmatprep.subr.mxu0 0.0
        %2605 = vmatpush1.msra.mxu0 0.0
        %2606 = vmatprep.subr.mxu0 0.0
        %2607 = vmatpush1.msra.mxu0 0.0
        %2608 = vmatprep.subr.mxu0 0.0
        %2609 = vmatpush1.msra.mxu0 0.0
        %2610 = vmatprep.subr.mxu0 0.0
        %2611 = vmatpush1.msra.mxu0 0.0
        %2612 = vmatprep.subr.mxu0 0.0
        %2613 = vmatpush1.msra.mxu0 0.0
        %2614 = vmatprep.subr.mxu0 0.0
        %2615 = vmatpush1.msra.mxu0 %v2565
        %2616 = vmatprep.subr.mxu0 0.0
        %2617 = vmatpush1.msra.mxu0 %v2564
        %2618 = vmatprep.subr.mxu0 0.0
        %2619 = vmatpush1.msra.mxu0 %v2563
        %2620 = vmatprep.subr.mxu0 0.0
        %2621 = vmatpush1.msra.mxu0 %v2562
        %2622 = vmatprep.subr.mxu0 0.0
        %2623 = vmatpush2.msra.mxu0 0.0
        %2624 = vmatprep.subr.mxu0 0.0
        %2625 = vmatpush2.msra.mxu0 0.0
        %2626 = vmatprep.subr.mxu0 0.0
        %2627 = vmatpush2.msra.mxu0 0.0
        %2628 = vmatprep.subr.mxu0 0.0
        %2629 = vmatpush2.msra.mxu0 0.0
        %2630 = vmatprep.subr.mxu0 0.0
        %2631 = vmatpush2.msra.mxu0 0.0
        %2632 = vmatprep.subr.mxu0 0.0
        %2633 = vmatpush2.msra.mxu0 0.0
        %2634 = vmatprep.subr.mxu0 0.0
        %2635 = vmatpush2.msra.mxu0 0.0
        %2636 = vmatprep.subr.mxu0 0.0
        %2637 = vmatpush2.msra.mxu0 0.0
        %2638 = vmatprep.subr.mxu0 0.0
        %2639 = vmatpush2.msra.mxu0 0.0
        %2640 = vmatprep.subr.mxu0 0.0
        %2641 = vmatpush2.msra.mxu0 0.0
        %2642 = vmatprep.subr.mxu0 0.0
        %2643 = vmatpush2.msra.mxu0 0.0
        %2644 = vmatprep.subr.mxu0 0.0
        %2645 = vmatpush2.msra.mxu0 0.0
        %2646 = vmatprep.subr.mxu0 0.0
        %2647 = vmatpush2.msra.mxu0 0.0
        %2648 = vmatprep.subr.mxu0 0.0
        %2649 = vmatpush2.msra.mxu0 0.0
        %2650 = vmatprep.subr.mxu0 0.0
        %2651 = vmatpush2.msra.mxu0 0.0
        %2652 = vmatprep.subr.mxu0 0.0
        %2653 = vmatpush2.msra.mxu0 0.0
        %2654 = vmatprep.mubr.f32.mxu0 0.0
        %2655 = vmatmul.mubr.f32.gmra.mxu0 %v2567
        %v2656 = vpop.f32.mrf.mxu0
        %v2657 = vadd.f32 0.0, %v2656
        %v2658 = vpop.f32.mrf.mxu0
        %2659 = vmatprep.mubr.f32.mxu0 0.0
        %2660 = vmatmul.mubr.f32.gmra.mxu0 %v2570
        %v2661 = vpop.f32.mrf.mxu0
        %v2662 = vadd.f32 0.0, %v2661
        %v2663 = vpop.f32.mrf.mxu0
        %2664 = vmatprep.mubr.f32.mxu0 0.0
        %2665 = vmatmul.mubr.f32.gmra.mxu0 %v2573
        %v2666 = vpop.f32.mrf.mxu0
        %v2667 = vadd.f32 0.0, %v2666
        %v2668 = vpop.f32.mrf.mxu0
        %2669 = vmatprep.mubr.f32.mxu0 0.0
        %2670 = vmatmul.mubr.f32.gmra.mxu0 %v2576
        %v2671 = vpop.f32.mrf.mxu0
        %v2672 = vadd.f32 0.0, %v2671
        %v2673 = vpop.f32.mrf.mxu0
        %2674 = vmatprep.mubr.f32.mxu0 0.0
        %2675 = vmatmul.mubr.f32.gmra.mxu0 %v2579
        %v2676 = vpop.f32.mrf.mxu0
        %v2677 = vadd.f32 0.0, %v2676
        %v2678 = vpop.f32.mrf.mxu0
        %2679 = vmatprep.mubr.f32.mxu0 0.0
        %2680 = vmatmul.mubr.f32.gmra.mxu0 %v2582
        %v2681 = vpop.f32.mrf.mxu0
        %v2682 = vadd.f32 0.0, %v2681
        %v2683 = vpop.f32.mrf.mxu0
        %2684 = vmatprep.mubr.f32.mxu0 0.0
        %2685 = vmatmul.mubr.f32.gmra.mxu0 %v2585
        %v2686 = vpop.f32.mrf.mxu0
        %v2687 = vadd.f32 0.0, %v2686
        %v2688 = vpop.f32.mrf.mxu0
        %2689 = vmatprep.mubr.f32.mxu0 0.0
        %2690 = vmatmul.mubr.f32.gmra.mxu0 %v2588
        %v2691 = vpop.f32.mrf.mxu0
        %v2692 = vadd.f32 0.0, %v2691
        %v2693 = vpop.f32.mrf.mxu0
        %2694 = vdwg.mxu0
        %v2695 = vadd.f32 %v2415, %v2657
        %v2696 = vadd.f32 %v2416, %v2662
        %v2697 = vadd.f32 %v2417, %v2667
        %v2698 = vadd.f32 %v2418, %v2672
        %v2699 = vadd.f32 %v2419, %v2677
        %v2700 = vadd.f32 %v2420, %v2682
        %v2701 = vadd.f32 %v2421, %v2687
        %v2702 = vadd.f32 %v2422, %v2692
        %s2703 = scalar_lea.vmem %s3, 448
        %v2704 = vld [vmem:[%s2703] sm:$0xff]
        %v2705 = vld [vmem:[%s2703 + $0x8] sm:$0xff]
        %v2706 = vld [vmem:[%s2703 + $0x10] sm:$0xff]
        %v2707 = vld [vmem:[%s2703 + $0x18] sm:$0xff]
        %v2708 = vld [vmem:[%s2703 + $0x20] sm:$0xff]
        %v2709 = vld [vmem:[%s2703 + $0x28] sm:$0xff]
        %v2710 = vld [vmem:[%s2703 + $0x30] sm:$0xff]
        %v2711 = vld [vmem:[%s2703 + $0x38] sm:$0xff]
        %v2713 = vsel %vm767, %v2704, 0
        %v2716 = vsel %vm767, %v2705, 0
        %v2719 = vsel %vm767, %v2706, 0
        %v2722 = vsel %vm767, %v2707, 0
        %v2725 = vsel %vm767, %v2708, 0
        %v2728 = vsel %vm767, %v2709, 0
        %v2731 = vsel %vm767, %v2710, 0
        %v2734 = vsel %vm767, %v2711, 0
        %2736 = vmatprep.subr.mxu0 0.0
        %2737 = vmatpush1.msra.mxu0 0.0
        %2738 = vmatprep.subr.mxu0 0.0
        %2739 = vmatpush1.msra.mxu0 0.0
        %2740 = vmatprep.subr.mxu0 0.0
        %2741 = vmatpush1.msra.mxu0 0.0
        %2742 = vmatprep.subr.mxu0 0.0
        %2743 = vmatpush1.msra.mxu0 0.0
        %2744 = vmatprep.subr.mxu0 0.0
        %2745 = vmatpush1.msra.mxu0 0.0
        %2746 = vmatprep.subr.mxu0 0.0
        %2747 = vmatpush1.msra.mxu0 0.0
        %2748 = vmatprep.subr.mxu0 0.0
        %2749 = vmatpush1.msra.mxu0 0.0
        %2750 = vmatprep.subr.mxu0 0.0
        %2751 = vmatpush1.msra.mxu0 0.0
        %2752 = vmatprep.subr.mxu0 0.0
        %2753 = vmatpush1.msra.mxu0 %v758
        %2754 = vmatprep.subr.mxu0 0.0
        %2755 = vmatpush1.msra.mxu0 %v757
        %2756 = vmatprep.subr.mxu0 0.0
        %2757 = vmatpush1.msra.mxu0 %v756
        %2758 = vmatprep.subr.mxu0 0.0
        %2759 = vmatpush1.msra.mxu0 %v755
        %2760 = vmatprep.subr.mxu0 0.0
        %2761 = vmatpush1.msra.mxu0 %v754
        %2762 = vmatprep.subr.mxu0 0.0
        %2763 = vmatpush1.msra.mxu0 %v753
        %2764 = vmatprep.subr.mxu0 0.0
        %2765 = vmatpush1.msra.mxu0 %v752
        %2766 = vmatprep.subr.mxu0 0.0
        %2767 = vmatpush1.msra.mxu0 %v751
        %2768 = vmatprep.subr.mxu0 0.0
        %2769 = vmatpush2.msra.mxu0 0.0
        %2770 = vmatprep.subr.mxu0 0.0
        %2771 = vmatpush2.msra.mxu0 0.0
        %2772 = vmatprep.subr.mxu0 0.0
        %2773 = vmatpush2.msra.mxu0 0.0
        %2774 = vmatprep.subr.mxu0 0.0
        %2775 = vmatpush2.msra.mxu0 0.0
        %2776 = vmatprep.subr.mxu0 0.0
        %2777 = vmatpush2.msra.mxu0 0.0
        %2778 = vmatprep.subr.mxu0 0.0
        %2779 = vmatpush2.msra.mxu0 0.0
        %2780 = vmatprep.subr.mxu0 0.0
        %2781 = vmatpush2.msra.mxu0 0.0
        %2782 = vmatprep.subr.mxu0 0.0
        %2783 = vmatpush2.msra.mxu0 0.0
        %2784 = vmatprep.subr.mxu0 0.0
        %2785 = vmatpush2.msra.mxu0 0.0
        %2786 = vmatprep.subr.mxu0 0.0
        %2787 = vmatpush2.msra.mxu0 0.0
        %2788 = vmatprep.subr.mxu0 0.0
        %2789 = vmatpush2.msra.mxu0 0.0
        %2790 = vmatprep.subr.mxu0 0.0
        %2791 = vmatpush2.msra.mxu0 0.0
        %2792 = vmatprep.subr.mxu0 0.0
        %2793 = vmatpush2.msra.mxu0 0.0
        %2794 = vmatprep.subr.mxu0 0.0
        %2795 = vmatpush2.msra.mxu0 0.0
        %2796 = vmatprep.subr.mxu0 0.0
        %2797 = vmatpush2.msra.mxu0 0.0
        %2798 = vmatprep.subr.mxu0 0.0
        %2799 = vmatpush2.msra.mxu0 0.0
        %2800 = vmatprep.mubr.f32.mxu0 0.0
        %2801 = vmatmul.mubr.f32.gmra.mxu0 %v2713
        %v2802 = vpop.f32.mrf.mxu0
        %v2803 = vadd.f32 0.0, %v2802
        %v2804 = vpop.f32.mrf.mxu0
        %2805 = vmatprep.mubr.f32.mxu0 0.0
        %2806 = vmatmul.mubr.f32.gmra.mxu0 %v2716
        %v2807 = vpop.f32.mrf.mxu0
        %v2808 = vadd.f32 0.0, %v2807
        %v2809 = vpop.f32.mrf.mxu0
        %2810 = vmatprep.mubr.f32.mxu0 0.0
        %2811 = vmatmul.mubr.f32.gmra.mxu0 %v2719
        %v2812 = vpop.f32.mrf.mxu0
        %v2813 = vadd.f32 0.0, %v2812
        %v2814 = vpop.f32.mrf.mxu0
        %2815 = vmatprep.mubr.f32.mxu0 0.0
        %2816 = vmatmul.mubr.f32.gmra.mxu0 %v2722
        %v2817 = vpop.f32.mrf.mxu0
        %v2818 = vadd.f32 0.0, %v2817
        %v2819 = vpop.f32.mrf.mxu0
        %2820 = vmatprep.mubr.f32.mxu0 0.0
        %2821 = vmatmul.mubr.f32.gmra.mxu0 %v2725
        %v2822 = vpop.f32.mrf.mxu0
        %v2823 = vadd.f32 0.0, %v2822
        %v2824 = vpop.f32.mrf.mxu0
        %2825 = vmatprep.mubr.f32.mxu0 0.0
        %2826 = vmatmul.mubr.f32.gmra.mxu0 %v2728
        %v2827 = vpop.f32.mrf.mxu0
        %v2828 = vadd.f32 0.0, %v2827
        %v2829 = vpop.f32.mrf.mxu0
        %2830 = vmatprep.mubr.f32.mxu0 0.0
        %2831 = vmatmul.mubr.f32.gmra.mxu0 %v2731
        %v2832 = vpop.f32.mrf.mxu0
        %v2833 = vadd.f32 0.0, %v2832
        %v2834 = vpop.f32.mrf.mxu0
        %2835 = vmatprep.mubr.f32.mxu0 0.0
        %2836 = vmatmul.mubr.f32.gmra.mxu0 %v2734
        %v2837 = vpop.f32.mrf.mxu0
        %v2838 = vadd.f32 0.0, %v2837
        %v2839 = vpop.f32.mrf.mxu0
        %2840 = vdwg.mxu0
        %s2841 = scalar_lea.vmem %s4, 224
        %v2842 = vld [vmem:[%s2841] sm:$0xff]
        %v2843 = vld [vmem:[%s2841 + $0x8] sm:$0xff]
        %v2844 = vld [vmem:[%s2841 + $0x10] sm:$0xff]
        %v2845 = vld [vmem:[%s2841 + $0x18] sm:$0xff]
        %v2847 = vsel %vm1044, %v2803, 0
        %v2850 = vsel %vm1044, %v2808, 0
        %v2853 = vsel %vm1044, %v2813, 0
        %v2856 = vsel %vm1044, %v2818, 0
        %v2859 = vsel %vm1044, %v2823, 0
        %v2862 = vsel %vm1044, %v2828, 0
        %v2865 = vsel %vm1044, %v2833, 0
        %v2868 = vsel %vm1044, %v2838, 0
        %2870 = vmatprep.subr.mxu0 0.0
        %2871 = vmatpush1.msra.mxu0 0.0
        %2872 = vmatprep.subr.mxu0 0.0
        %2873 = vmatpush1.msra.mxu0 0.0
        %2874 = vmatprep.subr.mxu0 0.0
        %2875 = vmatpush1.msra.mxu0 0.0
        %2876 = vmatprep.subr.mxu0 0.0
        %2877 = vmatpush1.msra.mxu0 0.0
        %2878 = vmatprep.subr.mxu0 0.0
        %2879 = vmatpush1.msra.mxu0 0.0
        %2880 = vmatprep.subr.mxu0 0.0
        %2881 = vmatpush1.msra.mxu0 0.0
        %2882 = vmatprep.subr.mxu0 0.0
        %2883 = vmatpush1.msra.mxu0 0.0
        %2884 = vmatprep.subr.mxu0 0.0
        %2885 = vmatpush1.msra.mxu0 0.0
        %2886 = vmatprep.subr.mxu0 0.0
        %2887 = vmatpush1.msra.mxu0 0.0
        %2888 = vmatprep.subr.mxu0 0.0
        %2889 = vmatpush1.msra.mxu0 0.0
        %2890 = vmatprep.subr.mxu0 0.0
        %2891 = vmatpush1.msra.mxu0 0.0
        %2892 = vmatprep.subr.mxu0 0.0
        %2893 = vmatpush1.msra.mxu0 0.0
        %2894 = vmatprep.subr.mxu0 0.0
        %2895 = vmatpush1.msra.mxu0 %v2845
        %2896 = vmatprep.subr.mxu0 0.0
        %2897 = vmatpush1.msra.mxu0 %v2844
        %2898 = vmatprep.subr.mxu0 0.0
        %2899 = vmatpush1.msra.mxu0 %v2843
        %2900 = vmatprep.subr.mxu0 0.0
        %2901 = vmatpush1.msra.mxu0 %v2842
        %2902 = vmatprep.subr.mxu0 0.0
        %2903 = vmatpush2.msra.mxu0 0.0
        %2904 = vmatprep.subr.mxu0 0.0
        %2905 = vmatpush2.msra.mxu0 0.0
        %2906 = vmatprep.subr.mxu0 0.0
        %2907 = vmatpush2.msra.mxu0 0.0
        %2908 = vmatprep.subr.mxu0 0.0
        %2909 = vmatpush2.msra.mxu0 0.0
        %2910 = vmatprep.subr.mxu0 0.0
        %2911 = vmatpush2.msra.mxu0 0.0
        %2912 = vmatprep.subr.mxu0 0.0
        %2913 = vmatpush2.msra.mxu0 0.0
        %2914 = vmatprep.subr.mxu0 0.0
        %2915 = vmatpush2.msra.mxu0 0.0
        %2916 = vmatprep.subr.mxu0 0.0
        %2917 = vmatpush2.msra.mxu0 0.0
        %2918 = vmatprep.subr.mxu0 0.0
        %2919 = vmatpush2.msra.mxu0 0.0
        %2920 = vmatprep.subr.mxu0 0.0
        %2921 = vmatpush2.msra.mxu0 0.0
        %2922 = vmatprep.subr.mxu0 0.0
        %2923 = vmatpush2.msra.mxu0 0.0
        %2924 = vmatprep.subr.mxu0 0.0
        %2925 = vmatpush2.msra.mxu0 0.0
        %2926 = vmatprep.subr.mxu0 0.0
        %2927 = vmatpush2.msra.mxu0 0.0
        %2928 = vmatprep.subr.mxu0 0.0
        %2929 = vmatpush2.msra.mxu0 0.0
        %2930 = vmatprep.subr.mxu0 0.0
        %2931 = vmatpush2.msra.mxu0 0.0
        %2932 = vmatprep.subr.mxu0 0.0
        %2933 = vmatpush2.msra.mxu0 0.0
        %2934 = vmatprep.mubr.f32.mxu0 0.0
        %2935 = vmatmul.mubr.f32.gmra.mxu0 %v2847
        %v2936 = vpop.f32.mrf.mxu0
        %v2937 = vadd.f32 0.0, %v2936
        %v2938 = vpop.f32.mrf.mxu0
        %2939 = vmatprep.mubr.f32.mxu0 0.0
        %2940 = vmatmul.mubr.f32.gmra.mxu0 %v2850
        %v2941 = vpop.f32.mrf.mxu0
        %v2942 = vadd.f32 0.0, %v2941
        %v2943 = vpop.f32.mrf.mxu0
        %2944 = vmatprep.mubr.f32.mxu0 0.0
        %2945 = vmatmul.mubr.f32.gmra.mxu0 %v2853
        %v2946 = vpop.f32.mrf.mxu0
        %v2947 = vadd.f32 0.0, %v2946
        %v2948 = vpop.f32.mrf.mxu0
        %2949 = vmatprep.mubr.f32.mxu0 0.0
        %2950 = vmatmul.mubr.f32.gmra.mxu0 %v2856
        %v2951 = vpop.f32.mrf.mxu0
        %v2952 = vadd.f32 0.0, %v2951
        %v2953 = vpop.f32.mrf.mxu0
        %2954 = vmatprep.mubr.f32.mxu0 0.0
        %2955 = vmatmul.mubr.f32.gmra.mxu0 %v2859
        %v2956 = vpop.f32.mrf.mxu0
        %v2957 = vadd.f32 0.0, %v2956
        %v2958 = vpop.f32.mrf.mxu0
        %2959 = vmatprep.mubr.f32.mxu0 0.0
        %2960 = vmatmul.mubr.f32.gmra.mxu0 %v2862
        %v2961 = vpop.f32.mrf.mxu0
        %v2962 = vadd.f32 0.0, %v2961
        %v2963 = vpop.f32.mrf.mxu0
        %2964 = vmatprep.mubr.f32.mxu0 0.0
        %2965 = vmatmul.mubr.f32.gmra.mxu0 %v2865
        %v2966 = vpop.f32.mrf.mxu0
        %v2967 = vadd.f32 0.0, %v2966
        %v2968 = vpop.f32.mrf.mxu0
        %2969 = vmatprep.mubr.f32.mxu0 0.0
        %2970 = vmatmul.mubr.f32.gmra.mxu0 %v2868
        %v2971 = vpop.f32.mrf.mxu0
        %v2972 = vadd.f32 0.0, %v2971
        %v2973 = vpop.f32.mrf.mxu0
        %2974 = vdwg.mxu0
        %v2975 = vadd.f32 %v2695, %v2937
        %v2976 = vadd.f32 %v2696, %v2942
        %v2977 = vadd.f32 %v2697, %v2947
        %v2978 = vadd.f32 %v2698, %v2952
        %v2979 = vadd.f32 %v2699, %v2957
        %v2980 = vadd.f32 %v2700, %v2962
        %v2981 = vadd.f32 %v2701, %v2967
        %v2982 = vadd.f32 %v2702, %v2972
        %s2983 = scalar_lea.vmem %s3, 512
        %v2984 = vld [vmem:[%s2983] sm:$0xff]
        %v2985 = vld [vmem:[%s2983 + $0x8] sm:$0xff]
        %v2986 = vld [vmem:[%s2983 + $0x10] sm:$0xff]
        %v2987 = vld [vmem:[%s2983 + $0x18] sm:$0xff]
        %v2988 = vld [vmem:[%s2983 + $0x20] sm:$0xff]
        %v2989 = vld [vmem:[%s2983 + $0x28] sm:$0xff]
        %v2990 = vld [vmem:[%s2983 + $0x30] sm:$0xff]
        %v2991 = vld [vmem:[%s2983 + $0x38] sm:$0xff]
        %v2993 = vsel %vm767, %v2984, 0
        %v2996 = vsel %vm767, %v2985, 0
        %v2999 = vsel %vm767, %v2986, 0
        %v3002 = vsel %vm767, %v2987, 0
        %v3005 = vsel %vm767, %v2988, 0
        %v3008 = vsel %vm767, %v2989, 0
        %v3011 = vsel %vm767, %v2990, 0
        %v3014 = vsel %vm767, %v2991, 0
        %3016 = vmatprep.subr.mxu0 0.0
        %3017 = vmatpush1.msra.mxu0 0.0
        %3018 = vmatprep.subr.mxu0 0.0
        %3019 = vmatpush1.msra.mxu0 0.0
        %3020 = vmatprep.subr.mxu0 0.0
        %3021 = vmatpush1.msra.mxu0 0.0
        %3022 = vmatprep.subr.mxu0 0.0
        %3023 = vmatpush1.msra.mxu0 0.0
        %3024 = vmatprep.subr.mxu0 0.0
        %3025 = vmatpush1.msra.mxu0 0.0
        %3026 = vmatprep.subr.mxu0 0.0
        %3027 = vmatpush1.msra.mxu0 0.0
        %3028 = vmatprep.subr.mxu0 0.0
        %3029 = vmatpush1.msra.mxu0 0.0
        %3030 = vmatprep.subr.mxu0 0.0
        %3031 = vmatpush1.msra.mxu0 0.0
        %3032 = vmatprep.subr.mxu0 0.0
        %3033 = vmatpush1.msra.mxu0 %v758
        %3034 = vmatprep.subr.mxu0 0.0
        %3035 = vmatpush1.msra.mxu0 %v757
        %3036 = vmatprep.subr.mxu0 0.0
        %3037 = vmatpush1.msra.mxu0 %v756
        %3038 = vmatprep.subr.mxu0 0.0
        %3039 = vmatpush1.msra.mxu0 %v755
        %3040 = vmatprep.subr.mxu0 0.0
        %3041 = vmatpush1.msra.mxu0 %v754
        %3042 = vmatprep.subr.mxu0 0.0
        %3043 = vmatpush1.msra.mxu0 %v753
        %3044 = vmatprep.subr.mxu0 0.0
        %3045 = vmatpush1.msra.mxu0 %v752
        %3046 = vmatprep.subr.mxu0 0.0
        %3047 = vmatpush1.msra.mxu0 %v751
        %3048 = vmatprep.subr.mxu0 0.0
        %3049 = vmatpush2.msra.mxu0 0.0
        %3050 = vmatprep.subr.mxu0 0.0
        %3051 = vmatpush2.msra.mxu0 0.0
        %3052 = vmatprep.subr.mxu0 0.0
        %3053 = vmatpush2.msra.mxu0 0.0
        %3054 = vmatprep.subr.mxu0 0.0
        %3055 = vmatpush2.msra.mxu0 0.0
        %3056 = vmatprep.subr.mxu0 0.0
        %3057 = vmatpush2.msra.mxu0 0.0
        %3058 = vmatprep.subr.mxu0 0.0
        %3059 = vmatpush2.msra.mxu0 0.0
        %3060 = vmatprep.subr.mxu0 0.0
        %3061 = vmatpush2.msra.mxu0 0.0
        %3062 = vmatprep.subr.mxu0 0.0
        %3063 = vmatpush2.msra.mxu0 0.0
        %3064 = vmatprep.subr.mxu0 0.0
        %3065 = vmatpush2.msra.mxu0 0.0
        %3066 = vmatprep.subr.mxu0 0.0
        %3067 = vmatpush2.msra.mxu0 0.0
        %3068 = vmatprep.subr.mxu0 0.0
        %3069 = vmatpush2.msra.mxu0 0.0
        %3070 = vmatprep.subr.mxu0 0.0
        %3071 = vmatpush2.msra.mxu0 0.0
        %3072 = vmatprep.subr.mxu0 0.0
        %3073 = vmatpush2.msra.mxu0 0.0
        %3074 = vmatprep.subr.mxu0 0.0
        %3075 = vmatpush2.msra.mxu0 0.0
        %3076 = vmatprep.subr.mxu0 0.0
        %3077 = vmatpush2.msra.mxu0 0.0
        %3078 = vmatprep.subr.mxu0 0.0
        %3079 = vmatpush2.msra.mxu0 0.0
        %3080 = vmatprep.mubr.f32.mxu0 0.0
        %3081 = vmatmul.mubr.f32.gmra.mxu0 %v2993
        %v3082 = vpop.f32.mrf.mxu0
        %v3083 = vadd.f32 0.0, %v3082
        %v3084 = vpop.f32.mrf.mxu0
        %3085 = vmatprep.mubr.f32.mxu0 0.0
        %3086 = vmatmul.mubr.f32.gmra.mxu0 %v2996
        %v3087 = vpop.f32.mrf.mxu0
        %v3088 = vadd.f32 0.0, %v3087
        %v3089 = vpop.f32.mrf.mxu0
        %3090 = vmatprep.mubr.f32.mxu0 0.0
        %3091 = vmatmul.mubr.f32.gmra.mxu0 %v2999
        %v3092 = vpop.f32.mrf.mxu0
        %v3093 = vadd.f32 0.0, %v3092
        %v3094 = vpop.f32.mrf.mxu0
        %3095 = vmatprep.mubr.f32.mxu0 0.0
        %3096 = vmatmul.mubr.f32.gmra.mxu0 %v3002
        %v3097 = vpop.f32.mrf.mxu0
        %v3098 = vadd.f32 0.0, %v3097
        %v3099 = vpop.f32.mrf.mxu0
        %3100 = vmatprep.mubr.f32.mxu0 0.0
        %3101 = vmatmul.mubr.f32.gmra.mxu0 %v3005
        %v3102 = vpop.f32.mrf.mxu0
        %v3103 = vadd.f32 0.0, %v3102
        %v3104 = vpop.f32.mrf.mxu0
        %3105 = vmatprep.mubr.f32.mxu0 0.0
        %3106 = vmatmul.mubr.f32.gmra.mxu0 %v3008
        %v3107 = vpop.f32.mrf.mxu0
        %v3108 = vadd.f32 0.0, %v3107
        %v3109 = vpop.f32.mrf.mxu0
        %3110 = vmatprep.mubr.f32.mxu0 0.0
        %3111 = vmatmul.mubr.f32.gmra.mxu0 %v3011
        %v3112 = vpop.f32.mrf.mxu0
        %v3113 = vadd.f32 0.0, %v3112
        %v3114 = vpop.f32.mrf.mxu0
        %3115 = vmatprep.mubr.f32.mxu0 0.0
        %3116 = vmatmul.mubr.f32.gmra.mxu0 %v3014
        %v3117 = vpop.f32.mrf.mxu0
        %v3118 = vadd.f32 0.0, %v3117
        %v3119 = vpop.f32.mrf.mxu0
        %3120 = vdwg.mxu0
        %s3121 = scalar_lea.vmem %s4, 256
        %v3122 = vld [vmem:[%s3121] sm:$0xff]
        %v3123 = vld [vmem:[%s3121 + $0x8] sm:$0xff]
        %v3124 = vld [vmem:[%s3121 + $0x10] sm:$0xff]
        %v3125 = vld [vmem:[%s3121 + $0x18] sm:$0xff]
        %v3127 = vsel %vm1044, %v3083, 0
        %v3130 = vsel %vm1044, %v3088, 0
        %v3133 = vsel %vm1044, %v3093, 0
        %v3136 = vsel %vm1044, %v3098, 0
        %v3139 = vsel %vm1044, %v3103, 0
        %v3142 = vsel %vm1044, %v3108, 0
        %v3145 = vsel %vm1044, %v3113, 0
        %v3148 = vsel %vm1044, %v3118, 0
        %3150 = vmatprep.subr.mxu0 0.0
        %3151 = vmatpush1.msra.mxu0 0.0
        %3152 = vmatprep.subr.mxu0 0.0
        %3153 = vmatpush1.msra.mxu0 0.0
        %3154 = vmatprep.subr.mxu0 0.0
        %3155 = vmatpush1.msra.mxu0 0.0
        %3156 = vmatprep.subr.mxu0 0.0
        %3157 = vmatpush1.msra.mxu0 0.0
        %3158 = vmatprep.subr.mxu0 0.0
        %3159 = vmatpush1.msra.mxu0 0.0
        %3160 = vmatprep.subr.mxu0 0.0
        %3161 = vmatpush1.msra.mxu0 0.0
        %3162 = vmatprep.subr.mxu0 0.0
        %3163 = vmatpush1.msra.mxu0 0.0
        %3164 = vmatprep.subr.mxu0 0.0
        %3165 = vmatpush1.msra.mxu0 0.0
        %3166 = vmatprep.subr.mxu0 0.0
        %3167 = vmatpush1.msra.mxu0 0.0
        %3168 = vmatprep.subr.mxu0 0.0
        %3169 = vmatpush1.msra.mxu0 0.0
        %3170 = vmatprep.subr.mxu0 0.0
        %3171 = vmatpush1.msra.mxu0 0.0
        %3172 = vmatprep.subr.mxu0 0.0
        %3173 = vmatpush1.msra.mxu0 0.0
        %3174 = vmatprep.subr.mxu0 0.0
        %3175 = vmatpush1.msra.mxu0 %v3125
        %3176 = vmatprep.subr.mxu0 0.0
        %3177 = vmatpush1.msra.mxu0 %v3124
        %3178 = vmatprep.subr.mxu0 0.0
        %3179 = vmatpush1.msra.mxu0 %v3123
        %3180 = vmatprep.subr.mxu0 0.0
        %3181 = vmatpush1.msra.mxu0 %v3122
        %3182 = vmatprep.subr.mxu0 0.0
        %3183 = vmatpush2.msra.mxu0 0.0
        %3184 = vmatprep.subr.mxu0 0.0
        %3185 = vmatpush2.msra.mxu0 0.0
        %3186 = vmatprep.subr.mxu0 0.0
        %3187 = vmatpush2.msra.mxu0 0.0
        %3188 = vmatprep.subr.mxu0 0.0
        %3189 = vmatpush2.msra.mxu0 0.0
        %3190 = vmatprep.subr.mxu0 0.0
        %3191 = vmatpush2.msra.mxu0 0.0
        %3192 = vmatprep.subr.mxu0 0.0
        %3193 = vmatpush2.msra.mxu0 0.0
        %3194 = vmatprep.subr.mxu0 0.0
        %3195 = vmatpush2.msra.mxu0 0.0
        %3196 = vmatprep.subr.mxu0 0.0
        %3197 = vmatpush2.msra.mxu0 0.0
        %3198 = vmatprep.subr.mxu0 0.0
        %3199 = vmatpush2.msra.mxu0 0.0
        %3200 = vmatprep.subr.mxu0 0.0
        %3201 = vmatpush2.msra.mxu0 0.0
        %3202 = vmatprep.subr.mxu0 0.0
        %3203 = vmatpush2.msra.mxu0 0.0
        %3204 = vmatprep.subr.mxu0 0.0
        %3205 = vmatpush2.msra.mxu0 0.0
        %3206 = vmatprep.subr.mxu0 0.0
        %3207 = vmatpush2.msra.mxu0 0.0
        %3208 = vmatprep.subr.mxu0 0.0
        %3209 = vmatpush2.msra.mxu0 0.0
        %3210 = vmatprep.subr.mxu0 0.0
        %3211 = vmatpush2.msra.mxu0 0.0
        %3212 = vmatprep.subr.mxu0 0.0
        %3213 = vmatpush2.msra.mxu0 0.0
        %3214 = vmatprep.mubr.f32.mxu0 0.0
        %3215 = vmatmul.mubr.f32.gmra.mxu0 %v3127
        %v3216 = vpop.f32.mrf.mxu0
        %v3217 = vadd.f32 0.0, %v3216
        %v3218 = vpop.f32.mrf.mxu0
        %3219 = vmatprep.mubr.f32.mxu0 0.0
        %3220 = vmatmul.mubr.f32.gmra.mxu0 %v3130
        %v3221 = vpop.f32.mrf.mxu0
        %v3222 = vadd.f32 0.0, %v3221
        %v3223 = vpop.f32.mrf.mxu0
        %3224 = vmatprep.mubr.f32.mxu0 0.0
        %3225 = vmatmul.mubr.f32.gmra.mxu0 %v3133
        %v3226 = vpop.f32.mrf.mxu0
        %v3227 = vadd.f32 0.0, %v3226
        %v3228 = vpop.f32.mrf.mxu0
        %3229 = vmatprep.mubr.f32.mxu0 0.0
        %3230 = vmatmul.mubr.f32.gmra.mxu0 %v3136
        %v3231 = vpop.f32.mrf.mxu0
        %v3232 = vadd.f32 0.0, %v3231
        %v3233 = vpop.f32.mrf.mxu0
        %3234 = vmatprep.mubr.f32.mxu0 0.0
        %3235 = vmatmul.mubr.f32.gmra.mxu0 %v3139
        %v3236 = vpop.f32.mrf.mxu0
        %v3237 = vadd.f32 0.0, %v3236
        %v3238 = vpop.f32.mrf.mxu0
        %3239 = vmatprep.mubr.f32.mxu0 0.0
        %3240 = vmatmul.mubr.f32.gmra.mxu0 %v3142
        %v3241 = vpop.f32.mrf.mxu0
        %v3242 = vadd.f32 0.0, %v3241
        %v3243 = vpop.f32.mrf.mxu0
        %3244 = vmatprep.mubr.f32.mxu0 0.0
        %3245 = vmatmul.mubr.f32.gmra.mxu0 %v3145
        %v3246 = vpop.f32.mrf.mxu0
        %v3247 = vadd.f32 0.0, %v3246
        %v3248 = vpop.f32.mrf.mxu0
        %3249 = vmatprep.mubr.f32.mxu0 0.0
        %3250 = vmatmul.mubr.f32.gmra.mxu0 %v3148
        %v3251 = vpop.f32.mrf.mxu0
        %v3252 = vadd.f32 0.0, %v3251
        %v3253 = vpop.f32.mrf.mxu0
        %3254 = vdwg.mxu0
        %v3255 = vadd.f32 %v2975, %v3217
        %v3256 = vadd.f32 %v2976, %v3222
        %v3257 = vadd.f32 %v2977, %v3227
        %v3258 = vadd.f32 %v2978, %v3232
        %v3259 = vadd.f32 %v2979, %v3237
        %v3260 = vadd.f32 %v2980, %v3242
        %v3261 = vadd.f32 %v2981, %v3247
        %v3262 = vadd.f32 %v2982, %v3252
        %v3263 = vld [vmem:[%s5] sm:$0x1]
        %v3265 = vlaneseq
        %v3266 = vshrl.u32 %v3265, 7
        %v3267 = vsub.s32 0, %v3266
        %v3268 = vrot.slane %v3263, %v3267
        %v3270 = vadd.f32 %v3255, %v3268
        %v3271 = vadd.f32 %v3256, %v3268
        %v3272 = vadd.f32 %v3257, %v3268
        %v3273 = vadd.f32 %v3258, %v3268
        %v3274 = vadd.f32 %v3259, %v3268
        %v3275 = vadd.f32 %v3260, %v3268
        %v3276 = vadd.f32 %v3261, %v3268
        %v3277 = vadd.f32 %v3262, %v3268
        %v3278 = vmax.f32 %v3270, 0.0
        %v3279 = vmax.f32 %v3271, 0.0
        %v3280 = vmax.f32 %v3272, 0.0
        %v3281 = vmax.f32 %v3273, 0.0
        %v3282 = vmax.f32 %v3274, 0.0
        %v3283 = vmax.f32 %v3275, 0.0
        %v3284 = vmax.f32 %v3276, 0.0
        %v3285 = vmax.f32 %v3277, 0.0
        %v3286 = vld [vmem:[%s6] sm:$0xff]
        %v3288 = vsel %vm767, %v3286, 0
        %3290 = vmatprep.subr.mxu0 0.0
        %3291 = vmatpush1.msra.mxu0 0.0
        %3292 = vmatprep.subr.mxu0 0.0
        %3293 = vmatpush1.msra.mxu0 0.0
        %3294 = vmatprep.subr.mxu0 0.0
        %3295 = vmatpush1.msra.mxu0 0.0
        %3296 = vmatprep.subr.mxu0 0.0
        %3297 = vmatpush1.msra.mxu0 0.0
        %3298 = vmatprep.subr.mxu0 0.0
        %3299 = vmatpush1.msra.mxu0 0.0
        %3300 = vmatprep.subr.mxu0 0.0
        %3301 = vmatpush1.msra.mxu0 0.0
        %3302 = vmatprep.subr.mxu0 0.0
        %3303 = vmatpush1.msra.mxu0 0.0
        %3304 = vmatprep.subr.mxu0 0.0
        %3305 = vmatpush1.msra.mxu0 0.0
        %3306 = vmatprep.subr.mxu0 0.0
        %3307 = vmatpush1.msra.mxu0 %v3285
        %3308 = vmatprep.subr.mxu0 0.0
        %3309 = vmatpush1.msra.mxu0 %v3284
        %3310 = vmatprep.subr.mxu0 0.0
        %3311 = vmatpush1.msra.mxu0 %v3283
        %3312 = vmatprep.subr.mxu0 0.0
        %3313 = vmatpush1.msra.mxu0 %v3282
        %3314 = vmatprep.subr.mxu0 0.0
        %3315 = vmatpush1.msra.mxu0 %v3281
        %3316 = vmatprep.subr.mxu0 0.0
        %3317 = vmatpush1.msra.mxu0 %v3280
        %3318 = vmatprep.subr.mxu0 0.0
        %3319 = vmatpush1.msra.mxu0 %v3279
        %3320 = vmatprep.subr.mxu0 0.0
        %3321 = vmatpush1.msra.mxu0 %v3278
        %3322 = vmatprep.subr.mxu0 0.0
        %3323 = vmatpush2.msra.mxu0 0.0
        %3324 = vmatprep.subr.mxu0 0.0
        %3325 = vmatpush2.msra.mxu0 0.0
        %3326 = vmatprep.subr.mxu0 0.0
        %3327 = vmatpush2.msra.mxu0 0.0
        %3328 = vmatprep.subr.mxu0 0.0
        %3329 = vmatpush2.msra.mxu0 0.0
        %3330 = vmatprep.subr.mxu0 0.0
        %3331 = vmatpush2.msra.mxu0 0.0
        %3332 = vmatprep.subr.mxu0 0.0
        %3333 = vmatpush2.msra.mxu0 0.0
        %3334 = vmatprep.subr.mxu0 0.0
        %3335 = vmatpush2.msra.mxu0 0.0
        %3336 = vmatprep.subr.mxu0 0.0
        %3337 = vmatpush2.msra.mxu0 0.0
        %3338 = vmatprep.subr.mxu0 0.0
        %3339 = vmatpush2.msra.mxu0 0.0
        %3340 = vmatprep.subr.mxu0 0.0
        %3341 = vmatpush2.msra.mxu0 0.0
        %3342 = vmatprep.subr.mxu0 0.0
        %3343 = vmatpush2.msra.mxu0 0.0
        %3344 = vmatprep.subr.mxu0 0.0
        %3345 = vmatpush2.msra.mxu0 0.0
        %3346 = vmatprep.subr.mxu0 0.0
        %3347 = vmatpush2.msra.mxu0 0.0
        %3348 = vmatprep.subr.mxu0 0.0
        %3349 = vmatpush2.msra.mxu0 0.0
        %3350 = vmatprep.subr.mxu0 0.0
        %3351 = vmatpush2.msra.mxu0 0.0
        %3352 = vmatprep.subr.mxu0 0.0
        %3353 = vmatpush2.msra.mxu0 0.0
        %3354 = vmatprep.mubr.f32.mxu0 0.0
        %3355 = vmatmul.mubr.f32.gmra.mxu0 %v3288
        %v3356 = vpop.f32.mrf.mxu0
        %v3357 = vadd.f32 0.0, %v3356
        %v3358 = vpop.f32.mrf.mxu0
        %3359 = vdwg.mxu0
        %v3360 = vld [vmem:[%s7] sm:$0xff]
        %v3361 = vld [vmem:[%s7 + $0x8] sm:$0xff]
        %v3362 = vld [vmem:[%s7 + $0x10] sm:$0xff]
        %v3363 = vld [vmem:[%s7 + $0x18] sm:$0xff]
        %v3364 = vld [vmem:[%s8] sm:$0x1]
        %v3366 = vlaneseq
        %v3367 = vshrl.u32 %v3366, 7
        %v3368 = vsub.s32 0, %v3367
        %v3369 = vrot.slane %v3364, %v3368
        %v3372 = vsel %vm1044, %v3357, 0
        %3374 = vmatprep.subr.mxu0 0.0
        %3375 = vmatpush1.msra.mxu0 0.0
        %3376 = vmatprep.subr.mxu0 0.0
        %3377 = vmatpush1.msra.mxu0 0.0
        %3378 = vmatprep.subr.mxu0 0.0
        %3379 = vmatpush1.msra.mxu0 0.0
        %3380 = vmatprep.subr.mxu0 0.0
        %3381 = vmatpush1.msra.mxu0 0.0
        %3382 = vmatprep.subr.mxu0 0.0
        %3383 = vmatpush1.msra.mxu0 0.0
        %3384 = vmatprep.subr.mxu0 0.0
        %3385 = vmatpush1.msra.mxu0 0.0
        %3386 = vmatprep.subr.mxu0 0.0
        %3387 = vmatpush1.msra.mxu0 0.0
        %3388 = vmatprep.subr.mxu0 0.0
        %3389 = vmatpush1.msra.mxu0 0.0
        %3390 = vmatprep.subr.mxu0 0.0
        %3391 = vmatpush1.msra.mxu0 0.0
        %3392 = vmatprep.subr.mxu0 0.0
        %3393 = vmatpush1.msra.mxu0 0.0
        %3394 = vmatprep.subr.mxu0 0.0
        %3395 = vmatpush1.msra.mxu0 0.0
        %3396 = vmatprep.subr.mxu0 0.0
        %3397 = vmatpush1.msra.mxu0 0.0
        %3398 = vmatprep.subr.mxu0 0.0
        %3399 = vmatpush1.msra.mxu0 %v3363
        %3400 = vmatprep.subr.mxu0 0.0
        %3401 = vmatpush1.msra.mxu0 %v3362
        %3402 = vmatprep.subr.mxu0 0.0
        %3403 = vmatpush1.msra.mxu0 %v3361
        %3404 = vmatprep.subr.mxu0 0.0
        %3405 = vmatpush1.msra.mxu0 %v3360
        %3406 = vmatprep.subr.mxu0 0.0
        %3407 = vmatpush2.msra.mxu0 0.0
        %3408 = vmatprep.subr.mxu0 0.0
        %3409 = vmatpush2.msra.mxu0 0.0
        %3410 = vmatprep.subr.mxu0 0.0
        %3411 = vmatpush2.msra.mxu0 0.0
        %3412 = vmatprep.subr.mxu0 0.0
        %3413 = vmatpush2.msra.mxu0 0.0
        %3414 = vmatprep.subr.mxu0 0.0
        %3415 = vmatpush2.msra.mxu0 0.0
        %3416 = vmatprep.subr.mxu0 0.0
        %3417 = vmatpush2.msra.mxu0 0.0
        %3418 = vmatprep.subr.mxu0 0.0
        %3419 = vmatpush2.msra.mxu0 0.0
        %3420 = vmatprep.subr.mxu0 0.0
        %3421 = vmatpush2.msra.mxu0 0.0
        %3422 = vmatprep.subr.mxu0 0.0
        %3423 = vmatpush2.msra.mxu0 0.0
        %3424 = vmatprep.subr.mxu0 0.0
        %3425 = vmatpush2.msra.mxu0 0.0
        %3426 = vmatprep.subr.mxu0 0.0
        %3427 = vmatpush2.msra.mxu0 0.0
        %3428 = vmatprep.subr.mxu0 0.0
        %3429 = vmatpush2.msra.mxu0 0.0
        %3430 = vmatprep.subr.mxu0 0.0
        %3431 = vmatpush2.msra.mxu0 0.0
        %3432 = vmatprep.subr.mxu0 0.0
        %3433 = vmatpush2.msra.mxu0 0.0
        %3434 = vmatprep.subr.mxu0 0.0
        %3435 = vmatpush2.msra.mxu0 0.0
        %3436 = vmatprep.subr.mxu0 0.0
        %3437 = vmatpush2.msra.mxu0 0.0
        %3438 = vmatprep.mubr.f32.mxu0 0.0
        %3439 = vmatmul.mubr.f32.gmra.mxu0 %v3372
        %v3440 = vpop.f32.mrf.mxu0
        %v3441 = vadd.f32 %v3369, %v3440
        %v3442 = vpop.f32.mrf.mxu0
        %3443 = vdwg.mxu0
        %v3444 = vmax.f32 %v3441, 0.0
        %v3445 = vld [vmem:[%s9] sm:$0xff]
        %vm3446 = vcmask 64512
        %v3448 = vsel %vm3446, %v3445, 0
        %3450 = vmatprep.subr.mxu0 0.0
        %3451 = vmatpush1.msra.mxu0 0.0
        %3452 = vmatprep.subr.mxu0 0.0
        %3453 = vmatpush1.msra.mxu0 0.0
        %3454 = vmatprep.subr.mxu0 0.0
        %3455 = vmatpush1.msra.mxu0 0.0
        %3456 = vmatprep.subr.mxu0 0.0
        %3457 = vmatpush1.msra.mxu0 0.0
        %3458 = vmatprep.subr.mxu0 0.0
        %3459 = vmatpush1.msra.mxu0 0.0
        %3460 = vmatprep.subr.mxu0 0.0
        %3461 = vmatpush1.msra.mxu0 0.0
        %3462 = vmatprep.subr.mxu0 0.0
        %3463 = vmatpush1.msra.mxu0 0.0
        %3464 = vmatprep.subr.mxu0 0.0
        %3465 = vmatpush1.msra.mxu0 0.0
        %3466 = vmatprep.subr.mxu0 0.0
        %3467 = vmatpush1.msra.mxu0 0.0
        %3468 = vmatprep.subr.mxu0 0.0
        %3469 = vmatpush1.msra.mxu0 0.0
        %3470 = vmatprep.subr.mxu0 0.0
        %3471 = vmatpush1.msra.mxu0 0.0
        %3472 = vmatprep.subr.mxu0 0.0
        %3473 = vmatpush1.msra.mxu0 0.0
        %3474 = vmatprep.subr.mxu0 0.0
        %3475 = vmatpush1.msra.mxu0 0.0
        %3476 = vmatprep.subr.mxu0 0.0
        %3477 = vmatpush1.msra.mxu0 0.0
        %3478 = vmatprep.subr.mxu0 0.0
        %3479 = vmatpush1.msra.mxu0 0.0
        %3480 = vmatprep.subr.mxu0 0.0
        %3481 = vmatpush1.msra.mxu0 %v3444
        %3482 = vmatprep.subr.mxu0 0.0
        %3483 = vmatpush2.msra.mxu0 0.0
        %3484 = vmatprep.subr.mxu0 0.0
        %3485 = vmatpush2.msra.mxu0 0.0
        %3486 = vmatprep.subr.mxu0 0.0
        %3487 = vmatpush2.msra.mxu0 0.0
        %3488 = vmatprep.subr.mxu0 0.0
        %3489 = vmatpush2.msra.mxu0 0.0
        %3490 = vmatprep.subr.mxu0 0.0
        %3491 = vmatpush2.msra.mxu0 0.0
        %3492 = vmatprep.subr.mxu0 0.0
        %3493 = vmatpush2.msra.mxu0 0.0
        %3494 = vmatprep.subr.mxu0 0.0
        %3495 = vmatpush2.msra.mxu0 0.0
        %3496 = vmatprep.subr.mxu0 0.0
        %3497 = vmatpush2.msra.mxu0 0.0
        %3498 = vmatprep.subr.mxu0 0.0
        %3499 = vmatpush2.msra.mxu0 0.0
        %3500 = vmatprep.subr.mxu0 0.0
        %3501 = vmatpush2.msra.mxu0 0.0
        %3502 = vmatprep.subr.mxu0 0.0
        %3503 = vmatpush2.msra.mxu0 0.0
        %3504 = vmatprep.subr.mxu0 0.0
        %3505 = vmatpush2.msra.mxu0 0.0
        %3506 = vmatprep.subr.mxu0 0.0
        %3507 = vmatpush2.msra.mxu0 0.0
        %3508 = vmatprep.subr.mxu0 0.0
        %3509 = vmatpush2.msra.mxu0 0.0
        %3510 = vmatprep.subr.mxu0 0.0
        %3511 = vmatpush2.msra.mxu0 0.0
        %3512 = vmatprep.subr.mxu0 0.0
        %3513 = vmatpush2.msra.mxu0 0.0
        %3514 = vmatprep.mubr.f32.mxu0 0.0
        %3515 = vmatmul.mubr.f32.gmra.mxu0 %v3448
        %v3516 = vpop.f32.mrf.mxu0
        %v3517 = vadd.f32 0.0, %v3516
        %v3518 = vpop.f32.mrf.mxu0
        %3519 = vdwg.mxu0
        %v3520 = vld [vmem:[%s10] sm:$0xff]
        %v3521 = vld [vmem:[%s10 + $0x8] sm:$0xff]
        %v3522 = vld [vmem:[%s10 + $0x10] sm:$0xff]
        %v3523 = vld [vmem:[%s10 + $0x18] sm:$0xff]
        %s3524 = scalar_lea.vmem %s9, 8
        %v3525 = vld [vmem:[%s3524] sm:$0xff]
        %v3527 = vsel %vm3446, %v3525, 0
        %3529 = vmatprep.subr.mxu0 0.0
        %3530 = vmatpush1.msra.mxu0 0.0
        %3531 = vmatprep.subr.mxu0 0.0
        %3532 = vmatpush1.msra.mxu0 0.0
        %3533 = vmatprep.subr.mxu0 0.0
        %3534 = vmatpush1.msra.mxu0 0.0
        %3535 = vmatprep.subr.mxu0 0.0
        %3536 = vmatpush1.msra.mxu0 0.0
        %3537 = vmatprep.subr.mxu0 0.0
        %3538 = vmatpush1.msra.mxu0 0.0
        %3539 = vmatprep.subr.mxu0 0.0
        %3540 = vmatpush1.msra.mxu0 0.0
        %3541 = vmatprep.subr.mxu0 0.0
        %3542 = vmatpush1.msra.mxu0 0.0
        %3543 = vmatprep.subr.mxu0 0.0
        %3544 = vmatpush1.msra.mxu0 0.0
        %3545 = vmatprep.subr.mxu0 0.0
        %3546 = vmatpush1.msra.mxu0 0.0
        %3547 = vmatprep.subr.mxu0 0.0
        %3548 = vmatpush1.msra.mxu0 0.0
        %3549 = vmatprep.subr.mxu0 0.0
        %3550 = vmatpush1.msra.mxu0 0.0
        %3551 = vmatprep.subr.mxu0 0.0
        %3552 = vmatpush1.msra.mxu0 0.0
        %3553 = vmatprep.subr.mxu0 0.0
        %3554 = vmatpush1.msra.mxu0 0.0
        %3555 = vmatprep.subr.mxu0 0.0
        %3556 = vmatpush1.msra.mxu0 0.0
        %3557 = vmatprep.subr.mxu0 0.0
        %3558 = vmatpush1.msra.mxu0 0.0
        %3559 = vmatprep.subr.mxu0 0.0
        %3560 = vmatpush1.msra.mxu0 %v3444
        %3561 = vmatprep.subr.mxu0 0.0
        %3562 = vmatpush2.msra.mxu0 0.0
        %3563 = vmatprep.subr.mxu0 0.0
        %3564 = vmatpush2.msra.mxu0 0.0
        %3565 = vmatprep.subr.mxu0 0.0
        %3566 = vmatpush2.msra.mxu0 0.0
        %3567 = vmatprep.subr.mxu0 0.0
        %3568 = vmatpush2.msra.mxu0 0.0
        %3569 = vmatprep.subr.mxu0 0.0
        %3570 = vmatpush2.msra.mxu0 0.0
        %3571 = vmatprep.subr.mxu0 0.0
        %3572 = vmatpush2.msra.mxu0 0.0
        %3573 = vmatprep.subr.mxu0 0.0
        %3574 = vmatpush2.msra.mxu0 0.0
        %3575 = vmatprep.subr.mxu0 0.0
        %3576 = vmatpush2.msra.mxu0 0.0
        %3577 = vmatprep.subr.mxu0 0.0
        %3578 = vmatpush2.msra.mxu0 0.0
        %3579 = vmatprep.subr.mxu0 0.0
        %3580 = vmatpush2.msra.mxu0 0.0
        %3581 = vmatprep.subr.mxu0 0.0
        %3582 = vmatpush2.msra.mxu0 0.0
        %3583 = vmatprep.subr.mxu0 0.0
        %3584 = vmatpush2.msra.mxu0 0.0
        %3585 = vmatprep.subr.mxu0 0.0
        %3586 = vmatpush2.msra.mxu0 0.0
        %3587 = vmatprep.subr.mxu0 0.0
        %3588 = vmatpush2.msra.mxu0 0.0
        %3589 = vmatprep.subr.mxu0 0.0
        %3590 = vmatpush2.msra.mxu0 0.0
        %3591 = vmatprep.subr.mxu0 0.0
        %3592 = vmatpush2.msra.mxu0 0.0
        %3593 = vmatprep.mubr.f32.mxu0 0.0
        %3594 = vmatmul.mubr.f32.gmra.mxu0 %v3527
        %v3595 = vpop.f32.mrf.mxu0
        %v3596 = vadd.f32 0.0, %v3595
        %v3597 = vpop.f32.mrf.mxu0
        %3598 = vdwg.mxu0
        %s3599 = scalar_lea.vmem %s10, 32
        %v3600 = vld [vmem:[%s3599] sm:$0xff]
        %v3601 = vld [vmem:[%s3599 + $0x8] sm:$0xff]
        %v3602 = vld [vmem:[%s3599 + $0x10] sm:$0xff]
        %v3603 = vld [vmem:[%s3599 + $0x18] sm:$0xff]
        %v3605 = vsel %vm1044, %v3596, 0
        %3607 = vmatprep.subr.mxu0 0.0
        %3608 = vmatpush1.msra.mxu0 0.0
        %3609 = vmatprep.subr.mxu0 0.0
        %3610 = vmatpush1.msra.mxu0 0.0
        %3611 = vmatprep.subr.mxu0 0.0
        %3612 = vmatpush1.msra.mxu0 0.0
        %3613 = vmatprep.subr.mxu0 0.0
        %3614 = vmatpush1.msra.mxu0 0.0
        %3615 = vmatprep.subr.mxu0 0.0
        %3616 = vmatpush1.msra.mxu0 0.0
        %3617 = vmatprep.subr.mxu0 0.0
        %3618 = vmatpush1.msra.mxu0 0.0
        %3619 = vmatprep.subr.mxu0 0.0
        %3620 = vmatpush1.msra.mxu0 0.0
        %3621 = vmatprep.subr.mxu0 0.0
        %3622 = vmatpush1.msra.mxu0 0.0
        %3623 = vmatprep.subr.mxu0 0.0
        %3624 = vmatpush1.msra.mxu0 0.0
        %3625 = vmatprep.subr.mxu0 0.0
        %3626 = vmatpush1.msra.mxu0 0.0
        %3627 = vmatprep.subr.mxu0 0.0
        %3628 = vmatpush1.msra.mxu0 0.0
        %3629 = vmatprep.subr.mxu0 0.0
        %3630 = vmatpush1.msra.mxu0 0.0
        %3631 = vmatprep.subr.mxu0 0.0
        %3632 = vmatpush1.msra.mxu0 %v3603
        %3633 = vmatprep.subr.mxu0 0.0
        %3634 = vmatpush1.msra.mxu0 %v3602
        %3635 = vmatprep.subr.mxu0 0.0
        %3636 = vmatpush1.msra.mxu0 %v3601
        %3637 = vmatprep.subr.mxu0 0.0
        %3638 = vmatpush1.msra.mxu0 %v3600
        %3639 = vmatprep.subr.mxu0 0.0
        %3640 = vmatpush2.msra.mxu0 0.0
        %3641 = vmatprep.subr.mxu0 0.0
        %3642 = vmatpush2.msra.mxu0 0.0
        %3643 = vmatprep.subr.mxu0 0.0
        %3644 = vmatpush2.msra.mxu0 0.0
        %3645 = vmatprep.subr.mxu0 0.0
        %3646 = vmatpush2.msra.mxu0 0.0
        %3647 = vmatprep.subr.mxu0 0.0
        %3648 = vmatpush2.msra.mxu0 0.0
        %3649 = vmatprep.subr.mxu0 0.0
        %3650 = vmatpush2.msra.mxu0 0.0
        %3651 = vmatprep.subr.mxu0 0.0
        %3652 = vmatpush2.msra.mxu0 0.0
        %3653 = vmatprep.subr.mxu0 0.0
        %3654 = vmatpush2.msra.mxu0 0.0
        %3655 = vmatprep.subr.mxu0 0.0
        %3656 = vmatpush2.msra.mxu0 0.0
        %3657 = vmatprep.subr.mxu0 0.0
        %3658 = vmatpush2.msra.mxu0 0.0
        %3659 = vmatprep.subr.mxu0 0.0
        %3660 = vmatpush2.msra.mxu0 0.0
        %3661 = vmatprep.subr.mxu0 0.0
        %3662 = vmatpush2.msra.mxu0 0.0
        %3663 = vmatprep.subr.mxu0 0.0
        %3664 = vmatpush2.msra.mxu0 0.0
        %3665 = vmatprep.subr.mxu0 0.0
        %3666 = vmatpush2.msra.mxu0 0.0
        %3667 = vmatprep.subr.mxu0 0.0
        %3668 = vmatpush2.msra.mxu0 0.0
        %3669 = vmatprep.subr.mxu0 0.0
        %3670 = vmatpush2.msra.mxu0 0.0
        %3671 = vmatprep.mubr.f32.mxu0 0.0
        %3672 = vmatmul.mubr.f32.gmra.mxu0 %v3605
        %v3673 = vpop.f32.mrf.mxu0
        %v3674 = vadd.f32 0.0, %v3673
        %v3675 = vpop.f32.mrf.mxu0
        %3676 = vdwg.mxu0
        %v3678 = vsel %vm1044, %v3517, 0
        %3680 = vmatprep.subr.mxu0 0.0
        %3681 = vmatpush1.msra.mxu0 0.0
        %3682 = vmatprep.subr.mxu0 0.0
        %3683 = vmatpush1.msra.mxu0 0.0
        %3684 = vmatprep.subr.mxu0 0.0
        %3685 = vmatpush1.msra.mxu0 0.0
        %3686 = vmatprep.subr.mxu0 0.0
        %3687 = vmatpush1.msra.mxu0 0.0
        %3688 = vmatprep.subr.mxu0 0.0
        %3689 = vmatpush1.msra.mxu0 0.0
        %3690 = vmatprep.subr.mxu0 0.0
        %3691 = vmatpush1.msra.mxu0 0.0
        %3692 = vmatprep.subr.mxu0 0.0
        %3693 = vmatpush1.msra.mxu0 0.0
        %3694 = vmatprep.subr.mxu0 0.0
        %3695 = vmatpush1.msra.mxu0 0.0
        %3696 = vmatprep.subr.mxu0 0.0
        %3697 = vmatpush1.msra.mxu0 0.0
        %3698 = vmatprep.subr.mxu0 0.0
        %3699 = vmatpush1.msra.mxu0 0.0
        %3700 = vmatprep.subr.mxu0 0.0
        %3701 = vmatpush1.msra.mxu0 0.0
        %3702 = vmatprep.subr.mxu0 0.0
        %3703 = vmatpush1.msra.mxu0 0.0
        %3704 = vmatprep.subr.mxu0 0.0
        %3705 = vmatpush1.msra.mxu0 %v3523
        %3706 = vmatprep.subr.mxu0 0.0
        %3707 = vmatpush1.msra.mxu0 %v3522
        %3708 = vmatprep.subr.mxu0 0.0
        %3709 = vmatpush1.msra.mxu0 %v3521
        %3710 = vmatprep.subr.mxu0 0.0
        %3711 = vmatpush1.msra.mxu0 %v3520
        %3712 = vmatprep.subr.mxu0 0.0
        %3713 = vmatpush2.msra.mxu0 0.0
        %3714 = vmatprep.subr.mxu0 0.0
        %3715 = vmatpush2.msra.mxu0 0.0
        %3716 = vmatprep.subr.mxu0 0.0
        %3717 = vmatpush2.msra.mxu0 0.0
        %3718 = vmatprep.subr.mxu0 0.0
        %3719 = vmatpush2.msra.mxu0 0.0
        %3720 = vmatprep.subr.mxu0 0.0
        %3721 = vmatpush2.msra.mxu0 0.0
        %3722 = vmatprep.subr.mxu0 0.0
        %3723 = vmatpush2.msra.mxu0 0.0
        %3724 = vmatprep.subr.mxu0 0.0
        %3725 = vmatpush2.msra.mxu0 0.0
        %3726 = vmatprep.subr.mxu0 0.0
        %3727 = vmatpush2.msra.mxu0 0.0
        %3728 = vmatprep.subr.mxu0 0.0
        %3729 = vmatpush2.msra.mxu0 0.0
        %3730 = vmatprep.subr.mxu0 0.0
        %3731 = vmatpush2.msra.mxu0 0.0
        %3732 = vmatprep.subr.mxu0 0.0
        %3733 = vmatpush2.msra.mxu0 0.0
        %3734 = vmatprep.subr.mxu0 0.0
        %3735 = vmatpush2.msra.mxu0 0.0
        %3736 = vmatprep.subr.mxu0 0.0
        %3737 = vmatpush2.msra.mxu0 0.0
        %3738 = vmatprep.subr.mxu0 0.0
        %3739 = vmatpush2.msra.mxu0 0.0
        %3740 = vmatprep.subr.mxu0 0.0
        %3741 = vmatpush2.msra.mxu0 0.0
        %3742 = vmatprep.subr.mxu0 0.0
        %3743 = vmatpush2.msra.mxu0 0.0
        %3744 = vmatprep.mubr.f32.mxu0 0.0
        %3745 = vmatmul.mubr.f32.gmra.mxu0 %v3678
        %v3746 = vpop.f32.mrf.mxu0
        %v3747 = vadd.f32 %v3674, %v3746
        %v3748 = vpop.f32.mrf.mxu0
        %3749 = vdwg.mxu0
        %s3750 = scalar_lea.vmem %s9, 16
        %v3751 = vld [vmem:[%s3750] sm:$0xff]
        %v3753 = vsel %vm3446, %v3751, 0
        %3755 = vmatprep.subr.mxu0 0.0
        %3756 = vmatpush1.msra.mxu0 0.0
        %3757 = vmatprep.subr.mxu0 0.0
        %3758 = vmatpush1.msra.mxu0 0.0
        %3759 = vmatprep.subr.mxu0 0.0
        %3760 = vmatpush1.msra.mxu0 0.0
        %3761 = vmatprep.subr.mxu0 0.0
        %3762 = vmatpush1.msra.mxu0 0.0
        %3763 = vmatprep.subr.mxu0 0.0
        %3764 = vmatpush1.msra.mxu0 0.0
        %3765 = vmatprep.subr.mxu0 0.0
        %3766 = vmatpush1.msra.mxu0 0.0
        %3767 = vmatprep.subr.mxu0 0.0
        %3768 = vmatpush1.msra.mxu0 0.0
        %3769 = vmatprep.subr.mxu0 0.0
        %3770 = vmatpush1.msra.mxu0 0.0
        %3771 = vmatprep.subr.mxu0 0.0
        %3772 = vmatpush1.msra.mxu0 0.0
        %3773 = vmatprep.subr.mxu0 0.0
        %3774 = vmatpush1.msra.mxu0 0.0
        %3775 = vmatprep.subr.mxu0 0.0
        %3776 = vmatpush1.msra.mxu0 0.0
        %3777 = vmatprep.subr.mxu0 0.0
        %3778 = vmatpush1.msra.mxu0 0.0
        %3779 = vmatprep.subr.mxu0 0.0
        %3780 = vmatpush1.msra.mxu0 0.0
        %3781 = vmatprep.subr.mxu0 0.0
        %3782 = vmatpush1.msra.mxu0 0.0
        %3783 = vmatprep.subr.mxu0 0.0
        %3784 = vmatpush1.msra.mxu0 0.0
        %3785 = vmatprep.subr.mxu0 0.0
        %3786 = vmatpush1.msra.mxu0 %v3444
        %3787 = vmatprep.subr.mxu0 0.0
        %3788 = vmatpush2.msra.mxu0 0.0
        %3789 = vmatprep.subr.mxu0 0.0
        %3790 = vmatpush2.msra.mxu0 0.0
        %3791 = vmatprep.subr.mxu0 0.0
        %3792 = vmatpush2.msra.mxu0 0.0
        %3793 = vmatprep.subr.mxu0 0.0
        %3794 = vmatpush2.msra.mxu0 0.0
        %3795 = vmatprep.subr.mxu0 0.0
        %3796 = vmatpush2.msra.mxu0 0.0
        %3797 = vmatprep.subr.mxu0 0.0
        %3798 = vmatpush2.msra.mxu0 0.0
        %3799 = vmatprep.subr.mxu0 0.0
        %3800 = vmatpush2.msra.mxu0 0.0
        %3801 = vmatprep.subr.mxu0 0.0
        %3802 = vmatpush2.msra.mxu0 0.0
        %3803 = vmatprep.subr.mxu0 0.0
        %3804 = vmatpush2.msra.mxu0 0.0
        %3805 = vmatprep.subr.mxu0 0.0
        %3806 = vmatpush2.msra.mxu0 0.0
        %3807 = vmatprep.subr.mxu0 0.0
        %3808 = vmatpush2.msra.mxu0 0.0
        %3809 = vmatprep.subr.mxu0 0.0
        %3810 = vmatpush2.msra.mxu0 0.0
        %3811 = vmatprep.subr.mxu0 0.0
        %3812 = vmatpush2.msra.mxu0 0.0
        %3813 = vmatprep.subr.mxu0 0.0
        %3814 = vmatpush2.msra.mxu0 0.0
        %3815 = vmatprep.subr.mxu0 0.0
        %3816 = vmatpush2.msra.mxu0 0.0
        %3817 = vmatprep.subr.mxu0 0.0
        %3818 = vmatpush2.msra.mxu0 0.0
        %3819 = vmatprep.mubr.f32.mxu0 0.0
        %3820 = vmatmul.mubr.f32.gmra.mxu0 %v3753
        %v3821 = vpop.f32.mrf.mxu0
        %v3822 = vadd.f32 0.0, %v3821
        %v3823 = vpop.f32.mrf.mxu0
        %3824 = vdwg.mxu0
        %s3825 = scalar_lea.vmem %s10, 64
        %v3826 = vld [vmem:[%s3825] sm:$0xff]
        %v3827 = vld [vmem:[%s3825 + $0x8] sm:$0xff]
        %v3828 = vld [vmem:[%s3825 + $0x10] sm:$0xff]
        %v3829 = vld [vmem:[%s3825 + $0x18] sm:$0xff]
        %v3831 = vsel %vm1044, %v3822, 0
        %3833 = vmatprep.subr.mxu0 0.0
        %3834 = vmatpush1.msra.mxu0 0.0
        %3835 = vmatprep.subr.mxu0 0.0
        %3836 = vmatpush1.msra.mxu0 0.0
        %3837 = vmatprep.subr.mxu0 0.0
        %3838 = vmatpush1.msra.mxu0 0.0
        %3839 = vmatprep.subr.mxu0 0.0
        %3840 = vmatpush1.msra.mxu0 0.0
        %3841 = vmatprep.subr.mxu0 0.0
        %3842 = vmatpush1.msra.mxu0 0.0
        %3843 = vmatprep.subr.mxu0 0.0
        %3844 = vmatpush1.msra.mxu0 0.0
        %3845 = vmatprep.subr.mxu0 0.0
        %3846 = vmatpush1.msra.mxu0 0.0
        %3847 = vmatprep.subr.mxu0 0.0
        %3848 = vmatpush1.msra.mxu0 0.0
        %3849 = vmatprep.subr.mxu0 0.0
        %3850 = vmatpush1.msra.mxu0 0.0
        %3851 = vmatprep.subr.mxu0 0.0
        %3852 = vmatpush1.msra.mxu0 0.0
        %3853 = vmatprep.subr.mxu0 0.0
        %3854 = vmatpush1.msra.mxu0 0.0
        %3855 = vmatprep.subr.mxu0 0.0
        %3856 = vmatpush1.msra.mxu0 0.0
        %3857 = vmatprep.subr.mxu0 0.0
        %3858 = vmatpush1.msra.mxu0 %v3829
        %3859 = vmatprep.subr.mxu0 0.0
        %3860 = vmatpush1.msra.mxu0 %v3828
        %3861 = vmatprep.subr.mxu0 0.0
        %3862 = vmatpush1.msra.mxu0 %v3827
        %3863 = vmatprep.subr.mxu0 0.0
        %3864 = vmatpush1.msra.mxu0 %v3826
        %3865 = vmatprep.subr.mxu0 0.0
        %3866 = vmatpush2.msra.mxu0 0.0
        %3867 = vmatprep.subr.mxu0 0.0
        %3868 = vmatpush2.msra.mxu0 0.0
        %3869 = vmatprep.subr.mxu0 0.0
        %3870 = vmatpush2.msra.mxu0 0.0
        %3871 = vmatprep.subr.mxu0 0.0
        %3872 = vmatpush2.msra.mxu0 0.0
        %3873 = vmatprep.subr.mxu0 0.0
        %3874 = vmatpush2.msra.mxu0 0.0
        %3875 = vmatprep.subr.mxu0 0.0
        %3876 = vmatpush2.msra.mxu0 0.0
        %3877 = vmatprep.subr.mxu0 0.0
        %3878 = vmatpush2.msra.mxu0 0.0
        %3879 = vmatprep.subr.mxu0 0.0
        %3880 = vmatpush2.msra.mxu0 0.0
        %3881 = vmatprep.subr.mxu0 0.0
        %3882 = vmatpush2.msra.mxu0 0.0
        %3883 = vmatprep.subr.mxu0 0.0
        %3884 = vmatpush2.msra.mxu0 0.0
        %3885 = vmatprep.subr.mxu0 0.0
        %3886 = vmatpush2.msra.mxu0 0.0
        %3887 = vmatprep.subr.mxu0 0.0
        %3888 = vmatpush2.msra.mxu0 0.0
        %3889 = vmatprep.subr.mxu0 0.0
        %3890 = vmatpush2.msra.mxu0 0.0
        %3891 = vmatprep.subr.mxu0 0.0
        %3892 = vmatpush2.msra.mxu0 0.0
        %3893 = vmatprep.subr.mxu0 0.0
        %3894 = vmatpush2.msra.mxu0 0.0
        %3895 = vmatprep.subr.mxu0 0.0
        %3896 = vmatpush2.msra.mxu0 0.0
        %3897 = vmatprep.mubr.f32.mxu0 0.0
        %3898 = vmatmul.mubr.f32.gmra.mxu0 %v3831
        %v3899 = vpop.f32.mrf.mxu0
        %v3900 = vadd.f32 0.0, %v3899
        %v3901 = vpop.f32.mrf.mxu0
        %3902 = vdwg.mxu0
        %v3903 = vadd.f32 %v3747, %v3900
        %s3904 = scalar_lea.vmem %s9, 24
        %v3905 = vld [vmem:[%s3904] sm:$0xff]
        %v3907 = vsel %vm3446, %v3905, 0
        %3909 = vmatprep.subr.mxu0 0.0
        %3910 = vmatpush1.msra.mxu0 0.0
        %3911 = vmatprep.subr.mxu0 0.0
        %3912 = vmatpush1.msra.mxu0 0.0
        %3913 = vmatprep.subr.mxu0 0.0
        %3914 = vmatpush1.msra.mxu0 0.0
        %3915 = vmatprep.subr.mxu0 0.0
        %3916 = vmatpush1.msra.mxu0 0.0
        %3917 = vmatprep.subr.mxu0 0.0
        %3918 = vmatpush1.msra.mxu0 0.0
        %3919 = vmatprep.subr.mxu0 0.0
        %3920 = vmatpush1.msra.mxu0 0.0
        %3921 = vmatprep.subr.mxu0 0.0
        %3922 = vmatpush1.msra.mxu0 0.0
        %3923 = vmatprep.subr.mxu0 0.0
        %3924 = vmatpush1.msra.mxu0 0.0
        %3925 = vmatprep.subr.mxu0 0.0
        %3926 = vmatpush1.msra.mxu0 0.0
        %3927 = vmatprep.subr.mxu0 0.0
        %3928 = vmatpush1.msra.mxu0 0.0
        %3929 = vmatprep.subr.mxu0 0.0
        %3930 = vmatpush1.msra.mxu0 0.0
        %3931 = vmatprep.subr.mxu0 0.0
        %3932 = vmatpush1.msra.mxu0 0.0
        %3933 = vmatprep.subr.mxu0 0.0
        %3934 = vmatpush1.msra.mxu0 0.0
        %3935 = vmatprep.subr.mxu0 0.0
        %3936 = vmatpush1.msra.mxu0 0.0
        %3937 = vmatprep.subr.mxu0 0.0
        %3938 = vmatpush1.msra.mxu0 0.0
        %3939 = vmatprep.subr.mxu0 0.0
        %3940 = vmatpush1.msra.mxu0 %v3444
        %3941 = vmatprep.subr.mxu0 0.0
        %3942 = vmatpush2.msra.mxu0 0.0
        %3943 = vmatprep.subr.mxu0 0.0
        %3944 = vmatpush2.msra.mxu0 0.0
        %3945 = vmatprep.subr.mxu0 0.0
        %3946 = vmatpush2.msra.mxu0 0.0
        %3947 = vmatprep.subr.mxu0 0.0
        %3948 = vmatpush2.msra.mxu0 0.0
        %3949 = vmatprep.subr.mxu0 0.0
        %3950 = vmatpush2.msra.mxu0 0.0
        %3951 = vmatprep.subr.mxu0 0.0
        %3952 = vmatpush2.msra.mxu0 0.0
        %3953 = vmatprep.subr.mxu0 0.0
        %3954 = vmatpush2.msra.mxu0 0.0
        %3955 = vmatprep.subr.mxu0 0.0
        %3956 = vmatpush2.msra.mxu0 0.0
        %3957 = vmatprep.subr.mxu0 0.0
        %3958 = vmatpush2.msra.mxu0 0.0
        %3959 = vmatprep.subr.mxu0 0.0
        %3960 = vmatpush2.msra.mxu0 0.0
        %3961 = vmatprep.subr.mxu0 0.0
        %3962 = vmatpush2.msra.mxu0 0.0
        %3963 = vmatprep.subr.mxu0 0.0
        %3964 = vmatpush2.msra.mxu0 0.0
        %3965 = vmatprep.subr.mxu0 0.0
        %3966 = vmatpush2.msra.mxu0 0.0
        %3967 = vmatprep.subr.mxu0 0.0
        %3968 = vmatpush2.msra.mxu0 0.0
        %3969 = vmatprep.subr.mxu0 0.0
        %3970 = vmatpush2.msra.mxu0 0.0
        %3971 = vmatprep.subr.mxu0 0.0
        %3972 = vmatpush2.msra.mxu0 0.0
        %3973 = vmatprep.mubr.f32.mxu0 0.0
        %3974 = vmatmul.mubr.f32.gmra.mxu0 %v3907
        %v3975 = vpop.f32.mrf.mxu0
        %v3976 = vadd.f32 0.0, %v3975
        %v3977 = vpop.f32.mrf.mxu0
        %3978 = vdwg.mxu0
        %s3979 = scalar_lea.vmem %s10, 96
        %v3980 = vld [vmem:[%s3979] sm:$0xff]
        %v3981 = vld [vmem:[%s3979 + $0x8] sm:$0xff]
        %v3982 = vld [vmem:[%s3979 + $0x10] sm:$0xff]
        %v3983 = vld [vmem:[%s3979 + $0x18] sm:$0xff]
        %v3985 = vsel %vm1044, %v3976, 0
        %3987 = vmatprep.subr.mxu0 0.0
        %3988 = vmatpush1.msra.mxu0 0.0
        %3989 = vmatprep.subr.mxu0 0.0
        %3990 = vmatpush1.msra.mxu0 0.0
        %3991 = vmatprep.subr.mxu0 0.0
        %3992 = vmatpush1.msra.mxu0 0.0
        %3993 = vmatprep.subr.mxu0 0.0
        %3994 = vmatpush1.msra.mxu0 0.0
        %3995 = vmatprep.subr.mxu0 0.0
        %3996 = vmatpush1.msra.mxu0 0.0
        %3997 = vmatprep.subr.mxu0 0.0
        %3998 = vmatpush1.msra.mxu0 0.0
        %3999 = vmatprep.subr.mxu0 0.0
        %4000 = vmatpush1.msra.mxu0 0.0
        %4001 = vmatprep.subr.mxu0 0.0
        %4002 = vmatpush1.msra.mxu0 0.0
        %4003 = vmatprep.subr.mxu0 0.0
        %4004 = vmatpush1.msra.mxu0 0.0
        %4005 = vmatprep.subr.mxu0 0.0
        %4006 = vmatpush1.msra.mxu0 0.0
        %4007 = vmatprep.subr.mxu0 0.0
        %4008 = vmatpush1.msra.mxu0 0.0
        %4009 = vmatprep.subr.mxu0 0.0
        %4010 = vmatpush1.msra.mxu0 0.0
        %4011 = vmatprep.subr.mxu0 0.0
        %4012 = vmatpush1.msra.mxu0 %v3983
        %4013 = vmatprep.subr.mxu0 0.0
        %4014 = vmatpush1.msra.mxu0 %v3982
        %4015 = vmatprep.subr.mxu0 0.0
        %4016 = vmatpush1.msra.mxu0 %v3981
        %4017 = vmatprep.subr.mxu0 0.0
        %4018 = vmatpush1.msra.mxu0 %v3980
        %4019 = vmatprep.subr.mxu0 0.0
        %4020 = vmatpush2.msra.mxu0 0.0
        %4021 = vmatprep.subr.mxu0 0.0
        %4022 = vmatpush2.msra.mxu0 0.0
        %4023 = vmatprep.subr.mxu0 0.0
        %4024 = vmatpush2.msra.mxu0 0.0
        %4025 = vmatprep.subr.mxu0 0.0
        %4026 = vmatpush2.msra.mxu0 0.0
        %4027 = vmatprep.subr.mxu0 0.0
        %4028 = vmatpush2.msra.mxu0 0.0
        %4029 = vmatprep.subr.mxu0 0.0
        %4030 = vmatpush2.msra.mxu0 0.0
        %4031 = vmatprep.subr.mxu0 0.0
        %4032 = vmatpush2.msra.mxu0 0.0
        %4033 = vmatprep.subr.mxu0 0.0
        %4034 = vmatpush2.msra.mxu0 0.0
        %4035 = vmatprep.subr.mxu0 0.0
        %4036 = vmatpush2.msra.mxu0 0.0
        %4037 = vmatprep.subr.mxu0 0.0
        %4038 = vmatpush2.msra.mxu0 0.0
        %4039 = vmatprep.subr.mxu0 0.0
        %4040 = vmatpush2.msra.mxu0 0.0
        %4041 = vmatprep.subr.mxu0 0.0
        %4042 = vmatpush2.msra.mxu0 0.0
        %4043 = vmatprep.subr.mxu0 0.0
        %4044 = vmatpush2.msra.mxu0 0.0
        %4045 = vmatprep.subr.mxu0 0.0
        %4046 = vmatpush2.msra.mxu0 0.0
        %4047 = vmatprep.subr.mxu0 0.0
        %4048 = vmatpush2.msra.mxu0 0.0
        %4049 = vmatprep.subr.mxu0 0.0
        %4050 = vmatpush2.msra.mxu0 0.0
        %4051 = vmatprep.mubr.f32.mxu0 0.0
        %4052 = vmatmul.mubr.f32.gmra.mxu0 %v3985
        %v4053 = vpop.f32.mrf.mxu0
        %v4054 = vadd.f32 0.0, %v4053
        %v4055 = vpop.f32.mrf.mxu0
        %4056 = vdwg.mxu0
        %v4057 = vadd.f32 %v3903, %v4054
        %s4058 = scalar_lea.vmem %s9, 32
        %v4059 = vld [vmem:[%s4058] sm:$0xff]
        %v4061 = vsel %vm3446, %v4059, 0
        %4063 = vmatprep.subr.mxu0 0.0
        %4064 = vmatpush1.msra.mxu0 0.0
        %4065 = vmatprep.subr.mxu0 0.0
        %4066 = vmatpush1.msra.mxu0 0.0
        %4067 = vmatprep.subr.mxu0 0.0
        %4068 = vmatpush1.msra.mxu0 0.0
        %4069 = vmatprep.subr.mxu0 0.0
        %4070 = vmatpush1.msra.mxu0 0.0
        %4071 = vmatprep.subr.mxu0 0.0
        %4072 = vmatpush1.msra.mxu0 0.0
        %4073 = vmatprep.subr.mxu0 0.0
        %4074 = vmatpush1.msra.mxu0 0.0
        %4075 = vmatprep.subr.mxu0 0.0
        %4076 = vmatpush1.msra.mxu0 0.0
        %4077 = vmatprep.subr.mxu0 0.0
        %4078 = vmatpush1.msra.mxu0 0.0
        %4079 = vmatprep.subr.mxu0 0.0
        %4080 = vmatpush1.msra.mxu0 0.0
        %4081 = vmatprep.subr.mxu0 0.0
        %4082 = vmatpush1.msra.mxu0 0.0
        %4083 = vmatprep.subr.mxu0 0.0
        %4084 = vmatpush1.msra.mxu0 0.0
        %4085 = vmatprep.subr.mxu0 0.0
        %4086 = vmatpush1.msra.mxu0 0.0
        %4087 = vmatprep.subr.mxu0 0.0
        %4088 = vmatpush1.msra.mxu0 0.0
        %4089 = vmatprep.subr.mxu0 0.0
        %4090 = vmatpush1.msra.mxu0 0.0
        %4091 = vmatprep.subr.mxu0 0.0
        %4092 = vmatpush1.msra.mxu0 0.0
        %4093 = vmatprep.subr.mxu0 0.0
        %4094 = vmatpush1.msra.mxu0 %v3444
        %4095 = vmatprep.subr.mxu0 0.0
        %4096 = vmatpush2.msra.mxu0 0.0
        %4097 = vmatprep.subr.mxu0 0.0
        %4098 = vmatpush2.msra.mxu0 0.0
        %4099 = vmatprep.subr.mxu0 0.0
        %4100 = vmatpush2.msra.mxu0 0.0
        %4101 = vmatprep.subr.mxu0 0.0
        %4102 = vmatpush2.msra.mxu0 0.0
        %4103 = vmatprep.subr.mxu0 0.0
        %4104 = vmatpush2.msra.mxu0 0.0
        %4105 = vmatprep.subr.mxu0 0.0
        %4106 = vmatpush2.msra.mxu0 0.0
        %4107 = vmatprep.subr.mxu0 0.0
        %4108 = vmatpush2.msra.mxu0 0.0
        %4109 = vmatprep.subr.mxu0 0.0
        %4110 = vmatpush2.msra.mxu0 0.0
        %4111 = vmatprep.subr.mxu0 0.0
        %4112 = vmatpush2.msra.mxu0 0.0
        %4113 = vmatprep.subr.mxu0 0.0
        %4114 = vmatpush2.msra.mxu0 0.0
        %4115 = vmatprep.subr.mxu0 0.0
        %4116 = vmatpush2.msra.mxu0 0.0
        %4117 = vmatprep.subr.mxu0 0.0
        %4118 = vmatpush2.msra.mxu0 0.0
        %4119 = vmatprep.subr.mxu0 0.0
        %4120 = vmatpush2.msra.mxu0 0.0
        %4121 = vmatprep.subr.mxu0 0.0
        %4122 = vmatpush2.msra.mxu0 0.0
        %4123 = vmatprep.subr.mxu0 0.0
        %4124 = vmatpush2.msra.mxu0 0.0
        %4125 = vmatprep.subr.mxu0 0.0
        %4126 = vmatpush2.msra.mxu0 0.0
        %4127 = vmatprep.mubr.f32.mxu0 0.0
        %4128 = vmatmul.mubr.f32.gmra.mxu0 %v4061
        %v4129 = vpop.f32.mrf.mxu0
        %v4130 = vadd.f32 0.0, %v4129
        %v4131 = vpop.f32.mrf.mxu0
        %4132 = vdwg.mxu0
        %s4133 = scalar_lea.vmem %s10, 128
        %v4134 = vld [vmem:[%s4133] sm:$0xff]
        %v4135 = vld [vmem:[%s4133 + $0x8] sm:$0xff]
        %v4136 = vld [vmem:[%s4133 + $0x10] sm:$0xff]
        %v4137 = vld [vmem:[%s4133 + $0x18] sm:$0xff]
        %v4139 = vsel %vm1044, %v4130, 0
        %4141 = vmatprep.subr.mxu0 0.0
        %4142 = vmatpush1.msra.mxu0 0.0
        %4143 = vmatprep.subr.mxu0 0.0
        %4144 = vmatpush1.msra.mxu0 0.0
        %4145 = vmatprep.subr.mxu0 0.0
        %4146 = vmatpush1.msra.mxu0 0.0
        %4147 = vmatprep.subr.mxu0 0.0
        %4148 = vmatpush1.msra.mxu0 0.0
        %4149 = vmatprep.subr.mxu0 0.0
        %4150 = vmatpush1.msra.mxu0 0.0
        %4151 = vmatprep.subr.mxu0 0.0
        %4152 = vmatpush1.msra.mxu0 0.0
        %4153 = vmatprep.subr.mxu0 0.0
        %4154 = vmatpush1.msra.mxu0 0.0
        %4155 = vmatprep.subr.mxu0 0.0
        %4156 = vmatpush1.msra.mxu0 0.0
        %4157 = vmatprep.subr.mxu0 0.0
        %4158 = vmatpush1.msra.mxu0 0.0
        %4159 = vmatprep.subr.mxu0 0.0
        %4160 = vmatpush1.msra.mxu0 0.0
        %4161 = vmatprep.subr.mxu0 0.0
        %4162 = vmatpush1.msra.mxu0 0.0
        %4163 = vmatprep.subr.mxu0 0.0
        %4164 = vmatpush1.msra.mxu0 0.0
        %4165 = vmatprep.subr.mxu0 0.0
        %4166 = vmatpush1.msra.mxu0 %v4137
        %4167 = vmatprep.subr.mxu0 0.0
        %4168 = vmatpush1.msra.mxu0 %v4136
        %4169 = vmatprep.subr.mxu0 0.0
        %4170 = vmatpush1.msra.mxu0 %v4135
        %4171 = vmatprep.subr.mxu0 0.0
        %4172 = vmatpush1.msra.mxu0 %v4134
        %4173 = vmatprep.subr.mxu0 0.0
        %4174 = vmatpush2.msra.mxu0 0.0
        %4175 = vmatprep.subr.mxu0 0.0
        %4176 = vmatpush2.msra.mxu0 0.0
        %4177 = vmatprep.subr.mxu0 0.0
        %4178 = vmatpush2.msra.mxu0 0.0
        %4179 = vmatprep.subr.mxu0 0.0
        %4180 = vmatpush2.msra.mxu0 0.0
        %4181 = vmatprep.subr.mxu0 0.0
        %4182 = vmatpush2.msra.mxu0 0.0
        %4183 = vmatprep.subr.mxu0 0.0
        %4184 = vmatpush2.msra.mxu0 0.0
        %4185 = vmatprep.subr.mxu0 0.0
        %4186 = vmatpush2.msra.mxu0 0.0
        %4187 = vmatprep.subr.mxu0 0.0
        %4188 = vmatpush2.msra.mxu0 0.0
        %4189 = vmatprep.subr.mxu0 0.0
        %4190 = vmatpush2.msra.mxu0 0.0
        %4191 = vmatprep.subr.mxu0 0.0
        %4192 = vmatpush2.msra.mxu0 0.0
        %4193 = vmatprep.subr.mxu0 0.0
        %4194 = vmatpush2.msra.mxu0 0.0
        %4195 = vmatprep.subr.mxu0 0.0
        %4196 = vmatpush2.msra.mxu0 0.0
        %4197 = vmatprep.subr.mxu0 0.0
        %4198 = vmatpush2.msra.mxu0 0.0
        %4199 = vmatprep.subr.mxu0 0.0
        %4200 = vmatpush2.msra.mxu0 0.0
        %4201 = vmatprep.subr.mxu0 0.0
        %4202 = vmatpush2.msra.mxu0 0.0
        %4203 = vmatprep.subr.mxu0 0.0
        %4204 = vmatpush2.msra.mxu0 0.0
        %4205 = vmatprep.mubr.f32.mxu0 0.0
        %4206 = vmatmul.mubr.f32.gmra.mxu0 %v4139
        %v4207 = vpop.f32.mrf.mxu0
        %v4208 = vadd.f32 0.0, %v4207
        %v4209 = vpop.f32.mrf.mxu0
        %4210 = vdwg.mxu0
        %v4211 = vadd.f32 %v4057, %v4208
        %s4212 = scalar_lea.vmem %s9, 40
        %v4213 = vld [vmem:[%s4212] sm:$0xff]
        %v4215 = vsel %vm3446, %v4213, 0
        %4217 = vmatprep.subr.mxu0 0.0
        %4218 = vmatpush1.msra.mxu0 0.0
        %4219 = vmatprep.subr.mxu0 0.0
        %4220 = vmatpush1.msra.mxu0 0.0
        %4221 = vmatprep.subr.mxu0 0.0
        %4222 = vmatpush1.msra.mxu0 0.0
        %4223 = vmatprep.subr.mxu0 0.0
        %4224 = vmatpush1.msra.mxu0 0.0
        %4225 = vmatprep.subr.mxu0 0.0
        %4226 = vmatpush1.msra.mxu0 0.0
        %4227 = vmatprep.subr.mxu0 0.0
        %4228 = vmatpush1.msra.mxu0 0.0
        %4229 = vmatprep.subr.mxu0 0.0
        %4230 = vmatpush1.msra.mxu0 0.0
        %4231 = vmatprep.subr.mxu0 0.0
        %4232 = vmatpush1.msra.mxu0 0.0
        %4233 = vmatprep.subr.mxu0 0.0
        %4234 = vmatpush1.msra.mxu0 0.0
        %4235 = vmatprep.subr.mxu0 0.0
        %4236 = vmatpush1.msra.mxu0 0.0
        %4237 = vmatprep.subr.mxu0 0.0
        %4238 = vmatpush1.msra.mxu0 0.0
        %4239 = vmatprep.subr.mxu0 0.0
        %4240 = vmatpush1.msra.mxu0 0.0
        %4241 = vmatprep.subr.mxu0 0.0
        %4242 = vmatpush1.msra.mxu0 0.0
        %4243 = vmatprep.subr.mxu0 0.0
        %4244 = vmatpush1.msra.mxu0 0.0
        %4245 = vmatprep.subr.mxu0 0.0
        %4246 = vmatpush1.msra.mxu0 0.0
        %4247 = vmatprep.subr.mxu0 0.0
        %4248 = vmatpush1.msra.mxu0 %v3444
        %4249 = vmatprep.subr.mxu0 0.0
        %4250 = vmatpush2.msra.mxu0 0.0
        %4251 = vmatprep.subr.mxu0 0.0
        %4252 = vmatpush2.msra.mxu0 0.0
        %4253 = vmatprep.subr.mxu0 0.0
        %4254 = vmatpush2.msra.mxu0 0.0
        %4255 = vmatprep.subr.mxu0 0.0
        %4256 = vmatpush2.msra.mxu0 0.0
        %4257 = vmatprep.subr.mxu0 0.0
        %4258 = vmatpush2.msra.mxu0 0.0
        %4259 = vmatprep.subr.mxu0 0.0
        %4260 = vmatpush2.msra.mxu0 0.0
        %4261 = vmatprep.subr.mxu0 0.0
        %4262 = vmatpush2.msra.mxu0 0.0
        %4263 = vmatprep.subr.mxu0 0.0
        %4264 = vmatpush2.msra.mxu0 0.0
        %4265 = vmatprep.subr.mxu0 0.0
        %4266 = vmatpush2.msra.mxu0 0.0
        %4267 = vmatprep.subr.mxu0 0.0
        %4268 = vmatpush2.msra.mxu0 0.0
        %4269 = vmatprep.subr.mxu0 0.0
        %4270 = vmatpush2.msra.mxu0 0.0
        %4271 = vmatprep.subr.mxu0 0.0
        %4272 = vmatpush2.msra.mxu0 0.0
        %4273 = vmatprep.subr.mxu0 0.0
        %4274 = vmatpush2.msra.mxu0 0.0
        %4275 = vmatprep.subr.mxu0 0.0
        %4276 = vmatpush2.msra.mxu0 0.0
        %4277 = vmatprep.subr.mxu0 0.0
        %4278 = vmatpush2.msra.mxu0 0.0
        %4279 = vmatprep.subr.mxu0 0.0
        %4280 = vmatpush2.msra.mxu0 0.0
        %4281 = vmatprep.mubr.f32.mxu0 0.0
        %4282 = vmatmul.mubr.f32.gmra.mxu0 %v4215
        %v4283 = vpop.f32.mrf.mxu0
        %v4284 = vadd.f32 0.0, %v4283
        %v4285 = vpop.f32.mrf.mxu0
        %4286 = vdwg.mxu0
        %s4287 = scalar_lea.vmem %s10, 160
        %v4288 = vld [vmem:[%s4287] sm:$0xff]
        %v4289 = vld [vmem:[%s4287 + $0x8] sm:$0xff]
        %v4290 = vld [vmem:[%s4287 + $0x10] sm:$0xff]
        %v4291 = vld [vmem:[%s4287 + $0x18] sm:$0xff]
        %v4293 = vsel %vm1044, %v4284, 0
        %4295 = vmatprep.subr.mxu0 0.0
        %4296 = vmatpush1.msra.mxu0 0.0
        %4297 = vmatprep.subr.mxu0 0.0
        %4298 = vmatpush1.msra.mxu0 0.0
        %4299 = vmatprep.subr.mxu0 0.0
        %4300 = vmatpush1.msra.mxu0 0.0
        %4301 = vmatprep.subr.mxu0 0.0
        %4302 = vmatpush1.msra.mxu0 0.0
        %4303 = vmatprep.subr.mxu0 0.0
        %4304 = vmatpush1.msra.mxu0 0.0
        %4305 = vmatprep.subr.mxu0 0.0
        %4306 = vmatpush1.msra.mxu0 0.0
        %4307 = vmatprep.subr.mxu0 0.0
        %4308 = vmatpush1.msra.mxu0 0.0
        %4309 = vmatprep.subr.mxu0 0.0
        %4310 = vmatpush1.msra.mxu0 0.0
        %4311 = vmatprep.subr.mxu0 0.0
        %4312 = vmatpush1.msra.mxu0 0.0
        %4313 = vmatprep.subr.mxu0 0.0
        %4314 = vmatpush1.msra.mxu0 0.0
        %4315 = vmatprep.subr.mxu0 0.0
        %4316 = vmatpush1.msra.mxu0 0.0
        %4317 = vmatprep.subr.mxu0 0.0
        %4318 = vmatpush1.msra.mxu0 0.0
        %4319 = vmatprep.subr.mxu0 0.0
        %4320 = vmatpush1.msra.mxu0 %v4291
        %4321 = vmatprep.subr.mxu0 0.0
        %4322 = vmatpush1.msra.mxu0 %v4290
        %4323 = vmatprep.subr.mxu0 0.0
        %4324 = vmatpush1.msra.mxu0 %v4289
        %4325 = vmatprep.subr.mxu0 0.0
        %4326 = vmatpush1.msra.mxu0 %v4288
        %4327 = vmatprep.subr.mxu0 0.0
        %4328 = vmatpush2.msra.mxu0 0.0
        %4329 = vmatprep.subr.mxu0 0.0
        %4330 = vmatpush2.msra.mxu0 0.0
        %4331 = vmatprep.subr.mxu0 0.0
        %4332 = vmatpush2.msra.mxu0 0.0
        %4333 = vmatprep.subr.mxu0 0.0
        %4334 = vmatpush2.msra.mxu0 0.0
        %4335 = vmatprep.subr.mxu0 0.0
        %4336 = vmatpush2.msra.mxu0 0.0
        %4337 = vmatprep.subr.mxu0 0.0
        %4338 = vmatpush2.msra.mxu0 0.0
        %4339 = vmatprep.subr.mxu0 0.0
        %4340 = vmatpush2.msra.mxu0 0.0
        %4341 = vmatprep.subr.mxu0 0.0
        %4342 = vmatpush2.msra.mxu0 0.0
        %4343 = vmatprep.subr.mxu0 0.0
        %4344 = vmatpush2.msra.mxu0 0.0
        %4345 = vmatprep.subr.mxu0 0.0
        %4346 = vmatpush2.msra.mxu0 0.0
        %4347 = vmatprep.subr.mxu0 0.0
        %4348 = vmatpush2.msra.mxu0 0.0
        %4349 = vmatprep.subr.mxu0 0.0
        %4350 = vmatpush2.msra.mxu0 0.0
        %4351 = vmatprep.subr.mxu0 0.0
        %4352 = vmatpush2.msra.mxu0 0.0
        %4353 = vmatprep.subr.mxu0 0.0
        %4354 = vmatpush2.msra.mxu0 0.0
        %4355 = vmatprep.subr.mxu0 0.0
        %4356 = vmatpush2.msra.mxu0 0.0
        %4357 = vmatprep.subr.mxu0 0.0
        %4358 = vmatpush2.msra.mxu0 0.0
        %4359 = vmatprep.mubr.f32.mxu0 0.0
        %4360 = vmatmul.mubr.f32.gmra.mxu0 %v4293
        %v4361 = vpop.f32.mrf.mxu0
        %v4362 = vadd.f32 0.0, %v4361
        %v4363 = vpop.f32.mrf.mxu0
        %4364 = vdwg.mxu0
        %v4365 = vadd.f32 %v4211, %v4362
        %s4366 = scalar_lea.vmem %s9, 48
        %v4367 = vld [vmem:[%s4366] sm:$0xff]
        %v4369 = vsel %vm3446, %v4367, 0
        %4371 = vmatprep.subr.mxu0 0.0
        %4372 = vmatpush1.msra.mxu0 0.0
        %4373 = vmatprep.subr.mxu0 0.0
        %4374 = vmatpush1.msra.mxu0 0.0
        %4375 = vmatprep.subr.mxu0 0.0
        %4376 = vmatpush1.msra.mxu0 0.0
        %4377 = vmatprep.subr.mxu0 0.0
        %4378 = vmatpush1.msra.mxu0 0.0
        %4379 = vmatprep.subr.mxu0 0.0
        %4380 = vmatpush1.msra.mxu0 0.0
        %4381 = vmatprep.subr.mxu0 0.0
        %4382 = vmatpush1.msra.mxu0 0.0
        %4383 = vmatprep.subr.mxu0 0.0
        %4384 = vmatpush1.msra.mxu0 0.0
        %4385 = vmatprep.subr.mxu0 0.0
        %4386 = vmatpush1.msra.mxu0 0.0
        %4387 = vmatprep.subr.mxu0 0.0
        %4388 = vmatpush1.msra.mxu0 0.0
        %4389 = vmatprep.subr.mxu0 0.0
        %4390 = vmatpush1.msra.mxu0 0.0
        %4391 = vmatprep.subr.mxu0 0.0
        %4392 = vmatpush1.msra.mxu0 0.0
        %4393 = vmatprep.subr.mxu0 0.0
        %4394 = vmatpush1.msra.mxu0 0.0
        %4395 = vmatprep.subr.mxu0 0.0
        %4396 = vmatpush1.msra.mxu0 0.0
        %4397 = vmatprep.subr.mxu0 0.0
        %4398 = vmatpush1.msra.mxu0 0.0
        %4399 = vmatprep.subr.mxu0 0.0
        %4400 = vmatpush1.msra.mxu0 0.0
        %4401 = vmatprep.subr.mxu0 0.0
        %4402 = vmatpush1.msra.mxu0 %v3444
        %4403 = vmatprep.subr.mxu0 0.0
        %4404 = vmatpush2.msra.mxu0 0.0
        %4405 = vmatprep.subr.mxu0 0.0
        %4406 = vmatpush2.msra.mxu0 0.0
        %4407 = vmatprep.subr.mxu0 0.0
        %4408 = vmatpush2.msra.mxu0 0.0
        %4409 = vmatprep.subr.mxu0 0.0
        %4410 = vmatpush2.msra.mxu0 0.0
        %4411 = vmatprep.subr.mxu0 0.0
        %4412 = vmatpush2.msra.mxu0 0.0
        %4413 = vmatprep.subr.mxu0 0.0
        %4414 = vmatpush2.msra.mxu0 0.0
        %4415 = vmatprep.subr.mxu0 0.0
        %4416 = vmatpush2.msra.mxu0 0.0
        %4417 = vmatprep.subr.mxu0 0.0
        %4418 = vmatpush2.msra.mxu0 0.0
        %4419 = vmatprep.subr.mxu0 0.0
        %4420 = vmatpush2.msra.mxu0 0.0
        %4421 = vmatprep.subr.mxu0 0.0
        %4422 = vmatpush2.msra.mxu0 0.0
        %4423 = vmatprep.subr.mxu0 0.0
        %4424 = vmatpush2.msra.mxu0 0.0
        %4425 = vmatprep.subr.mxu0 0.0
        %4426 = vmatpush2.msra.mxu0 0.0
        %4427 = vmatprep.subr.mxu0 0.0
        %4428 = vmatpush2.msra.mxu0 0.0
        %4429 = vmatprep.subr.mxu0 0.0
        %4430 = vmatpush2.msra.mxu0 0.0
        %4431 = vmatprep.subr.mxu0 0.0
        %4432 = vmatpush2.msra.mxu0 0.0
        %4433 = vmatprep.subr.mxu0 0.0
        %4434 = vmatpush2.msra.mxu0 0.0
        %4435 = vmatprep.mubr.f32.mxu0 0.0
        %4436 = vmatmul.mubr.f32.gmra.mxu0 %v4369
        %v4437 = vpop.f32.mrf.mxu0
        %v4438 = vadd.f32 0.0, %v4437
        %v4439 = vpop.f32.mrf.mxu0
        %4440 = vdwg.mxu0
        %s4441 = scalar_lea.vmem %s10, 192
        %v4442 = vld [vmem:[%s4441] sm:$0xff]
        %v4443 = vld [vmem:[%s4441 + $0x8] sm:$0xff]
        %v4444 = vld [vmem:[%s4441 + $0x10] sm:$0xff]
        %v4445 = vld [vmem:[%s4441 + $0x18] sm:$0xff]
        %v4447 = vsel %vm1044, %v4438, 0
        %4449 = vmatprep.subr.mxu0 0.0
        %4450 = vmatpush1.msra.mxu0 0.0
        %4451 = vmatprep.subr.mxu0 0.0
        %4452 = vmatpush1.msra.mxu0 0.0
        %4453 = vmatprep.subr.mxu0 0.0
        %4454 = vmatpush1.msra.mxu0 0.0
        %4455 = vmatprep.subr.mxu0 0.0
        %4456 = vmatpush1.msra.mxu0 0.0
        %4457 = vmatprep.subr.mxu0 0.0
        %4458 = vmatpush1.msra.mxu0 0.0
        %4459 = vmatprep.subr.mxu0 0.0
        %4460 = vmatpush1.msra.mxu0 0.0
        %4461 = vmatprep.subr.mxu0 0.0
        %4462 = vmatpush1.msra.mxu0 0.0
        %4463 = vmatprep.subr.mxu0 0.0
        %4464 = vmatpush1.msra.mxu0 0.0
        %4465 = vmatprep.subr.mxu0 0.0
        %4466 = vmatpush1.msra.mxu0 0.0
        %4467 = vmatprep.subr.mxu0 0.0
        %4468 = vmatpush1.msra.mxu0 0.0
        %4469 = vmatprep.subr.mxu0 0.0
        %4470 = vmatpush1.msra.mxu0 0.0
        %4471 = vmatprep.subr.mxu0 0.0
        %4472 = vmatpush1.msra.mxu0 0.0
        %4473 = vmatprep.subr.mxu0 0.0
        %4474 = vmatpush1.msra.mxu0 %v4445
        %4475 = vmatprep.subr.mxu0 0.0
        %4476 = vmatpush1.msra.mxu0 %v4444
        %4477 = vmatprep.subr.mxu0 0.0
        %4478 = vmatpush1.msra.mxu0 %v4443
        %4479 = vmatprep.subr.mxu0 0.0
        %4480 = vmatpush1.msra.mxu0 %v4442
        %4481 = vmatprep.subr.mxu0 0.0
        %4482 = vmatpush2.msra.mxu0 0.0
        %4483 = vmatprep.subr.mxu0 0.0
        %4484 = vmatpush2.msra.mxu0 0.0
        %4485 = vmatprep.subr.mxu0 0.0
        %4486 = vmatpush2.msra.mxu0 0.0
        %4487 = vmatprep.subr.mxu0 0.0
        %4488 = vmatpush2.msra.mxu0 0.0
        %4489 = vmatprep.subr.mxu0 0.0
        %4490 = vmatpush2.msra.mxu0 0.0
        %4491 = vmatprep.subr.mxu0 0.0
        %4492 = vmatpush2.msra.mxu0 0.0
        %4493 = vmatprep.subr.mxu0 0.0
        %4494 = vmatpush2.msra.mxu0 0.0
        %4495 = vmatprep.subr.mxu0 0.0
        %4496 = vmatpush2.msra.mxu0 0.0
        %4497 = vmatprep.subr.mxu0 0.0
        %4498 = vmatpush2.msra.mxu0 0.0
        %4499 = vmatprep.subr.mxu0 0.0
        %4500 = vmatpush2.msra.mxu0 0.0
        %4501 = vmatprep.subr.mxu0 0.0
        %4502 = vmatpush2.msra.mxu0 0.0
        %4503 = vmatprep.subr.mxu0 0.0
        %4504 = vmatpush2.msra.mxu0 0.0
        %4505 = vmatprep.subr.mxu0 0.0
        %4506 = vmatpush2.msra.mxu0 0.0
        %4507 = vmatprep.subr.mxu0 0.0
        %4508 = vmatpush2.msra.mxu0 0.0
        %4509 = vmatprep.subr.mxu0 0.0
        %4510 = vmatpush2.msra.mxu0 0.0
        %4511 = vmatprep.subr.mxu0 0.0
        %4512 = vmatpush2.msra.mxu0 0.0
        %4513 = vmatprep.mubr.f32.mxu0 0.0
        %4514 = vmatmul.mubr.f32.gmra.mxu0 %v4447
        %v4515 = vpop.f32.mrf.mxu0
        %v4516 = vadd.f32 0.0, %v4515
        %v4517 = vpop.f32.mrf.mxu0
        %4518 = vdwg.mxu0
        %v4519 = vadd.f32 %v4365, %v4516
        %s4520 = scalar_lea.vmem %s9, 56
        %v4521 = vld [vmem:[%s4520] sm:$0xff]
        %v4523 = vsel %vm3446, %v4521, 0
        %4525 = vmatprep.subr.mxu0 0.0
        %4526 = vmatpush1.msra.mxu0 0.0
        %4527 = vmatprep.subr.mxu0 0.0
        %4528 = vmatpush1.msra.mxu0 0.0
        %4529 = vmatprep.subr.mxu0 0.0
        %4530 = vmatpush1.msra.mxu0 0.0
        %4531 = vmatprep.subr.mxu0 0.0
        %4532 = vmatpush1.msra.mxu0 0.0
        %4533 = vmatprep.subr.mxu0 0.0
        %4534 = vmatpush1.msra.mxu0 0.0
        %4535 = vmatprep.subr.mxu0 0.0
        %4536 = vmatpush1.msra.mxu0 0.0
        %4537 = vmatprep.subr.mxu0 0.0
        %4538 = vmatpush1.msra.mxu0 0.0
        %4539 = vmatprep.subr.mxu0 0.0
        %4540 = vmatpush1.msra.mxu0 0.0
        %4541 = vmatprep.subr.mxu0 0.0
        %4542 = vmatpush1.msra.mxu0 0.0
        %4543 = vmatprep.subr.mxu0 0.0
        %4544 = vmatpush1.msra.mxu0 0.0
        %4545 = vmatprep.subr.mxu0 0.0
        %4546 = vmatpush1.msra.mxu0 0.0
        %4547 = vmatprep.subr.mxu0 0.0
        %4548 = vmatpush1.msra.mxu0 0.0
        %4549 = vmatprep.subr.mxu0 0.0
        %4550 = vmatpush1.msra.mxu0 0.0
        %4551 = vmatprep.subr.mxu0 0.0
        %4552 = vmatpush1.msra.mxu0 0.0
        %4553 = vmatprep.subr.mxu0 0.0
        %4554 = vmatpush1.msra.mxu0 0.0
        %4555 = vmatprep.subr.mxu0 0.0
        %4556 = vmatpush1.msra.mxu0 %v3444
        %4557 = vmatprep.subr.mxu0 0.0
        %4558 = vmatpush2.msra.mxu0 0.0
        %4559 = vmatprep.subr.mxu0 0.0
        %4560 = vmatpush2.msra.mxu0 0.0
        %4561 = vmatprep.subr.mxu0 0.0
        %4562 = vmatpush2.msra.mxu0 0.0
        %4563 = vmatprep.subr.mxu0 0.0
        %4564 = vmatpush2.msra.mxu0 0.0
        %4565 = vmatprep.subr.mxu0 0.0
        %4566 = vmatpush2.msra.mxu0 0.0
        %4567 = vmatprep.subr.mxu0 0.0
        %4568 = vmatpush2.msra.mxu0 0.0
        %4569 = vmatprep.subr.mxu0 0.0
        %4570 = vmatpush2.msra.mxu0 0.0
        %4571 = vmatprep.subr.mxu0 0.0
        %4572 = vmatpush2.msra.mxu0 0.0
        %4573 = vmatprep.subr.mxu0 0.0
        %4574 = vmatpush2.msra.mxu0 0.0
        %4575 = vmatprep.subr.mxu0 0.0
        %4576 = vmatpush2.msra.mxu0 0.0
        %4577 = vmatprep.subr.mxu0 0.0
        %4578 = vmatpush2.msra.mxu0 0.0
        %4579 = vmatprep.subr.mxu0 0.0
        %4580 = vmatpush2.msra.mxu0 0.0
        %4581 = vmatprep.subr.mxu0 0.0
        %4582 = vmatpush2.msra.mxu0 0.0
        %4583 = vmatprep.subr.mxu0 0.0
        %4584 = vmatpush2.msra.mxu0 0.0
        %4585 = vmatprep.subr.mxu0 0.0
        %4586 = vmatpush2.msra.mxu0 0.0
        %4587 = vmatprep.subr.mxu0 0.0
        %4588 = vmatpush2.msra.mxu0 0.0
        %4589 = vmatprep.mubr.f32.mxu0 0.0
        %4590 = vmatmul.mubr.f32.gmra.mxu0 %v4523
        %v4591 = vpop.f32.mrf.mxu0
        %v4592 = vadd.f32 0.0, %v4591
        %v4593 = vpop.f32.mrf.mxu0
        %4594 = vdwg.mxu0
        %s4595 = scalar_lea.vmem %s10, 224
        %v4596 = vld [vmem:[%s4595] sm:$0xff]
        %v4597 = vld [vmem:[%s4595 + $0x8] sm:$0xff]
        %v4598 = vld [vmem:[%s4595 + $0x10] sm:$0xff]
        %v4599 = vld [vmem:[%s4595 + $0x18] sm:$0xff]
        %v4601 = vsel %vm1044, %v4592, 0
        %4603 = vmatprep.subr.mxu0 0.0
        %4604 = vmatpush1.msra.mxu0 0.0
        %4605 = vmatprep.subr.mxu0 0.0
        %4606 = vmatpush1.msra.mxu0 0.0
        %4607 = vmatprep.subr.mxu0 0.0
        %4608 = vmatpush1.msra.mxu0 0.0
        %4609 = vmatprep.subr.mxu0 0.0
        %4610 = vmatpush1.msra.mxu0 0.0
        %4611 = vmatprep.subr.mxu0 0.0
        %4612 = vmatpush1.msra.mxu0 0.0
        %4613 = vmatprep.subr.mxu0 0.0
        %4614 = vmatpush1.msra.mxu0 0.0
        %4615 = vmatprep.subr.mxu0 0.0
        %4616 = vmatpush1.msra.mxu0 0.0
        %4617 = vmatprep.subr.mxu0 0.0
        %4618 = vmatpush1.msra.mxu0 0.0
        %4619 = vmatprep.subr.mxu0 0.0
        %4620 = vmatpush1.msra.mxu0 0.0
        %4621 = vmatprep.subr.mxu0 0.0
        %4622 = vmatpush1.msra.mxu0 0.0
        %4623 = vmatprep.subr.mxu0 0.0
        %4624 = vmatpush1.msra.mxu0 0.0
        %4625 = vmatprep.subr.mxu0 0.0
        %4626 = vmatpush1.msra.mxu0 0.0
        %4627 = vmatprep.subr.mxu0 0.0
        %4628 = vmatpush1.msra.mxu0 %v4599
        %4629 = vmatprep.subr.mxu0 0.0
        %4630 = vmatpush1.msra.mxu0 %v4598
        %4631 = vmatprep.subr.mxu0 0.0
        %4632 = vmatpush1.msra.mxu0 %v4597
        %4633 = vmatprep.subr.mxu0 0.0
        %4634 = vmatpush1.msra.mxu0 %v4596
        %4635 = vmatprep.subr.mxu0 0.0
        %4636 = vmatpush2.msra.mxu0 0.0
        %4637 = vmatprep.subr.mxu0 0.0
        %4638 = vmatpush2.msra.mxu0 0.0
        %4639 = vmatprep.subr.mxu0 0.0
        %4640 = vmatpush2.msra.mxu0 0.0
        %4641 = vmatprep.subr.mxu0 0.0
        %4642 = vmatpush2.msra.mxu0 0.0
        %4643 = vmatprep.subr.mxu0 0.0
        %4644 = vmatpush2.msra.mxu0 0.0
        %4645 = vmatprep.subr.mxu0 0.0
        %4646 = vmatpush2.msra.mxu0 0.0
        %4647 = vmatprep.subr.mxu0 0.0
        %4648 = vmatpush2.msra.mxu0 0.0
        %4649 = vmatprep.subr.mxu0 0.0
        %4650 = vmatpush2.msra.mxu0 0.0
        %4651 = vmatprep.subr.mxu0 0.0
        %4652 = vmatpush2.msra.mxu0 0.0
        %4653 = vmatprep.subr.mxu0 0.0
        %4654 = vmatpush2.msra.mxu0 0.0
        %4655 = vmatprep.subr.mxu0 0.0
        %4656 = vmatpush2.msra.mxu0 0.0
        %4657 = vmatprep.subr.mxu0 0.0
        %4658 = vmatpush2.msra.mxu0 0.0
        %4659 = vmatprep.subr.mxu0 0.0
        %4660 = vmatpush2.msra.mxu0 0.0
        %4661 = vmatprep.subr.mxu0 0.0
        %4662 = vmatpush2.msra.mxu0 0.0
        %4663 = vmatprep.subr.mxu0 0.0
        %4664 = vmatpush2.msra.mxu0 0.0
        %4665 = vmatprep.subr.mxu0 0.0
        %4666 = vmatpush2.msra.mxu0 0.0
        %4667 = vmatprep.mubr.f32.mxu0 0.0
        %4668 = vmatmul.mubr.f32.gmra.mxu0 %v4601
        %v4669 = vpop.f32.mrf.mxu0
        %v4670 = vadd.f32 0.0, %v4669
        %v4671 = vpop.f32.mrf.mxu0
        %4672 = vdwg.mxu0
        %v4673 = vadd.f32 %v4519, %v4670
        %s4674 = scalar_lea.vmem %s9, 64
        %v4675 = vld [vmem:[%s4674] sm:$0xff]
        %v4677 = vsel %vm3446, %v4675, 0
        %4679 = vmatprep.subr.mxu0 0.0
        %4680 = vmatpush1.msra.mxu0 0.0
        %4681 = vmatprep.subr.mxu0 0.0
        %4682 = vmatpush1.msra.mxu0 0.0
        %4683 = vmatprep.subr.mxu0 0.0
        %4684 = vmatpush1.msra.mxu0 0.0
        %4685 = vmatprep.subr.mxu0 0.0
        %4686 = vmatpush1.msra.mxu0 0.0
        %4687 = vmatprep.subr.mxu0 0.0
        %4688 = vmatpush1.msra.mxu0 0.0
        %4689 = vmatprep.subr.mxu0 0.0
        %4690 = vmatpush1.msra.mxu0 0.0
        %4691 = vmatprep.subr.mxu0 0.0
        %4692 = vmatpush1.msra.mxu0 0.0
        %4693 = vmatprep.subr.mxu0 0.0
        %4694 = vmatpush1.msra.mxu0 0.0
        %4695 = vmatprep.subr.mxu0 0.0
        %4696 = vmatpush1.msra.mxu0 0.0
        %4697 = vmatprep.subr.mxu0 0.0
        %4698 = vmatpush1.msra.mxu0 0.0
        %4699 = vmatprep.subr.mxu0 0.0
        %4700 = vmatpush1.msra.mxu0 0.0
        %4701 = vmatprep.subr.mxu0 0.0
        %4702 = vmatpush1.msra.mxu0 0.0
        %4703 = vmatprep.subr.mxu0 0.0
        %4704 = vmatpush1.msra.mxu0 0.0
        %4705 = vmatprep.subr.mxu0 0.0
        %4706 = vmatpush1.msra.mxu0 0.0
        %4707 = vmatprep.subr.mxu0 0.0
        %4708 = vmatpush1.msra.mxu0 0.0
        %4709 = vmatprep.subr.mxu0 0.0
        %4710 = vmatpush1.msra.mxu0 %v3444
        %4711 = vmatprep.subr.mxu0 0.0
        %4712 = vmatpush2.msra.mxu0 0.0
        %4713 = vmatprep.subr.mxu0 0.0
        %4714 = vmatpush2.msra.mxu0 0.0
        %4715 = vmatprep.subr.mxu0 0.0
        %4716 = vmatpush2.msra.mxu0 0.0
        %4717 = vmatprep.subr.mxu0 0.0
        %4718 = vmatpush2.msra.mxu0 0.0
        %4719 = vmatprep.subr.mxu0 0.0
        %4720 = vmatpush2.msra.mxu0 0.0
        %4721 = vmatprep.subr.mxu0 0.0
        %4722 = vmatpush2.msra.mxu0 0.0
        %4723 = vmatprep.subr.mxu0 0.0
        %4724 = vmatpush2.msra.mxu0 0.0
        %4725 = vmatprep.subr.mxu0 0.0
        %4726 = vmatpush2.msra.mxu0 0.0
        %4727 = vmatprep.subr.mxu0 0.0
        %4728 = vmatpush2.msra.mxu0 0.0
        %4729 = vmatprep.subr.mxu0 0.0
        %4730 = vmatpush2.msra.mxu0 0.0
        %4731 = vmatprep.subr.mxu0 0.0
        %4732 = vmatpush2.msra.mxu0 0.0
        %4733 = vmatprep.subr.mxu0 0.0
        %4734 = vmatpush2.msra.mxu0 0.0
        %4735 = vmatprep.subr.mxu0 0.0
        %4736 = vmatpush2.msra.mxu0 0.0
        %4737 = vmatprep.subr.mxu0 0.0
        %4738 = vmatpush2.msra.mxu0 0.0
        %4739 = vmatprep.subr.mxu0 0.0
        %4740 = vmatpush2.msra.mxu0 0.0
        %4741 = vmatprep.subr.mxu0 0.0
        %4742 = vmatpush2.msra.mxu0 0.0
        %4743 = vmatprep.mubr.f32.mxu0 0.0
        %4744 = vmatmul.mubr.f32.gmra.mxu0 %v4677
        %v4745 = vpop.f32.mrf.mxu0
        %v4746 = vadd.f32 0.0, %v4745
        %v4747 = vpop.f32.mrf.mxu0
        %4748 = vdwg.mxu0
        %s4749 = scalar_lea.vmem %s10, 256
        %v4750 = vld [vmem:[%s4749] sm:$0xff]
        %v4751 = vld [vmem:[%s4749 + $0x8] sm:$0xff]
        %v4752 = vld [vmem:[%s4749 + $0x10] sm:$0xff]
        %v4753 = vld [vmem:[%s4749 + $0x18] sm:$0xff]
        %v4755 = vsel %vm1044, %v4746, 0
        %4757 = vmatprep.subr.mxu0 0.0
        %4758 = vmatpush1.msra.mxu0 0.0
        %4759 = vmatprep.subr.mxu0 0.0
        %4760 = vmatpush1.msra.mxu0 0.0
        %4761 = vmatprep.subr.mxu0 0.0
        %4762 = vmatpush1.msra.mxu0 0.0
        %4763 = vmatprep.subr.mxu0 0.0
        %4764 = vmatpush1.msra.mxu0 0.0
        %4765 = vmatprep.subr.mxu0 0.0
        %4766 = vmatpush1.msra.mxu0 0.0
        %4767 = vmatprep.subr.mxu0 0.0
        %4768 = vmatpush1.msra.mxu0 0.0
        %4769 = vmatprep.subr.mxu0 0.0
        %4770 = vmatpush1.msra.mxu0 0.0
        %4771 = vmatprep.subr.mxu0 0.0
        %4772 = vmatpush1.msra.mxu0 0.0
        %4773 = vmatprep.subr.mxu0 0.0
        %4774 = vmatpush1.msra.mxu0 0.0
        %4775 = vmatprep.subr.mxu0 0.0
        %4776 = vmatpush1.msra.mxu0 0.0
        %4777 = vmatprep.subr.mxu0 0.0
        %4778 = vmatpush1.msra.mxu0 0.0
        %4779 = vmatprep.subr.mxu0 0.0
        %4780 = vmatpush1.msra.mxu0 0.0
        %4781 = vmatprep.subr.mxu0 0.0
        %4782 = vmatpush1.msra.mxu0 %v4753
        %4783 = vmatprep.subr.mxu0 0.0
        %4784 = vmatpush1.msra.mxu0 %v4752
        %4785 = vmatprep.subr.mxu0 0.0
        %4786 = vmatpush1.msra.mxu0 %v4751
        %4787 = vmatprep.subr.mxu0 0.0
        %4788 = vmatpush1.msra.mxu0 %v4750
        %4789 = vmatprep.subr.mxu0 0.0
        %4790 = vmatpush2.msra.mxu0 0.0
        %4791 = vmatprep.subr.mxu0 0.0
        %4792 = vmatpush2.msra.mxu0 0.0
        %4793 = vmatprep.subr.mxu0 0.0
        %4794 = vmatpush2.msra.mxu0 0.0
        %4795 = vmatprep.subr.mxu0 0.0
        %4796 = vmatpush2.msra.mxu0 0.0
        %4797 = vmatprep.subr.mxu0 0.0
        %4798 = vmatpush2.msra.mxu0 0.0
        %4799 = vmatprep.subr.mxu0 0.0
        %4800 = vmatpush2.msra.mxu0 0.0
        %4801 = vmatprep.subr.mxu0 0.0
        %4802 = vmatpush2.msra.mxu0 0.0
        %4803 = vmatprep.subr.mxu0 0.0
        %4804 = vmatpush2.msra.mxu0 0.0
        %4805 = vmatprep.subr.mxu0 0.0
        %4806 = vmatpush2.msra.mxu0 0.0
        %4807 = vmatprep.subr.mxu0 0.0
        %4808 = vmatpush2.msra.mxu0 0.0
        %4809 = vmatprep.subr.mxu0 0.0
        %4810 = vmatpush2.msra.mxu0 0.0
        %4811 = vmatprep.subr.mxu0 0.0
        %4812 = vmatpush2.msra.mxu0 0.0
        %4813 = vmatprep.subr.mxu0 0.0
        %4814 = vmatpush2.msra.mxu0 0.0
        %4815 = vmatprep.subr.mxu0 0.0
        %4816 = vmatpush2.msra.mxu0 0.0
        %4817 = vmatprep.subr.mxu0 0.0
        %4818 = vmatpush2.msra.mxu0 0.0
        %4819 = vmatprep.subr.mxu0 0.0
        %4820 = vmatpush2.msra.mxu0 0.0
        %4821 = vmatprep.mubr.f32.mxu0 0.0
        %4822 = vmatmul.mubr.f32.gmra.mxu0 %v4755
        %v4823 = vpop.f32.mrf.mxu0
        %v4824 = vadd.f32 0.0, %v4823
        %v4825 = vpop.f32.mrf.mxu0
        %4826 = vdwg.mxu0
        %v4827 = vadd.f32 %v4673, %v4824
        %v4828 = vld [vmem:[%s11] sm:$0x1]
        %v4830 = vlaneseq
        %v4831 = vshrl.u32 %v4830, 7
        %v4832 = vsub.s32 0, %v4831
        %v4833 = vrot.slane %v4828, %v4832
        %v4835 = vadd.f32 %v4827, %v4833
        %v4836 = vmax.f32 %v4835, 0.0
        %v4837 = vld [vmem:[%s12] sm:$0xff]
        %v4839 = vsel %vm3446, %v4837, 0
        %4841 = vmatprep.subr.mxu0 0.0
        %4842 = vmatpush1.msra.mxu0 0.0
        %4843 = vmatprep.subr.mxu0 0.0
        %4844 = vmatpush1.msra.mxu0 0.0
        %4845 = vmatprep.subr.mxu0 0.0
        %4846 = vmatpush1.msra.mxu0 0.0
        %4847 = vmatprep.subr.mxu0 0.0
        %4848 = vmatpush1.msra.mxu0 0.0
        %4849 = vmatprep.subr.mxu0 0.0
        %4850 = vmatpush1.msra.mxu0 0.0
        %4851 = vmatprep.subr.mxu0 0.0
        %4852 = vmatpush1.msra.mxu0 0.0
        %4853 = vmatprep.subr.mxu0 0.0
        %4854 = vmatpush1.msra.mxu0 0.0
        %4855 = vmatprep.subr.mxu0 0.0
        %4856 = vmatpush1.msra.mxu0 0.0
        %4857 = vmatprep.subr.mxu0 0.0
        %4858 = vmatpush1.msra.mxu0 0.0
        %4859 = vmatprep.subr.mxu0 0.0
        %4860 = vmatpush1.msra.mxu0 0.0
        %4861 = vmatprep.subr.mxu0 0.0
        %4862 = vmatpush1.msra.mxu0 0.0
        %4863 = vmatprep.subr.mxu0 0.0
        %4864 = vmatpush1.msra.mxu0 0.0
        %4865 = vmatprep.subr.mxu0 0.0
        %4866 = vmatpush1.msra.mxu0 0.0
        %4867 = vmatprep.subr.mxu0 0.0
        %4868 = vmatpush1.msra.mxu0 0.0
        %4869 = vmatprep.subr.mxu0 0.0
        %4870 = vmatpush1.msra.mxu0 0.0
        %4871 = vmatprep.subr.mxu0 0.0
        %4872 = vmatpush1.msra.mxu0 %v4836
        %4873 = vmatprep.subr.mxu0 0.0
        %4874 = vmatpush2.msra.mxu0 0.0
        %4875 = vmatprep.subr.mxu0 0.0
        %4876 = vmatpush2.msra.mxu0 0.0
        %4877 = vmatprep.subr.mxu0 0.0
        %4878 = vmatpush2.msra.mxu0 0.0
        %4879 = vmatprep.subr.mxu0 0.0
        %4880 = vmatpush2.msra.mxu0 0.0
        %4881 = vmatprep.subr.mxu0 0.0
        %4882 = vmatpush2.msra.mxu0 0.0
        %4883 = vmatprep.subr.mxu0 0.0
        %4884 = vmatpush2.msra.mxu0 0.0
        %4885 = vmatprep.subr.mxu0 0.0
        %4886 = vmatpush2.msra.mxu0 0.0
        %4887 = vmatprep.subr.mxu0 0.0
        %4888 = vmatpush2.msra.mxu0 0.0
        %4889 = vmatprep.subr.mxu0 0.0
        %4890 = vmatpush2.msra.mxu0 0.0
        %4891 = vmatprep.subr.mxu0 0.0
        %4892 = vmatpush2.msra.mxu0 0.0
        %4893 = vmatprep.subr.mxu0 0.0
        %4894 = vmatpush2.msra.mxu0 0.0
        %4895 = vmatprep.subr.mxu0 0.0
        %4896 = vmatpush2.msra.mxu0 0.0
        %4897 = vmatprep.subr.mxu0 0.0
        %4898 = vmatpush2.msra.mxu0 0.0
        %4899 = vmatprep.subr.mxu0 0.0
        %4900 = vmatpush2.msra.mxu0 0.0
        %4901 = vmatprep.subr.mxu0 0.0
        %4902 = vmatpush2.msra.mxu0 0.0
        %4903 = vmatprep.subr.mxu0 0.0
        %4904 = vmatpush2.msra.mxu0 0.0
        %4905 = vmatprep.mubr.f32.mxu0 0.0
        %4906 = vmatmul.mubr.f32.gmra.mxu0 %v4839
        %v4907 = vpop.f32.mrf.mxu0
        %v4908 = vadd.f32 0.0, %v4907
        %v4909 = vpop.f32.mrf.mxu0
        %4910 = vdwg.mxu0
        %v4911 = vld [vmem:[%s13] sm:$0xff]
        %v4912 = vld [vmem:[%s13 + $0x8] sm:$0xff]
        %v4913 = vld [vmem:[%s13 + $0x10] sm:$0xff]
        %v4914 = vld [vmem:[%s13 + $0x18] sm:$0xff]
        %v4915 = vld [vmem:[%s14] sm:$0x1]
        %v4917 = vlaneseq
        %v4918 = vshrl.u32 %v4917, 7
        %v4919 = vsub.s32 0, %v4918
        %v4920 = vrot.slane %v4915, %v4919
        %v4923 = vsel %vm1044, %v4908, 0
        %4925 = vmatprep.subr.mxu0 0.0
        %4926 = vmatpush1.msra.mxu0 0.0
        %4927 = vmatprep.subr.mxu0 0.0
        %4928 = vmatpush1.msra.mxu0 0.0
        %4929 = vmatprep.subr.mxu0 0.0
        %4930 = vmatpush1.msra.mxu0 0.0
        %4931 = vmatprep.subr.mxu0 0.0
        %4932 = vmatpush1.msra.mxu0 0.0
        %4933 = vmatprep.subr.mxu0 0.0
        %4934 = vmatpush1.msra.mxu0 0.0
        %4935 = vmatprep.subr.mxu0 0.0
        %4936 = vmatpush1.msra.mxu0 0.0
        %4937 = vmatprep.subr.mxu0 0.0
        %4938 = vmatpush1.msra.mxu0 0.0
        %4939 = vmatprep.subr.mxu0 0.0
        %4940 = vmatpush1.msra.mxu0 0.0
        %4941 = vmatprep.subr.mxu0 0.0
        %4942 = vmatpush1.msra.mxu0 0.0
        %4943 = vmatprep.subr.mxu0 0.0
        %4944 = vmatpush1.msra.mxu0 0.0
        %4945 = vmatprep.subr.mxu0 0.0
        %4946 = vmatpush1.msra.mxu0 0.0
        %4947 = vmatprep.subr.mxu0 0.0
        %4948 = vmatpush1.msra.mxu0 0.0
        %4949 = vmatprep.subr.mxu0 0.0
        %4950 = vmatpush1.msra.mxu0 %v4914
        %4951 = vmatprep.subr.mxu0 0.0
        %4952 = vmatpush1.msra.mxu0 %v4913
        %4953 = vmatprep.subr.mxu0 0.0
        %4954 = vmatpush1.msra.mxu0 %v4912
        %4955 = vmatprep.subr.mxu0 0.0
        %4956 = vmatpush1.msra.mxu0 %v4911
        %4957 = vmatprep.subr.mxu0 0.0
        %4958 = vmatpush2.msra.mxu0 0.0
        %4959 = vmatprep.subr.mxu0 0.0
        %4960 = vmatpush2.msra.mxu0 0.0
        %4961 = vmatprep.subr.mxu0 0.0
        %4962 = vmatpush2.msra.mxu0 0.0
        %4963 = vmatprep.subr.mxu0 0.0
        %4964 = vmatpush2.msra.mxu0 0.0
        %4965 = vmatprep.subr.mxu0 0.0
        %4966 = vmatpush2.msra.mxu0 0.0
        %4967 = vmatprep.subr.mxu0 0.0
        %4968 = vmatpush2.msra.mxu0 0.0
        %4969 = vmatprep.subr.mxu0 0.0
        %4970 = vmatpush2.msra.mxu0 0.0
        %4971 = vmatprep.subr.mxu0 0.0
        %4972 = vmatpush2.msra.mxu0 0.0
        %4973 = vmatprep.subr.mxu0 0.0
        %4974 = vmatpush2.msra.mxu0 0.0
        %4975 = vmatprep.subr.mxu0 0.0
        %4976 = vmatpush2.msra.mxu0 0.0
        %4977 = vmatprep.subr.mxu0 0.0
        %4978 = vmatpush2.msra.mxu0 0.0
        %4979 = vmatprep.subr.mxu0 0.0
        %4980 = vmatpush2.msra.mxu0 0.0
        %4981 = vmatprep.subr.mxu0 0.0
        %4982 = vmatpush2.msra.mxu0 0.0
        %4983 = vmatprep.subr.mxu0 0.0
        %4984 = vmatpush2.msra.mxu0 0.0
        %4985 = vmatprep.subr.mxu0 0.0
        %4986 = vmatpush2.msra.mxu0 0.0
        %4987 = vmatprep.subr.mxu0 0.0
        %4988 = vmatpush2.msra.mxu0 0.0
        %4989 = vmatprep.mubr.f32.mxu0 0.0
        %4990 = vmatmul.mubr.f32.gmra.mxu0 %v4923
        %v4991 = vpop.f32.mrf.mxu0
        %v4992 = vadd.f32 %v4920, %v4991
        %v4993 = vpop.f32.mrf.mxu0
        %4994 = vdwg.mxu0
        %v4995 = vmax.f32 %v4992, 0.0
        %v4996 = vld [vmem:[%s15] sm:$0xff]
        %v4998 = vsel %vm3446, %v4996, 0
        %5000 = vmatprep.subr.mxu0 0.0
        %5001 = vmatpush1.msra.mxu0 0.0
        %5002 = vmatprep.subr.mxu0 0.0
        %5003 = vmatpush1.msra.mxu0 0.0
        %5004 = vmatprep.subr.mxu0 0.0
        %5005 = vmatpush1.msra.mxu0 0.0
        %5006 = vmatprep.subr.mxu0 0.0
        %5007 = vmatpush1.msra.mxu0 0.0
        %5008 = vmatprep.subr.mxu0 0.0
        %5009 = vmatpush1.msra.mxu0 0.0
        %5010 = vmatprep.subr.mxu0 0.0
        %5011 = vmatpush1.msra.mxu0 0.0
        %5012 = vmatprep.subr.mxu0 0.0
        %5013 = vmatpush1.msra.mxu0 0.0
        %5014 = vmatprep.subr.mxu0 0.0
        %5015 = vmatpush1.msra.mxu0 0.0
        %5016 = vmatprep.subr.mxu0 0.0
        %5017 = vmatpush1.msra.mxu0 0.0
        %5018 = vmatprep.subr.mxu0 0.0
        %5019 = vmatpush1.msra.mxu0 0.0
        %5020 = vmatprep.subr.mxu0 0.0
        %5021 = vmatpush1.msra.mxu0 0.0
        %5022 = vmatprep.subr.mxu0 0.0
        %5023 = vmatpush1.msra.mxu0 0.0
        %5024 = vmatprep.subr.mxu0 0.0
        %5025 = vmatpush1.msra.mxu0 0.0
        %5026 = vmatprep.subr.mxu0 0.0
        %5027 = vmatpush1.msra.mxu0 0.0
        %5028 = vmatprep.subr.mxu0 0.0
        %5029 = vmatpush1.msra.mxu0 0.0
        %5030 = vmatprep.subr.mxu0 0.0
        %5031 = vmatpush1.msra.mxu0 %v4995
        %5032 = vmatprep.subr.mxu0 0.0
        %5033 = vmatpush2.msra.mxu0 0.0
        %5034 = vmatprep.subr.mxu0 0.0
        %5035 = vmatpush2.msra.mxu0 0.0
        %5036 = vmatprep.subr.mxu0 0.0
        %5037 = vmatpush2.msra.mxu0 0.0
        %5038 = vmatprep.subr.mxu0 0.0
        %5039 = vmatpush2.msra.mxu0 0.0
        %5040 = vmatprep.subr.mxu0 0.0
        %5041 = vmatpush2.msra.mxu0 0.0
        %5042 = vmatprep.subr.mxu0 0.0
        %5043 = vmatpush2.msra.mxu0 0.0
        %5044 = vmatprep.subr.mxu0 0.0
        %5045 = vmatpush2.msra.mxu0 0.0
        %5046 = vmatprep.subr.mxu0 0.0
        %5047 = vmatpush2.msra.mxu0 0.0
        %5048 = vmatprep.subr.mxu0 0.0
        %5049 = vmatpush2.msra.mxu0 0.0
        %5050 = vmatprep.subr.mxu0 0.0
        %5051 = vmatpush2.msra.mxu0 0.0
        %5052 = vmatprep.subr.mxu0 0.0
        %5053 = vmatpush2.msra.mxu0 0.0
        %5054 = vmatprep.subr.mxu0 0.0
        %5055 = vmatpush2.msra.mxu0 0.0
        %5056 = vmatprep.subr.mxu0 0.0
        %5057 = vmatpush2.msra.mxu0 0.0
        %5058 = vmatprep.subr.mxu0 0.0
        %5059 = vmatpush2.msra.mxu0 0.0
        %5060 = vmatprep.subr.mxu0 0.0
        %5061 = vmatpush2.msra.mxu0 0.0
        %5062 = vmatprep.subr.mxu0 0.0
        %5063 = vmatpush2.msra.mxu0 0.0
        %5064 = vmatprep.mubr.f32.mxu0 0.0
        %5065 = vmatmul.mubr.f32.gmra.mxu0 %v4998
        %v5066 = vpop.f32.mrf.mxu0
        %v5067 = vadd.f32 0.0, %v5066
        %v5068 = vpop.f32.mrf.mxu0
        %5069 = vdwg.mxu0
        %v5070 = vld [vmem:[%s16] sm:$0xff]
        %v5071 = vld [vmem:[%s16 + $0x8] sm:$0xff]
        %v5072 = vld [vmem:[%s16 + $0x10] sm:$0xff]
        %v5073 = vld [vmem:[%s16 + $0x18] sm:$0xff]
        %v5074 = vld [vmem:[%s16 + $0x20] sm:$0xff]
        %v5075 = vld [vmem:[%s16 + $0x28] sm:$0xff]
        %v5076 = vld [vmem:[%s16 + $0x30] sm:$0xff]
        %v5077 = vld [vmem:[%s16 + $0x38] sm:$0xff]
        %s5078 = scalar_lea.vmem %s15, 8
        %v5079 = vld [vmem:[%s5078] sm:$0xff]
        %v5081 = vsel %vm3446, %v5079, 0
        %5083 = vmatprep.subr.mxu0 0.0
        %5084 = vmatpush1.msra.mxu0 0.0
        %5085 = vmatprep.subr.mxu0 0.0
        %5086 = vmatpush1.msra.mxu0 0.0
        %5087 = vmatprep.subr.mxu0 0.0
        %5088 = vmatpush1.msra.mxu0 0.0
        %5089 = vmatprep.subr.mxu0 0.0
        %5090 = vmatpush1.msra.mxu0 0.0
        %5091 = vmatprep.subr.mxu0 0.0
        %5092 = vmatpush1.msra.mxu0 0.0
        %5093 = vmatprep.subr.mxu0 0.0
        %5094 = vmatpush1.msra.mxu0 0.0
        %5095 = vmatprep.subr.mxu0 0.0
        %5096 = vmatpush1.msra.mxu0 0.0
        %5097 = vmatprep.subr.mxu0 0.0
        %5098 = vmatpush1.msra.mxu0 0.0
        %5099 = vmatprep.subr.mxu0 0.0
        %5100 = vmatpush1.msra.mxu0 0.0
        %5101 = vmatprep.subr.mxu0 0.0
        %5102 = vmatpush1.msra.mxu0 0.0
        %5103 = vmatprep.subr.mxu0 0.0
        %5104 = vmatpush1.msra.mxu0 0.0
        %5105 = vmatprep.subr.mxu0 0.0
        %5106 = vmatpush1.msra.mxu0 0.0
        %5107 = vmatprep.subr.mxu0 0.0
        %5108 = vmatpush1.msra.mxu0 0.0
        %5109 = vmatprep.subr.mxu0 0.0
        %5110 = vmatpush1.msra.mxu0 0.0
        %5111 = vmatprep.subr.mxu0 0.0
        %5112 = vmatpush1.msra.mxu0 0.0
        %5113 = vmatprep.subr.mxu0 0.0
        %5114 = vmatpush1.msra.mxu0 %v4995
        %5115 = vmatprep.subr.mxu0 0.0
        %5116 = vmatpush2.msra.mxu0 0.0
        %5117 = vmatprep.subr.mxu0 0.0
        %5118 = vmatpush2.msra.mxu0 0.0
        %5119 = vmatprep.subr.mxu0 0.0
        %5120 = vmatpush2.msra.mxu0 0.0
        %5121 = vmatprep.subr.mxu0 0.0
        %5122 = vmatpush2.msra.mxu0 0.0
        %5123 = vmatprep.subr.mxu0 0.0
        %5124 = vmatpush2.msra.mxu0 0.0
        %5125 = vmatprep.subr.mxu0 0.0
        %5126 = vmatpush2.msra.mxu0 0.0
        %5127 = vmatprep.subr.mxu0 0.0
        %5128 = vmatpush2.msra.mxu0 0.0
        %5129 = vmatprep.subr.mxu0 0.0
        %5130 = vmatpush2.msra.mxu0 0.0
        %5131 = vmatprep.subr.mxu0 0.0
        %5132 = vmatpush2.msra.mxu0 0.0
        %5133 = vmatprep.subr.mxu0 0.0
        %5134 = vmatpush2.msra.mxu0 0.0
        %5135 = vmatprep.subr.mxu0 0.0
        %5136 = vmatpush2.msra.mxu0 0.0
        %5137 = vmatprep.subr.mxu0 0.0
        %5138 = vmatpush2.msra.mxu0 0.0
        %5139 = vmatprep.subr.mxu0 0.0
        %5140 = vmatpush2.msra.mxu0 0.0
        %5141 = vmatprep.subr.mxu0 0.0
        %5142 = vmatpush2.msra.mxu0 0.0
        %5143 = vmatprep.subr.mxu0 0.0
        %5144 = vmatpush2.msra.mxu0 0.0
        %5145 = vmatprep.subr.mxu0 0.0
        %5146 = vmatpush2.msra.mxu0 0.0
        %5147 = vmatprep.mubr.f32.mxu0 0.0
        %5148 = vmatmul.mubr.f32.gmra.mxu0 %v5081
        %v5149 = vpop.f32.mrf.mxu0
        %v5150 = vadd.f32 0.0, %v5149
        %v5151 = vpop.f32.mrf.mxu0
        %5152 = vdwg.mxu0
        %s5153 = scalar_lea.vmem %s16, 64
        %v5154 = vld [vmem:[%s5153] sm:$0xff]
        %v5155 = vld [vmem:[%s5153 + $0x8] sm:$0xff]
        %v5156 = vld [vmem:[%s5153 + $0x10] sm:$0xff]
        %v5157 = vld [vmem:[%s5153 + $0x18] sm:$0xff]
        %v5158 = vld [vmem:[%s5153 + $0x20] sm:$0xff]
        %v5159 = vld [vmem:[%s5153 + $0x28] sm:$0xff]
        %v5160 = vld [vmem:[%s5153 + $0x30] sm:$0xff]
        %v5161 = vld [vmem:[%s5153 + $0x38] sm:$0xff]
        %v5163 = vsel %vm767, %v5150, 0
        %5165 = vmatprep.subr.mxu0 0.0
        %5166 = vmatpush1.msra.mxu0 0.0
        %5167 = vmatprep.subr.mxu0 0.0
        %5168 = vmatpush1.msra.mxu0 0.0
        %5169 = vmatprep.subr.mxu0 0.0
        %5170 = vmatpush1.msra.mxu0 0.0
        %5171 = vmatprep.subr.mxu0 0.0
        %5172 = vmatpush1.msra.mxu0 0.0
        %5173 = vmatprep.subr.mxu0 0.0
        %5174 = vmatpush1.msra.mxu0 0.0
        %5175 = vmatprep.subr.mxu0 0.0
        %5176 = vmatpush1.msra.mxu0 0.0
        %5177 = vmatprep.subr.mxu0 0.0
        %5178 = vmatpush1.msra.mxu0 0.0
        %5179 = vmatprep.subr.mxu0 0.0
        %5180 = vmatpush1.msra.mxu0 0.0
        %5181 = vmatprep.subr.mxu0 0.0
        %5182 = vmatpush1.msra.mxu0 %v5161
        %5183 = vmatprep.subr.mxu0 0.0
        %5184 = vmatpush1.msra.mxu0 %v5160
        %5185 = vmatprep.subr.mxu0 0.0
        %5186 = vmatpush1.msra.mxu0 %v5159
        %5187 = vmatprep.subr.mxu0 0.0
        %5188 = vmatpush1.msra.mxu0 %v5158
        %5189 = vmatprep.subr.mxu0 0.0
        %5190 = vmatpush1.msra.mxu0 %v5157
        %5191 = vmatprep.subr.mxu0 0.0
        %5192 = vmatpush1.msra.mxu0 %v5156
        %5193 = vmatprep.subr.mxu0 0.0
        %5194 = vmatpush1.msra.mxu0 %v5155
        %5195 = vmatprep.subr.mxu0 0.0
        %5196 = vmatpush1.msra.mxu0 %v5154
        %5197 = vmatprep.subr.mxu0 0.0
        %5198 = vmatpush2.msra.mxu0 0.0
        %5199 = vmatprep.subr.mxu0 0.0
        %5200 = vmatpush2.msra.mxu0 0.0
        %5201 = vmatprep.subr.mxu0 0.0
        %5202 = vmatpush2.msra.mxu0 0.0
        %5203 = vmatprep.subr.mxu0 0.0
        %5204 = vmatpush2.msra.mxu0 0.0
        %5205 = vmatprep.subr.mxu0 0.0
        %5206 = vmatpush2.msra.mxu0 0.0
        %5207 = vmatprep.subr.mxu0 0.0
        %5208 = vmatpush2.msra.mxu0 0.0
        %5209 = vmatprep.subr.mxu0 0.0
        %5210 = vmatpush2.msra.mxu0 0.0
        %5211 = vmatprep.subr.mxu0 0.0
        %5212 = vmatpush2.msra.mxu0 0.0
        %5213 = vmatprep.subr.mxu0 0.0
        %5214 = vmatpush2.msra.mxu0 0.0
        %5215 = vmatprep.subr.mxu0 0.0
        %5216 = vmatpush2.msra.mxu0 0.0
        %5217 = vmatprep.subr.mxu0 0.0
        %5218 = vmatpush2.msra.mxu0 0.0
        %5219 = vmatprep.subr.mxu0 0.0
        %5220 = vmatpush2.msra.mxu0 0.0
        %5221 = vmatprep.subr.mxu0 0.0
        %5222 = vmatpush2.msra.mxu0 0.0
        %5223 = vmatprep.subr.mxu0 0.0
        %5224 = vmatpush2.msra.mxu0 0.0
        %5225 = vmatprep.subr.mxu0 0.0
        %5226 = vmatpush2.msra.mxu0 0.0
        %5227 = vmatprep.subr.mxu0 0.0
        %5228 = vmatpush2.msra.mxu0 0.0
        %5229 = vmatprep.mubr.f32.mxu0 0.0
        %5230 = vmatmul.mubr.f32.gmra.mxu0 %v5163
        %v5231 = vpop.f32.mrf.mxu0
        %v5232 = vadd.f32 0.0, %v5231
        %v5233 = vpop.f32.mrf.mxu0
        %5234 = vdwg.mxu0
        %v5236 = vsel %vm767, %v5067, 0
        %5238 = vmatprep.subr.mxu0 0.0
        %5239 = vmatpush1.msra.mxu0 0.0
        %5240 = vmatprep.subr.mxu0 0.0
        %5241 = vmatpush1.msra.mxu0 0.0
        %5242 = vmatprep.subr.mxu0 0.0
        %5243 = vmatpush1.msra.mxu0 0.0
        %5244 = vmatprep.subr.mxu0 0.0
        %5245 = vmatpush1.msra.mxu0 0.0
        %5246 = vmatprep.subr.mxu0 0.0
        %5247 = vmatpush1.msra.mxu0 0.0
        %5248 = vmatprep.subr.mxu0 0.0
        %5249 = vmatpush1.msra.mxu0 0.0
        %5250 = vmatprep.subr.mxu0 0.0
        %5251 = vmatpush1.msra.mxu0 0.0
        %5252 = vmatprep.subr.mxu0 0.0
        %5253 = vmatpush1.msra.mxu0 0.0
        %5254 = vmatprep.subr.mxu0 0.0
        %5255 = vmatpush1.msra.mxu0 %v5077
        %5256 = vmatprep.subr.mxu0 0.0
        %5257 = vmatpush1.msra.mxu0 %v5076
        %5258 = vmatprep.subr.mxu0 0.0
        %5259 = vmatpush1.msra.mxu0 %v5075
        %5260 = vmatprep.subr.mxu0 0.0
        %5261 = vmatpush1.msra.mxu0 %v5074
        %5262 = vmatprep.subr.mxu0 0.0
        %5263 = vmatpush1.msra.mxu0 %v5073
        %5264 = vmatprep.subr.mxu0 0.0
        %5265 = vmatpush1.msra.mxu0 %v5072
        %5266 = vmatprep.subr.mxu0 0.0
        %5267 = vmatpush1.msra.mxu0 %v5071
        %5268 = vmatprep.subr.mxu0 0.0
        %5269 = vmatpush1.msra.mxu0 %v5070
        %5270 = vmatprep.subr.mxu0 0.0
        %5271 = vmatpush2.msra.mxu0 0.0
        %5272 = vmatprep.subr.mxu0 0.0
        %5273 = vmatpush2.msra.mxu0 0.0
        %5274 = vmatprep.subr.mxu0 0.0
        %5275 = vmatpush2.msra.mxu0 0.0
        %5276 = vmatprep.subr.mxu0 0.0
        %5277 = vmatpush2.msra.mxu0 0.0
        %5278 = vmatprep.subr.mxu0 0.0
        %5279 = vmatpush2.msra.mxu0 0.0
        %5280 = vmatprep.subr.mxu0 0.0
        %5281 = vmatpush2.msra.mxu0 0.0
        %5282 = vmatprep.subr.mxu0 0.0
        %5283 = vmatpush2.msra.mxu0 0.0
        %5284 = vmatprep.subr.mxu0 0.0
        %5285 = vmatpush2.msra.mxu0 0.0
        %5286 = vmatprep.subr.mxu0 0.0
        %5287 = vmatpush2.msra.mxu0 0.0
        %5288 = vmatprep.subr.mxu0 0.0
        %5289 = vmatpush2.msra.mxu0 0.0
        %5290 = vmatprep.subr.mxu0 0.0
        %5291 = vmatpush2.msra.mxu0 0.0
        %5292 = vmatprep.subr.mxu0 0.0
        %5293 = vmatpush2.msra.mxu0 0.0
        %5294 = vmatprep.subr.mxu0 0.0
        %5295 = vmatpush2.msra.mxu0 0.0
        %5296 = vmatprep.subr.mxu0 0.0
        %5297 = vmatpush2.msra.mxu0 0.0
        %5298 = vmatprep.subr.mxu0 0.0
        %5299 = vmatpush2.msra.mxu0 0.0
        %5300 = vmatprep.subr.mxu0 0.0
        %5301 = vmatpush2.msra.mxu0 0.0
        %5302 = vmatprep.mubr.f32.mxu0 0.0
        %5303 = vmatmul.mubr.f32.gmra.mxu0 %v5236
        %v5304 = vpop.f32.mrf.mxu0
        %v5305 = vadd.f32 %v5232, %v5304
        %v5306 = vpop.f32.mrf.mxu0
        %5307 = vdwg.mxu0
        %s5308 = scalar_lea.vmem %s15, 16
        %v5309 = vld [vmem:[%s5308] sm:$0xff]
        %v5311 = vsel %vm3446, %v5309, 0
        %5313 = vmatprep.subr.mxu0 0.0
        %5314 = vmatpush1.msra.mxu0 0.0
        %5315 = vmatprep.subr.mxu0 0.0
        %5316 = vmatpush1.msra.mxu0 0.0
        %5317 = vmatprep.subr.mxu0 0.0
        %5318 = vmatpush1.msra.mxu0 0.0
        %5319 = vmatprep.subr.mxu0 0.0
        %5320 = vmatpush1.msra.mxu0 0.0
        %5321 = vmatprep.subr.mxu0 0.0
        %5322 = vmatpush1.msra.mxu0 0.0
        %5323 = vmatprep.subr.mxu0 0.0
        %5324 = vmatpush1.msra.mxu0 0.0
        %5325 = vmatprep.subr.mxu0 0.0
        %5326 = vmatpush1.msra.mxu0 0.0
        %5327 = vmatprep.subr.mxu0 0.0
        %5328 = vmatpush1.msra.mxu0 0.0
        %5329 = vmatprep.subr.mxu0 0.0
        %5330 = vmatpush1.msra.mxu0 0.0
        %5331 = vmatprep.subr.mxu0 0.0
        %5332 = vmatpush1.msra.mxu0 0.0
        %5333 = vmatprep.subr.mxu0 0.0
        %5334 = vmatpush1.msra.mxu0 0.0
        %5335 = vmatprep.subr.mxu0 0.0
        %5336 = vmatpush1.msra.mxu0 0.0
        %5337 = vmatprep.subr.mxu0 0.0
        %5338 = vmatpush1.msra.mxu0 0.0
        %5339 = vmatprep.subr.mxu0 0.0
        %5340 = vmatpush1.msra.mxu0 0.0
        %5341 = vmatprep.subr.mxu0 0.0
        %5342 = vmatpush1.msra.mxu0 0.0
        %5343 = vmatprep.subr.mxu0 0.0
        %5344 = vmatpush1.msra.mxu0 %v4995
        %5345 = vmatprep.subr.mxu0 0.0
        %5346 = vmatpush2.msra.mxu0 0.0
        %5347 = vmatprep.subr.mxu0 0.0
        %5348 = vmatpush2.msra.mxu0 0.0
        %5349 = vmatprep.subr.mxu0 0.0
        %5350 = vmatpush2.msra.mxu0 0.0
        %5351 = vmatprep.subr.mxu0 0.0
        %5352 = vmatpush2.msra.mxu0 0.0
        %5353 = vmatprep.subr.mxu0 0.0
        %5354 = vmatpush2.msra.mxu0 0.0
        %5355 = vmatprep.subr.mxu0 0.0
        %5356 = vmatpush2.msra.mxu0 0.0
        %5357 = vmatprep.subr.mxu0 0.0
        %5358 = vmatpush2.msra.mxu0 0.0
        %5359 = vmatprep.subr.mxu0 0.0
        %5360 = vmatpush2.msra.mxu0 0.0
        %5361 = vmatprep.subr.mxu0 0.0
        %5362 = vmatpush2.msra.mxu0 0.0
        %5363 = vmatprep.subr.mxu0 0.0
        %5364 = vmatpush2.msra.mxu0 0.0
        %5365 = vmatprep.subr.mxu0 0.0
        %5366 = vmatpush2.msra.mxu0 0.0
        %5367 = vmatprep.subr.mxu0 0.0
        %5368 = vmatpush2.msra.mxu0 0.0
        %5369 = vmatprep.subr.mxu0 0.0
        %5370 = vmatpush2.msra.mxu0 0.0
        %5371 = vmatprep.subr.mxu0 0.0
        %5372 = vmatpush2.msra.mxu0 0.0
        %5373 = vmatprep.subr.mxu0 0.0
        %5374 = vmatpush2.msra.mxu0 0.0
        %5375 = vmatprep.subr.mxu0 0.0
        %5376 = vmatpush2.msra.mxu0 0.0
        %5377 = vmatprep.mubr.f32.mxu0 0.0
        %5378 = vmatmul.mubr.f32.gmra.mxu0 %v5311
        %v5379 = vpop.f32.mrf.mxu0
        %v5380 = vadd.f32 0.0, %v5379
        %v5381 = vpop.f32.mrf.mxu0
        %5382 = vdwg.mxu0
        %s5383 = scalar_lea.vmem %s16, 128
        %v5384 = vld [vmem:[%s5383] sm:$0xff]
        %v5385 = vld [vmem:[%s5383 + $0x8] sm:$0xff]
        %v5386 = vld [vmem:[%s5383 + $0x10] sm:$0xff]
        %v5387 = vld [vmem:[%s5383 + $0x18] sm:$0xff]
        %v5388 = vld [vmem:[%s5383 + $0x20] sm:$0xff]
        %v5389 = vld [vmem:[%s5383 + $0x28] sm:$0xff]
        %v5390 = vld [vmem:[%s5383 + $0x30] sm:$0xff]
        %v5391 = vld [vmem:[%s5383 + $0x38] sm:$0xff]
        %v5393 = vsel %vm767, %v5380, 0
        %5395 = vmatprep.subr.mxu0 0.0
        %5396 = vmatpush1.msra.mxu0 0.0
        %5397 = vmatprep.subr.mxu0 0.0
        %5398 = vmatpush1.msra.mxu0 0.0
        %5399 = vmatprep.subr.mxu0 0.0
        %5400 = vmatpush1.msra.mxu0 0.0
        %5401 = vmatprep.subr.mxu0 0.0
        %5402 = vmatpush1.msra.mxu0 0.0
        %5403 = vmatprep.subr.mxu0 0.0
        %5404 = vmatpush1.msra.mxu0 0.0
        %5405 = vmatprep.subr.mxu0 0.0
        %5406 = vmatpush1.msra.mxu0 0.0
        %5407 = vmatprep.subr.mxu0 0.0
        %5408 = vmatpush1.msra.mxu0 0.0
        %5409 = vmatprep.subr.mxu0 0.0
        %5410 = vmatpush1.msra.mxu0 0.0
        %5411 = vmatprep.subr.mxu0 0.0
        %5412 = vmatpush1.msra.mxu0 %v5391
        %5413 = vmatprep.subr.mxu0 0.0
        %5414 = vmatpush1.msra.mxu0 %v5390
        %5415 = vmatprep.subr.mxu0 0.0
        %5416 = vmatpush1.msra.mxu0 %v5389
        %5417 = vmatprep.subr.mxu0 0.0
        %5418 = vmatpush1.msra.mxu0 %v5388
        %5419 = vmatprep.subr.mxu0 0.0
        %5420 = vmatpush1.msra.mxu0 %v5387
        %5421 = vmatprep.subr.mxu0 0.0
        %5422 = vmatpush1.msra.mxu0 %v5386
        %5423 = vmatprep.subr.mxu0 0.0
        %5424 = vmatpush1.msra.mxu0 %v5385
        %5425 = vmatprep.subr.mxu0 0.0
        %5426 = vmatpush1.msra.mxu0 %v5384
        %5427 = vmatprep.subr.mxu0 0.0
        %5428 = vmatpush2.msra.mxu0 0.0
        %5429 = vmatprep.subr.mxu0 0.0
        %5430 = vmatpush2.msra.mxu0 0.0
        %5431 = vmatprep.subr.mxu0 0.0
        %5432 = vmatpush2.msra.mxu0 0.0
        %5433 = vmatprep.subr.mxu0 0.0
        %5434 = vmatpush2.msra.mxu0 0.0
        %5435 = vmatprep.subr.mxu0 0.0
        %5436 = vmatpush2.msra.mxu0 0.0
        %5437 = vmatprep.subr.mxu0 0.0
        %5438 = vmatpush2.msra.mxu0 0.0
        %5439 = vmatprep.subr.mxu0 0.0
        %5440 = vmatpush2.msra.mxu0 0.0
        %5441 = vmatprep.subr.mxu0 0.0
        %5442 = vmatpush2.msra.mxu0 0.0
        %5443 = vmatprep.subr.mxu0 0.0
        %5444 = vmatpush2.msra.mxu0 0.0
        %5445 = vmatprep.subr.mxu0 0.0
        %5446 = vmatpush2.msra.mxu0 0.0
        %5447 = vmatprep.subr.mxu0 0.0
        %5448 = vmatpush2.msra.mxu0 0.0
        %5449 = vmatprep.subr.mxu0 0.0
        %5450 = vmatpush2.msra.mxu0 0.0
        %5451 = vmatprep.subr.mxu0 0.0
        %5452 = vmatpush2.msra.mxu0 0.0
        %5453 = vmatprep.subr.mxu0 0.0
        %5454 = vmatpush2.msra.mxu0 0.0
        %5455 = vmatprep.subr.mxu0 0.0
        %5456 = vmatpush2.msra.mxu0 0.0
        %5457 = vmatprep.subr.mxu0 0.0
        %5458 = vmatpush2.msra.mxu0 0.0
        %5459 = vmatprep.mubr.f32.mxu0 0.0
        %5460 = vmatmul.mubr.f32.gmra.mxu0 %v5393
        %v5461 = vpop.f32.mrf.mxu0
        %v5462 = vadd.f32 0.0, %v5461
        %v5463 = vpop.f32.mrf.mxu0
        %5464 = vdwg.mxu0
        %v5465 = vadd.f32 %v5305, %v5462
        %s5466 = scalar_lea.vmem %s15, 24
        %v5467 = vld [vmem:[%s5466] sm:$0xff]
        %v5469 = vsel %vm3446, %v5467, 0
        %5471 = vmatprep.subr.mxu0 0.0
        %5472 = vmatpush1.msra.mxu0 0.0
        %5473 = vmatprep.subr.mxu0 0.0
        %5474 = vmatpush1.msra.mxu0 0.0
        %5475 = vmatprep.subr.mxu0 0.0
        %5476 = vmatpush1.msra.mxu0 0.0
        %5477 = vmatprep.subr.mxu0 0.0
        %5478 = vmatpush1.msra.mxu0 0.0
        %5479 = vmatprep.subr.mxu0 0.0
        %5480 = vmatpush1.msra.mxu0 0.0
        %5481 = vmatprep.subr.mxu0 0.0
        %5482 = vmatpush1.msra.mxu0 0.0
        %5483 = vmatprep.subr.mxu0 0.0
        %5484 = vmatpush1.msra.mxu0 0.0
        %5485 = vmatprep.subr.mxu0 0.0
        %5486 = vmatpush1.msra.mxu0 0.0
        %5487 = vmatprep.subr.mxu0 0.0
        %5488 = vmatpush1.msra.mxu0 0.0
        %5489 = vmatprep.subr.mxu0 0.0
        %5490 = vmatpush1.msra.mxu0 0.0
        %5491 = vmatprep.subr.mxu0 0.0
        %5492 = vmatpush1.msra.mxu0 0.0
        %5493 = vmatprep.subr.mxu0 0.0
        %5494 = vmatpush1.msra.mxu0 0.0
        %5495 = vmatprep.subr.mxu0 0.0
        %5496 = vmatpush1.msra.mxu0 0.0
        %5497 = vmatprep.subr.mxu0 0.0
        %5498 = vmatpush1.msra.mxu0 0.0
        %5499 = vmatprep.subr.mxu0 0.0
        %5500 = vmatpush1.msra.mxu0 0.0
        %5501 = vmatprep.subr.mxu0 0.0
        %5502 = vmatpush1.msra.mxu0 %v4995
        %5503 = vmatprep.subr.mxu0 0.0
        %5504 = vmatpush2.msra.mxu0 0.0
        %5505 = vmatprep.subr.mxu0 0.0
        %5506 = vmatpush2.msra.mxu0 0.0
        %5507 = vmatprep.subr.mxu0 0.0
        %5508 = vmatpush2.msra.mxu0 0.0
        %5509 = vmatprep.subr.mxu0 0.0
        %5510 = vmatpush2.msra.mxu0 0.0
        %5511 = vmatprep.subr.mxu0 0.0
        %5512 = vmatpush2.msra.mxu0 0.0
        %5513 = vmatprep.subr.mxu0 0.0
        %5514 = vmatpush2.msra.mxu0 0.0
        %5515 = vmatprep.subr.mxu0 0.0
        %5516 = vmatpush2.msra.mxu0 0.0
        %5517 = vmatprep.subr.mxu0 0.0
        %5518 = vmatpush2.msra.mxu0 0.0
        %5519 = vmatprep.subr.mxu0 0.0
        %5520 = vmatpush2.msra.mxu0 0.0
        %5521 = vmatprep.subr.mxu0 0.0
        %5522 = vmatpush2.msra.mxu0 0.0
        %5523 = vmatprep.subr.mxu0 0.0
        %5524 = vmatpush2.msra.mxu0 0.0
        %5525 = vmatprep.subr.mxu0 0.0
        %5526 = vmatpush2.msra.mxu0 0.0
        %5527 = vmatprep.subr.mxu0 0.0
        %5528 = vmatpush2.msra.mxu0 0.0
        %5529 = vmatprep.subr.mxu0 0.0
        %5530 = vmatpush2.msra.mxu0 0.0
        %5531 = vmatprep.subr.mxu0 0.0
        %5532 = vmatpush2.msra.mxu0 0.0
        %5533 = vmatprep.subr.mxu0 0.0
        %5534 = vmatpush2.msra.mxu0 0.0
        %5535 = vmatprep.mubr.f32.mxu0 0.0
        %5536 = vmatmul.mubr.f32.gmra.mxu0 %v5469
        %v5537 = vpop.f32.mrf.mxu0
        %v5538 = vadd.f32 0.0, %v5537
        %v5539 = vpop.f32.mrf.mxu0
        %5540 = vdwg.mxu0
        %s5541 = scalar_lea.vmem %s16, 192
        %v5542 = vld [vmem:[%s5541] sm:$0xff]
        %v5543 = vld [vmem:[%s5541 + $0x8] sm:$0xff]
        %v5544 = vld [vmem:[%s5541 + $0x10] sm:$0xff]
        %v5545 = vld [vmem:[%s5541 + $0x18] sm:$0xff]
        %v5546 = vld [vmem:[%s5541 + $0x20] sm:$0xff]
        %v5547 = vld [vmem:[%s5541 + $0x28] sm:$0xff]
        %v5548 = vld [vmem:[%s5541 + $0x30] sm:$0xff]
        %v5549 = vld [vmem:[%s5541 + $0x38] sm:$0xff]
        %v5551 = vsel %vm767, %v5538, 0
        %5553 = vmatprep.subr.mxu0 0.0
        %5554 = vmatpush1.msra.mxu0 0.0
        %5555 = vmatprep.subr.mxu0 0.0
        %5556 = vmatpush1.msra.mxu0 0.0
        %5557 = vmatprep.subr.mxu0 0.0
        %5558 = vmatpush1.msra.mxu0 0.0
        %5559 = vmatprep.subr.mxu0 0.0
        %5560 = vmatpush1.msra.mxu0 0.0
        %5561 = vmatprep.subr.mxu0 0.0
        %5562 = vmatpush1.msra.mxu0 0.0
        %5563 = vmatprep.subr.mxu0 0.0
        %5564 = vmatpush1.msra.mxu0 0.0
        %5565 = vmatprep.subr.mxu0 0.0
        %5566 = vmatpush1.msra.mxu0 0.0
        %5567 = vmatprep.subr.mxu0 0.0
        %5568 = vmatpush1.msra.mxu0 0.0
        %5569 = vmatprep.subr.mxu0 0.0
        %5570 = vmatpush1.msra.mxu0 %v5549
        %5571 = vmatprep.subr.mxu0 0.0
        %5572 = vmatpush1.msra.mxu0 %v5548
        %5573 = vmatprep.subr.mxu0 0.0
        %5574 = vmatpush1.msra.mxu0 %v5547
        %5575 = vmatprep.subr.mxu0 0.0
        %5576 = vmatpush1.msra.mxu0 %v5546
        %5577 = vmatprep.subr.mxu0 0.0
        %5578 = vmatpush1.msra.mxu0 %v5545
        %5579 = vmatprep.subr.mxu0 0.0
        %5580 = vmatpush1.msra.mxu0 %v5544
        %5581 = vmatprep.subr.mxu0 0.0
        %5582 = vmatpush1.msra.mxu0 %v5543
        %5583 = vmatprep.subr.mxu0 0.0
        %5584 = vmatpush1.msra.mxu0 %v5542
        %5585 = vmatprep.subr.mxu0 0.0
        %5586 = vmatpush2.msra.mxu0 0.0
        %5587 = vmatprep.subr.mxu0 0.0
        %5588 = vmatpush2.msra.mxu0 0.0
        %5589 = vmatprep.subr.mxu0 0.0
        %5590 = vmatpush2.msra.mxu0 0.0
        %5591 = vmatprep.subr.mxu0 0.0
        %5592 = vmatpush2.msra.mxu0 0.0
        %5593 = vmatprep.subr.mxu0 0.0
        %5594 = vmatpush2.msra.mxu0 0.0
        %5595 = vmatprep.subr.mxu0 0.0
        %5596 = vmatpush2.msra.mxu0 0.0
        %5597 = vmatprep.subr.mxu0 0.0
        %5598 = vmatpush2.msra.mxu0 0.0
        %5599 = vmatprep.subr.mxu0 0.0
        %5600 = vmatpush2.msra.mxu0 0.0
        %5601 = vmatprep.subr.mxu0 0.0
        %5602 = vmatpush2.msra.mxu0 0.0
        %5603 = vmatprep.subr.mxu0 0.0
        %5604 = vmatpush2.msra.mxu0 0.0
        %5605 = vmatprep.subr.mxu0 0.0
        %5606 = vmatpush2.msra.mxu0 0.0
        %5607 = vmatprep.subr.mxu0 0.0
        %5608 = vmatpush2.msra.mxu0 0.0
        %5609 = vmatprep.subr.mxu0 0.0
        %5610 = vmatpush2.msra.mxu0 0.0
        %5611 = vmatprep.subr.mxu0 0.0
        %5612 = vmatpush2.msra.mxu0 0.0
        %5613 = vmatprep.subr.mxu0 0.0
        %5614 = vmatpush2.msra.mxu0 0.0
        %5615 = vmatprep.subr.mxu0 0.0
        %5616 = vmatpush2.msra.mxu0 0.0
        %5617 = vmatprep.mubr.f32.mxu0 0.0
        %5618 = vmatmul.mubr.f32.gmra.mxu0 %v5551
        %v5619 = vpop.f32.mrf.mxu0
        %v5620 = vadd.f32 0.0, %v5619
        %v5621 = vpop.f32.mrf.mxu0
        %5622 = vdwg.mxu0
        %v5623 = vadd.f32 %v5465, %v5620
        %s5624 = scalar_lea.vmem %s15, 32
        %v5625 = vld [vmem:[%s5624] sm:$0xff]
        %v5627 = vsel %vm3446, %v5625, 0
        %5629 = vmatprep.subr.mxu0 0.0
        %5630 = vmatpush1.msra.mxu0 0.0
        %5631 = vmatprep.subr.mxu0 0.0
        %5632 = vmatpush1.msra.mxu0 0.0
        %5633 = vmatprep.subr.mxu0 0.0
        %5634 = vmatpush1.msra.mxu0 0.0
        %5635 = vmatprep.subr.mxu0 0.0
        %5636 = vmatpush1.msra.mxu0 0.0
        %5637 = vmatprep.subr.mxu0 0.0
        %5638 = vmatpush1.msra.mxu0 0.0
        %5639 = vmatprep.subr.mxu0 0.0
        %5640 = vmatpush1.msra.mxu0 0.0
        %5641 = vmatprep.subr.mxu0 0.0
        %5642 = vmatpush1.msra.mxu0 0.0
        %5643 = vmatprep.subr.mxu0 0.0
        %5644 = vmatpush1.msra.mxu0 0.0
        %5645 = vmatprep.subr.mxu0 0.0
        %5646 = vmatpush1.msra.mxu0 0.0
        %5647 = vmatprep.subr.mxu0 0.0
        %5648 = vmatpush1.msra.mxu0 0.0
        %5649 = vmatprep.subr.mxu0 0.0
        %5650 = vmatpush1.msra.mxu0 0.0
        %5651 = vmatprep.subr.mxu0 0.0
        %5652 = vmatpush1.msra.mxu0 0.0
        %5653 = vmatprep.subr.mxu0 0.0
        %5654 = vmatpush1.msra.mxu0 0.0
        %5655 = vmatprep.subr.mxu0 0.0
        %5656 = vmatpush1.msra.mxu0 0.0
        %5657 = vmatprep.subr.mxu0 0.0
        %5658 = vmatpush1.msra.mxu0 0.0
        %5659 = vmatprep.subr.mxu0 0.0
        %5660 = vmatpush1.msra.mxu0 %v4995
        %5661 = vmatprep.subr.mxu0 0.0
        %5662 = vmatpush2.msra.mxu0 0.0
        %5663 = vmatprep.subr.mxu0 0.0
        %5664 = vmatpush2.msra.mxu0 0.0
        %5665 = vmatprep.subr.mxu0 0.0
        %5666 = vmatpush2.msra.mxu0 0.0
        %5667 = vmatprep.subr.mxu0 0.0
        %5668 = vmatpush2.msra.mxu0 0.0
        %5669 = vmatprep.subr.mxu0 0.0
        %5670 = vmatpush2.msra.mxu0 0.0
        %5671 = vmatprep.subr.mxu0 0.0
        %5672 = vmatpush2.msra.mxu0 0.0
        %5673 = vmatprep.subr.mxu0 0.0
        %5674 = vmatpush2.msra.mxu0 0.0
        %5675 = vmatprep.subr.mxu0 0.0
        %5676 = vmatpush2.msra.mxu0 0.0
        %5677 = vmatprep.subr.mxu0 0.0
        %5678 = vmatpush2.msra.mxu0 0.0
        %5679 = vmatprep.subr.mxu0 0.0
        %5680 = vmatpush2.msra.mxu0 0.0
        %5681 = vmatprep.subr.mxu0 0.0
        %5682 = vmatpush2.msra.mxu0 0.0
        %5683 = vmatprep.subr.mxu0 0.0
        %5684 = vmatpush2.msra.mxu0 0.0
        %5685 = vmatprep.subr.mxu0 0.0
        %5686 = vmatpush2.msra.mxu0 0.0
        %5687 = vmatprep.subr.mxu0 0.0
        %5688 = vmatpush2.msra.mxu0 0.0
        %5689 = vmatprep.subr.mxu0 0.0
        %5690 = vmatpush2.msra.mxu0 0.0
        %5691 = vmatprep.subr.mxu0 0.0
        %5692 = vmatpush2.msra.mxu0 0.0
        %5693 = vmatprep.mubr.f32.mxu0 0.0
        %5694 = vmatmul.mubr.f32.gmra.mxu0 %v5627
        %v5695 = vpop.f32.mrf.mxu0
        %v5696 = vadd.f32 0.0, %v5695
        %v5697 = vpop.f32.mrf.mxu0
        %5698 = vdwg.mxu0
        %s5699 = scalar_lea.vmem %s16, 256
        %v5700 = vld [vmem:[%s5699] sm:$0xff]
        %v5701 = vld [vmem:[%s5699 + $0x8] sm:$0xff]
        %v5702 = vld [vmem:[%s5699 + $0x10] sm:$0xff]
        %v5703 = vld [vmem:[%s5699 + $0x18] sm:$0xff]
        %v5704 = vld [vmem:[%s5699 + $0x20] sm:$0xff]
        %v5705 = vld [vmem:[%s5699 + $0x28] sm:$0xff]
        %v5706 = vld [vmem:[%s5699 + $0x30] sm:$0xff]
        %v5707 = vld [vmem:[%s5699 + $0x38] sm:$0xff]
        %v5709 = vsel %vm767, %v5696, 0
        %5711 = vmatprep.subr.mxu0 0.0
        %5712 = vmatpush1.msra.mxu0 0.0
        %5713 = vmatprep.subr.mxu0 0.0
        %5714 = vmatpush1.msra.mxu0 0.0
        %5715 = vmatprep.subr.mxu0 0.0
        %5716 = vmatpush1.msra.mxu0 0.0
        %5717 = vmatprep.subr.mxu0 0.0
        %5718 = vmatpush1.msra.mxu0 0.0
        %5719 = vmatprep.subr.mxu0 0.0
        %5720 = vmatpush1.msra.mxu0 0.0
        %5721 = vmatprep.subr.mxu0 0.0
        %5722 = vmatpush1.msra.mxu0 0.0
        %5723 = vmatprep.subr.mxu0 0.0
        %5724 = vmatpush1.msra.mxu0 0.0
        %5725 = vmatprep.subr.mxu0 0.0
        %5726 = vmatpush1.msra.mxu0 0.0
        %5727 = vmatprep.subr.mxu0 0.0
        %5728 = vmatpush1.msra.mxu0 %v5707
        %5729 = vmatprep.subr.mxu0 0.0
        %5730 = vmatpush1.msra.mxu0 %v5706
        %5731 = vmatprep.subr.mxu0 0.0
        %5732 = vmatpush1.msra.mxu0 %v5705
        %5733 = vmatprep.subr.mxu0 0.0
        %5734 = vmatpush1.msra.mxu0 %v5704
        %5735 = vmatprep.subr.mxu0 0.0
        %5736 = vmatpush1.msra.mxu0 %v5703
        %5737 = vmatprep.subr.mxu0 0.0
        %5738 = vmatpush1.msra.mxu0 %v5702
        %5739 = vmatprep.subr.mxu0 0.0
        %5740 = vmatpush1.msra.mxu0 %v5701
        %5741 = vmatprep.subr.mxu0 0.0
        %5742 = vmatpush1.msra.mxu0 %v5700
        %5743 = vmatprep.subr.mxu0 0.0
        %5744 = vmatpush2.msra.mxu0 0.0
        %5745 = vmatprep.subr.mxu0 0.0
        %5746 = vmatpush2.msra.mxu0 0.0
        %5747 = vmatprep.subr.mxu0 0.0
        %5748 = vmatpush2.msra.mxu0 0.0
        %5749 = vmatprep.subr.mxu0 0.0
        %5750 = vmatpush2.msra.mxu0 0.0
        %5751 = vmatprep.subr.mxu0 0.0
        %5752 = vmatpush2.msra.mxu0 0.0
        %5753 = vmatprep.subr.mxu0 0.0
        %5754 = vmatpush2.msra.mxu0 0.0
        %5755 = vmatprep.subr.mxu0 0.0
        %5756 = vmatpush2.msra.mxu0 0.0
        %5757 = vmatprep.subr.mxu0 0.0
        %5758 = vmatpush2.msra.mxu0 0.0
        %5759 = vmatprep.subr.mxu0 0.0
        %5760 = vmatpush2.msra.mxu0 0.0
        %5761 = vmatprep.subr.mxu0 0.0
        %5762 = vmatpush2.msra.mxu0 0.0
        %5763 = vmatprep.subr.mxu0 0.0
        %5764 = vmatpush2.msra.mxu0 0.0
        %5765 = vmatprep.subr.mxu0 0.0
        %5766 = vmatpush2.msra.mxu0 0.0
        %5767 = vmatprep.subr.mxu0 0.0
        %5768 = vmatpush2.msra.mxu0 0.0
        %5769 = vmatprep.subr.mxu0 0.0
        %5770 = vmatpush2.msra.mxu0 0.0
        %5771 = vmatprep.subr.mxu0 0.0
        %5772 = vmatpush2.msra.mxu0 0.0
        %5773 = vmatprep.subr.mxu0 0.0
        %5774 = vmatpush2.msra.mxu0 0.0
        %5775 = vmatprep.mubr.f32.mxu0 0.0
        %5776 = vmatmul.mubr.f32.gmra.mxu0 %v5709
        %v5777 = vpop.f32.mrf.mxu0
        %v5778 = vadd.f32 0.0, %v5777
        %v5779 = vpop.f32.mrf.mxu0
        %5780 = vdwg.mxu0
        %v5781 = vadd.f32 %v5623, %v5778
        %s5782 = scalar_lea.vmem %s15, 40
        %v5783 = vld [vmem:[%s5782] sm:$0xff]
        %v5785 = vsel %vm3446, %v5783, 0
        %5787 = vmatprep.subr.mxu0 0.0
        %5788 = vmatpush1.msra.mxu0 0.0
        %5789 = vmatprep.subr.mxu0 0.0
        %5790 = vmatpush1.msra.mxu0 0.0
        %5791 = vmatprep.subr.mxu0 0.0
        %5792 = vmatpush1.msra.mxu0 0.0
        %5793 = vmatprep.subr.mxu0 0.0
        %5794 = vmatpush1.msra.mxu0 0.0
        %5795 = vmatprep.subr.mxu0 0.0
        %5796 = vmatpush1.msra.mxu0 0.0
        %5797 = vmatprep.subr.mxu0 0.0
        %5798 = vmatpush1.msra.mxu0 0.0
        %5799 = vmatprep.subr.mxu0 0.0
        %5800 = vmatpush1.msra.mxu0 0.0
        %5801 = vmatprep.subr.mxu0 0.0
        %5802 = vmatpush1.msra.mxu0 0.0
        %5803 = vmatprep.subr.mxu0 0.0
        %5804 = vmatpush1.msra.mxu0 0.0
        %5805 = vmatprep.subr.mxu0 0.0
        %5806 = vmatpush1.msra.mxu0 0.0
        %5807 = vmatprep.subr.mxu0 0.0
        %5808 = vmatpush1.msra.mxu0 0.0
        %5809 = vmatprep.subr.mxu0 0.0
        %5810 = vmatpush1.msra.mxu0 0.0
        %5811 = vmatprep.subr.mxu0 0.0
        %5812 = vmatpush1.msra.mxu0 0.0
        %5813 = vmatprep.subr.mxu0 0.0
        %5814 = vmatpush1.msra.mxu0 0.0
        %5815 = vmatprep.subr.mxu0 0.0
        %5816 = vmatpush1.msra.mxu0 0.0
        %5817 = vmatprep.subr.mxu0 0.0
        %5818 = vmatpush1.msra.mxu0 %v4995
        %5819 = vmatprep.subr.mxu0 0.0
        %5820 = vmatpush2.msra.mxu0 0.0
        %5821 = vmatprep.subr.mxu0 0.0
        %5822 = vmatpush2.msra.mxu0 0.0
        %5823 = vmatprep.subr.mxu0 0.0
        %5824 = vmatpush2.msra.mxu0 0.0
        %5825 = vmatprep.subr.mxu0 0.0
        %5826 = vmatpush2.msra.mxu0 0.0
        %5827 = vmatprep.subr.mxu0 0.0
        %5828 = vmatpush2.msra.mxu0 0.0
        %5829 = vmatprep.subr.mxu0 0.0
        %5830 = vmatpush2.msra.mxu0 0.0
        %5831 = vmatprep.subr.mxu0 0.0
        %5832 = vmatpush2.msra.mxu0 0.0
        %5833 = vmatprep.subr.mxu0 0.0
        %5834 = vmatpush2.msra.mxu0 0.0
        %5835 = vmatprep.subr.mxu0 0.0
        %5836 = vmatpush2.msra.mxu0 0.0
        %5837 = vmatprep.subr.mxu0 0.0
        %5838 = vmatpush2.msra.mxu0 0.0
        %5839 = vmatprep.subr.mxu0 0.0
        %5840 = vmatpush2.msra.mxu0 0.0
        %5841 = vmatprep.subr.mxu0 0.0
        %5842 = vmatpush2.msra.mxu0 0.0
        %5843 = vmatprep.subr.mxu0 0.0
        %5844 = vmatpush2.msra.mxu0 0.0
        %5845 = vmatprep.subr.mxu0 0.0
        %5846 = vmatpush2.msra.mxu0 0.0
        %5847 = vmatprep.subr.mxu0 0.0
        %5848 = vmatpush2.msra.mxu0 0.0
        %5849 = vmatprep.subr.mxu0 0.0
        %5850 = vmatpush2.msra.mxu0 0.0
        %5851 = vmatprep.mubr.f32.mxu0 0.0
        %5852 = vmatmul.mubr.f32.gmra.mxu0 %v5785
        %v5853 = vpop.f32.mrf.mxu0
        %v5854 = vadd.f32 0.0, %v5853
        %v5855 = vpop.f32.mrf.mxu0
        %5856 = vdwg.mxu0
        %s5857 = scalar_lea.vmem %s16, 320
        %v5858 = vld [vmem:[%s5857] sm:$0xff]
        %v5859 = vld [vmem:[%s5857 + $0x8] sm:$0xff]
        %v5860 = vld [vmem:[%s5857 + $0x10] sm:$0xff]
        %v5861 = vld [vmem:[%s5857 + $0x18] sm:$0xff]
        %v5862 = vld [vmem:[%s5857 + $0x20] sm:$0xff]
        %v5863 = vld [vmem:[%s5857 + $0x28] sm:$0xff]
        %v5864 = vld [vmem:[%s5857 + $0x30] sm:$0xff]
        %v5865 = vld [vmem:[%s5857 + $0x38] sm:$0xff]
        %v5867 = vsel %vm767, %v5854, 0
        %5869 = vmatprep.subr.mxu0 0.0
        %5870 = vmatpush1.msra.mxu0 0.0
        %5871 = vmatprep.subr.mxu0 0.0
        %5872 = vmatpush1.msra.mxu0 0.0
        %5873 = vmatprep.subr.mxu0 0.0
        %5874 = vmatpush1.msra.mxu0 0.0
        %5875 = vmatprep.subr.mxu0 0.0
        %5876 = vmatpush1.msra.mxu0 0.0
        %5877 = vmatprep.subr.mxu0 0.0
        %5878 = vmatpush1.msra.mxu0 0.0
        %5879 = vmatprep.subr.mxu0 0.0
        %5880 = vmatpush1.msra.mxu0 0.0
        %5881 = vmatprep.subr.mxu0 0.0
        %5882 = vmatpush1.msra.mxu0 0.0
        %5883 = vmatprep.subr.mxu0 0.0
        %5884 = vmatpush1.msra.mxu0 0.0
        %5885 = vmatprep.subr.mxu0 0.0
        %5886 = vmatpush1.msra.mxu0 %v5865
        %5887 = vmatprep.subr.mxu0 0.0
        %5888 = vmatpush1.msra.mxu0 %v5864
        %5889 = vmatprep.subr.mxu0 0.0
        %5890 = vmatpush1.msra.mxu0 %v5863
        %5891 = vmatprep.subr.mxu0 0.0
        %5892 = vmatpush1.msra.mxu0 %v5862
        %5893 = vmatprep.subr.mxu0 0.0
        %5894 = vmatpush1.msra.mxu0 %v5861
        %5895 = vmatprep.subr.mxu0 0.0
        %5896 = vmatpush1.msra.mxu0 %v5860
        %5897 = vmatprep.subr.mxu0 0.0
        %5898 = vmatpush1.msra.mxu0 %v5859
        %5899 = vmatprep.subr.mxu0 0.0
        %5900 = vmatpush1.msra.mxu0 %v5858
        %5901 = vmatprep.subr.mxu0 0.0
        %5902 = vmatpush2.msra.mxu0 0.0
        %5903 = vmatprep.subr.mxu0 0.0
        %5904 = vmatpush2.msra.mxu0 0.0
        %5905 = vmatprep.subr.mxu0 0.0
        %5906 = vmatpush2.msra.mxu0 0.0
        %5907 = vmatprep.subr.mxu0 0.0
        %5908 = vmatpush2.msra.mxu0 0.0
        %5909 = vmatprep.subr.mxu0 0.0
        %5910 = vmatpush2.msra.mxu0 0.0
        %5911 = vmatprep.subr.mxu0 0.0
        %5912 = vmatpush2.msra.mxu0 0.0
        %5913 = vmatprep.subr.mxu0 0.0
        %5914 = vmatpush2.msra.mxu0 0.0
        %5915 = vmatprep.subr.mxu0 0.0
        %5916 = vmatpush2.msra.mxu0 0.0
        %5917 = vmatprep.subr.mxu0 0.0
        %5918 = vmatpush2.msra.mxu0 0.0
        %5919 = vmatprep.subr.mxu0 0.0
        %5920 = vmatpush2.msra.mxu0 0.0
        %5921 = vmatprep.subr.mxu0 0.0
        %5922 = vmatpush2.msra.mxu0 0.0
        %5923 = vmatprep.subr.mxu0 0.0
        %5924 = vmatpush2.msra.mxu0 0.0
        %5925 = vmatprep.subr.mxu0 0.0
        %5926 = vmatpush2.msra.mxu0 0.0
        %5927 = vmatprep.subr.mxu0 0.0
        %5928 = vmatpush2.msra.mxu0 0.0
        %5929 = vmatprep.subr.mxu0 0.0
        %5930 = vmatpush2.msra.mxu0 0.0
        %5931 = vmatprep.subr.mxu0 0.0
        %5932 = vmatpush2.msra.mxu0 0.0
        %5933 = vmatprep.mubr.f32.mxu0 0.0
        %5934 = vmatmul.mubr.f32.gmra.mxu0 %v5867
        %v5935 = vpop.f32.mrf.mxu0
        %v5936 = vadd.f32 0.0, %v5935
        %v5937 = vpop.f32.mrf.mxu0
        %5938 = vdwg.mxu0
        %v5939 = vadd.f32 %v5781, %v5936
        %s5940 = scalar_lea.vmem %s15, 48
        %v5941 = vld [vmem:[%s5940] sm:$0xff]
        %v5943 = vsel %vm3446, %v5941, 0
        %5945 = vmatprep.subr.mxu0 0.0
        %5946 = vmatpush1.msra.mxu0 0.0
        %5947 = vmatprep.subr.mxu0 0.0
        %5948 = vmatpush1.msra.mxu0 0.0
        %5949 = vmatprep.subr.mxu0 0.0
        %5950 = vmatpush1.msra.mxu0 0.0
        %5951 = vmatprep.subr.mxu0 0.0
        %5952 = vmatpush1.msra.mxu0 0.0
        %5953 = vmatprep.subr.mxu0 0.0
        %5954 = vmatpush1.msra.mxu0 0.0
        %5955 = vmatprep.subr.mxu0 0.0
        %5956 = vmatpush1.msra.mxu0 0.0
        %5957 = vmatprep.subr.mxu0 0.0
        %5958 = vmatpush1.msra.mxu0 0.0
        %5959 = vmatprep.subr.mxu0 0.0
        %5960 = vmatpush1.msra.mxu0 0.0
        %5961 = vmatprep.subr.mxu0 0.0
        %5962 = vmatpush1.msra.mxu0 0.0
        %5963 = vmatprep.subr.mxu0 0.0
        %5964 = vmatpush1.msra.mxu0 0.0
        %5965 = vmatprep.subr.mxu0 0.0
        %5966 = vmatpush1.msra.mxu0 0.0
        %5967 = vmatprep.subr.mxu0 0.0
        %5968 = vmatpush1.msra.mxu0 0.0
        %5969 = vmatprep.subr.mxu0 0.0
        %5970 = vmatpush1.msra.mxu0 0.0
        %5971 = vmatprep.subr.mxu0 0.0
        %5972 = vmatpush1.msra.mxu0 0.0
        %5973 = vmatprep.subr.mxu0 0.0
        %5974 = vmatpush1.msra.mxu0 0.0
        %5975 = vmatprep.subr.mxu0 0.0
        %5976 = vmatpush1.msra.mxu0 %v4995
        %5977 = vmatprep.subr.mxu0 0.0
        %5978 = vmatpush2.msra.mxu0 0.0
        %5979 = vmatprep.subr.mxu0 0.0
        %5980 = vmatpush2.msra.mxu0 0.0
        %5981 = vmatprep.subr.mxu0 0.0
        %5982 = vmatpush2.msra.mxu0 0.0
        %5983 = vmatprep.subr.mxu0 0.0
        %5984 = vmatpush2.msra.mxu0 0.0
        %5985 = vmatprep.subr.mxu0 0.0
        %5986 = vmatpush2.msra.mxu0 0.0
        %5987 = vmatprep.subr.mxu0 0.0
        %5988 = vmatpush2.msra.mxu0 0.0
        %5989 = vmatprep.subr.mxu0 0.0
        %5990 = vmatpush2.msra.mxu0 0.0
        %5991 = vmatprep.subr.mxu0 0.0
        %5992 = vmatpush2.msra.mxu0 0.0
        %5993 = vmatprep.subr.mxu0 0.0
        %5994 = vmatpush2.msra.mxu0 0.0
        %5995 = vmatprep.subr.mxu0 0.0
        %5996 = vmatpush2.msra.mxu0 0.0
        %5997 = vmatprep.subr.mxu0 0.0
        %5998 = vmatpush2.msra.mxu0 0.0
        %5999 = vmatprep.subr.mxu0 0.0
        %6000 = vmatpush2.msra.mxu0 0.0
        %6001 = vmatprep.subr.mxu0 0.0
        %6002 = vmatpush2.msra.mxu0 0.0
        %6003 = vmatprep.subr.mxu0 0.0
        %6004 = vmatpush2.msra.mxu0 0.0
        %6005 = vmatprep.subr.mxu0 0.0
        %6006 = vmatpush2.msra.mxu0 0.0
        %6007 = vmatprep.subr.mxu0 0.0
        %6008 = vmatpush2.msra.mxu0 0.0
        %6009 = vmatprep.mubr.f32.mxu0 0.0
        %6010 = vmatmul.mubr.f32.gmra.mxu0 %v5943
        %v6011 = vpop.f32.mrf.mxu0
        %v6012 = vadd.f32 0.0, %v6011
        %v6013 = vpop.f32.mrf.mxu0
        %6014 = vdwg.mxu0
        %s6015 = scalar_lea.vmem %s16, 384
        %v6016 = vld [vmem:[%s6015] sm:$0xff]
        %v6017 = vld [vmem:[%s6015 + $0x8] sm:$0xff]
        %v6018 = vld [vmem:[%s6015 + $0x10] sm:$0xff]
        %v6019 = vld [vmem:[%s6015 + $0x18] sm:$0xff]
        %v6020 = vld [vmem:[%s6015 + $0x20] sm:$0xff]
        %v6021 = vld [vmem:[%s6015 + $0x28] sm:$0xff]
        %v6022 = vld [vmem:[%s6015 + $0x30] sm:$0xff]
        %v6023 = vld [vmem:[%s6015 + $0x38] sm:$0xff]
        %v6025 = vsel %vm767, %v6012, 0
        %6027 = vmatprep.subr.mxu0 0.0
        %6028 = vmatpush1.msra.mxu0 0.0
        %6029 = vmatprep.subr.mxu0 0.0
        %6030 = vmatpush1.msra.mxu0 0.0
        %6031 = vmatprep.subr.mxu0 0.0
        %6032 = vmatpush1.msra.mxu0 0.0
        %6033 = vmatprep.subr.mxu0 0.0
        %6034 = vmatpush1.msra.mxu0 0.0
        %6035 = vmatprep.subr.mxu0 0.0
        %6036 = vmatpush1.msra.mxu0 0.0
        %6037 = vmatprep.subr.mxu0 0.0
        %6038 = vmatpush1.msra.mxu0 0.0
        %6039 = vmatprep.subr.mxu0 0.0
        %6040 = vmatpush1.msra.mxu0 0.0
        %6041 = vmatprep.subr.mxu0 0.0
        %6042 = vmatpush1.msra.mxu0 0.0
        %6043 = vmatprep.subr.mxu0 0.0
        %6044 = vmatpush1.msra.mxu0 %v6023
        %6045 = vmatprep.subr.mxu0 0.0
        %6046 = vmatpush1.msra.mxu0 %v6022
        %6047 = vmatprep.subr.mxu0 0.0
        %6048 = vmatpush1.msra.mxu0 %v6021
        %6049 = vmatprep.subr.mxu0 0.0
        %6050 = vmatpush1.msra.mxu0 %v6020
        %6051 = vmatprep.subr.mxu0 0.0
        %6052 = vmatpush1.msra.mxu0 %v6019
        %6053 = vmatprep.subr.mxu0 0.0
        %6054 = vmatpush1.msra.mxu0 %v6018
        %6055 = vmatprep.subr.mxu0 0.0
        %6056 = vmatpush1.msra.mxu0 %v6017
        %6057 = vmatprep.subr.mxu0 0.0
        %6058 = vmatpush1.msra.mxu0 %v6016
        %6059 = vmatprep.subr.mxu0 0.0
        %6060 = vmatpush2.msra.mxu0 0.0
        %6061 = vmatprep.subr.mxu0 0.0
        %6062 = vmatpush2.msra.mxu0 0.0
        %6063 = vmatprep.subr.mxu0 0.0
        %6064 = vmatpush2.msra.mxu0 0.0
        %6065 = vmatprep.subr.mxu0 0.0
        %6066 = vmatpush2.msra.mxu0 0.0
        %6067 = vmatprep.subr.mxu0 0.0
        %6068 = vmatpush2.msra.mxu0 0.0
        %6069 = vmatprep.subr.mxu0 0.0
        %6070 = vmatpush2.msra.mxu0 0.0
        %6071 = vmatprep.subr.mxu0 0.0
        %6072 = vmatpush2.msra.mxu0 0.0
        %6073 = vmatprep.subr.mxu0 0.0
        %6074 = vmatpush2.msra.mxu0 0.0
        %6075 = vmatprep.subr.mxu0 0.0
        %6076 = vmatpush2.msra.mxu0 0.0
        %6077 = vmatprep.subr.mxu0 0.0
        %6078 = vmatpush2.msra.mxu0 0.0
        %6079 = vmatprep.subr.mxu0 0.0
        %6080 = vmatpush2.msra.mxu0 0.0
        %6081 = vmatprep.subr.mxu0 0.0
        %6082 = vmatpush2.msra.mxu0 0.0
        %6083 = vmatprep.subr.mxu0 0.0
        %6084 = vmatpush2.msra.mxu0 0.0
        %6085 = vmatprep.subr.mxu0 0.0
        %6086 = vmatpush2.msra.mxu0 0.0
        %6087 = vmatprep.subr.mxu0 0.0
        %6088 = vmatpush2.msra.mxu0 0.0
        %6089 = vmatprep.subr.mxu0 0.0
        %6090 = vmatpush2.msra.mxu0 0.0
        %6091 = vmatprep.mubr.f32.mxu0 0.0
        %6092 = vmatmul.mubr.f32.gmra.mxu0 %v6025
        %v6093 = vpop.f32.mrf.mxu0
        %v6094 = vadd.f32 0.0, %v6093
        %v6095 = vpop.f32.mrf.mxu0
        %6096 = vdwg.mxu0
        %v6097 = vadd.f32 %v5939, %v6094
        %s6098 = scalar_lea.vmem %s15, 56
        %v6099 = vld [vmem:[%s6098] sm:$0xff]
        %v6101 = vsel %vm3446, %v6099, 0
        %6103 = vmatprep.subr.mxu0 0.0
        %6104 = vmatpush1.msra.mxu0 0.0
        %6105 = vmatprep.subr.mxu0 0.0
        %6106 = vmatpush1.msra.mxu0 0.0
        %6107 = vmatprep.subr.mxu0 0.0
        %6108 = vmatpush1.msra.mxu0 0.0
        %6109 = vmatprep.subr.mxu0 0.0
        %6110 = vmatpush1.msra.mxu0 0.0
        %6111 = vmatprep.subr.mxu0 0.0
        %6112 = vmatpush1.msra.mxu0 0.0
        %6113 = vmatprep.subr.mxu0 0.0
        %6114 = vmatpush1.msra.mxu0 0.0
        %6115 = vmatprep.subr.mxu0 0.0
        %6116 = vmatpush1.msra.mxu0 0.0
        %6117 = vmatprep.subr.mxu0 0.0
        %6118 = vmatpush1.msra.mxu0 0.0
        %6119 = vmatprep.subr.mxu0 0.0
        %6120 = vmatpush1.msra.mxu0 0.0
        %6121 = vmatprep.subr.mxu0 0.0
        %6122 = vmatpush1.msra.mxu0 0.0
        %6123 = vmatprep.subr.mxu0 0.0
        %6124 = vmatpush1.msra.mxu0 0.0
        %6125 = vmatprep.subr.mxu0 0.0
        %6126 = vmatpush1.msra.mxu0 0.0
        %6127 = vmatprep.subr.mxu0 0.0
        %6128 = vmatpush1.msra.mxu0 0.0
        %6129 = vmatprep.subr.mxu0 0.0
        %6130 = vmatpush1.msra.mxu0 0.0
        %6131 = vmatprep.subr.mxu0 0.0
        %6132 = vmatpush1.msra.mxu0 0.0
        %6133 = vmatprep.subr.mxu0 0.0
        %6134 = vmatpush1.msra.mxu0 %v4995
        %6135 = vmatprep.subr.mxu0 0.0
        %6136 = vmatpush2.msra.mxu0 0.0
        %6137 = vmatprep.subr.mxu0 0.0
        %6138 = vmatpush2.msra.mxu0 0.0
        %6139 = vmatprep.subr.mxu0 0.0
        %6140 = vmatpush2.msra.mxu0 0.0
        %6141 = vmatprep.subr.mxu0 0.0
        %6142 = vmatpush2.msra.mxu0 0.0
        %6143 = vmatprep.subr.mxu0 0.0
        %6144 = vmatpush2.msra.mxu0 0.0
        %6145 = vmatprep.subr.mxu0 0.0
        %6146 = vmatpush2.msra.mxu0 0.0
        %6147 = vmatprep.subr.mxu0 0.0
        %6148 = vmatpush2.msra.mxu0 0.0
        %6149 = vmatprep.subr.mxu0 0.0
        %6150 = vmatpush2.msra.mxu0 0.0
        %6151 = vmatprep.subr.mxu0 0.0
        %6152 = vmatpush2.msra.mxu0 0.0
        %6153 = vmatprep.subr.mxu0 0.0
        %6154 = vmatpush2.msra.mxu0 0.0
        %6155 = vmatprep.subr.mxu0 0.0
        %6156 = vmatpush2.msra.mxu0 0.0
        %6157 = vmatprep.subr.mxu0 0.0
        %6158 = vmatpush2.msra.mxu0 0.0
        %6159 = vmatprep.subr.mxu0 0.0
        %6160 = vmatpush2.msra.mxu0 0.0
        %6161 = vmatprep.subr.mxu0 0.0
        %6162 = vmatpush2.msra.mxu0 0.0
        %6163 = vmatprep.subr.mxu0 0.0
        %6164 = vmatpush2.msra.mxu0 0.0
        %6165 = vmatprep.subr.mxu0 0.0
        %6166 = vmatpush2.msra.mxu0 0.0
        %6167 = vmatprep.mubr.f32.mxu0 0.0
        %6168 = vmatmul.mubr.f32.gmra.mxu0 %v6101
        %v6169 = vpop.f32.mrf.mxu0
        %v6170 = vadd.f32 0.0, %v6169
        %v6171 = vpop.f32.mrf.mxu0
        %6172 = vdwg.mxu0
        %s6173 = scalar_lea.vmem %s16, 448
        %v6174 = vld [vmem:[%s6173] sm:$0xff]
        %v6175 = vld [vmem:[%s6173 + $0x8] sm:$0xff]
        %v6176 = vld [vmem:[%s6173 + $0x10] sm:$0xff]
        %v6177 = vld [vmem:[%s6173 + $0x18] sm:$0xff]
        %v6178 = vld [vmem:[%s6173 + $0x20] sm:$0xff]
        %v6179 = vld [vmem:[%s6173 + $0x28] sm:$0xff]
        %v6180 = vld [vmem:[%s6173 + $0x30] sm:$0xff]
        %v6181 = vld [vmem:[%s6173 + $0x38] sm:$0xff]
        %v6183 = vsel %vm767, %v6170, 0
        %6185 = vmatprep.subr.mxu0 0.0
        %6186 = vmatpush1.msra.mxu0 0.0
        %6187 = vmatprep.subr.mxu0 0.0
        %6188 = vmatpush1.msra.mxu0 0.0
        %6189 = vmatprep.subr.mxu0 0.0
        %6190 = vmatpush1.msra.mxu0 0.0
        %6191 = vmatprep.subr.mxu0 0.0
        %6192 = vmatpush1.msra.mxu0 0.0
        %6193 = vmatprep.subr.mxu0 0.0
        %6194 = vmatpush1.msra.mxu0 0.0
        %6195 = vmatprep.subr.mxu0 0.0
        %6196 = vmatpush1.msra.mxu0 0.0
        %6197 = vmatprep.subr.mxu0 0.0
        %6198 = vmatpush1.msra.mxu0 0.0
        %6199 = vmatprep.subr.mxu0 0.0
        %6200 = vmatpush1.msra.mxu0 0.0
        %6201 = vmatprep.subr.mxu0 0.0
        %6202 = vmatpush1.msra.mxu0 %v6181
        %6203 = vmatprep.subr.mxu0 0.0
        %6204 = vmatpush1.msra.mxu0 %v6180
        %6205 = vmatprep.subr.mxu0 0.0
        %6206 = vmatpush1.msra.mxu0 %v6179
        %6207 = vmatprep.subr.mxu0 0.0
        %6208 = vmatpush1.msra.mxu0 %v6178
        %6209 = vmatprep.subr.mxu0 0.0
        %6210 = vmatpush1.msra.mxu0 %v6177
        %6211 = vmatprep.subr.mxu0 0.0
        %6212 = vmatpush1.msra.mxu0 %v6176
        %6213 = vmatprep.subr.mxu0 0.0
        %6214 = vmatpush1.msra.mxu0 %v6175
        %6215 = vmatprep.subr.mxu0 0.0
        %6216 = vmatpush1.msra.mxu0 %v6174
        %6217 = vmatprep.subr.mxu0 0.0
        %6218 = vmatpush2.msra.mxu0 0.0
        %6219 = vmatprep.subr.mxu0 0.0
        %6220 = vmatpush2.msra.mxu0 0.0
        %6221 = vmatprep.subr.mxu0 0.0
        %6222 = vmatpush2.msra.mxu0 0.0
        %6223 = vmatprep.subr.mxu0 0.0
        %6224 = vmatpush2.msra.mxu0 0.0
        %6225 = vmatprep.subr.mxu0 0.0
        %6226 = vmatpush2.msra.mxu0 0.0
        %6227 = vmatprep.subr.mxu0 0.0
        %6228 = vmatpush2.msra.mxu0 0.0
        %6229 = vmatprep.subr.mxu0 0.0
        %6230 = vmatpush2.msra.mxu0 0.0
        %6231 = vmatprep.subr.mxu0 0.0
        %6232 = vmatpush2.msra.mxu0 0.0
        %6233 = vmatprep.subr.mxu0 0.0
        %6234 = vmatpush2.msra.mxu0 0.0
        %6235 = vmatprep.subr.mxu0 0.0
        %6236 = vmatpush2.msra.mxu0 0.0
        %6237 = vmatprep.subr.mxu0 0.0
        %6238 = vmatpush2.msra.mxu0 0.0
        %6239 = vmatprep.subr.mxu0 0.0
        %6240 = vmatpush2.msra.mxu0 0.0
        %6241 = vmatprep.subr.mxu0 0.0
        %6242 = vmatpush2.msra.mxu0 0.0
        %6243 = vmatprep.subr.mxu0 0.0
        %6244 = vmatpush2.msra.mxu0 0.0
        %6245 = vmatprep.subr.mxu0 0.0
        %6246 = vmatpush2.msra.mxu0 0.0
        %6247 = vmatprep.subr.mxu0 0.0
        %6248 = vmatpush2.msra.mxu0 0.0
        %6249 = vmatprep.mubr.f32.mxu0 0.0
        %6250 = vmatmul.mubr.f32.gmra.mxu0 %v6183
        %v6251 = vpop.f32.mrf.mxu0
        %v6252 = vadd.f32 0.0, %v6251
        %v6253 = vpop.f32.mrf.mxu0
        %6254 = vdwg.mxu0
        %v6255 = vadd.f32 %v6097, %v6252
        %s6256 = scalar_lea.vmem %s15, 64
        %v6257 = vld [vmem:[%s6256] sm:$0xff]
        %v6259 = vsel %vm3446, %v6257, 0
        %6261 = vmatprep.subr.mxu0 0.0
        %6262 = vmatpush1.msra.mxu0 0.0
        %6263 = vmatprep.subr.mxu0 0.0
        %6264 = vmatpush1.msra.mxu0 0.0
        %6265 = vmatprep.subr.mxu0 0.0
        %6266 = vmatpush1.msra.mxu0 0.0
        %6267 = vmatprep.subr.mxu0 0.0
        %6268 = vmatpush1.msra.mxu0 0.0
        %6269 = vmatprep.subr.mxu0 0.0
        %6270 = vmatpush1.msra.mxu0 0.0
        %6271 = vmatprep.subr.mxu0 0.0
        %6272 = vmatpush1.msra.mxu0 0.0
        %6273 = vmatprep.subr.mxu0 0.0
        %6274 = vmatpush1.msra.mxu0 0.0
        %6275 = vmatprep.subr.mxu0 0.0
        %6276 = vmatpush1.msra.mxu0 0.0
        %6277 = vmatprep.subr.mxu0 0.0
        %6278 = vmatpush1.msra.mxu0 0.0
        %6279 = vmatprep.subr.mxu0 0.0
        %6280 = vmatpush1.msra.mxu0 0.0
        %6281 = vmatprep.subr.mxu0 0.0
        %6282 = vmatpush1.msra.mxu0 0.0
        %6283 = vmatprep.subr.mxu0 0.0
        %6284 = vmatpush1.msra.mxu0 0.0
        %6285 = vmatprep.subr.mxu0 0.0
        %6286 = vmatpush1.msra.mxu0 0.0
        %6287 = vmatprep.subr.mxu0 0.0
        %6288 = vmatpush1.msra.mxu0 0.0
        %6289 = vmatprep.subr.mxu0 0.0
        %6290 = vmatpush1.msra.mxu0 0.0
        %6291 = vmatprep.subr.mxu0 0.0
        %6292 = vmatpush1.msra.mxu0 %v4995
        %6293 = vmatprep.subr.mxu0 0.0
        %6294 = vmatpush2.msra.mxu0 0.0
        %6295 = vmatprep.subr.mxu0 0.0
        %6296 = vmatpush2.msra.mxu0 0.0
        %6297 = vmatprep.subr.mxu0 0.0
        %6298 = vmatpush2.msra.mxu0 0.0
        %6299 = vmatprep.subr.mxu0 0.0
        %6300 = vmatpush2.msra.mxu0 0.0
        %6301 = vmatprep.subr.mxu0 0.0
        %6302 = vmatpush2.msra.mxu0 0.0
        %6303 = vmatprep.subr.mxu0 0.0
        %6304 = vmatpush2.msra.mxu0 0.0
        %6305 = vmatprep.subr.mxu0 0.0
        %6306 = vmatpush2.msra.mxu0 0.0
        %6307 = vmatprep.subr.mxu0 0.0
        %6308 = vmatpush2.msra.mxu0 0.0
        %6309 = vmatprep.subr.mxu0 0.0
        %6310 = vmatpush2.msra.mxu0 0.0
        %6311 = vmatprep.subr.mxu0 0.0
        %6312 = vmatpush2.msra.mxu0 0.0
        %6313 = vmatprep.subr.mxu0 0.0
        %6314 = vmatpush2.msra.mxu0 0.0
        %6315 = vmatprep.subr.mxu0 0.0
        %6316 = vmatpush2.msra.mxu0 0.0
        %6317 = vmatprep.subr.mxu0 0.0
        %6318 = vmatpush2.msra.mxu0 0.0
        %6319 = vmatprep.subr.mxu0 0.0
        %6320 = vmatpush2.msra.mxu0 0.0
        %6321 = vmatprep.subr.mxu0 0.0
        %6322 = vmatpush2.msra.mxu0 0.0
        %6323 = vmatprep.subr.mxu0 0.0
        %6324 = vmatpush2.msra.mxu0 0.0
        %6325 = vmatprep.mubr.f32.mxu0 0.0
        %6326 = vmatmul.mubr.f32.gmra.mxu0 %v6259
        %v6327 = vpop.f32.mrf.mxu0
        %v6328 = vadd.f32 0.0, %v6327
        %v6329 = vpop.f32.mrf.mxu0
        %6330 = vdwg.mxu0
        %s6331 = scalar_lea.vmem %s16, 512
        %v6332 = vld [vmem:[%s6331] sm:$0xff]
        %v6333 = vld [vmem:[%s6331 + $0x8] sm:$0xff]
        %v6334 = vld [vmem:[%s6331 + $0x10] sm:$0xff]
        %v6335 = vld [vmem:[%s6331 + $0x18] sm:$0xff]
        %v6336 = vld [vmem:[%s6331 + $0x20] sm:$0xff]
        %v6337 = vld [vmem:[%s6331 + $0x28] sm:$0xff]
        %v6338 = vld [vmem:[%s6331 + $0x30] sm:$0xff]
        %v6339 = vld [vmem:[%s6331 + $0x38] sm:$0xff]
        %v6341 = vsel %vm767, %v6328, 0
        %6343 = vmatprep.subr.mxu0 0.0
        %6344 = vmatpush1.msra.mxu0 0.0
        %6345 = vmatprep.subr.mxu0 0.0
        %6346 = vmatpush1.msra.mxu0 0.0
        %6347 = vmatprep.subr.mxu0 0.0
        %6348 = vmatpush1.msra.mxu0 0.0
        %6349 = vmatprep.subr.mxu0 0.0
        %6350 = vmatpush1.msra.mxu0 0.0
        %6351 = vmatprep.subr.mxu0 0.0
        %6352 = vmatpush1.msra.mxu0 0.0
        %6353 = vmatprep.subr.mxu0 0.0
        %6354 = vmatpush1.msra.mxu0 0.0
        %6355 = vmatprep.subr.mxu0 0.0
        %6356 = vmatpush1.msra.mxu0 0.0
        %6357 = vmatprep.subr.mxu0 0.0
        %6358 = vmatpush1.msra.mxu0 0.0
        %6359 = vmatprep.subr.mxu0 0.0
        %6360 = vmatpush1.msra.mxu0 %v6339
        %6361 = vmatprep.subr.mxu0 0.0
        %6362 = vmatpush1.msra.mxu0 %v6338
        %6363 = vmatprep.subr.mxu0 0.0
        %6364 = vmatpush1.msra.mxu0 %v6337
        %6365 = vmatprep.subr.mxu0 0.0
        %6366 = vmatpush1.msra.mxu0 %v6336
        %6367 = vmatprep.subr.mxu0 0.0
        %6368 = vmatpush1.msra.mxu0 %v6335
        %6369 = vmatprep.subr.mxu0 0.0
        %6370 = vmatpush1.msra.mxu0 %v6334
        %6371 = vmatprep.subr.mxu0 0.0
        %6372 = vmatpush1.msra.mxu0 %v6333
        %6373 = vmatprep.subr.mxu0 0.0
        %6374 = vmatpush1.msra.mxu0 %v6332
        %6375 = vmatprep.subr.mxu0 0.0
        %6376 = vmatpush2.msra.mxu0 0.0
        %6377 = vmatprep.subr.mxu0 0.0
        %6378 = vmatpush2.msra.mxu0 0.0
        %6379 = vmatprep.subr.mxu0 0.0
        %6380 = vmatpush2.msra.mxu0 0.0
        %6381 = vmatprep.subr.mxu0 0.0
        %6382 = vmatpush2.msra.mxu0 0.0
        %6383 = vmatprep.subr.mxu0 0.0
        %6384 = vmatpush2.msra.mxu0 0.0
        %6385 = vmatprep.subr.mxu0 0.0
        %6386 = vmatpush2.msra.mxu0 0.0
        %6387 = vmatprep.subr.mxu0 0.0
        %6388 = vmatpush2.msra.mxu0 0.0
        %6389 = vmatprep.subr.mxu0 0.0
        %6390 = vmatpush2.msra.mxu0 0.0
        %6391 = vmatprep.subr.mxu0 0.0
        %6392 = vmatpush2.msra.mxu0 0.0
        %6393 = vmatprep.subr.mxu0 0.0
        %6394 = vmatpush2.msra.mxu0 0.0
        %6395 = vmatprep.subr.mxu0 0.0
        %6396 = vmatpush2.msra.mxu0 0.0
        %6397 = vmatprep.subr.mxu0 0.0
        %6398 = vmatpush2.msra.mxu0 0.0
        %6399 = vmatprep.subr.mxu0 0.0
        %6400 = vmatpush2.msra.mxu0 0.0
        %6401 = vmatprep.subr.mxu0 0.0
        %6402 = vmatpush2.msra.mxu0 0.0
        %6403 = vmatprep.subr.mxu0 0.0
        %6404 = vmatpush2.msra.mxu0 0.0
        %6405 = vmatprep.subr.mxu0 0.0
        %6406 = vmatpush2.msra.mxu0 0.0
        %6407 = vmatprep.mubr.f32.mxu0 0.0
        %6408 = vmatmul.mubr.f32.gmra.mxu0 %v6341
        %v6409 = vpop.f32.mrf.mxu0
        %v6410 = vadd.f32 0.0, %v6409
        %v6411 = vpop.f32.mrf.mxu0
        %6412 = vdwg.mxu0
        %v6413 = vadd.f32 %v6255, %v6410
        %v6414 = vld [vmem:[%s17] sm:$0x1]
        %v6416 = vlaneseq
        %v6417 = vshrl.u32 %v6416, 7
        %v6418 = vsub.s32 0, %v6417
        %v6419 = vrot.slane %v6414, %v6418
        %v6421 = vadd.f32 %v6413, %v6419
        %v6422 = vmax.f32 %v6421, 0.0
        %v6423 = vld [vmem:[%s18] sm:$0xff]
        %v6425 = vsel %vm3446, %v6423, 0
        %6427 = vmatprep.subr.mxu0 0.0
        %6428 = vmatpush1.msra.mxu0 0.0
        %6429 = vmatprep.subr.mxu0 0.0
        %6430 = vmatpush1.msra.mxu0 0.0
        %6431 = vmatprep.subr.mxu0 0.0
        %6432 = vmatpush1.msra.mxu0 0.0
        %6433 = vmatprep.subr.mxu0 0.0
        %6434 = vmatpush1.msra.mxu0 0.0
        %6435 = vmatprep.subr.mxu0 0.0
        %6436 = vmatpush1.msra.mxu0 0.0
        %6437 = vmatprep.subr.mxu0 0.0
        %6438 = vmatpush1.msra.mxu0 0.0
        %6439 = vmatprep.subr.mxu0 0.0
        %6440 = vmatpush1.msra.mxu0 0.0
        %6441 = vmatprep.subr.mxu0 0.0
        %6442 = vmatpush1.msra.mxu0 0.0
        %6443 = vmatprep.subr.mxu0 0.0
        %6444 = vmatpush1.msra.mxu0 0.0
        %6445 = vmatprep.subr.mxu0 0.0
        %6446 = vmatpush1.msra.mxu0 0.0
        %6447 = vmatprep.subr.mxu0 0.0
        %6448 = vmatpush1.msra.mxu0 0.0
        %6449 = vmatprep.subr.mxu0 0.0
        %6450 = vmatpush1.msra.mxu0 0.0
        %6451 = vmatprep.subr.mxu0 0.0
        %6452 = vmatpush1.msra.mxu0 0.0
        %6453 = vmatprep.subr.mxu0 0.0
        %6454 = vmatpush1.msra.mxu0 0.0
        %6455 = vmatprep.subr.mxu0 0.0
        %6456 = vmatpush1.msra.mxu0 0.0
        %6457 = vmatprep.subr.mxu0 0.0
        %6458 = vmatpush1.msra.mxu0 %v6422
        %6459 = vmatprep.subr.mxu0 0.0
        %6460 = vmatpush2.msra.mxu0 0.0
        %6461 = vmatprep.subr.mxu0 0.0
        %6462 = vmatpush2.msra.mxu0 0.0
        %6463 = vmatprep.subr.mxu0 0.0
        %6464 = vmatpush2.msra.mxu0 0.0
        %6465 = vmatprep.subr.mxu0 0.0
        %6466 = vmatpush2.msra.mxu0 0.0
        %6467 = vmatprep.subr.mxu0 0.0
        %6468 = vmatpush2.msra.mxu0 0.0
        %6469 = vmatprep.subr.mxu0 0.0
        %6470 = vmatpush2.msra.mxu0 0.0
        %6471 = vmatprep.subr.mxu0 0.0
        %6472 = vmatpush2.msra.mxu0 0.0
        %6473 = vmatprep.subr.mxu0 0.0
        %6474 = vmatpush2.msra.mxu0 0.0
        %6475 = vmatprep.subr.mxu0 0.0
        %6476 = vmatpush2.msra.mxu0 0.0
        %6477 = vmatprep.subr.mxu0 0.0
        %6478 = vmatpush2.msra.mxu0 0.0
        %6479 = vmatprep.subr.mxu0 0.0
        %6480 = vmatpush2.msra.mxu0 0.0
        %6481 = vmatprep.subr.mxu0 0.0
        %6482 = vmatpush2.msra.mxu0 0.0
        %6483 = vmatprep.subr.mxu0 0.0
        %6484 = vmatpush2.msra.mxu0 0.0
        %6485 = vmatprep.subr.mxu0 0.0
        %6486 = vmatpush2.msra.mxu0 0.0
        %6487 = vmatprep.subr.mxu0 0.0
        %6488 = vmatpush2.msra.mxu0 0.0
        %6489 = vmatprep.subr.mxu0 0.0
        %6490 = vmatpush2.msra.mxu0 0.0
        %6491 = vmatprep.mubr.f32.mxu0 0.0
        %6492 = vmatmul.mubr.f32.gmra.mxu0 %v6425
        %v6493 = vpop.f32.mrf.mxu0
        %v6494 = vadd.f32 0.0, %v6493
        %v6495 = vpop.f32.mrf.mxu0
        %6496 = vdwg.mxu0
        %6497 = vst.msk [vmem:[%s595] sm:$0xff] %vm767, %v6494
        %s6498 = sand.u32 %s445, 1
        %s6499 = scalar_lea.sflag [#allocation3], %s6498
        %s6500 = sand.u32 %s445, 1
        %s6501 = smul.addr %s6500, 8
        %s6502 = scalar_lea.vmem [#allocation2], %s6501
        // Predicated region
        $region97: #{dense_block_forward.1} parent=95 // pred_check
          %p6503 = pneg %p455
        $region98: #{dense_block_forward.1} parent=95 // pred_check_branch
          %6505 = sbr.rel (%p6503) target = $region100
        $region99: #{dense_block_forward.1} parent=95 // pred_region
          %s6507 = ssub.s32 128, 128
          %6508 = vsyncadd %s6499, %s6507
          %s6509 = smul.addr %s33, 128
          %s6510 = scalar_lea.hbm %s19, %s6509
          %s6512 = sshll.u32 %s6502, 4
          %s6513 = int_to_ptr.vmem [resolvable:$true] %s6512
          %6515 = dma.vmem_to_hbm [thread:$0]  %s6513, 128, %s6510, %s6499
        $region100: #{dense_block_forward.1} parent=95 // pred_fallthru
          _
      $region96: #{dense_block_forward.1} parent=5 // pred_fallthru
        _
      %p6516 = scmp.le.s32.totalorder 2, %s28
      // Predicated region
      $region101: #{dense_block_forward.1} parent=5 // pred_check
        %p6517 = pneg %p6516
      $region102: #{dense_block_forward.1} parent=5 // pred_check_branch
        %6519 = sbr.rel (%p6517) target = $region104
      $region103: #{dense_block_forward.1} parent=5 // pred_region
        %s6520 = ssub.s32 %s28, 2
        // Predicated region
        $region105: #{dense_block_forward.1} parent=103 // pred_check
          %p6521 = pneg %p461
        $region106: #{dense_block_forward.1} parent=103 // pred_check_branch
          %6523 = sbr.rel (%p6521) target = $region108
        $region107: #{dense_block_forward.1} parent=103 // pred_region
          %s6524 = sand.u32 %s446, 1
          %s6525 = scalar_lea.sflag [#allocation3], %s6524
          %s6526 = sand.u32 %s446, 1
          %s6527 = smul.addr %s6526, 8
          %s6528 = scalar_lea.vmem [#allocation2], %s6527
          %6529 = dma.done %s6525, 128
        $region108: #{dense_block_forward.1} parent=103 // pred_fallthru
          _
      $region104: #{dense_block_forward.1} parent=5 // pred_fallthru
        _
    $region6: #{dense_block_forward.1} parent=1 // loop_footer
      %s32 = sadd.s32 1, %s28
    $region7: #{dense_block_forward.1} parent=1 // loop_footer_branch
      %27 = sbr.rel target = $region3
    $region8: #{dense_block_forward.1} parent=1 // loop_exit
      _
    %6530 = vsyncpa [#allocation3], 1
    %s6531 = scalar_lea.sflag [#allocation3], 1
    %6532 = vsyncpa %s6531, 1

</llo_original>
